<compile_context>
chip_gen: v7x
topology: tpu7x:2x2x1
jax: 0.10.0
libtpu: 0.0.40
codegen_flags: <defaults>
</compile_context>

<pallas_src>
import functools

import jax
import jax.numpy as jnp
from jax.experimental import pallas as pl
from jax.experimental.pallas import tpu as pltpu


def fused_relu_conv1x1_bn_kernel(x_ref, w_ref, g_ref, b_ref, o_ref, *,
                                 eps, inv_m, matmul_dtype):
    """ReLU -> 1x1 conv (as W_tile @ X on the MXU) -> batch-norm, per C_out tile.

    x_ref: (C_in,   M) f32   activations (VMEM-resident, constant index_map)
    w_ref: (C_tile, C_in) f32 conv weight tile (cast to bf16 in-kernel)
    g_ref: (C_tile, 1) f32   BN gamma tile
    b_ref: (C_tile, 1) f32   BN beta tile
    o_ref: (C_tile, M) f32   normalized output tile
    """
    # ReLU + MXU-input cast.  Recomputed per tile (VPU filler; see header note on
    # why a program_id==0-guarded scratch is unsafe under megacore "parallel").
    x = jnp.maximum(x_ref[...], 0.0).astype(matmul_dtype)
    w = w_ref[...].astype(matmul_dtype)

    # (C_tile, M), f32 accumulation on the MXU.
    y = jnp.dot(w, x, preferred_element_type=jnp.float32)

    # Per-channel batch statistics (biased variance, as PyTorch BN uses to normalize).
    mean = jnp.sum(y, axis=1, keepdims=True) * inv_m                 # (C_tile, 1)
    centered = y - mean
    var = jnp.sum(centered * centered, axis=1, keepdims=True) * inv_m

    scale = g_ref[...] * jax.lax.rsqrt(var + eps)                    # (C_tile, 1)
    o_ref[...] = centered * scale + b_ref[...]


def _pick_cout_tiles(c_out):
    """Largest grid size in {8,4,2,1} whose tile is a multiple of 8 sublanes."""
    for g in (8, 4, 2, 1):
        if c_out % g == 0 and (c_out // g) % 8 == 0:
            return g
    return 1


def relu_conv1x1_bn(x_nchw, conv_w, gamma, beta, eps=1e-5,
                    matmul_dtype=jnp.bfloat16):
    """PyTorch-equivalent forward: BatchNorm2d(Conv2d_1x1(ReLU(x)))."""
    N, C_in, H, W = x_nchw.shape
    C_out = conv_w.shape[0]
    M = N * H * W

    # (N, C, H, W) -> (C, M). Free reshape for N == 1; one transpose otherwise.
    if N == 1:
        x_cm = x_nchw.reshape(C_in, M)
    else:
        x_cm = jnp.transpose(x_nchw.reshape(N, C_in, H * W), (1, 0, 2)).reshape(C_in, M)
    x_cm = x_cm.astype(jnp.float32)

    # Weight stays f32 here; the bf16 cast happens inside the kernel (halves weight
    # HBM traffic vs. a separate wrapper-side cast pass).
    w = conv_w.reshape(C_out, C_in).astype(jnp.float32)
    g = gamma.reshape(C_out, 1).astype(jnp.float32)
    b = beta.reshape(C_out, 1).astype(jnp.float32)

    n_tiles = _pick_cout_tiles(C_out)
    tile_c = C_out // n_tiles

    kernel = functools.partial(
        fused_relu_conv1x1_bn_kernel,
        eps=float(eps), inv_m=1.0 / M, matmul_dtype=matmul_dtype)

    out_cm = pl.pallas_call(
        kernel,
        out_shape=jax.ShapeDtypeStruct((C_out, M), jnp.float32),
        grid_spec=pltpu.PrefetchScalarGridSpec(
            num_scalar_prefetch=0,
            grid=(n_tiles,),
            in_specs=[
                # x: full array, constant block index -> DMA'd once, VMEM-resident.
                pl.BlockSpec((C_in, M), lambda i: (0, 0)),
                # w / gamma / beta / out: tiled along C_out, auto double-buffered.
                pl.BlockSpec((tile_c, C_in), lambda i: (i, 0)),
                pl.BlockSpec((tile_c, 1), lambda i: (i, 0)),
                pl.BlockSpec((tile_c, 1), lambda i: (i, 0)),
            ],
            out_specs=pl.BlockSpec((tile_c, M), lambda i: (i, 0)),
        ),
        compiler_params=pltpu.CompilerParams(
            # C_out tiles are fully independent (per-channel BN stats) -> megacore.
            dimension_semantics=("parallel",),
            # Working set (double-buffered) ~17-18 MiB; 32 MiB gives headroom, stays
            # well under v7x's 64 MiB physical VMEM, and lifts v5e's 16 MiB default.
            vmem_limit_bytes=32 * 1024 * 1024,
        ),
    )(x_cm, w, g, b)

    # (C, M) -> NCHW (free reshape for N == 1).
    if N == 1:
        return out_cm.reshape(1, C_out, H, W)
    return jnp.transpose(out_cm.reshape(C_out, N, H * W), (1, 0, 2)).reshape(N, C_out, H, W)


def reference_jax(x_nchw, conv_w, gamma, beta, eps=1e-5, matmul_dtype=jnp.float32):
    """Pure-JAX reference (matmul_dtype controls the conv input precision)."""
    N, C_in, H, W = x_nchw.shape
    C_out = conv_w.shape[0]
    x = jnp.maximum(x_nchw, 0.0).astype(matmul_dtype)
    w = conv_w.reshape(C_out, C_in).astype(matmul_dtype)
    y = jnp.einsum("oc,nchw->nohw", w, x, preferred_element_type=jnp.float32)
    mean = jnp.mean(y, axis=(0, 2, 3), keepdims=True)
    var = jnp.mean((y - mean) ** 2, axis=(0, 2, 3), keepdims=True)
    out = (y - mean) * jax.lax.rsqrt(var + eps)
    return out * gamma[None, :, None, None] + beta[None, :, None, None]


if __name__ == "__main__":
    # Shapes from the module: x [1, 1056, 28, 28], Conv2d(1056 -> 1056, k=1, bias=False)
    N, C, H, W = 1, 1056, 28, 28
    key = jax.random.PRNGKey(0)
    kx, kw, kg, kb = jax.random.split(key, 4)

    x = jax.random.normal(kx, (N, C, H, W), dtype=jnp.float32)
    conv_w = jax.random.normal(kw, (C, C, 1, 1), dtype=jnp.float32) * (1.0 / jnp.sqrt(C))
    gamma = jax.random.uniform(kg, (C,), dtype=jnp.float32, minval=0.5, maxval=1.5)
    beta = jax.random.normal(kb, (C,), dtype=jnp.float32) * 0.1

    out = jax.block_until_ready(relu_conv1x1_bn(x, conv_w, gamma, beta))
    assert out.shape == (N, C, H, W), out.shape

    # Tight check vs. a reference using the same bf16 MXU inputs (validates kernel logic).
    ref_bf16 = reference_jax(x, conv_w, gamma, beta, matmul_dtype=jnp.bfloat16)
    err_bf16 = float(jnp.max(jnp.abs(out - ref_bf16)))
    assert jnp.allclose(out, ref_bf16, atol=2e-3, rtol=2e-3), err_bf16

    # Looser check vs. the full-f32 (PyTorch-semantics) reference: bf16 MXU inputs shift
    # numerics slightly, stats/affine stay in f32.
    ref_f32 = reference_jax(x, conv_w, gamma, beta, matmul_dtype=jnp.float32)
    err_f32 = float(jnp.max(jnp.abs(out - ref_f32)))
    assert jnp.allclose(out, ref_f32, atol=3e-2, rtol=3e-2), err_f32

    print("KERNEL_OK")
</pallas_src>

<mosaic_0001>
module attributes {stable_mosaic.version = 11 : i64} {
  func.func @fused_relu_conv1x1_bn_kernel(%arg0: i32, %arg1: memref<1056x784xf32, #tpu.memory_space<vmem>>, %arg2: memref<264x1056xf32, #tpu.memory_space<vmem>>, %arg3: memref<264x1xf32, #tpu.memory_space<vmem>>, %arg4: memref<264x1xf32, #tpu.memory_space<vmem>>, %arg5: memref<264x784xf32, #tpu.memory_space<vmem>>) attributes {dimension_semantics = [#tpu.dimension_semantics<parallel>], iteration_bounds = array<i64: 4>, scalar_prefetch = 0 : i64, scratch_operands = 0 : i64, tpu.core_type = #tpu.core_type<tc>, window_params = [{pipeline_mode = #tpu.pipeline_mode<synchronous>, transform_indices = @transform_0, window_bounds = array<i64: 1056, 784>}, {transform_indices = @transform_1, window_bounds = array<i64: 264, 1056>}, {transform_indices = @transform_2, window_bounds = array<i64: 264, 1>}, {transform_indices = @transform_3, window_bounds = array<i64: 264, 1>}, {transform_indices = @transform_4, window_bounds = array<i64: 264, 784>}]} {
    %c0 = arith.constant 0 : index
    %c0_0 = arith.constant 0 : index
    %0 = vector.load %arg1[%c0, %c0_0] : memref<1056x784xf32, #tpu.memory_space<vmem>>, vector<1056x784xf32>
    %cst = arith.constant 0.000000e+00 : f32
    %1 = vector.broadcast %cst : f32 to vector<1056x784xf32>
    %2 = arith.maximumf %0, %1 : vector<1056x784xf32>
    %3 = arith.truncf %2 : vector<1056x784xf32> to vector<1056x784xbf16>
    %c0_1 = arith.constant 0 : index
    %c0_2 = arith.constant 0 : index
    %4 = vector.load %arg2[%c0_1, %c0_2] : memref<264x1056xf32, #tpu.memory_space<vmem>>, vector<264x1056xf32>
    %5 = arith.truncf %4 : vector<264x1056xf32> to vector<264x1056xbf16>
    %cst_3 = arith.constant dense<0.000000e+00> : vector<264x784xf32>
    %6 = tpu.matmul %5, %3, %cst_3 {dimension_numbers = #tpu.dot_dimension_numbers<[1], [0], [0], [1], [0, 0, 1, 1], [], []>} : vector<264x1056xbf16>, vector<1056x784xbf16>, vector<264x784xf32> -> vector<264x784xf32>
    %cst_4 = arith.constant dense<0.000000e+00> : vector<264xf32>
    %7 = vector.multi_reduction <add>, %6, %cst_4 [1] : vector<264x784xf32> to vector<264xf32>
    %8 = vector.shape_cast %7 : vector<264xf32> to vector<264x1xf32>
    %cst_5 = arith.constant 0.00127551018 : f32
    %9 = vector.broadcast %cst_5 : f32 to vector<264x1xf32>
    %10 = arith.mulf %8, %9 : vector<264x1xf32>
    %11 = vector.broadcast %10 : vector<264x1xf32> to vector<264x784xf32>
    %12 = arith.subf %6, %11 : vector<264x784xf32>
    %13 = arith.mulf %12, %12 : vector<264x784xf32>
    %cst_6 = arith.constant dense<0.000000e+00> : vector<264xf32>
    %14 = vector.multi_reduction <add>, %13, %cst_6 [1] : vector<264x784xf32> to vector<264xf32>
    %15 = vector.shape_cast %14 : vector<264xf32> to vector<264x1xf32>
    %cst_7 = arith.constant 0.00127551018 : f32
    %16 = vector.broadcast %cst_7 : f32 to vector<264x1xf32>
    %17 = arith.mulf %15, %16 : vector<264x1xf32>
    %c0_8 = arith.constant 0 : index
    %c0_9 = arith.constant 0 : index
    %18 = vector.load %arg3[%c0_8, %c0_9] : memref<264x1xf32, #tpu.memory_space<vmem>>, vector<264x1xf32>
    %cst_10 = arith.constant 9.99999974E-6 : f32
    %19 = vector.broadcast %cst_10 : f32 to vector<264x1xf32>
    %20 = arith.addf %17, %19 : vector<264x1xf32>
    %21 = math.rsqrt %20 : vector<264x1xf32>
    %22 = arith.mulf %18, %21 : vector<264x1xf32>
    %23 = vector.broadcast %22 : vector<264x1xf32> to vector<264x784xf32>
    %24 = arith.mulf %12, %23 : vector<264x784xf32>
    %c0_11 = arith.constant 0 : index
    %c0_12 = arith.constant 0 : index
    %25 = vector.load %arg4[%c0_11, %c0_12] : memref<264x1xf32, #tpu.memory_space<vmem>>, vector<264x1xf32>
    %26 = vector.broadcast %25 : vector<264x1xf32> to vector<264x784xf32>
    %27 = arith.addf %24, %26 : vector<264x784xf32>
    %c0_13 = arith.constant 0 : index
    %c0_14 = arith.constant 0 : index
    %28 = vector.load %arg5[%c0_13, %c0_14] : memref<264x784xf32, #tpu.memory_space<vmem>>, vector<264x784xf32>
    tpu.vector_store %arg5[%c0_13, %c0_14], %27 {strides = array<i32>} : memref<264x784xf32, #tpu.memory_space<vmem>>, vector<264x784xf32>,
    return
  }
  func.func @transform_0(%arg0: i32) -> (i32, i32) {
    %c0_i32 = arith.constant 0 : i32
    %c0_i32_0 = arith.constant 0 : i32
    %c0_i32_1 = arith.constant 0 : i32
    return %c0_i32, %c0_i32_0 : i32, i32
  }
  func.func @transform_1(%arg0: i32) -> (i32, i32) {
    %c0_i32 = arith.constant 0 : i32
    %c0_i32_0 = arith.constant 0 : i32
    return %arg0, %c0_i32 : i32, i32
  }
  func.func @transform_2(%arg0: i32) -> (i32, i32) {
    %c0_i32 = arith.constant 0 : i32
    %c0_i32_0 = arith.constant 0 : i32
    return %arg0, %c0_i32 : i32, i32
  }
  func.func @transform_3(%arg0: i32) -> (i32, i32) {
    %c0_i32 = arith.constant 0 : i32
    %c0_i32_0 = arith.constant 0 : i32
    return %arg0, %c0_i32 : i32, i32
  }
  func.func @transform_4(%arg0: i32) -> (i32, i32) {
    %c0_i32 = arith.constant 0 : i32
    %c0_i32_0 = arith.constant 0 : i32
    return %arg0, %c0_i32 : i32, i32
  }
}

</mosaic_0001>

<llo_original>
// kernel: tpu_custom_call.1
$region0: #{tpu_custom_call.1}
  #allocation0 [shape = 'u32[]', space=smem, size = 0x4, offset = 0x4, fixed_abs, tag = 'smem constant byte address 0x4 - core index']
  #allocation1 [shape = 'u32[144,128]{1,0:T(1,128)}', space=vmem, size = 0x12000, scoped, tag = 'internal scratch']
  %s0 = inlined_call_operand.vmem [shape: f32[1056,784], index: 0, kind: input, shape index: {}]
  %s1 = inlined_call_operand.vmem [shape: f32[1056,1056], index: 1, kind: input, shape index: {}]
  %s2 = inlined_call_operand.vmem [shape: f32[1056,1], index: 2, kind: input, shape index: {}]
  %s3 = inlined_call_operand.vmem [shape: f32[1056,1], index: 3, kind: input, shape index: {}]
  %s4 = inlined_call_operand.vmem [shape: f32[1056,784], index: 4, kind: output, shape index: {}]
  %s5 = sld [smem:[#allocation0]]
  $region49: #{tpu_custom_call.1} parent=0
    _
  %s7 = ssub.s32 1, %s5
  %s8 = scalar_select 0, %s7, %s5
  loop: start=0, step=1, limit=6
  $region2: #{tpu_custom_call.1} parent=0 // loop_pre_header
    _
  $region3: #{tpu_custom_call.1} parent=0 // loop_header
    %s10 = sphi 0, %s14
    %p11 = scmp.ge.s32.totalorder %s10, 6
    %s18 = sphi 0, %s18
    %s20 = sphi 0, %s18
    %s21 = sphi 0, %s20
    %s35 = sphi 0, %s21
    %s41 = sphi 0, %s43
    %s44 = sphi 0, %s41
    %s45 = sphi 0, %s44
    %s61 = sphi 0, %s45
    %s67 = sphi 0, %s69
    %s70 = sphi 0, %s67
    %s71 = sphi 0, %s70
    %s87 = sphi 0, %s71
    %s93 = sphi 0, %s95
    %s96 = sphi 0, %s93
    %s97 = sphi 0, %s96
    %s113 = sphi 0, %s97
    %s119 = sphi 0, %s121
    %s122 = sphi 0, %s119
    %s123 = sphi 0, %s122
    %s139 = sphi 0, %s123
  $region4: #{tpu_custom_call.1} parent=0 // loop_header_branch
    %13 = sbr.rel (%p11) target = $region8
  $region5: #{tpu_custom_call.1} parent=0 // loop_body
    %s15 = ssub.s32 %s10, 1
    %s16 = ssub.s32 %s10, 2
    %s17 = sadd.s32 %s10, 1
    %s19 = sadd.s32 %s18, 1
    %p22 = scmp.eq.s32.totalorder %s10, 3
    %p23 = scmp.ne.s32.totalorder %s18, %s20
    %p24 = scmp.eq.s32.totalorder %s10, 0
    %p25 = por %p23, %p24
    %p26 = scmp.ne.s32.totalorder %s18, %s20
    %p27 = scmp.eq.s32.totalorder %s15, 3
    %p28 = por %p26, %p27
    %p29 = scmp.ne.s32.totalorder %s20, %s21
    %p30 = scmp.eq.s32.totalorder %s15, 0
    %p31 = por %p29, %p30
    %p32 = scmp.ne.s32.totalorder %s20, %s21
    %p33 = scmp.eq.s32.totalorder %s16, 3
    %p34 = por %p32, %p33
    %p36 = scmp.ne.s32.totalorder %s21, %s35
    %p37 = scmp.eq.s32.totalorder %s16, 0
    %p38 = por %p36, %p37
    %s39 = ssub.s32 %s10, %s17
    %p40 = scmp.eq.s32.totalorder %s39, 0
    %s42 = sadd.s32 %s41, 1
    %s43 = scalar_select %p40, %s41, %s42
    %p46 = pneg %p40
    %p47 = scmp.eq.s32.totalorder %s10, 3
    %p48 = por %p46, %p47
    %p49 = scmp.ne.s32.totalorder %s41, %s44
    %p50 = scmp.eq.s32.totalorder %s10, 0
    %p51 = por %p49, %p50
    %p52 = scmp.ne.s32.totalorder %s41, %s44
    %p53 = scmp.eq.s32.totalorder %s15, 3
    %p54 = por %p52, %p53
    %p55 = scmp.ne.s32.totalorder %s44, %s45
    %p56 = scmp.eq.s32.totalorder %s15, 0
    %p57 = por %p55, %p56
    %p58 = scmp.ne.s32.totalorder %s44, %s45
    %p59 = scmp.eq.s32.totalorder %s16, 3
    %p60 = por %p58, %p59
    %p62 = scmp.ne.s32.totalorder %s45, %s61
    %p63 = scmp.eq.s32.totalorder %s16, 0
    %p64 = por %p62, %p63
    %s65 = ssub.s32 %s10, %s17
    %p66 = scmp.eq.s32.totalorder %s65, 0
    %s68 = sadd.s32 %s67, 1
    %s69 = scalar_select %p66, %s67, %s68
    %p72 = pneg %p66
    %p73 = scmp.eq.s32.totalorder %s10, 3
    %p74 = por %p72, %p73
    %p75 = scmp.ne.s32.totalorder %s67, %s70
    %p76 = scmp.eq.s32.totalorder %s10, 0
    %p77 = por %p75, %p76
    %p78 = scmp.ne.s32.totalorder %s67, %s70
    %p79 = scmp.eq.s32.totalorder %s15, 3
    %p80 = por %p78, %p79
    %p81 = scmp.ne.s32.totalorder %s70, %s71
    %p82 = scmp.eq.s32.totalorder %s15, 0
    %p83 = por %p81, %p82
    %p84 = scmp.ne.s32.totalorder %s70, %s71
    %p85 = scmp.eq.s32.totalorder %s16, 3
    %p86 = por %p84, %p85
    %p88 = scmp.ne.s32.totalorder %s71, %s87
    %p89 = scmp.eq.s32.totalorder %s16, 0
    %p90 = por %p88, %p89
    %s91 = ssub.s32 %s10, %s17
    %p92 = scmp.eq.s32.totalorder %s91, 0
    %s94 = sadd.s32 %s93, 1
    %s95 = scalar_select %p92, %s93, %s94
    %p98 = pneg %p92
    %p99 = scmp.eq.s32.totalorder %s10, 3
    %p100 = por %p98, %p99
    %p101 = scmp.ne.s32.totalorder %s93, %s96
    %p102 = scmp.eq.s32.totalorder %s10, 0
    %p103 = por %p101, %p102
    %p104 = scmp.ne.s32.totalorder %s93, %s96
    %p105 = scmp.eq.s32.totalorder %s15, 3
    %p106 = por %p104, %p105
    %p107 = scmp.ne.s32.totalorder %s96, %s97
    %p108 = scmp.eq.s32.totalorder %s15, 0
    %p109 = por %p107, %p108
    %p110 = scmp.ne.s32.totalorder %s96, %s97
    %p111 = scmp.eq.s32.totalorder %s16, 3
    %p112 = por %p110, %p111
    %p114 = scmp.ne.s32.totalorder %s97, %s113
    %p115 = scmp.eq.s32.totalorder %s16, 0
    %p116 = por %p114, %p115
    %s117 = ssub.s32 %s10, %s17
    %p118 = scmp.eq.s32.totalorder %s117, 0
    %s120 = sadd.s32 %s119, 1
    %s121 = scalar_select %p118, %s119, %s120
    %p124 = pneg %p118
    %p125 = scmp.eq.s32.totalorder %s10, 3
    %p126 = por %p124, %p125
    %p127 = scmp.ne.s32.totalorder %s119, %s122
    %p128 = scmp.eq.s32.totalorder %s10, 0
    %p129 = por %p127, %p128
    %p130 = scmp.ne.s32.totalorder %s119, %s122
    %p131 = scmp.eq.s32.totalorder %s15, 3
    %p132 = por %p130, %p131
    %p133 = scmp.ne.s32.totalorder %s122, %s123
    %p134 = scmp.eq.s32.totalorder %s15, 0
    %p135 = por %p133, %p134
    %p136 = scmp.ne.s32.totalorder %s122, %s123
    %p137 = scmp.eq.s32.totalorder %s16, 3
    %p138 = por %p136, %p137
    %p140 = scmp.ne.s32.totalorder %s123, %s139
    %p141 = scmp.eq.s32.totalorder %s16, 0
    %p142 = por %p140, %p141
    %p143 = scmp.le.s32.totalorder 1, %s10
    %p144 = scmp.lt.s32.totalorder %s10, 5
    %p145 = pnand %p143, %p144
    %p146 = pneg %p145
    // Predicated region
    $region9: #{tpu_custom_call.1} parent=5 // pred_check
      _
    $region10: #{tpu_custom_call.1} parent=5 // pred_check_branch
      %148 = sbr.rel (%p145) target = $region12
    $region11: #{tpu_custom_call.1} parent=5 // pred_region
      %s149 = ssub.s32 %s10, 1
      // Predicated region
      $region13: #{tpu_custom_call.1} parent=11 // pred_check
        %p150 = pneg %p31
      $region14: #{tpu_custom_call.1} parent=11 // pred_check_branch
        %152 = sbr.rel (%p150) target = $region16
      $region15: #{tpu_custom_call.1} parent=11 // pred_region
        _
      $region16: #{tpu_custom_call.1} parent=11 // pred_fallthru
        _
    $region12: #{tpu_custom_call.1} parent=5 // pred_fallthru
      _
    %p153 = scmp.lt.s32.totalorder %s10, 4
    // Predicated region
    $region17: #{tpu_custom_call.1} parent=5 // pred_check
      %p154 = pneg %p153
    $region18: #{tpu_custom_call.1} parent=5 // pred_check_branch
      %156 = sbr.rel (%p154) target = $region20
    $region19: #{tpu_custom_call.1} parent=5 // pred_region
      // Predicated region
      $region21: #{tpu_custom_call.1} parent=19 // pred_check
        %p157 = pneg %p51
      $region22: #{tpu_custom_call.1} parent=19 // pred_check_branch
        %159 = sbr.rel (%p157) target = $region24
      $region23: #{tpu_custom_call.1} parent=19 // pred_region
        %s160 = smul.u32 33, %s10
        %p161 = scmp.lt.s32.totalorder %s160, 131
        %s162 = scalar_select %p161, %s160, 131
        %s163 = smul.addr %s162, 9
        %s164 = smul.addr %s163, 8
        %s165 = scalar_lea.vmem %s1, %s164
        %s166 = smul.u32 33, %s10
      $region24: #{tpu_custom_call.1} parent=19 // pred_fallthru
        _
      // Predicated region
      $region25: #{tpu_custom_call.1} parent=19 // pred_check
        %p167 = pneg %p77
      $region26: #{tpu_custom_call.1} parent=19 // pred_check_branch
        %169 = sbr.rel (%p167) target = $region28
      $region27: #{tpu_custom_call.1} parent=19 // pred_region
        %s170 = smul.u32 33, %s10
        %p171 = scmp.lt.s32.totalorder %s170, 131
        %s172 = scalar_select %p171, %s170, 131
        %s173 = smul.addr %s172, 8
        %s174 = scalar_lea.vmem %s2, %s173
        %s175 = smul.u32 33, %s10
      $region28: #{tpu_custom_call.1} parent=19 // pred_fallthru
        _
      // Predicated region
      $region29: #{tpu_custom_call.1} parent=19 // pred_check
        %p176 = pneg %p103
      $region30: #{tpu_custom_call.1} parent=19 // pred_check_branch
        %178 = sbr.rel (%p176) target = $region32
      $region31: #{tpu_custom_call.1} parent=19 // pred_region
        %s179 = smul.u32 33, %s10
        %p180 = scmp.lt.s32.totalorder %s179, 131
        %s181 = scalar_select %p180, %s179, 131
        %s182 = smul.addr %s181, 8
        %s183 = scalar_lea.vmem %s3, %s182
        %s184 = smul.u32 33, %s10
      $region32: #{tpu_custom_call.1} parent=19 // pred_fallthru
        _
    $region20: #{tpu_custom_call.1} parent=5 // pred_fallthru
      _
    %p185 = scmp.le.s32.totalorder 1, %s10
    %p186 = scmp.lt.s32.totalorder %s10, 5
    %p187 = pnand %p185, %p186
    %p188 = pneg %p187
    // Predicated region
    $region33: #{tpu_custom_call.1} parent=5 // pred_check
      _
    $region34: #{tpu_custom_call.1} parent=5 // pred_check_branch
      %190 = sbr.rel (%p187) target = $region36
    $region35: #{tpu_custom_call.1} parent=5 // pred_region
      %s191 = ssub.s32 %s10, 1
      %p192 = pneg %p31
      %p193 = pneg %p28
      %s194 = smul.u32 33, %s15
      %p195 = scmp.lt.s32.totalorder %s194, 131
      %s196 = scalar_select %p195, %s194, 131
      %s197 = smul.addr %s196, 9
      %s198 = smul.addr %s197, 8
      %s199 = scalar_lea.vmem %s1, %s198
      %p200 = pneg %p57
      %p201 = pneg %p54
      %s202 = smul.u32 33, %s15
      %p203 = scmp.lt.s32.totalorder %s202, 131
      %s204 = scalar_select %p203, %s202, 131
      %s205 = smul.addr %s204, 8
      %s206 = scalar_lea.vmem %s2, %s205
      %p207 = pneg %p83
      %p208 = pneg %p80
      %s209 = smul.u32 33, %s15
      %p210 = scmp.lt.s32.totalorder %s209, 131
      %s211 = scalar_select %p210, %s209, 131
      %s212 = smul.addr %s211, 8
      %s213 = scalar_lea.vmem %s3, %s212
      %p214 = pneg %p109
      %p215 = pneg %p106
      %p216 = pneg %p135
      %p217 = pneg %p132
      %s218 = smul.u32 33, %s15
      %p219 = scmp.lt.s32.totalorder %s218, 131
      %s220 = scalar_select %p219, %s218, 131
      %s221 = smul.addr %s220, 7
      %s222 = smul.addr %s221, 8
      %s223 = scalar_lea.vmem %s4, %s222
      %s224 = smul.u32 33, %s15
      %p225 = scmp.lt.s32.totalorder %s224, 131
      %s226 = scalar_select %p225, %s224, 131
      %s227 = smul.addr %s226, 9
      %s228 = smul.addr %s227, 8
      %s229 = scalar_lea.vmem %s1, %s228
      %s230 = smul.u32 33, %s15
      %s231 = smul.u32 33, %s15
      %p232 = scmp.lt.s32.totalorder %s231, 131
      %s233 = scalar_select %p232, %s231, 131
      %s234 = smul.addr %s233, 8
      %s235 = scalar_lea.vmem %s2, %s234
      %s236 = smul.u32 33, %s15
      %s237 = smul.u32 33, %s15
      %p238 = scmp.lt.s32.totalorder %s237, 131
      %s239 = scalar_select %p238, %s237, 131
      %s240 = smul.addr %s239, 8
      %s241 = scalar_lea.vmem %s3, %s240
      %s242 = smul.u32 33, %s15
      %s243 = smul.u32 33, %s15
      %p244 = scmp.lt.s32.totalorder %s243, 131
      %s245 = scalar_select %p244, %s243, 131
      %s246 = smul.addr %s245, 7
      %s247 = smul.addr %s246, 8
      %s248 = scalar_lea.vmem %s4, %s247
      %s249 = smul.u32 33, %s15
      %v251 = vld [vmem:[%s0] sm:$0xff]
      %v252 = vld [vmem:[%s0 + $0x8] sm:$0xff]
      %v253 = vld [vmem:[%s0 + $0x10] sm:$0xff]
      %v254 = vld [vmem:[%s0 + $0x18] sm:$0xff]
      %v255 = vld [vmem:[%s0 + $0x20] sm:$0xff]
      %v256 = vld [vmem:[%s0 + $0x28] sm:$0xff]
      %v257 = vld [vmem:[%s0 + $0x30] sm:$0xff]
      %v258 = vld [vmem:[%s0 + $0x38] sm:$0xff]
      %v259 = vld [vmem:[%s0 + $0x40] sm:$0xff]
      %v260 = vld [vmem:[%s0 + $0x48] sm:$0xff]
      %v261 = vld [vmem:[%s0 + $0x50] sm:$0xff]
      %v262 = vld [vmem:[%s0 + $0x58] sm:$0xff]
      %v263 = vld [vmem:[%s0 + $0x60] sm:$0xff]
      %v264 = vld [vmem:[%s0 + $0x68] sm:$0xff]
      %v265 = vld [vmem:[%s0 + $0x70] sm:$0xff]
      %v266 = vld [vmem:[%s0 + $0x78] sm:$0xff]
      %v267 = vld [vmem:[%s0 + $0x80] sm:$0xff]
      %v268 = vld [vmem:[%s0 + $0x88] sm:$0xff]
      %v269 = vld [vmem:[%s0 + $0x90] sm:$0xff]
      %v270 = vld [vmem:[%s0 + $0x98] sm:$0xff]
      %v271 = vld [vmem:[%s0 + $0xa0] sm:$0xff]
      %v272 = vld [vmem:[%s0 + $0xa8] sm:$0xff]
      %v273 = vld [vmem:[%s0 + $0xb0] sm:$0xff]
      %v274 = vld [vmem:[%s0 + $0xb8] sm:$0xff]
      %v275 = vld [vmem:[%s0 + $0xc0] sm:$0xff]
      %v276 = vld [vmem:[%s0 + $0xc8] sm:$0xff]
      %v277 = vld [vmem:[%s0 + $0xd0] sm:$0xff]
      %v278 = vld [vmem:[%s0 + $0xd8] sm:$0xff]
      %v279 = vld [vmem:[%s0 + $0xe0] sm:$0xff]
      %v280 = vld [vmem:[%s0 + $0xe8] sm:$0xff]
      %v281 = vld [vmem:[%s0 + $0xf0] sm:$0xff]
      %v282 = vld [vmem:[%s0 + $0xf8] sm:$0xff]
      %v283 = vld [vmem:[%s0 + $0x100] sm:$0xff]
      %v284 = vld [vmem:[%s0 + $0x108] sm:$0xff]
      %v285 = vld [vmem:[%s0 + $0x110] sm:$0xff]
      %v286 = vld [vmem:[%s0 + $0x118] sm:$0xff]
      %v287 = vld [vmem:[%s0 + $0x120] sm:$0xff]
      %v288 = vld [vmem:[%s0 + $0x128] sm:$0xff]
      %v289 = vld [vmem:[%s0 + $0x130] sm:$0xff]
      %v290 = vld [vmem:[%s0 + $0x138] sm:$0xff]
      %v291 = vld [vmem:[%s0 + $0x140] sm:$0xff]
      %v292 = vld [vmem:[%s0 + $0x148] sm:$0xff]
      %v293 = vld [vmem:[%s0 + $0x150] sm:$0xff]
      %v294 = vld [vmem:[%s0 + $0x158] sm:$0xff]
      %v295 = vld [vmem:[%s0 + $0x160] sm:$0xff]
      %v296 = vld [vmem:[%s0 + $0x168] sm:$0xff]
      %v297 = vld [vmem:[%s0 + $0x170] sm:$0xff]
      %v298 = vld [vmem:[%s0 + $0x178] sm:$0xff]
      %v299 = vld [vmem:[%s0 + $0x180] sm:$0xff]
      %v300 = vld [vmem:[%s0 + $0x188] sm:$0xff]
      %v301 = vld [vmem:[%s0 + $0x190] sm:$0xff]
      %v302 = vld [vmem:[%s0 + $0x198] sm:$0xff]
      %v303 = vld [vmem:[%s0 + $0x1a0] sm:$0xff]
      %v304 = vld [vmem:[%s0 + $0x1a8] sm:$0xff]
      %v305 = vld [vmem:[%s0 + $0x1b0] sm:$0xff]
      %v306 = vld [vmem:[%s0 + $0x1b8] sm:$0xff]
      %v307 = vld [vmem:[%s0 + $0x1c0] sm:$0xff]
      %v308 = vld [vmem:[%s0 + $0x1c8] sm:$0xff]
      %v309 = vld [vmem:[%s0 + $0x1d0] sm:$0xff]
      %v310 = vld [vmem:[%s0 + $0x1d8] sm:$0xff]
      %v311 = vld [vmem:[%s0 + $0x1e0] sm:$0xff]
      %v312 = vld [vmem:[%s0 + $0x1e8] sm:$0xff]
      %v313 = vld [vmem:[%s0 + $0x1f0] sm:$0xff]
      %v314 = vld [vmem:[%s0 + $0x1f8] sm:$0xff]
      %v315 = vld [vmem:[%s0 + $0x200] sm:$0xff]
      %v316 = vld [vmem:[%s0 + $0x208] sm:$0xff]
      %v317 = vld [vmem:[%s0 + $0x210] sm:$0xff]
      %v318 = vld [vmem:[%s0 + $0x218] sm:$0xff]
      %v319 = vld [vmem:[%s0 + $0x220] sm:$0xff]
      %v320 = vld [vmem:[%s0 + $0x228] sm:$0xff]
      %v321 = vld [vmem:[%s0 + $0x230] sm:$0xff]
      %v322 = vld [vmem:[%s0 + $0x238] sm:$0xff]
      %v323 = vld [vmem:[%s0 + $0x240] sm:$0xff]
      %v324 = vld [vmem:[%s0 + $0x248] sm:$0xff]
      %v325 = vld [vmem:[%s0 + $0x250] sm:$0xff]
      %v326 = vld [vmem:[%s0 + $0x258] sm:$0xff]
      %v327 = vld [vmem:[%s0 + $0x260] sm:$0xff]
      %v328 = vld [vmem:[%s0 + $0x268] sm:$0xff]
      %v329 = vld [vmem:[%s0 + $0x270] sm:$0xff]
      %v330 = vld [vmem:[%s0 + $0x278] sm:$0xff]
      %v331 = vld [vmem:[%s0 + $0x280] sm:$0xff]
      %v332 = vld [vmem:[%s0 + $0x288] sm:$0xff]
      %v333 = vld [vmem:[%s0 + $0x290] sm:$0xff]
      %v334 = vld [vmem:[%s0 + $0x298] sm:$0xff]
      %v335 = vld [vmem:[%s0 + $0x2a0] sm:$0xff]
      %v336 = vld [vmem:[%s0 + $0x2a8] sm:$0xff]
      %v337 = vld [vmem:[%s0 + $0x2b0] sm:$0xff]
      %v338 = vld [vmem:[%s0 + $0x2b8] sm:$0xff]
      %v339 = vld [vmem:[%s0 + $0x2c0] sm:$0xff]
      %v340 = vld [vmem:[%s0 + $0x2c8] sm:$0xff]
      %v341 = vld [vmem:[%s0 + $0x2d0] sm:$0xff]
      %v342 = vld [vmem:[%s0 + $0x2d8] sm:$0xff]
      %v343 = vld [vmem:[%s0 + $0x2e0] sm:$0xff]
      %v344 = vld [vmem:[%s0 + $0x2e8] sm:$0xff]
      %v345 = vld [vmem:[%s0 + $0x2f0] sm:$0xff]
      %v346 = vld [vmem:[%s0 + $0x2f8] sm:$0xff]
      %v347 = vld [vmem:[%s0 + $0x300] sm:$0xff]
      %v348 = vld [vmem:[%s0 + $0x308] sm:$0xff]
      %v349 = vld [vmem:[%s0 + $0x310] sm:$0xff]
      %v350 = vld [vmem:[%s0 + $0x318] sm:$0xff]
      %v351 = vld [vmem:[%s0 + $0x320] sm:$0xff]
      %v352 = vld [vmem:[%s0 + $0x328] sm:$0xff]
      %v353 = vld [vmem:[%s0 + $0x330] sm:$0xff]
      %v354 = vld [vmem:[%s0 + $0x338] sm:$0xff]
      %v355 = vld [vmem:[%s0 + $0x340] sm:$0xff]
      %v356 = vld [vmem:[%s0 + $0x348] sm:$0xff]
      %v357 = vld [vmem:[%s0 + $0x350] sm:$0xff]
      %v358 = vld [vmem:[%s0 + $0x358] sm:$0xff]
      %v359 = vld [vmem:[%s0 + $0x360] sm:$0xff]
      %v360 = vld [vmem:[%s0 + $0x368] sm:$0xff]
      %v361 = vld [vmem:[%s0 + $0x370] sm:$0xff]
      %v362 = vld [vmem:[%s0 + $0x378] sm:$0xff]
      %v363 = vld [vmem:[%s0 + $0x380] sm:$0xff]
      %v364 = vld [vmem:[%s0 + $0x388] sm:$0xff]
      %v365 = vld [vmem:[%s0 + $0x390] sm:$0xff]
      %v366 = vld [vmem:[%s0 + $0x398] sm:$0xff]
      %v367 = vld [vmem:[%s0 + $0x3a0] sm:$0xff]
      %v368 = vld [vmem:[%s0 + $0x3a8] sm:$0xff]
      %v369 = vld [vmem:[%s0 + $0x3b0] sm:$0xff]
      %v370 = vld [vmem:[%s0 + $0x3b8] sm:$0xff]
      %v371 = vld [vmem:[%s0 + $0x3c0] sm:$0xff]
      %v372 = vld [vmem:[%s0 + $0x3c8] sm:$0xff]
      %v373 = vld [vmem:[%s0 + $0x3d0] sm:$0xff]
      %v374 = vld [vmem:[%s0 + $0x3d8] sm:$0xff]
      %v375 = vld [vmem:[%s0 + $0x3e0] sm:$0xff]
      %v376 = vld [vmem:[%s0 + $0x3e8] sm:$0xff]
      %v377 = vld [vmem:[%s0 + $0x3f0] sm:$0xff]
      %v378 = vld [vmem:[%s0 + $0x3f8] sm:$0xff]
      %v379 = vld [vmem:[%s0 + $0x400] sm:$0xff]
      %v380 = vld [vmem:[%s0 + $0x408] sm:$0xff]
      %v381 = vld [vmem:[%s0 + $0x410] sm:$0xff]
      %v382 = vld [vmem:[%s0 + $0x418] sm:$0xff]
      %v383 = vld [vmem:[%s0 + $0x420] sm:$0xff]
      %v384 = vld [vmem:[%s0 + $0x428] sm:$0xff]
      %v385 = vld [vmem:[%s0 + $0x430] sm:$0xff]
      %v386 = vld [vmem:[%s0 + $0x438] sm:$0xff]
      %v387 = vld [vmem:[%s0 + $0x440] sm:$0xff]
      %v388 = vld [vmem:[%s0 + $0x448] sm:$0xff]
      %v389 = vld [vmem:[%s0 + $0x450] sm:$0xff]
      %v390 = vld [vmem:[%s0 + $0x458] sm:$0xff]
      %v391 = vld [vmem:[%s0 + $0x460] sm:$0xff]
      %v392 = vld [vmem:[%s0 + $0x468] sm:$0xff]
      %v393 = vld [vmem:[%s0 + $0x470] sm:$0xff]
      %v394 = vld [vmem:[%s0 + $0x478] sm:$0xff]
      %v395 = vld [vmem:[%s0 + $0x480] sm:$0xff]
      %v396 = vld [vmem:[%s0 + $0x488] sm:$0xff]
      %v397 = vld [vmem:[%s0 + $0x490] sm:$0xff]
      %v398 = vld [vmem:[%s0 + $0x498] sm:$0xff]
      %v399 = vld [vmem:[%s0 + $0x4a0] sm:$0xff]
      %v400 = vld [vmem:[%s0 + $0x4a8] sm:$0xff]
      %v401 = vld [vmem:[%s0 + $0x4b0] sm:$0xff]
      %v402 = vld [vmem:[%s0 + $0x4b8] sm:$0xff]
      %v403 = vld [vmem:[%s0 + $0x4c0] sm:$0xff]
      %v404 = vld [vmem:[%s0 + $0x4c8] sm:$0xff]
      %v405 = vld [vmem:[%s0 + $0x4d0] sm:$0xff]
      %v406 = vld [vmem:[%s0 + $0x4d8] sm:$0xff]
      %v407 = vld [vmem:[%s0 + $0x4e0] sm:$0xff]
      %v408 = vld [vmem:[%s0 + $0x4e8] sm:$0xff]
      %v409 = vld [vmem:[%s0 + $0x4f0] sm:$0xff]
      %v410 = vld [vmem:[%s0 + $0x4f8] sm:$0xff]
      %v411 = vld [vmem:[%s0 + $0x500] sm:$0xff]
      %v412 = vld [vmem:[%s0 + $0x508] sm:$0xff]
      %v413 = vld [vmem:[%s0 + $0x510] sm:$0xff]
      %v414 = vld [vmem:[%s0 + $0x518] sm:$0xff]
      %v415 = vld [vmem:[%s0 + $0x520] sm:$0xff]
      %v416 = vld [vmem:[%s0 + $0x528] sm:$0xff]
      %v417 = vld [vmem:[%s0 + $0x530] sm:$0xff]
      %v418 = vld [vmem:[%s0 + $0x538] sm:$0xff]
      %v419 = vld [vmem:[%s0 + $0x540] sm:$0xff]
      %v420 = vld [vmem:[%s0 + $0x548] sm:$0xff]
      %v421 = vld [vmem:[%s0 + $0x550] sm:$0xff]
      %v422 = vld [vmem:[%s0 + $0x558] sm:$0xff]
      %v423 = vld [vmem:[%s0 + $0x560] sm:$0xff]
      %v424 = vld [vmem:[%s0 + $0x568] sm:$0xff]
      %v425 = vld [vmem:[%s0 + $0x570] sm:$0xff]
      %v426 = vld [vmem:[%s0 + $0x578] sm:$0xff]
      %v427 = vld [vmem:[%s0 + $0x580] sm:$0xff]
      %v428 = vld [vmem:[%s0 + $0x588] sm:$0xff]
      %v429 = vld [vmem:[%s0 + $0x590] sm:$0xff]
      %v430 = vld [vmem:[%s0 + $0x598] sm:$0xff]
      %v431 = vld [vmem:[%s0 + $0x5a0] sm:$0xff]
      %v432 = vld [vmem:[%s0 + $0x5a8] sm:$0xff]
      %v433 = vld [vmem:[%s0 + $0x5b0] sm:$0xff]
      %v434 = vld [vmem:[%s0 + $0x5b8] sm:$0xff]
      %v435 = vld [vmem:[%s0 + $0x5c0] sm:$0xff]
      %v436 = vld [vmem:[%s0 + $0x5c8] sm:$0xff]
      %v437 = vld [vmem:[%s0 + $0x5d0] sm:$0xff]
      %v438 = vld [vmem:[%s0 + $0x5d8] sm:$0xff]
      %v439 = vld [vmem:[%s0 + $0x5e0] sm:$0xff]
      %v440 = vld [vmem:[%s0 + $0x5e8] sm:$0xff]
      %v441 = vld [vmem:[%s0 + $0x5f0] sm:$0xff]
      %v442 = vld [vmem:[%s0 + $0x5f8] sm:$0xff]
      %v443 = vld [vmem:[%s0 + $0x600] sm:$0xff]
      %v444 = vld [vmem:[%s0 + $0x608] sm:$0xff]
      %v445 = vld [vmem:[%s0 + $0x610] sm:$0xff]
      %v446 = vld [vmem:[%s0 + $0x618] sm:$0xff]
      %v447 = vld [vmem:[%s0 + $0x620] sm:$0xff]
      %v448 = vld [vmem:[%s0 + $0x628] sm:$0xff]
      %v449 = vld [vmem:[%s0 + $0x630] sm:$0xff]
      %v450 = vld [vmem:[%s0 + $0x638] sm:$0xff]
      %v451 = vld [vmem:[%s0 + $0x640] sm:$0xff]
      %v452 = vld [vmem:[%s0 + $0x648] sm:$0xff]
      %v453 = vld [vmem:[%s0 + $0x650] sm:$0xff]
      %v454 = vld [vmem:[%s0 + $0x658] sm:$0xff]
      %v455 = vld [vmem:[%s0 + $0x660] sm:$0xff]
      %v456 = vld [vmem:[%s0 + $0x668] sm:$0xff]
      %v457 = vld [vmem:[%s0 + $0x670] sm:$0xff]
      %v458 = vld [vmem:[%s0 + $0x678] sm:$0xff]
      %v459 = vld [vmem:[%s0 + $0x680] sm:$0xff]
      %v460 = vld [vmem:[%s0 + $0x688] sm:$0xff]
      %v461 = vld [vmem:[%s0 + $0x690] sm:$0xff]
      %v462 = vld [vmem:[%s0 + $0x698] sm:$0xff]
      %v463 = vld [vmem:[%s0 + $0x6a0] sm:$0xff]
      %v464 = vld [vmem:[%s0 + $0x6a8] sm:$0xff]
      %v465 = vld [vmem:[%s0 + $0x6b0] sm:$0xff]
      %v466 = vld [vmem:[%s0 + $0x6b8] sm:$0xff]
      %v467 = vld [vmem:[%s0 + $0x6c0] sm:$0xff]
      %v468 = vld [vmem:[%s0 + $0x6c8] sm:$0xff]
      %v469 = vld [vmem:[%s0 + $0x6d0] sm:$0xff]
      %v470 = vld [vmem:[%s0 + $0x6d8] sm:$0xff]
      %v471 = vld [vmem:[%s0 + $0x6e0] sm:$0xff]
      %v472 = vld [vmem:[%s0 + $0x6e8] sm:$0xff]
      %v473 = vld [vmem:[%s0 + $0x6f0] sm:$0xff]
      %v474 = vld [vmem:[%s0 + $0x6f8] sm:$0xff]
      %v475 = vld [vmem:[%s0 + $0x700] sm:$0xff]
      %v476 = vld [vmem:[%s0 + $0x708] sm:$0xff]
      %v477 = vld [vmem:[%s0 + $0x710] sm:$0xff]
      %v478 = vld [vmem:[%s0 + $0x718] sm:$0xff]
      %v479 = vld [vmem:[%s0 + $0x720] sm:$0xff]
      %v480 = vld [vmem:[%s0 + $0x728] sm:$0xff]
      %v481 = vld [vmem:[%s0 + $0x730] sm:$0xff]
      %v482 = vld [vmem:[%s0 + $0x738] sm:$0xff]
      %v483 = vld [vmem:[%s0 + $0x740] sm:$0xff]
      %v484 = vld [vmem:[%s0 + $0x748] sm:$0xff]
      %v485 = vld [vmem:[%s0 + $0x750] sm:$0xff]
      %v486 = vld [vmem:[%s0 + $0x758] sm:$0xff]
      %v487 = vld [vmem:[%s0 + $0x760] sm:$0xff]
      %v488 = vld [vmem:[%s0 + $0x768] sm:$0xff]
      %v489 = vld [vmem:[%s0 + $0x770] sm:$0xff]
      %v490 = vld [vmem:[%s0 + $0x778] sm:$0xff]
      %v491 = vld [vmem:[%s0 + $0x780] sm:$0xff]
      %v492 = vld [vmem:[%s0 + $0x788] sm:$0xff]
      %v493 = vld [vmem:[%s0 + $0x790] sm:$0xff]
      %v494 = vld [vmem:[%s0 + $0x798] sm:$0xff]
      %v495 = vld [vmem:[%s0 + $0x7a0] sm:$0xff]
      %v496 = vld [vmem:[%s0 + $0x7a8] sm:$0xff]
      %v497 = vld [vmem:[%s0 + $0x7b0] sm:$0xff]
      %v498 = vld [vmem:[%s0 + $0x7b8] sm:$0xff]
      %v499 = vld [vmem:[%s0 + $0x7c0] sm:$0xff]
      %v500 = vld [vmem:[%s0 + $0x7c8] sm:$0xff]
      %v501 = vld [vmem:[%s0 + $0x7d0] sm:$0xff]
      %v502 = vld [vmem:[%s0 + $0x7d8] sm:$0xff]
      %v503 = vld [vmem:[%s0 + $0x7e0] sm:$0xff]
      %v504 = vld [vmem:[%s0 + $0x7e8] sm:$0xff]
      %v505 = vld [vmem:[%s0 + $0x7f0] sm:$0xff]
      %v506 = vld [vmem:[%s0 + $0x7f8] sm:$0xff]
      %v507 = vld [vmem:[%s0 + $0x800] sm:$0xff]
      %v508 = vld [vmem:[%s0 + $0x808] sm:$0xff]
      %v509 = vld [vmem:[%s0 + $0x810] sm:$0xff]
      %v510 = vld [vmem:[%s0 + $0x818] sm:$0xff]
      %v511 = vld [vmem:[%s0 + $0x820] sm:$0xff]
      %v512 = vld [vmem:[%s0 + $0x828] sm:$0xff]
      %v513 = vld [vmem:[%s0 + $0x830] sm:$0xff]
      %v514 = vld [vmem:[%s0 + $0x838] sm:$0xff]
      %v515 = vld [vmem:[%s0 + $0x840] sm:$0xff]
      %v516 = vld [vmem:[%s0 + $0x848] sm:$0xff]
      %v517 = vld [vmem:[%s0 + $0x850] sm:$0xff]
      %v518 = vld [vmem:[%s0 + $0x858] sm:$0xff]
      %v519 = vld [vmem:[%s0 + $0x860] sm:$0xff]
      %v520 = vld [vmem:[%s0 + $0x868] sm:$0xff]
      %v521 = vld [vmem:[%s0 + $0x870] sm:$0xff]
      %v522 = vld [vmem:[%s0 + $0x878] sm:$0xff]
      %v523 = vld [vmem:[%s0 + $0x880] sm:$0xff]
      %v524 = vld [vmem:[%s0 + $0x888] sm:$0xff]
      %v525 = vld [vmem:[%s0 + $0x890] sm:$0xff]
      %v526 = vld [vmem:[%s0 + $0x898] sm:$0xff]
      %v527 = vld [vmem:[%s0 + $0x8a0] sm:$0xff]
      %v528 = vld [vmem:[%s0 + $0x8a8] sm:$0xff]
      %v529 = vld [vmem:[%s0 + $0x8b0] sm:$0xff]
      %v530 = vld [vmem:[%s0 + $0x8b8] sm:$0xff]
      %v531 = vld [vmem:[%s0 + $0x8c0] sm:$0xff]
      %v532 = vld [vmem:[%s0 + $0x8c8] sm:$0xff]
      %v533 = vld [vmem:[%s0 + $0x8d0] sm:$0xff]
      %v534 = vld [vmem:[%s0 + $0x8d8] sm:$0xff]
      %v535 = vld [vmem:[%s0 + $0x8e0] sm:$0xff]
      %v536 = vld [vmem:[%s0 + $0x8e8] sm:$0xff]
      %v537 = vld [vmem:[%s0 + $0x8f0] sm:$0xff]
      %v538 = vld [vmem:[%s0 + $0x8f8] sm:$0xff]
      %v539 = vld [vmem:[%s0 + $0x900] sm:$0xff]
      %v540 = vld [vmem:[%s0 + $0x908] sm:$0xff]
      %v541 = vld [vmem:[%s0 + $0x910] sm:$0xff]
      %v542 = vld [vmem:[%s0 + $0x918] sm:$0xff]
      %v543 = vld [vmem:[%s0 + $0x920] sm:$0xff]
      %v544 = vld [vmem:[%s0 + $0x928] sm:$0xff]
      %v545 = vld [vmem:[%s0 + $0x930] sm:$0xff]
      %v546 = vld [vmem:[%s0 + $0x938] sm:$0xff]
      %v547 = vld [vmem:[%s0 + $0x940] sm:$0xff]
      %v548 = vld [vmem:[%s0 + $0x948] sm:$0xff]
      %v549 = vld [vmem:[%s0 + $0x950] sm:$0xff]
      %v550 = vld [vmem:[%s0 + $0x958] sm:$0xff]
      %v551 = vld [vmem:[%s0 + $0x960] sm:$0xff]
      %v552 = vld [vmem:[%s0 + $0x968] sm:$0xff]
      %v553 = vld [vmem:[%s0 + $0x970] sm:$0xff]
      %v554 = vld [vmem:[%s0 + $0x978] sm:$0xff]
      %v555 = vld [vmem:[%s0 + $0x980] sm:$0xff]
      %v556 = vld [vmem:[%s0 + $0x988] sm:$0xff]
      %v557 = vld [vmem:[%s0 + $0x990] sm:$0xff]
      %v558 = vld [vmem:[%s0 + $0x998] sm:$0xff]
      %v559 = vld [vmem:[%s0 + $0x9a0] sm:$0xff]
      %v560 = vld [vmem:[%s0 + $0x9a8] sm:$0xff]
      %v561 = vld [vmem:[%s0 + $0x9b0] sm:$0xff]
      %v562 = vld [vmem:[%s0 + $0x9b8] sm:$0xff]
      %v563 = vld [vmem:[%s0 + $0x9c0] sm:$0xff]
      %v564 = vld [vmem:[%s0 + $0x9c8] sm:$0xff]
      %v565 = vld [vmem:[%s0 + $0x9d0] sm:$0xff]
      %v566 = vld [vmem:[%s0 + $0x9d8] sm:$0xff]
      %v567 = vld [vmem:[%s0 + $0x9e0] sm:$0xff]
      %v568 = vld [vmem:[%s0 + $0x9e8] sm:$0xff]
      %v569 = vld [vmem:[%s0 + $0x9f0] sm:$0xff]
      %v570 = vld [vmem:[%s0 + $0x9f8] sm:$0xff]
      %v571 = vld [vmem:[%s0 + $0xa00] sm:$0xff]
      %v572 = vld [vmem:[%s0 + $0xa08] sm:$0xff]
      %v573 = vld [vmem:[%s0 + $0xa10] sm:$0xff]
      %v574 = vld [vmem:[%s0 + $0xa18] sm:$0xff]
      %v575 = vld [vmem:[%s0 + $0xa20] sm:$0xff]
      %v576 = vld [vmem:[%s0 + $0xa28] sm:$0xff]
      %v577 = vld [vmem:[%s0 + $0xa30] sm:$0xff]
      %v578 = vld [vmem:[%s0 + $0xa38] sm:$0xff]
      %v579 = vld [vmem:[%s0 + $0xa40] sm:$0xff]
      %v580 = vld [vmem:[%s0 + $0xa48] sm:$0xff]
      %v581 = vld [vmem:[%s0 + $0xa50] sm:$0xff]
      %v582 = vld [vmem:[%s0 + $0xa58] sm:$0xff]
      %v583 = vld [vmem:[%s0 + $0xa60] sm:$0xff]
      %v584 = vld [vmem:[%s0 + $0xa68] sm:$0xff]
      %v585 = vld [vmem:[%s0 + $0xa70] sm:$0xff]
      %v586 = vld [vmem:[%s0 + $0xa78] sm:$0xff]
      %v587 = vld [vmem:[%s0 + $0xa80] sm:$0xff]
      %v588 = vld [vmem:[%s0 + $0xa88] sm:$0xff]
      %v589 = vld [vmem:[%s0 + $0xa90] sm:$0xff]
      %v590 = vld [vmem:[%s0 + $0xa98] sm:$0xff]
      %v591 = vld [vmem:[%s0 + $0xaa0] sm:$0xff]
      %v592 = vld [vmem:[%s0 + $0xaa8] sm:$0xff]
      %v593 = vld [vmem:[%s0 + $0xab0] sm:$0xff]
      %v594 = vld [vmem:[%s0 + $0xab8] sm:$0xff]
      %v595 = vld [vmem:[%s0 + $0xac0] sm:$0xff]
      %v596 = vld [vmem:[%s0 + $0xac8] sm:$0xff]
      %v597 = vld [vmem:[%s0 + $0xad0] sm:$0xff]
      %v598 = vld [vmem:[%s0 + $0xad8] sm:$0xff]
      %v599 = vld [vmem:[%s0 + $0xae0] sm:$0xff]
      %v600 = vld [vmem:[%s0 + $0xae8] sm:$0xff]
      %v601 = vld [vmem:[%s0 + $0xaf0] sm:$0xff]
      %v602 = vld [vmem:[%s0 + $0xaf8] sm:$0xff]
      %v603 = vld [vmem:[%s0 + $0xb00] sm:$0xff]
      %v604 = vld [vmem:[%s0 + $0xb08] sm:$0xff]
      %v605 = vld [vmem:[%s0 + $0xb10] sm:$0xff]
      %v606 = vld [vmem:[%s0 + $0xb18] sm:$0xff]
      %v607 = vld [vmem:[%s0 + $0xb20] sm:$0xff]
      %v608 = vld [vmem:[%s0 + $0xb28] sm:$0xff]
      %v609 = vld [vmem:[%s0 + $0xb30] sm:$0xff]
      %v610 = vld [vmem:[%s0 + $0xb38] sm:$0xff]
      %v611 = vld [vmem:[%s0 + $0xb40] sm:$0xff]
      %v612 = vld [vmem:[%s0 + $0xb48] sm:$0xff]
      %v613 = vld [vmem:[%s0 + $0xb50] sm:$0xff]
      %v614 = vld [vmem:[%s0 + $0xb58] sm:$0xff]
      %v615 = vld [vmem:[%s0 + $0xb60] sm:$0xff]
      %v616 = vld [vmem:[%s0 + $0xb68] sm:$0xff]
      %v617 = vld [vmem:[%s0 + $0xb70] sm:$0xff]
      %v618 = vld [vmem:[%s0 + $0xb78] sm:$0xff]
      %v619 = vld [vmem:[%s0 + $0xb80] sm:$0xff]
      %v620 = vld [vmem:[%s0 + $0xb88] sm:$0xff]
      %v621 = vld [vmem:[%s0 + $0xb90] sm:$0xff]
      %v622 = vld [vmem:[%s0 + $0xb98] sm:$0xff]
      %v623 = vld [vmem:[%s0 + $0xba0] sm:$0xff]
      %v624 = vld [vmem:[%s0 + $0xba8] sm:$0xff]
      %v625 = vld [vmem:[%s0 + $0xbb0] sm:$0xff]
      %v626 = vld [vmem:[%s0 + $0xbb8] sm:$0xff]
      %v627 = vld [vmem:[%s0 + $0xbc0] sm:$0xff]
      %v628 = vld [vmem:[%s0 + $0xbc8] sm:$0xff]
      %v629 = vld [vmem:[%s0 + $0xbd0] sm:$0xff]
      %v630 = vld [vmem:[%s0 + $0xbd8] sm:$0xff]
      %v631 = vld [vmem:[%s0 + $0xbe0] sm:$0xff]
      %v632 = vld [vmem:[%s0 + $0xbe8] sm:$0xff]
      %v633 = vld [vmem:[%s0 + $0xbf0] sm:$0xff]
      %v634 = vld [vmem:[%s0 + $0xbf8] sm:$0xff]
      %v635 = vld [vmem:[%s0 + $0xc00] sm:$0xff]
      %v636 = vld [vmem:[%s0 + $0xc08] sm:$0xff]
      %v637 = vld [vmem:[%s0 + $0xc10] sm:$0xff]
      %v638 = vld [vmem:[%s0 + $0xc18] sm:$0xff]
      %v639 = vld [vmem:[%s0 + $0xc20] sm:$0xff]
      %v640 = vld [vmem:[%s0 + $0xc28] sm:$0xff]
      %v641 = vld [vmem:[%s0 + $0xc30] sm:$0xff]
      %v642 = vld [vmem:[%s0 + $0xc38] sm:$0xff]
      %v643 = vld [vmem:[%s0 + $0xc40] sm:$0xff]
      %v644 = vld [vmem:[%s0 + $0xc48] sm:$0xff]
      %v645 = vld [vmem:[%s0 + $0xc50] sm:$0xff]
      %v646 = vld [vmem:[%s0 + $0xc58] sm:$0xff]
      %v647 = vld [vmem:[%s0 + $0xc60] sm:$0xff]
      %v648 = vld [vmem:[%s0 + $0xc68] sm:$0xff]
      %v649 = vld [vmem:[%s0 + $0xc70] sm:$0xff]
      %v650 = vld [vmem:[%s0 + $0xc78] sm:$0xff]
      %v651 = vld [vmem:[%s0 + $0xc80] sm:$0xff]
      %v652 = vld [vmem:[%s0 + $0xc88] sm:$0xff]
      %v653 = vld [vmem:[%s0 + $0xc90] sm:$0xff]
      %v654 = vld [vmem:[%s0 + $0xc98] sm:$0xff]
      %v655 = vld [vmem:[%s0 + $0xca0] sm:$0xff]
      %v656 = vld [vmem:[%s0 + $0xca8] sm:$0xff]
      %v657 = vld [vmem:[%s0 + $0xcb0] sm:$0xff]
      %v658 = vld [vmem:[%s0 + $0xcb8] sm:$0xff]
      %v659 = vld [vmem:[%s0 + $0xcc0] sm:$0xff]
      %v660 = vld [vmem:[%s0 + $0xcc8] sm:$0xff]
      %v661 = vld [vmem:[%s0 + $0xcd0] sm:$0xff]
      %v662 = vld [vmem:[%s0 + $0xcd8] sm:$0xff]
      %v663 = vld [vmem:[%s0 + $0xce0] sm:$0xff]
      %v664 = vld [vmem:[%s0 + $0xce8] sm:$0xff]
      %v665 = vld [vmem:[%s0 + $0xcf0] sm:$0xff]
      %v666 = vld [vmem:[%s0 + $0xcf8] sm:$0xff]
      %v667 = vld [vmem:[%s0 + $0xd00] sm:$0xff]
      %v668 = vld [vmem:[%s0 + $0xd08] sm:$0xff]
      %v669 = vld [vmem:[%s0 + $0xd10] sm:$0xff]
      %v670 = vld [vmem:[%s0 + $0xd18] sm:$0xff]
      %v671 = vld [vmem:[%s0 + $0xd20] sm:$0xff]
      %v672 = vld [vmem:[%s0 + $0xd28] sm:$0xff]
      %v673 = vld [vmem:[%s0 + $0xd30] sm:$0xff]
      %v674 = vld [vmem:[%s0 + $0xd38] sm:$0xff]
      %v675 = vld [vmem:[%s0 + $0xd40] sm:$0xff]
      %v676 = vld [vmem:[%s0 + $0xd48] sm:$0xff]
      %v677 = vld [vmem:[%s0 + $0xd50] sm:$0xff]
      %v678 = vld [vmem:[%s0 + $0xd58] sm:$0xff]
      %v679 = vld [vmem:[%s0 + $0xd60] sm:$0xff]
      %v680 = vld [vmem:[%s0 + $0xd68] sm:$0xff]
      %v681 = vld [vmem:[%s0 + $0xd70] sm:$0xff]
      %v682 = vld [vmem:[%s0 + $0xd78] sm:$0xff]
      %v683 = vld [vmem:[%s0 + $0xd80] sm:$0xff]
      %v684 = vld [vmem:[%s0 + $0xd88] sm:$0xff]
      %v685 = vld [vmem:[%s0 + $0xd90] sm:$0xff]
      %v686 = vld [vmem:[%s0 + $0xd98] sm:$0xff]
      %v687 = vld [vmem:[%s0 + $0xda0] sm:$0xff]
      %v688 = vld [vmem:[%s0 + $0xda8] sm:$0xff]
      %v689 = vld [vmem:[%s0 + $0xdb0] sm:$0xff]
      %v690 = vld [vmem:[%s0 + $0xdb8] sm:$0xff]
      %v691 = vld [vmem:[%s0 + $0xdc0] sm:$0xff]
      %v692 = vld [vmem:[%s0 + $0xdc8] sm:$0xff]
      %v693 = vld [vmem:[%s0 + $0xdd0] sm:$0xff]
      %v694 = vld [vmem:[%s0 + $0xdd8] sm:$0xff]
      %v695 = vld [vmem:[%s0 + $0xde0] sm:$0xff]
      %v696 = vld [vmem:[%s0 + $0xde8] sm:$0xff]
      %v697 = vld [vmem:[%s0 + $0xdf0] sm:$0xff]
      %v698 = vld [vmem:[%s0 + $0xdf8] sm:$0xff]
      %v699 = vld [vmem:[%s0 + $0xe00] sm:$0xff]
      %v700 = vld [vmem:[%s0 + $0xe08] sm:$0xff]
      %v701 = vld [vmem:[%s0 + $0xe10] sm:$0xff]
      %v702 = vld [vmem:[%s0 + $0xe18] sm:$0xff]
      %v703 = vld [vmem:[%s0 + $0xe20] sm:$0xff]
      %v704 = vld [vmem:[%s0 + $0xe28] sm:$0xff]
      %v705 = vld [vmem:[%s0 + $0xe30] sm:$0xff]
      %v706 = vld [vmem:[%s0 + $0xe38] sm:$0xff]
      %v707 = vld [vmem:[%s0 + $0xe40] sm:$0xff]
      %v708 = vld [vmem:[%s0 + $0xe48] sm:$0xff]
      %v709 = vld [vmem:[%s0 + $0xe50] sm:$0xff]
      %v710 = vld [vmem:[%s0 + $0xe58] sm:$0xff]
      %v711 = vld [vmem:[%s0 + $0xe60] sm:$0xff]
      %v712 = vld [vmem:[%s0 + $0xe68] sm:$0xff]
      %v713 = vld [vmem:[%s0 + $0xe70] sm:$0xff]
      %v714 = vld [vmem:[%s0 + $0xe78] sm:$0xff]
      %v715 = vld [vmem:[%s0 + $0xe80] sm:$0xff]
      %v716 = vld [vmem:[%s0 + $0xe88] sm:$0xff]
      %v717 = vld [vmem:[%s0 + $0xe90] sm:$0xff]
      %v718 = vld [vmem:[%s0 + $0xe98] sm:$0xff]
      %v719 = vld [vmem:[%s0 + $0xea0] sm:$0xff]
      %v720 = vld [vmem:[%s0 + $0xea8] sm:$0xff]
      %v721 = vld [vmem:[%s0 + $0xeb0] sm:$0xff]
      %v722 = vld [vmem:[%s0 + $0xeb8] sm:$0xff]
      %v723 = vld [vmem:[%s0 + $0xec0] sm:$0xff]
      %v724 = vld [vmem:[%s0 + $0xec8] sm:$0xff]
      %v725 = vld [vmem:[%s0 + $0xed0] sm:$0xff]
      %v726 = vld [vmem:[%s0 + $0xed8] sm:$0xff]
      %v727 = vld [vmem:[%s0 + $0xee0] sm:$0xff]
      %v728 = vld [vmem:[%s0 + $0xee8] sm:$0xff]
      %v729 = vld [vmem:[%s0 + $0xef0] sm:$0xff]
      %v730 = vld [vmem:[%s0 + $0xef8] sm:$0xff]
      %v731 = vld [vmem:[%s0 + $0xf00] sm:$0xff]
      %v732 = vld [vmem:[%s0 + $0xf08] sm:$0xff]
      %v733 = vld [vmem:[%s0 + $0xf10] sm:$0xff]
      %v734 = vld [vmem:[%s0 + $0xf18] sm:$0xff]
      %v735 = vld [vmem:[%s0 + $0xf20] sm:$0xff]
      %v736 = vld [vmem:[%s0 + $0xf28] sm:$0xff]
      %v737 = vld [vmem:[%s0 + $0xf30] sm:$0xff]
      %v738 = vld [vmem:[%s0 + $0xf38] sm:$0xff]
      %v739 = vld [vmem:[%s0 + $0xf40] sm:$0xff]
      %v740 = vld [vmem:[%s0 + $0xf48] sm:$0xff]
      %v741 = vld [vmem:[%s0 + $0xf50] sm:$0xff]
      %v742 = vld [vmem:[%s0 + $0xf58] sm:$0xff]
      %v743 = vld [vmem:[%s0 + $0xf60] sm:$0xff]
      %v744 = vld [vmem:[%s0 + $0xf68] sm:$0xff]
      %v745 = vld [vmem:[%s0 + $0xf70] sm:$0xff]
      %v746 = vld [vmem:[%s0 + $0xf78] sm:$0xff]
      %v747 = vld [vmem:[%s0 + $0xf80] sm:$0xff]
      %v748 = vld [vmem:[%s0 + $0xf88] sm:$0xff]
      %v749 = vld [vmem:[%s0 + $0xf90] sm:$0xff]
      %v750 = vld [vmem:[%s0 + $0xf98] sm:$0xff]
      %v751 = vld [vmem:[%s0 + $0xfa0] sm:$0xff]
      %v752 = vld [vmem:[%s0 + $0xfa8] sm:$0xff]
      %v753 = vld [vmem:[%s0 + $0xfb0] sm:$0xff]
      %v754 = vld [vmem:[%s0 + $0xfb8] sm:$0xff]
      %v755 = vld [vmem:[%s0 + $0xfc0] sm:$0xff]
      %v756 = vld [vmem:[%s0 + $0xfc8] sm:$0xff]
      %v757 = vld [vmem:[%s0 + $0xfd0] sm:$0xff]
      %v758 = vld [vmem:[%s0 + $0xfd8] sm:$0xff]
      %v759 = vld [vmem:[%s0 + $0xfe0] sm:$0xff]
      %v760 = vld [vmem:[%s0 + $0xfe8] sm:$0xff]
      %v761 = vld [vmem:[%s0 + $0xff0] sm:$0xff]
      %v762 = vld [vmem:[%s0 + $0xff8] sm:$0xff]
      %v763 = vld [vmem:[%s0 + $0x1000] sm:$0xff]
      %v764 = vld [vmem:[%s0 + $0x1008] sm:$0xff]
      %v765 = vld [vmem:[%s0 + $0x1010] sm:$0xff]
      %v766 = vld [vmem:[%s0 + $0x1018] sm:$0xff]
      %v767 = vld [vmem:[%s0 + $0x1020] sm:$0xff]
      %v768 = vld [vmem:[%s0 + $0x1028] sm:$0xff]
      %v769 = vld [vmem:[%s0 + $0x1030] sm:$0xff]
      %v770 = vld [vmem:[%s0 + $0x1038] sm:$0xff]
      %v771 = vld [vmem:[%s0 + $0x1040] sm:$0xff]
      %v772 = vld [vmem:[%s0 + $0x1048] sm:$0xff]
      %v773 = vld [vmem:[%s0 + $0x1050] sm:$0xff]
      %v774 = vld [vmem:[%s0 + $0x1058] sm:$0xff]
      %v775 = vld [vmem:[%s0 + $0x1060] sm:$0xff]
      %v776 = vld [vmem:[%s0 + $0x1068] sm:$0xff]
      %v777 = vld [vmem:[%s0 + $0x1070] sm:$0xff]
      %v778 = vld [vmem:[%s0 + $0x1078] sm:$0xff]
      %v779 = vld [vmem:[%s0 + $0x1080] sm:$0xff]
      %v780 = vld [vmem:[%s0 + $0x1088] sm:$0xff]
      %v781 = vld [vmem:[%s0 + $0x1090] sm:$0xff]
      %v782 = vld [vmem:[%s0 + $0x1098] sm:$0xff]
      %v783 = vld [vmem:[%s0 + $0x10a0] sm:$0xff]
      %v784 = vld [vmem:[%s0 + $0x10a8] sm:$0xff]
      %v785 = vld [vmem:[%s0 + $0x10b0] sm:$0xff]
      %v786 = vld [vmem:[%s0 + $0x10b8] sm:$0xff]
      %v787 = vld [vmem:[%s0 + $0x10c0] sm:$0xff]
      %v788 = vld [vmem:[%s0 + $0x10c8] sm:$0xff]
      %v789 = vld [vmem:[%s0 + $0x10d0] sm:$0xff]
      %v790 = vld [vmem:[%s0 + $0x10d8] sm:$0xff]
      %v791 = vld [vmem:[%s0 + $0x10e0] sm:$0xff]
      %v792 = vld [vmem:[%s0 + $0x10e8] sm:$0xff]
      %v793 = vld [vmem:[%s0 + $0x10f0] sm:$0xff]
      %v794 = vld [vmem:[%s0 + $0x10f8] sm:$0xff]
      %v795 = vld [vmem:[%s0 + $0x1100] sm:$0xff]
      %v796 = vld [vmem:[%s0 + $0x1108] sm:$0xff]
      %v797 = vld [vmem:[%s0 + $0x1110] sm:$0xff]
      %v798 = vld [vmem:[%s0 + $0x1118] sm:$0xff]
      %v799 = vld [vmem:[%s0 + $0x1120] sm:$0xff]
      %v800 = vld [vmem:[%s0 + $0x1128] sm:$0xff]
      %v801 = vld [vmem:[%s0 + $0x1130] sm:$0xff]
      %v802 = vld [vmem:[%s0 + $0x1138] sm:$0xff]
      %v803 = vld [vmem:[%s0 + $0x1140] sm:$0xff]
      %v804 = vld [vmem:[%s0 + $0x1148] sm:$0xff]
      %v805 = vld [vmem:[%s0 + $0x1150] sm:$0xff]
      %v806 = vld [vmem:[%s0 + $0x1158] sm:$0xff]
      %v807 = vld [vmem:[%s0 + $0x1160] sm:$0xff]
      %v808 = vld [vmem:[%s0 + $0x1168] sm:$0xff]
      %v809 = vld [vmem:[%s0 + $0x1170] sm:$0xff]
      %v810 = vld [vmem:[%s0 + $0x1178] sm:$0xff]
      %v811 = vld [vmem:[%s0 + $0x1180] sm:$0xff]
      %v812 = vld [vmem:[%s0 + $0x1188] sm:$0xff]
      %v813 = vld [vmem:[%s0 + $0x1190] sm:$0xff]
      %v814 = vld [vmem:[%s0 + $0x1198] sm:$0xff]
      %v815 = vld [vmem:[%s0 + $0x11a0] sm:$0xff]
      %v816 = vld [vmem:[%s0 + $0x11a8] sm:$0xff]
      %v817 = vld [vmem:[%s0 + $0x11b0] sm:$0xff]
      %v818 = vld [vmem:[%s0 + $0x11b8] sm:$0xff]
      %v819 = vld [vmem:[%s0 + $0x11c0] sm:$0xff]
      %v820 = vld [vmem:[%s0 + $0x11c8] sm:$0xff]
      %v821 = vld [vmem:[%s0 + $0x11d0] sm:$0xff]
      %v822 = vld [vmem:[%s0 + $0x11d8] sm:$0xff]
      %v823 = vld [vmem:[%s0 + $0x11e0] sm:$0xff]
      %v824 = vld [vmem:[%s0 + $0x11e8] sm:$0xff]
      %v825 = vld [vmem:[%s0 + $0x11f0] sm:$0xff]
      %v826 = vld [vmem:[%s0 + $0x11f8] sm:$0xff]
      %v827 = vld [vmem:[%s0 + $0x1200] sm:$0xff]
      %v828 = vld [vmem:[%s0 + $0x1208] sm:$0xff]
      %v829 = vld [vmem:[%s0 + $0x1210] sm:$0xff]
      %v830 = vld [vmem:[%s0 + $0x1218] sm:$0xff]
      %v831 = vld [vmem:[%s0 + $0x1220] sm:$0xff]
      %v832 = vld [vmem:[%s0 + $0x1228] sm:$0xff]
      %v833 = vld [vmem:[%s0 + $0x1230] sm:$0xff]
      %v834 = vld [vmem:[%s0 + $0x1238] sm:$0xff]
      %v835 = vld [vmem:[%s0 + $0x1240] sm:$0xff]
      %v836 = vld [vmem:[%s0 + $0x1248] sm:$0xff]
      %v837 = vld [vmem:[%s0 + $0x1250] sm:$0xff]
      %v838 = vld [vmem:[%s0 + $0x1258] sm:$0xff]
      %v839 = vld [vmem:[%s0 + $0x1260] sm:$0xff]
      %v840 = vld [vmem:[%s0 + $0x1268] sm:$0xff]
      %v841 = vld [vmem:[%s0 + $0x1270] sm:$0xff]
      %v842 = vld [vmem:[%s0 + $0x1278] sm:$0xff]
      %v843 = vld [vmem:[%s0 + $0x1280] sm:$0xff]
      %v844 = vld [vmem:[%s0 + $0x1288] sm:$0xff]
      %v845 = vld [vmem:[%s0 + $0x1290] sm:$0xff]
      %v846 = vld [vmem:[%s0 + $0x1298] sm:$0xff]
      %v847 = vld [vmem:[%s0 + $0x12a0] sm:$0xff]
      %v848 = vld [vmem:[%s0 + $0x12a8] sm:$0xff]
      %v849 = vld [vmem:[%s0 + $0x12b0] sm:$0xff]
      %v850 = vld [vmem:[%s0 + $0x12b8] sm:$0xff]
      %v851 = vld [vmem:[%s0 + $0x12c0] sm:$0xff]
      %v852 = vld [vmem:[%s0 + $0x12c8] sm:$0xff]
      %v853 = vld [vmem:[%s0 + $0x12d0] sm:$0xff]
      %v854 = vld [vmem:[%s0 + $0x12d8] sm:$0xff]
      %v855 = vld [vmem:[%s0 + $0x12e0] sm:$0xff]
      %v856 = vld [vmem:[%s0 + $0x12e8] sm:$0xff]
      %v857 = vld [vmem:[%s0 + $0x12f0] sm:$0xff]
      %v858 = vld [vmem:[%s0 + $0x12f8] sm:$0xff]
      %v859 = vld [vmem:[%s0 + $0x1300] sm:$0xff]
      %v860 = vld [vmem:[%s0 + $0x1308] sm:$0xff]
      %v861 = vld [vmem:[%s0 + $0x1310] sm:$0xff]
      %v862 = vld [vmem:[%s0 + $0x1318] sm:$0xff]
      %v863 = vld [vmem:[%s0 + $0x1320] sm:$0xff]
      %v864 = vld [vmem:[%s0 + $0x1328] sm:$0xff]
      %v865 = vld [vmem:[%s0 + $0x1330] sm:$0xff]
      %v866 = vld [vmem:[%s0 + $0x1338] sm:$0xff]
      %v867 = vld [vmem:[%s0 + $0x1340] sm:$0xff]
      %v868 = vld [vmem:[%s0 + $0x1348] sm:$0xff]
      %v869 = vld [vmem:[%s0 + $0x1350] sm:$0xff]
      %v870 = vld [vmem:[%s0 + $0x1358] sm:$0xff]
      %v871 = vld [vmem:[%s0 + $0x1360] sm:$0xff]
      %v872 = vld [vmem:[%s0 + $0x1368] sm:$0xff]
      %v873 = vld [vmem:[%s0 + $0x1370] sm:$0xff]
      %v874 = vld [vmem:[%s0 + $0x1378] sm:$0xff]
      %v875 = vld [vmem:[%s0 + $0x1380] sm:$0xff]
      %v876 = vld [vmem:[%s0 + $0x1388] sm:$0xff]
      %v877 = vld [vmem:[%s0 + $0x1390] sm:$0xff]
      %v878 = vld [vmem:[%s0 + $0x1398] sm:$0xff]
      %v879 = vld [vmem:[%s0 + $0x13a0] sm:$0xff]
      %v880 = vld [vmem:[%s0 + $0x13a8] sm:$0xff]
      %v881 = vld [vmem:[%s0 + $0x13b0] sm:$0xff]
      %v882 = vld [vmem:[%s0 + $0x13b8] sm:$0xff]
      %v883 = vld [vmem:[%s0 + $0x13c0] sm:$0xff]
      %v884 = vld [vmem:[%s0 + $0x13c8] sm:$0xff]
      %v885 = vld [vmem:[%s0 + $0x13d0] sm:$0xff]
      %v886 = vld [vmem:[%s0 + $0x13d8] sm:$0xff]
      %v887 = vld [vmem:[%s0 + $0x13e0] sm:$0xff]
      %v888 = vld [vmem:[%s0 + $0x13e8] sm:$0xff]
      %v889 = vld [vmem:[%s0 + $0x13f0] sm:$0xff]
      %v890 = vld [vmem:[%s0 + $0x13f8] sm:$0xff]
      %v891 = vld [vmem:[%s0 + $0x1400] sm:$0xff]
      %v892 = vld [vmem:[%s0 + $0x1408] sm:$0xff]
      %v893 = vld [vmem:[%s0 + $0x1410] sm:$0xff]
      %v894 = vld [vmem:[%s0 + $0x1418] sm:$0xff]
      %v895 = vld [vmem:[%s0 + $0x1420] sm:$0xff]
      %v896 = vld [vmem:[%s0 + $0x1428] sm:$0xff]
      %v897 = vld [vmem:[%s0 + $0x1430] sm:$0xff]
      %v898 = vld [vmem:[%s0 + $0x1438] sm:$0xff]
      %v899 = vld [vmem:[%s0 + $0x1440] sm:$0xff]
      %v900 = vld [vmem:[%s0 + $0x1448] sm:$0xff]
      %v901 = vld [vmem:[%s0 + $0x1450] sm:$0xff]
      %v902 = vld [vmem:[%s0 + $0x1458] sm:$0xff]
      %v903 = vld [vmem:[%s0 + $0x1460] sm:$0xff]
      %v904 = vld [vmem:[%s0 + $0x1468] sm:$0xff]
      %v905 = vld [vmem:[%s0 + $0x1470] sm:$0xff]
      %v906 = vld [vmem:[%s0 + $0x1478] sm:$0xff]
      %v907 = vld [vmem:[%s0 + $0x1480] sm:$0xff]
      %v908 = vld [vmem:[%s0 + $0x1488] sm:$0xff]
      %v909 = vld [vmem:[%s0 + $0x1490] sm:$0xff]
      %v910 = vld [vmem:[%s0 + $0x1498] sm:$0xff]
      %v911 = vld [vmem:[%s0 + $0x14a0] sm:$0xff]
      %v912 = vld [vmem:[%s0 + $0x14a8] sm:$0xff]
      %v913 = vld [vmem:[%s0 + $0x14b0] sm:$0xff]
      %v914 = vld [vmem:[%s0 + $0x14b8] sm:$0xff]
      %v915 = vld [vmem:[%s0 + $0x14c0] sm:$0xff]
      %v916 = vld [vmem:[%s0 + $0x14c8] sm:$0xff]
      %v917 = vld [vmem:[%s0 + $0x14d0] sm:$0xff]
      %v918 = vld [vmem:[%s0 + $0x14d8] sm:$0xff]
      %v919 = vld [vmem:[%s0 + $0x14e0] sm:$0xff]
      %v920 = vld [vmem:[%s0 + $0x14e8] sm:$0xff]
      %v921 = vld [vmem:[%s0 + $0x14f0] sm:$0xff]
      %v922 = vld [vmem:[%s0 + $0x14f8] sm:$0xff]
      %v923 = vld [vmem:[%s0 + $0x1500] sm:$0xff]
      %v924 = vld [vmem:[%s0 + $0x1508] sm:$0xff]
      %v925 = vld [vmem:[%s0 + $0x1510] sm:$0xff]
      %v926 = vld [vmem:[%s0 + $0x1518] sm:$0xff]
      %v927 = vld [vmem:[%s0 + $0x1520] sm:$0xff]
      %v928 = vld [vmem:[%s0 + $0x1528] sm:$0xff]
      %v929 = vld [vmem:[%s0 + $0x1530] sm:$0xff]
      %v930 = vld [vmem:[%s0 + $0x1538] sm:$0xff]
      %v931 = vld [vmem:[%s0 + $0x1540] sm:$0xff]
      %v932 = vld [vmem:[%s0 + $0x1548] sm:$0xff]
      %v933 = vld [vmem:[%s0 + $0x1550] sm:$0xff]
      %v934 = vld [vmem:[%s0 + $0x1558] sm:$0xff]
      %v935 = vld [vmem:[%s0 + $0x1560] sm:$0xff]
      %v936 = vld [vmem:[%s0 + $0x1568] sm:$0xff]
      %v937 = vld [vmem:[%s0 + $0x1570] sm:$0xff]
      %v938 = vld [vmem:[%s0 + $0x1578] sm:$0xff]
      %v939 = vld [vmem:[%s0 + $0x1580] sm:$0xff]
      %v940 = vld [vmem:[%s0 + $0x1588] sm:$0xff]
      %v941 = vld [vmem:[%s0 + $0x1590] sm:$0xff]
      %v942 = vld [vmem:[%s0 + $0x1598] sm:$0xff]
      %v943 = vld [vmem:[%s0 + $0x15a0] sm:$0xff]
      %v944 = vld [vmem:[%s0 + $0x15a8] sm:$0xff]
      %v945 = vld [vmem:[%s0 + $0x15b0] sm:$0xff]
      %v946 = vld [vmem:[%s0 + $0x15b8] sm:$0xff]
      %v947 = vld [vmem:[%s0 + $0x15c0] sm:$0xff]
      %v948 = vld [vmem:[%s0 + $0x15c8] sm:$0xff]
      %v949 = vld [vmem:[%s0 + $0x15d0] sm:$0xff]
      %v950 = vld [vmem:[%s0 + $0x15d8] sm:$0xff]
      %v951 = vld [vmem:[%s0 + $0x15e0] sm:$0xff]
      %v952 = vld [vmem:[%s0 + $0x15e8] sm:$0xff]
      %v953 = vld [vmem:[%s0 + $0x15f0] sm:$0xff]
      %v954 = vld [vmem:[%s0 + $0x15f8] sm:$0xff]
      %v955 = vld [vmem:[%s0 + $0x1600] sm:$0xff]
      %v956 = vld [vmem:[%s0 + $0x1608] sm:$0xff]
      %v957 = vld [vmem:[%s0 + $0x1610] sm:$0xff]
      %v958 = vld [vmem:[%s0 + $0x1618] sm:$0xff]
      %v959 = vld [vmem:[%s0 + $0x1620] sm:$0xff]
      %v960 = vld [vmem:[%s0 + $0x1628] sm:$0xff]
      %v961 = vld [vmem:[%s0 + $0x1630] sm:$0xff]
      %v962 = vld [vmem:[%s0 + $0x1638] sm:$0xff]
      %v963 = vld [vmem:[%s0 + $0x1640] sm:$0xff]
      %v964 = vld [vmem:[%s0 + $0x1648] sm:$0xff]
      %v965 = vld [vmem:[%s0 + $0x1650] sm:$0xff]
      %v966 = vld [vmem:[%s0 + $0x1658] sm:$0xff]
      %v967 = vld [vmem:[%s0 + $0x1660] sm:$0xff]
      %v968 = vld [vmem:[%s0 + $0x1668] sm:$0xff]
      %v969 = vld [vmem:[%s0 + $0x1670] sm:$0xff]
      %v970 = vld [vmem:[%s0 + $0x1678] sm:$0xff]
      %v971 = vld [vmem:[%s0 + $0x1680] sm:$0xff]
      %v972 = vld [vmem:[%s0 + $0x1688] sm:$0xff]
      %v973 = vld [vmem:[%s0 + $0x1690] sm:$0xff]
      %v974 = vld [vmem:[%s0 + $0x1698] sm:$0xff]
      %v975 = vld [vmem:[%s0 + $0x16a0] sm:$0xff]
      %v976 = vld [vmem:[%s0 + $0x16a8] sm:$0xff]
      %v977 = vld [vmem:[%s0 + $0x16b0] sm:$0xff]
      %v978 = vld [vmem:[%s0 + $0x16b8] sm:$0xff]
      %v979 = vld [vmem:[%s0 + $0x16c0] sm:$0xff]
      %v980 = vld [vmem:[%s0 + $0x16c8] sm:$0xff]
      %v981 = vld [vmem:[%s0 + $0x16d0] sm:$0xff]
      %v982 = vld [vmem:[%s0 + $0x16d8] sm:$0xff]
      %v983 = vld [vmem:[%s0 + $0x16e0] sm:$0xff]
      %v984 = vld [vmem:[%s0 + $0x16e8] sm:$0xff]
      %v985 = vld [vmem:[%s0 + $0x16f0] sm:$0xff]
      %v986 = vld [vmem:[%s0 + $0x16f8] sm:$0xff]
      %v987 = vld [vmem:[%s0 + $0x1700] sm:$0xff]
      %v988 = vld [vmem:[%s0 + $0x1708] sm:$0xff]
      %v989 = vld [vmem:[%s0 + $0x1710] sm:$0xff]
      %v990 = vld [vmem:[%s0 + $0x1718] sm:$0xff]
      %v991 = vld [vmem:[%s0 + $0x1720] sm:$0xff]
      %v992 = vld [vmem:[%s0 + $0x1728] sm:$0xff]
      %v993 = vld [vmem:[%s0 + $0x1730] sm:$0xff]
      %v994 = vld [vmem:[%s0 + $0x1738] sm:$0xff]
      %v995 = vld [vmem:[%s0 + $0x1740] sm:$0xff]
      %v996 = vld [vmem:[%s0 + $0x1748] sm:$0xff]
      %v997 = vld [vmem:[%s0 + $0x1750] sm:$0xff]
      %v998 = vld [vmem:[%s0 + $0x1758] sm:$0xff]
      %v999 = vld [vmem:[%s0 + $0x1760] sm:$0xff]
      %v1000 = vld [vmem:[%s0 + $0x1768] sm:$0xff]
      %v1001 = vld [vmem:[%s0 + $0x1770] sm:$0xff]
      %v1002 = vld [vmem:[%s0 + $0x1778] sm:$0xff]
      %v1003 = vld [vmem:[%s0 + $0x1780] sm:$0xff]
      %v1004 = vld [vmem:[%s0 + $0x1788] sm:$0xff]
      %v1005 = vld [vmem:[%s0 + $0x1790] sm:$0xff]
      %v1006 = vld [vmem:[%s0 + $0x1798] sm:$0xff]
      %v1007 = vld [vmem:[%s0 + $0x17a0] sm:$0xff]
      %v1008 = vld [vmem:[%s0 + $0x17a8] sm:$0xff]
      %v1009 = vld [vmem:[%s0 + $0x17b0] sm:$0xff]
      %v1010 = vld [vmem:[%s0 + $0x17b8] sm:$0xff]
      %v1011 = vld [vmem:[%s0 + $0x17c0] sm:$0xff]
      %v1012 = vld [vmem:[%s0 + $0x17c8] sm:$0xff]
      %v1013 = vld [vmem:[%s0 + $0x17d0] sm:$0xff]
      %v1014 = vld [vmem:[%s0 + $0x17d8] sm:$0xff]
      %v1015 = vld [vmem:[%s0 + $0x17e0] sm:$0xff]
      %v1016 = vld [vmem:[%s0 + $0x17e8] sm:$0xff]
      %v1017 = vld [vmem:[%s0 + $0x17f0] sm:$0xff]
      %v1018 = vld [vmem:[%s0 + $0x17f8] sm:$0xff]
      %v1019 = vld [vmem:[%s0 + $0x1800] sm:$0xff]
      %v1020 = vld [vmem:[%s0 + $0x1808] sm:$0xff]
      %v1021 = vld [vmem:[%s0 + $0x1810] sm:$0xff]
      %v1022 = vld [vmem:[%s0 + $0x1818] sm:$0xff]
      %v1023 = vld [vmem:[%s0 + $0x1820] sm:$0xff]
      %v1024 = vld [vmem:[%s0 + $0x1828] sm:$0xff]
      %v1025 = vld [vmem:[%s0 + $0x1830] sm:$0xff]
      %v1026 = vld [vmem:[%s0 + $0x1838] sm:$0xff]
      %v1027 = vld [vmem:[%s0 + $0x1840] sm:$0xff]
      %v1028 = vld [vmem:[%s0 + $0x1848] sm:$0xff]
      %v1029 = vld [vmem:[%s0 + $0x1850] sm:$0xff]
      %v1030 = vld [vmem:[%s0 + $0x1858] sm:$0xff]
      %v1031 = vld [vmem:[%s0 + $0x1860] sm:$0xff]
      %v1032 = vld [vmem:[%s0 + $0x1868] sm:$0xff]
      %v1033 = vld [vmem:[%s0 + $0x1870] sm:$0xff]
      %v1034 = vld [vmem:[%s0 + $0x1878] sm:$0xff]
      %v1035 = vld [vmem:[%s0 + $0x1880] sm:$0xff]
      %v1036 = vld [vmem:[%s0 + $0x1888] sm:$0xff]
      %v1037 = vld [vmem:[%s0 + $0x1890] sm:$0xff]
      %v1038 = vld [vmem:[%s0 + $0x1898] sm:$0xff]
      %v1039 = vld [vmem:[%s0 + $0x18a0] sm:$0xff]
      %v1040 = vld [vmem:[%s0 + $0x18a8] sm:$0xff]
      %v1041 = vld [vmem:[%s0 + $0x18b0] sm:$0xff]
      %v1042 = vld [vmem:[%s0 + $0x18b8] sm:$0xff]
      %v1043 = vld [vmem:[%s0 + $0x18c0] sm:$0xff]
      %v1044 = vld [vmem:[%s0 + $0x18c8] sm:$0xff]
      %v1045 = vld [vmem:[%s0 + $0x18d0] sm:$0xff]
      %v1046 = vld [vmem:[%s0 + $0x18d8] sm:$0xff]
      %v1047 = vld [vmem:[%s0 + $0x18e0] sm:$0xff]
      %v1048 = vld [vmem:[%s0 + $0x18e8] sm:$0xff]
      %v1049 = vld [vmem:[%s0 + $0x18f0] sm:$0xff]
      %v1050 = vld [vmem:[%s0 + $0x18f8] sm:$0xff]
      %v1051 = vld [vmem:[%s0 + $0x1900] sm:$0xff]
      %v1052 = vld [vmem:[%s0 + $0x1908] sm:$0xff]
      %v1053 = vld [vmem:[%s0 + $0x1910] sm:$0xff]
      %v1054 = vld [vmem:[%s0 + $0x1918] sm:$0xff]
      %v1055 = vld [vmem:[%s0 + $0x1920] sm:$0xff]
      %v1056 = vld [vmem:[%s0 + $0x1928] sm:$0xff]
      %v1057 = vld [vmem:[%s0 + $0x1930] sm:$0xff]
      %v1058 = vld [vmem:[%s0 + $0x1938] sm:$0xff]
      %v1059 = vld [vmem:[%s0 + $0x1940] sm:$0xff]
      %v1060 = vld [vmem:[%s0 + $0x1948] sm:$0xff]
      %v1061 = vld [vmem:[%s0 + $0x1950] sm:$0xff]
      %v1062 = vld [vmem:[%s0 + $0x1958] sm:$0xff]
      %v1063 = vld [vmem:[%s0 + $0x1960] sm:$0xff]
      %v1064 = vld [vmem:[%s0 + $0x1968] sm:$0xff]
      %v1065 = vld [vmem:[%s0 + $0x1970] sm:$0xff]
      %v1066 = vld [vmem:[%s0 + $0x1978] sm:$0xff]
      %v1067 = vld [vmem:[%s0 + $0x1980] sm:$0xff]
      %v1068 = vld [vmem:[%s0 + $0x1988] sm:$0xff]
      %v1069 = vld [vmem:[%s0 + $0x1990] sm:$0xff]
      %v1070 = vld [vmem:[%s0 + $0x1998] sm:$0xff]
      %v1071 = vld [vmem:[%s0 + $0x19a0] sm:$0xff]
      %v1072 = vld [vmem:[%s0 + $0x19a8] sm:$0xff]
      %v1073 = vld [vmem:[%s0 + $0x19b0] sm:$0xff]
      %v1074 = vld [vmem:[%s0 + $0x19b8] sm:$0xff]
      %v1075 = vld [vmem:[%s0 + $0x19c0] sm:$0xff]
      %v1076 = vld [vmem:[%s0 + $0x19c8] sm:$0xff]
      %v1077 = vld [vmem:[%s0 + $0x19d0] sm:$0xff]
      %v1078 = vld [vmem:[%s0 + $0x19d8] sm:$0xff]
      %v1079 = vld [vmem:[%s0 + $0x19e0] sm:$0xff]
      %v1080 = vld [vmem:[%s0 + $0x19e8] sm:$0xff]
      %v1081 = vld [vmem:[%s0 + $0x19f0] sm:$0xff]
      %v1082 = vld [vmem:[%s0 + $0x19f8] sm:$0xff]
      %v1083 = vld [vmem:[%s0 + $0x1a00] sm:$0xff]
      %v1084 = vld [vmem:[%s0 + $0x1a08] sm:$0xff]
      %v1085 = vld [vmem:[%s0 + $0x1a10] sm:$0xff]
      %v1086 = vld [vmem:[%s0 + $0x1a18] sm:$0xff]
      %v1087 = vld [vmem:[%s0 + $0x1a20] sm:$0xff]
      %v1088 = vld [vmem:[%s0 + $0x1a28] sm:$0xff]
      %v1089 = vld [vmem:[%s0 + $0x1a30] sm:$0xff]
      %v1090 = vld [vmem:[%s0 + $0x1a38] sm:$0xff]
      %v1091 = vld [vmem:[%s0 + $0x1a40] sm:$0xff]
      %v1092 = vld [vmem:[%s0 + $0x1a48] sm:$0xff]
      %v1093 = vld [vmem:[%s0 + $0x1a50] sm:$0xff]
      %v1094 = vld [vmem:[%s0 + $0x1a58] sm:$0xff]
      %v1095 = vld [vmem:[%s0 + $0x1a60] sm:$0xff]
      %v1096 = vld [vmem:[%s0 + $0x1a68] sm:$0xff]
      %v1097 = vld [vmem:[%s0 + $0x1a70] sm:$0xff]
      %v1098 = vld [vmem:[%s0 + $0x1a78] sm:$0xff]
      %v1099 = vld [vmem:[%s0 + $0x1a80] sm:$0xff]
      %v1100 = vld [vmem:[%s0 + $0x1a88] sm:$0xff]
      %v1101 = vld [vmem:[%s0 + $0x1a90] sm:$0xff]
      %v1102 = vld [vmem:[%s0 + $0x1a98] sm:$0xff]
      %v1103 = vld [vmem:[%s0 + $0x1aa0] sm:$0xff]
      %v1104 = vld [vmem:[%s0 + $0x1aa8] sm:$0xff]
      %v1105 = vld [vmem:[%s0 + $0x1ab0] sm:$0xff]
      %v1106 = vld [vmem:[%s0 + $0x1ab8] sm:$0xff]
      %v1107 = vld [vmem:[%s0 + $0x1ac0] sm:$0xff]
      %v1108 = vld [vmem:[%s0 + $0x1ac8] sm:$0xff]
      %v1109 = vld [vmem:[%s0 + $0x1ad0] sm:$0xff]
      %v1110 = vld [vmem:[%s0 + $0x1ad8] sm:$0xff]
      %v1111 = vld [vmem:[%s0 + $0x1ae0] sm:$0xff]
      %v1112 = vld [vmem:[%s0 + $0x1ae8] sm:$0xff]
      %v1113 = vld [vmem:[%s0 + $0x1af0] sm:$0xff]
      %v1114 = vld [vmem:[%s0 + $0x1af8] sm:$0xff]
      %v1115 = vld [vmem:[%s0 + $0x1b00] sm:$0xff]
      %v1116 = vld [vmem:[%s0 + $0x1b08] sm:$0xff]
      %v1117 = vld [vmem:[%s0 + $0x1b10] sm:$0xff]
      %v1118 = vld [vmem:[%s0 + $0x1b18] sm:$0xff]
      %v1119 = vld [vmem:[%s0 + $0x1b20] sm:$0xff]
      %v1120 = vld [vmem:[%s0 + $0x1b28] sm:$0xff]
      %v1121 = vld [vmem:[%s0 + $0x1b30] sm:$0xff]
      %v1122 = vld [vmem:[%s0 + $0x1b38] sm:$0xff]
      %v1123 = vld [vmem:[%s0 + $0x1b40] sm:$0xff]
      %v1124 = vld [vmem:[%s0 + $0x1b48] sm:$0xff]
      %v1125 = vld [vmem:[%s0 + $0x1b50] sm:$0xff]
      %v1126 = vld [vmem:[%s0 + $0x1b58] sm:$0xff]
      %v1127 = vld [vmem:[%s0 + $0x1b60] sm:$0xff]
      %v1128 = vld [vmem:[%s0 + $0x1b68] sm:$0xff]
      %v1129 = vld [vmem:[%s0 + $0x1b70] sm:$0xff]
      %v1130 = vld [vmem:[%s0 + $0x1b78] sm:$0xff]
      %v1131 = vld [vmem:[%s0 + $0x1b80] sm:$0xff]
      %v1132 = vld [vmem:[%s0 + $0x1b88] sm:$0xff]
      %v1133 = vld [vmem:[%s0 + $0x1b90] sm:$0xff]
      %v1134 = vld [vmem:[%s0 + $0x1b98] sm:$0xff]
      %v1135 = vld [vmem:[%s0 + $0x1ba0] sm:$0xff]
      %v1136 = vld [vmem:[%s0 + $0x1ba8] sm:$0xff]
      %v1137 = vld [vmem:[%s0 + $0x1bb0] sm:$0xff]
      %v1138 = vld [vmem:[%s0 + $0x1bb8] sm:$0xff]
      %v1139 = vld [vmem:[%s0 + $0x1bc0] sm:$0xff]
      %v1140 = vld [vmem:[%s0 + $0x1bc8] sm:$0xff]
      %v1141 = vld [vmem:[%s0 + $0x1bd0] sm:$0xff]
      %v1142 = vld [vmem:[%s0 + $0x1bd8] sm:$0xff]
      %v1143 = vld [vmem:[%s0 + $0x1be0] sm:$0xff]
      %v1144 = vld [vmem:[%s0 + $0x1be8] sm:$0xff]
      %v1145 = vld [vmem:[%s0 + $0x1bf0] sm:$0xff]
      %v1146 = vld [vmem:[%s0 + $0x1bf8] sm:$0xff]
      %v1147 = vld [vmem:[%s0 + $0x1c00] sm:$0xff]
      %v1148 = vld [vmem:[%s0 + $0x1c08] sm:$0xff]
      %v1149 = vld [vmem:[%s0 + $0x1c10] sm:$0xff]
      %v1150 = vld [vmem:[%s0 + $0x1c18] sm:$0xff]
      %v1151 = vld [vmem:[%s0 + $0x1c20] sm:$0xff]
      %v1152 = vld [vmem:[%s0 + $0x1c28] sm:$0xff]
      %v1153 = vld [vmem:[%s0 + $0x1c30] sm:$0xff]
      %v1154 = vld [vmem:[%s0 + $0x1c38] sm:$0xff]
      %v1155 = vld [vmem:[%s0 + $0x1c40] sm:$0xff]
      %v1156 = vld [vmem:[%s0 + $0x1c48] sm:$0xff]
      %v1157 = vld [vmem:[%s0 + $0x1c50] sm:$0xff]
      %v1158 = vld [vmem:[%s0 + $0x1c58] sm:$0xff]
      %v1159 = vld [vmem:[%s0 + $0x1c60] sm:$0xff]
      %v1160 = vld [vmem:[%s0 + $0x1c68] sm:$0xff]
      %v1161 = vld [vmem:[%s0 + $0x1c70] sm:$0xff]
      %v1162 = vld [vmem:[%s0 + $0x1c78] sm:$0xff]
      %v1163 = vld [vmem:[%s0 + $0x1c80] sm:$0xff]
      %v1164 = vld [vmem:[%s0 + $0x1c88] sm:$0xff]
      %v1165 = vld [vmem:[%s0 + $0x1c90] sm:$0xff]
      %v1166 = vld [vmem:[%s0 + $0x1c98] sm:$0xff]
      %v1167 = vld [vmem:[%s0 + $0x1ca0] sm:$0xff]
      %v1168 = vld [vmem:[%s0 + $0x1ca8] sm:$0xff]
      %v1169 = vld [vmem:[%s0 + $0x1cb0] sm:$0xff]
      %v1170 = vld [vmem:[%s0 + $0x1cb8] sm:$0xff]
      %v1171 = vld [vmem:[%s0 + $0x1cc0] sm:$0xff]
      %v1172 = vld [vmem:[%s0 + $0x1cc8] sm:$0xff]
      %v1173 = vld [vmem:[%s0 + $0x1cd0] sm:$0xff]
      %v1174 = vld [vmem:[%s0 + $0x1cd8] sm:$0xff]
      %v1175 = vmax.f32 %v251, 0.0
      %v1176 = vmax.f32 %v252, 0.0
      %v1177 = vmax.f32 %v253, 0.0
      %v1178 = vmax.f32 %v254, 0.0
      %v1179 = vmax.f32 %v255, 0.0
      %v1180 = vmax.f32 %v256, 0.0
      %v1181 = vmax.f32 %v257, 0.0
      %v1182 = vmax.f32 %v258, 0.0
      %v1183 = vmax.f32 %v259, 0.0
      %v1184 = vmax.f32 %v260, 0.0
      %v1185 = vmax.f32 %v261, 0.0
      %v1186 = vmax.f32 %v262, 0.0
      %v1187 = vmax.f32 %v263, 0.0
      %v1188 = vmax.f32 %v264, 0.0
      %v1189 = vmax.f32 %v265, 0.0
      %v1190 = vmax.f32 %v266, 0.0
      %v1191 = vmax.f32 %v267, 0.0
      %v1192 = vmax.f32 %v268, 0.0
      %v1193 = vmax.f32 %v269, 0.0
      %v1194 = vmax.f32 %v270, 0.0
      %v1195 = vmax.f32 %v271, 0.0
      %v1196 = vmax.f32 %v272, 0.0
      %v1197 = vmax.f32 %v273, 0.0
      %v1198 = vmax.f32 %v274, 0.0
      %v1199 = vmax.f32 %v275, 0.0
      %v1200 = vmax.f32 %v276, 0.0
      %v1201 = vmax.f32 %v277, 0.0
      %v1202 = vmax.f32 %v278, 0.0
      %v1203 = vmax.f32 %v279, 0.0
      %v1204 = vmax.f32 %v280, 0.0
      %v1205 = vmax.f32 %v281, 0.0
      %v1206 = vmax.f32 %v282, 0.0
      %v1207 = vmax.f32 %v283, 0.0
      %v1208 = vmax.f32 %v284, 0.0
      %v1209 = vmax.f32 %v285, 0.0
      %v1210 = vmax.f32 %v286, 0.0
      %v1211 = vmax.f32 %v287, 0.0
      %v1212 = vmax.f32 %v288, 0.0
      %v1213 = vmax.f32 %v289, 0.0
      %v1214 = vmax.f32 %v290, 0.0
      %v1215 = vmax.f32 %v291, 0.0
      %v1216 = vmax.f32 %v292, 0.0
      %v1217 = vmax.f32 %v293, 0.0
      %v1218 = vmax.f32 %v294, 0.0
      %v1219 = vmax.f32 %v295, 0.0
      %v1220 = vmax.f32 %v296, 0.0
      %v1221 = vmax.f32 %v297, 0.0
      %v1222 = vmax.f32 %v298, 0.0
      %v1223 = vmax.f32 %v299, 0.0
      %v1224 = vmax.f32 %v300, 0.0
      %v1225 = vmax.f32 %v301, 0.0
      %v1226 = vmax.f32 %v302, 0.0
      %v1227 = vmax.f32 %v303, 0.0
      %v1228 = vmax.f32 %v304, 0.0
      %v1229 = vmax.f32 %v305, 0.0
      %v1230 = vmax.f32 %v306, 0.0
      %v1231 = vmax.f32 %v307, 0.0
      %v1232 = vmax.f32 %v308, 0.0
      %v1233 = vmax.f32 %v309, 0.0
      %v1234 = vmax.f32 %v310, 0.0
      %v1235 = vmax.f32 %v311, 0.0
      %v1236 = vmax.f32 %v312, 0.0
      %v1237 = vmax.f32 %v313, 0.0
      %v1238 = vmax.f32 %v314, 0.0
      %v1239 = vmax.f32 %v315, 0.0
      %v1240 = vmax.f32 %v316, 0.0
      %v1241 = vmax.f32 %v317, 0.0
      %v1242 = vmax.f32 %v318, 0.0
      %v1243 = vmax.f32 %v319, 0.0
      %v1244 = vmax.f32 %v320, 0.0
      %v1245 = vmax.f32 %v321, 0.0
      %v1246 = vmax.f32 %v322, 0.0
      %v1247 = vmax.f32 %v323, 0.0
      %v1248 = vmax.f32 %v324, 0.0
      %v1249 = vmax.f32 %v325, 0.0
      %v1250 = vmax.f32 %v326, 0.0
      %v1251 = vmax.f32 %v327, 0.0
      %v1252 = vmax.f32 %v328, 0.0
      %v1253 = vmax.f32 %v329, 0.0
      %v1254 = vmax.f32 %v330, 0.0
      %v1255 = vmax.f32 %v331, 0.0
      %v1256 = vmax.f32 %v332, 0.0
      %v1257 = vmax.f32 %v333, 0.0
      %v1258 = vmax.f32 %v334, 0.0
      %v1259 = vmax.f32 %v335, 0.0
      %v1260 = vmax.f32 %v336, 0.0
      %v1261 = vmax.f32 %v337, 0.0
      %v1262 = vmax.f32 %v338, 0.0
      %v1263 = vmax.f32 %v339, 0.0
      %v1264 = vmax.f32 %v340, 0.0
      %v1265 = vmax.f32 %v341, 0.0
      %v1266 = vmax.f32 %v342, 0.0
      %v1267 = vmax.f32 %v343, 0.0
      %v1268 = vmax.f32 %v344, 0.0
      %v1269 = vmax.f32 %v345, 0.0
      %v1270 = vmax.f32 %v346, 0.0
      %v1271 = vmax.f32 %v347, 0.0
      %v1272 = vmax.f32 %v348, 0.0
      %v1273 = vmax.f32 %v349, 0.0
      %v1274 = vmax.f32 %v350, 0.0
      %v1275 = vmax.f32 %v351, 0.0
      %v1276 = vmax.f32 %v352, 0.0
      %v1277 = vmax.f32 %v353, 0.0
      %v1278 = vmax.f32 %v354, 0.0
      %v1279 = vmax.f32 %v355, 0.0
      %v1280 = vmax.f32 %v356, 0.0
      %v1281 = vmax.f32 %v357, 0.0
      %v1282 = vmax.f32 %v358, 0.0
      %v1283 = vmax.f32 %v359, 0.0
      %v1284 = vmax.f32 %v360, 0.0
      %v1285 = vmax.f32 %v361, 0.0
      %v1286 = vmax.f32 %v362, 0.0
      %v1287 = vmax.f32 %v363, 0.0
      %v1288 = vmax.f32 %v364, 0.0
      %v1289 = vmax.f32 %v365, 0.0
      %v1290 = vmax.f32 %v366, 0.0
      %v1291 = vmax.f32 %v367, 0.0
      %v1292 = vmax.f32 %v368, 0.0
      %v1293 = vmax.f32 %v369, 0.0
      %v1294 = vmax.f32 %v370, 0.0
      %v1295 = vmax.f32 %v371, 0.0
      %v1296 = vmax.f32 %v372, 0.0
      %v1297 = vmax.f32 %v373, 0.0
      %v1298 = vmax.f32 %v374, 0.0
      %v1299 = vmax.f32 %v375, 0.0
      %v1300 = vmax.f32 %v376, 0.0
      %v1301 = vmax.f32 %v377, 0.0
      %v1302 = vmax.f32 %v378, 0.0
      %v1303 = vmax.f32 %v379, 0.0
      %v1304 = vmax.f32 %v380, 0.0
      %v1305 = vmax.f32 %v381, 0.0
      %v1306 = vmax.f32 %v382, 0.0
      %v1307 = vmax.f32 %v383, 0.0
      %v1308 = vmax.f32 %v384, 0.0
      %v1309 = vmax.f32 %v385, 0.0
      %v1310 = vmax.f32 %v386, 0.0
      %v1311 = vmax.f32 %v387, 0.0
      %v1312 = vmax.f32 %v388, 0.0
      %v1313 = vmax.f32 %v389, 0.0
      %v1314 = vmax.f32 %v390, 0.0
      %v1315 = vmax.f32 %v391, 0.0
      %v1316 = vmax.f32 %v392, 0.0
      %v1317 = vmax.f32 %v393, 0.0
      %v1318 = vmax.f32 %v394, 0.0
      %v1319 = vmax.f32 %v395, 0.0
      %v1320 = vmax.f32 %v396, 0.0
      %v1321 = vmax.f32 %v397, 0.0
      %v1322 = vmax.f32 %v398, 0.0
      %v1323 = vmax.f32 %v399, 0.0
      %v1324 = vmax.f32 %v400, 0.0
      %v1325 = vmax.f32 %v401, 0.0
      %v1326 = vmax.f32 %v402, 0.0
      %v1327 = vmax.f32 %v403, 0.0
      %v1328 = vmax.f32 %v404, 0.0
      %v1329 = vmax.f32 %v405, 0.0
      %v1330 = vmax.f32 %v406, 0.0
      %v1331 = vmax.f32 %v407, 0.0
      %v1332 = vmax.f32 %v408, 0.0
      %v1333 = vmax.f32 %v409, 0.0
      %v1334 = vmax.f32 %v410, 0.0
      %v1335 = vmax.f32 %v411, 0.0
      %v1336 = vmax.f32 %v412, 0.0
      %v1337 = vmax.f32 %v413, 0.0
      %v1338 = vmax.f32 %v414, 0.0
      %v1339 = vmax.f32 %v415, 0.0
      %v1340 = vmax.f32 %v416, 0.0
      %v1341 = vmax.f32 %v417, 0.0
      %v1342 = vmax.f32 %v418, 0.0
      %v1343 = vmax.f32 %v419, 0.0
      %v1344 = vmax.f32 %v420, 0.0
      %v1345 = vmax.f32 %v421, 0.0
      %v1346 = vmax.f32 %v422, 0.0
      %v1347 = vmax.f32 %v423, 0.0
      %v1348 = vmax.f32 %v424, 0.0
      %v1349 = vmax.f32 %v425, 0.0
      %v1350 = vmax.f32 %v426, 0.0
      %v1351 = vmax.f32 %v427, 0.0
      %v1352 = vmax.f32 %v428, 0.0
      %v1353 = vmax.f32 %v429, 0.0
      %v1354 = vmax.f32 %v430, 0.0
      %v1355 = vmax.f32 %v431, 0.0
      %v1356 = vmax.f32 %v432, 0.0
      %v1357 = vmax.f32 %v433, 0.0
      %v1358 = vmax.f32 %v434, 0.0
      %v1359 = vmax.f32 %v435, 0.0
      %v1360 = vmax.f32 %v436, 0.0
      %v1361 = vmax.f32 %v437, 0.0
      %v1362 = vmax.f32 %v438, 0.0
      %v1363 = vmax.f32 %v439, 0.0
      %v1364 = vmax.f32 %v440, 0.0
      %v1365 = vmax.f32 %v441, 0.0
      %v1366 = vmax.f32 %v442, 0.0
      %v1367 = vmax.f32 %v443, 0.0
      %v1368 = vmax.f32 %v444, 0.0
      %v1369 = vmax.f32 %v445, 0.0
      %v1370 = vmax.f32 %v446, 0.0
      %v1371 = vmax.f32 %v447, 0.0
      %v1372 = vmax.f32 %v448, 0.0
      %v1373 = vmax.f32 %v449, 0.0
      %v1374 = vmax.f32 %v450, 0.0
      %v1375 = vmax.f32 %v451, 0.0
      %v1376 = vmax.f32 %v452, 0.0
      %v1377 = vmax.f32 %v453, 0.0
      %v1378 = vmax.f32 %v454, 0.0
      %v1379 = vmax.f32 %v455, 0.0
      %v1380 = vmax.f32 %v456, 0.0
      %v1381 = vmax.f32 %v457, 0.0
      %v1382 = vmax.f32 %v458, 0.0
      %v1383 = vmax.f32 %v459, 0.0
      %v1384 = vmax.f32 %v460, 0.0
      %v1385 = vmax.f32 %v461, 0.0
      %v1386 = vmax.f32 %v462, 0.0
      %v1387 = vmax.f32 %v463, 0.0
      %v1388 = vmax.f32 %v464, 0.0
      %v1389 = vmax.f32 %v465, 0.0
      %v1390 = vmax.f32 %v466, 0.0
      %v1391 = vmax.f32 %v467, 0.0
      %v1392 = vmax.f32 %v468, 0.0
      %v1393 = vmax.f32 %v469, 0.0
      %v1394 = vmax.f32 %v470, 0.0
      %v1395 = vmax.f32 %v471, 0.0
      %v1396 = vmax.f32 %v472, 0.0
      %v1397 = vmax.f32 %v473, 0.0
      %v1398 = vmax.f32 %v474, 0.0
      %v1399 = vmax.f32 %v475, 0.0
      %v1400 = vmax.f32 %v476, 0.0
      %v1401 = vmax.f32 %v477, 0.0
      %v1402 = vmax.f32 %v478, 0.0
      %v1403 = vmax.f32 %v479, 0.0
      %v1404 = vmax.f32 %v480, 0.0
      %v1405 = vmax.f32 %v481, 0.0
      %v1406 = vmax.f32 %v482, 0.0
      %v1407 = vmax.f32 %v483, 0.0
      %v1408 = vmax.f32 %v484, 0.0
      %v1409 = vmax.f32 %v485, 0.0
      %v1410 = vmax.f32 %v486, 0.0
      %v1411 = vmax.f32 %v487, 0.0
      %v1412 = vmax.f32 %v488, 0.0
      %v1413 = vmax.f32 %v489, 0.0
      %v1414 = vmax.f32 %v490, 0.0
      %v1415 = vmax.f32 %v491, 0.0
      %v1416 = vmax.f32 %v492, 0.0
      %v1417 = vmax.f32 %v493, 0.0
      %v1418 = vmax.f32 %v494, 0.0
      %v1419 = vmax.f32 %v495, 0.0
      %v1420 = vmax.f32 %v496, 0.0
      %v1421 = vmax.f32 %v497, 0.0
      %v1422 = vmax.f32 %v498, 0.0
      %v1423 = vmax.f32 %v499, 0.0
      %v1424 = vmax.f32 %v500, 0.0
      %v1425 = vmax.f32 %v501, 0.0
      %v1426 = vmax.f32 %v502, 0.0
      %v1427 = vmax.f32 %v503, 0.0
      %v1428 = vmax.f32 %v504, 0.0
      %v1429 = vmax.f32 %v505, 0.0
      %v1430 = vmax.f32 %v506, 0.0
      %v1431 = vmax.f32 %v507, 0.0
      %v1432 = vmax.f32 %v508, 0.0
      %v1433 = vmax.f32 %v509, 0.0
      %v1434 = vmax.f32 %v510, 0.0
      %v1435 = vmax.f32 %v511, 0.0
      %v1436 = vmax.f32 %v512, 0.0
      %v1437 = vmax.f32 %v513, 0.0
      %v1438 = vmax.f32 %v514, 0.0
      %v1439 = vmax.f32 %v515, 0.0
      %v1440 = vmax.f32 %v516, 0.0
      %v1441 = vmax.f32 %v517, 0.0
      %v1442 = vmax.f32 %v518, 0.0
      %v1443 = vmax.f32 %v519, 0.0
      %v1444 = vmax.f32 %v520, 0.0
      %v1445 = vmax.f32 %v521, 0.0
      %v1446 = vmax.f32 %v522, 0.0
      %v1447 = vmax.f32 %v523, 0.0
      %v1448 = vmax.f32 %v524, 0.0
      %v1449 = vmax.f32 %v525, 0.0
      %v1450 = vmax.f32 %v526, 0.0
      %v1451 = vmax.f32 %v527, 0.0
      %v1452 = vmax.f32 %v528, 0.0
      %v1453 = vmax.f32 %v529, 0.0
      %v1454 = vmax.f32 %v530, 0.0
      %v1455 = vmax.f32 %v531, 0.0
      %v1456 = vmax.f32 %v532, 0.0
      %v1457 = vmax.f32 %v533, 0.0
      %v1458 = vmax.f32 %v534, 0.0
      %v1459 = vmax.f32 %v535, 0.0
      %v1460 = vmax.f32 %v536, 0.0
      %v1461 = vmax.f32 %v537, 0.0
      %v1462 = vmax.f32 %v538, 0.0
      %v1463 = vmax.f32 %v539, 0.0
      %v1464 = vmax.f32 %v540, 0.0
      %v1465 = vmax.f32 %v541, 0.0
      %v1466 = vmax.f32 %v542, 0.0
      %v1467 = vmax.f32 %v543, 0.0
      %v1468 = vmax.f32 %v544, 0.0
      %v1469 = vmax.f32 %v545, 0.0
      %v1470 = vmax.f32 %v546, 0.0
      %v1471 = vmax.f32 %v547, 0.0
      %v1472 = vmax.f32 %v548, 0.0
      %v1473 = vmax.f32 %v549, 0.0
      %v1474 = vmax.f32 %v550, 0.0
      %v1475 = vmax.f32 %v551, 0.0
      %v1476 = vmax.f32 %v552, 0.0
      %v1477 = vmax.f32 %v553, 0.0
      %v1478 = vmax.f32 %v554, 0.0
      %v1479 = vmax.f32 %v555, 0.0
      %v1480 = vmax.f32 %v556, 0.0
      %v1481 = vmax.f32 %v557, 0.0
      %v1482 = vmax.f32 %v558, 0.0
      %v1483 = vmax.f32 %v559, 0.0
      %v1484 = vmax.f32 %v560, 0.0
      %v1485 = vmax.f32 %v561, 0.0
      %v1486 = vmax.f32 %v562, 0.0
      %v1487 = vmax.f32 %v563, 0.0
      %v1488 = vmax.f32 %v564, 0.0
      %v1489 = vmax.f32 %v565, 0.0
      %v1490 = vmax.f32 %v566, 0.0
      %v1491 = vmax.f32 %v567, 0.0
      %v1492 = vmax.f32 %v568, 0.0
      %v1493 = vmax.f32 %v569, 0.0
      %v1494 = vmax.f32 %v570, 0.0
      %v1495 = vmax.f32 %v571, 0.0
      %v1496 = vmax.f32 %v572, 0.0
      %v1497 = vmax.f32 %v573, 0.0
      %v1498 = vmax.f32 %v574, 0.0
      %v1499 = vmax.f32 %v575, 0.0
      %v1500 = vmax.f32 %v576, 0.0
      %v1501 = vmax.f32 %v577, 0.0
      %v1502 = vmax.f32 %v578, 0.0
      %v1503 = vmax.f32 %v579, 0.0
      %v1504 = vmax.f32 %v580, 0.0
      %v1505 = vmax.f32 %v581, 0.0
      %v1506 = vmax.f32 %v582, 0.0
      %v1507 = vmax.f32 %v583, 0.0
      %v1508 = vmax.f32 %v584, 0.0
      %v1509 = vmax.f32 %v585, 0.0
      %v1510 = vmax.f32 %v586, 0.0
      %v1511 = vmax.f32 %v587, 0.0
      %v1512 = vmax.f32 %v588, 0.0
      %v1513 = vmax.f32 %v589, 0.0
      %v1514 = vmax.f32 %v590, 0.0
      %v1515 = vmax.f32 %v591, 0.0
      %v1516 = vmax.f32 %v592, 0.0
      %v1517 = vmax.f32 %v593, 0.0
      %v1518 = vmax.f32 %v594, 0.0
      %v1519 = vmax.f32 %v595, 0.0
      %v1520 = vmax.f32 %v596, 0.0
      %v1521 = vmax.f32 %v597, 0.0
      %v1522 = vmax.f32 %v598, 0.0
      %v1523 = vmax.f32 %v599, 0.0
      %v1524 = vmax.f32 %v600, 0.0
      %v1525 = vmax.f32 %v601, 0.0
      %v1526 = vmax.f32 %v602, 0.0
      %v1527 = vmax.f32 %v603, 0.0
      %v1528 = vmax.f32 %v604, 0.0
      %v1529 = vmax.f32 %v605, 0.0
      %v1530 = vmax.f32 %v606, 0.0
      %v1531 = vmax.f32 %v607, 0.0
      %v1532 = vmax.f32 %v608, 0.0
      %v1533 = vmax.f32 %v609, 0.0
      %v1534 = vmax.f32 %v610, 0.0
      %v1535 = vmax.f32 %v611, 0.0
      %v1536 = vmax.f32 %v612, 0.0
      %v1537 = vmax.f32 %v613, 0.0
      %v1538 = vmax.f32 %v614, 0.0
      %v1539 = vmax.f32 %v615, 0.0
      %v1540 = vmax.f32 %v616, 0.0
      %v1541 = vmax.f32 %v617, 0.0
      %v1542 = vmax.f32 %v618, 0.0
      %v1543 = vmax.f32 %v619, 0.0
      %v1544 = vmax.f32 %v620, 0.0
      %v1545 = vmax.f32 %v621, 0.0
      %v1546 = vmax.f32 %v622, 0.0
      %v1547 = vmax.f32 %v623, 0.0
      %v1548 = vmax.f32 %v624, 0.0
      %v1549 = vmax.f32 %v625, 0.0
      %v1550 = vmax.f32 %v626, 0.0
      %v1551 = vmax.f32 %v627, 0.0
      %v1552 = vmax.f32 %v628, 0.0
      %v1553 = vmax.f32 %v629, 0.0
      %v1554 = vmax.f32 %v630, 0.0
      %v1555 = vmax.f32 %v631, 0.0
      %v1556 = vmax.f32 %v632, 0.0
      %v1557 = vmax.f32 %v633, 0.0
      %v1558 = vmax.f32 %v634, 0.0
      %v1559 = vmax.f32 %v635, 0.0
      %v1560 = vmax.f32 %v636, 0.0
      %v1561 = vmax.f32 %v637, 0.0
      %v1562 = vmax.f32 %v638, 0.0
      %v1563 = vmax.f32 %v639, 0.0
      %v1564 = vmax.f32 %v640, 0.0
      %v1565 = vmax.f32 %v641, 0.0
      %v1566 = vmax.f32 %v642, 0.0
      %v1567 = vmax.f32 %v643, 0.0
      %v1568 = vmax.f32 %v644, 0.0
      %v1569 = vmax.f32 %v645, 0.0
      %v1570 = vmax.f32 %v646, 0.0
      %v1571 = vmax.f32 %v647, 0.0
      %v1572 = vmax.f32 %v648, 0.0
      %v1573 = vmax.f32 %v649, 0.0
      %v1574 = vmax.f32 %v650, 0.0
      %v1575 = vmax.f32 %v651, 0.0
      %v1576 = vmax.f32 %v652, 0.0
      %v1577 = vmax.f32 %v653, 0.0
      %v1578 = vmax.f32 %v654, 0.0
      %v1579 = vmax.f32 %v655, 0.0
      %v1580 = vmax.f32 %v656, 0.0
      %v1581 = vmax.f32 %v657, 0.0
      %v1582 = vmax.f32 %v658, 0.0
      %v1583 = vmax.f32 %v659, 0.0
      %v1584 = vmax.f32 %v660, 0.0
      %v1585 = vmax.f32 %v661, 0.0
      %v1586 = vmax.f32 %v662, 0.0
      %v1587 = vmax.f32 %v663, 0.0
      %v1588 = vmax.f32 %v664, 0.0
      %v1589 = vmax.f32 %v665, 0.0
      %v1590 = vmax.f32 %v666, 0.0
      %v1591 = vmax.f32 %v667, 0.0
      %v1592 = vmax.f32 %v668, 0.0
      %v1593 = vmax.f32 %v669, 0.0
      %v1594 = vmax.f32 %v670, 0.0
      %v1595 = vmax.f32 %v671, 0.0
      %v1596 = vmax.f32 %v672, 0.0
      %v1597 = vmax.f32 %v673, 0.0
      %v1598 = vmax.f32 %v674, 0.0
      %v1599 = vmax.f32 %v675, 0.0
      %v1600 = vmax.f32 %v676, 0.0
      %v1601 = vmax.f32 %v677, 0.0
      %v1602 = vmax.f32 %v678, 0.0
      %v1603 = vmax.f32 %v679, 0.0
      %v1604 = vmax.f32 %v680, 0.0
      %v1605 = vmax.f32 %v681, 0.0
      %v1606 = vmax.f32 %v682, 0.0
      %v1607 = vmax.f32 %v683, 0.0
      %v1608 = vmax.f32 %v684, 0.0
      %v1609 = vmax.f32 %v685, 0.0
      %v1610 = vmax.f32 %v686, 0.0
      %v1611 = vmax.f32 %v687, 0.0
      %v1612 = vmax.f32 %v688, 0.0
      %v1613 = vmax.f32 %v689, 0.0
      %v1614 = vmax.f32 %v690, 0.0
      %v1615 = vmax.f32 %v691, 0.0
      %v1616 = vmax.f32 %v692, 0.0
      %v1617 = vmax.f32 %v693, 0.0
      %v1618 = vmax.f32 %v694, 0.0
      %v1619 = vmax.f32 %v695, 0.0
      %v1620 = vmax.f32 %v696, 0.0
      %v1621 = vmax.f32 %v697, 0.0
      %v1622 = vmax.f32 %v698, 0.0
      %v1623 = vmax.f32 %v699, 0.0
      %v1624 = vmax.f32 %v700, 0.0
      %v1625 = vmax.f32 %v701, 0.0
      %v1626 = vmax.f32 %v702, 0.0
      %v1627 = vmax.f32 %v703, 0.0
      %v1628 = vmax.f32 %v704, 0.0
      %v1629 = vmax.f32 %v705, 0.0
      %v1630 = vmax.f32 %v706, 0.0
      %v1631 = vmax.f32 %v707, 0.0
      %v1632 = vmax.f32 %v708, 0.0
      %v1633 = vmax.f32 %v709, 0.0
      %v1634 = vmax.f32 %v710, 0.0
      %v1635 = vmax.f32 %v711, 0.0
      %v1636 = vmax.f32 %v712, 0.0
      %v1637 = vmax.f32 %v713, 0.0
      %v1638 = vmax.f32 %v714, 0.0
      %v1639 = vmax.f32 %v715, 0.0
      %v1640 = vmax.f32 %v716, 0.0
      %v1641 = vmax.f32 %v717, 0.0
      %v1642 = vmax.f32 %v718, 0.0
      %v1643 = vmax.f32 %v719, 0.0
      %v1644 = vmax.f32 %v720, 0.0
      %v1645 = vmax.f32 %v721, 0.0
      %v1646 = vmax.f32 %v722, 0.0
      %v1647 = vmax.f32 %v723, 0.0
      %v1648 = vmax.f32 %v724, 0.0
      %v1649 = vmax.f32 %v725, 0.0
      %v1650 = vmax.f32 %v726, 0.0
      %v1651 = vmax.f32 %v727, 0.0
      %v1652 = vmax.f32 %v728, 0.0
      %v1653 = vmax.f32 %v729, 0.0
      %v1654 = vmax.f32 %v730, 0.0
      %v1655 = vmax.f32 %v731, 0.0
      %v1656 = vmax.f32 %v732, 0.0
      %v1657 = vmax.f32 %v733, 0.0
      %v1658 = vmax.f32 %v734, 0.0
      %v1659 = vmax.f32 %v735, 0.0
      %v1660 = vmax.f32 %v736, 0.0
      %v1661 = vmax.f32 %v737, 0.0
      %v1662 = vmax.f32 %v738, 0.0
      %v1663 = vmax.f32 %v739, 0.0
      %v1664 = vmax.f32 %v740, 0.0
      %v1665 = vmax.f32 %v741, 0.0
      %v1666 = vmax.f32 %v742, 0.0
      %v1667 = vmax.f32 %v743, 0.0
      %v1668 = vmax.f32 %v744, 0.0
      %v1669 = vmax.f32 %v745, 0.0
      %v1670 = vmax.f32 %v746, 0.0
      %v1671 = vmax.f32 %v747, 0.0
      %v1672 = vmax.f32 %v748, 0.0
      %v1673 = vmax.f32 %v749, 0.0
      %v1674 = vmax.f32 %v750, 0.0
      %v1675 = vmax.f32 %v751, 0.0
      %v1676 = vmax.f32 %v752, 0.0
      %v1677 = vmax.f32 %v753, 0.0
      %v1678 = vmax.f32 %v754, 0.0
      %v1679 = vmax.f32 %v755, 0.0
      %v1680 = vmax.f32 %v756, 0.0
      %v1681 = vmax.f32 %v757, 0.0
      %v1682 = vmax.f32 %v758, 0.0
      %v1683 = vmax.f32 %v759, 0.0
      %v1684 = vmax.f32 %v760, 0.0
      %v1685 = vmax.f32 %v761, 0.0
      %v1686 = vmax.f32 %v762, 0.0
      %v1687 = vmax.f32 %v763, 0.0
      %v1688 = vmax.f32 %v764, 0.0
      %v1689 = vmax.f32 %v765, 0.0
      %v1690 = vmax.f32 %v766, 0.0
      %v1691 = vmax.f32 %v767, 0.0
      %v1692 = vmax.f32 %v768, 0.0
      %v1693 = vmax.f32 %v769, 0.0
      %v1694 = vmax.f32 %v770, 0.0
      %v1695 = vmax.f32 %v771, 0.0
      %v1696 = vmax.f32 %v772, 0.0
      %v1697 = vmax.f32 %v773, 0.0
      %v1698 = vmax.f32 %v774, 0.0
      %v1699 = vmax.f32 %v775, 0.0
      %v1700 = vmax.f32 %v776, 0.0
      %v1701 = vmax.f32 %v777, 0.0
      %v1702 = vmax.f32 %v778, 0.0
      %v1703 = vmax.f32 %v779, 0.0
      %v1704 = vmax.f32 %v780, 0.0
      %v1705 = vmax.f32 %v781, 0.0
      %v1706 = vmax.f32 %v782, 0.0
      %v1707 = vmax.f32 %v783, 0.0
      %v1708 = vmax.f32 %v784, 0.0
      %v1709 = vmax.f32 %v785, 0.0
      %v1710 = vmax.f32 %v786, 0.0
      %v1711 = vmax.f32 %v787, 0.0
      %v1712 = vmax.f32 %v788, 0.0
      %v1713 = vmax.f32 %v789, 0.0
      %v1714 = vmax.f32 %v790, 0.0
      %v1715 = vmax.f32 %v791, 0.0
      %v1716 = vmax.f32 %v792, 0.0
      %v1717 = vmax.f32 %v793, 0.0
      %v1718 = vmax.f32 %v794, 0.0
      %v1719 = vmax.f32 %v795, 0.0
      %v1720 = vmax.f32 %v796, 0.0
      %v1721 = vmax.f32 %v797, 0.0
      %v1722 = vmax.f32 %v798, 0.0
      %v1723 = vmax.f32 %v799, 0.0
      %v1724 = vmax.f32 %v800, 0.0
      %v1725 = vmax.f32 %v801, 0.0
      %v1726 = vmax.f32 %v802, 0.0
      %v1727 = vmax.f32 %v803, 0.0
      %v1728 = vmax.f32 %v804, 0.0
      %v1729 = vmax.f32 %v805, 0.0
      %v1730 = vmax.f32 %v806, 0.0
      %v1731 = vmax.f32 %v807, 0.0
      %v1732 = vmax.f32 %v808, 0.0
      %v1733 = vmax.f32 %v809, 0.0
      %v1734 = vmax.f32 %v810, 0.0
      %v1735 = vmax.f32 %v811, 0.0
      %v1736 = vmax.f32 %v812, 0.0
      %v1737 = vmax.f32 %v813, 0.0
      %v1738 = vmax.f32 %v814, 0.0
      %v1739 = vmax.f32 %v815, 0.0
      %v1740 = vmax.f32 %v816, 0.0
      %v1741 = vmax.f32 %v817, 0.0
      %v1742 = vmax.f32 %v818, 0.0
      %v1743 = vmax.f32 %v819, 0.0
      %v1744 = vmax.f32 %v820, 0.0
      %v1745 = vmax.f32 %v821, 0.0
      %v1746 = vmax.f32 %v822, 0.0
      %v1747 = vmax.f32 %v823, 0.0
      %v1748 = vmax.f32 %v824, 0.0
      %v1749 = vmax.f32 %v825, 0.0
      %v1750 = vmax.f32 %v826, 0.0
      %v1751 = vmax.f32 %v827, 0.0
      %v1752 = vmax.f32 %v828, 0.0
      %v1753 = vmax.f32 %v829, 0.0
      %v1754 = vmax.f32 %v830, 0.0
      %v1755 = vmax.f32 %v831, 0.0
      %v1756 = vmax.f32 %v832, 0.0
      %v1757 = vmax.f32 %v833, 0.0
      %v1758 = vmax.f32 %v834, 0.0
      %v1759 = vmax.f32 %v835, 0.0
      %v1760 = vmax.f32 %v836, 0.0
      %v1761 = vmax.f32 %v837, 0.0
      %v1762 = vmax.f32 %v838, 0.0
      %v1763 = vmax.f32 %v839, 0.0
      %v1764 = vmax.f32 %v840, 0.0
      %v1765 = vmax.f32 %v841, 0.0
      %v1766 = vmax.f32 %v842, 0.0
      %v1767 = vmax.f32 %v843, 0.0
      %v1768 = vmax.f32 %v844, 0.0
      %v1769 = vmax.f32 %v845, 0.0
      %v1770 = vmax.f32 %v846, 0.0
      %v1771 = vmax.f32 %v847, 0.0
      %v1772 = vmax.f32 %v848, 0.0
      %v1773 = vmax.f32 %v849, 0.0
      %v1774 = vmax.f32 %v850, 0.0
      %v1775 = vmax.f32 %v851, 0.0
      %v1776 = vmax.f32 %v852, 0.0
      %v1777 = vmax.f32 %v853, 0.0
      %v1778 = vmax.f32 %v854, 0.0
      %v1779 = vmax.f32 %v855, 0.0
      %v1780 = vmax.f32 %v856, 0.0
      %v1781 = vmax.f32 %v857, 0.0
      %v1782 = vmax.f32 %v858, 0.0
      %v1783 = vmax.f32 %v859, 0.0
      %v1784 = vmax.f32 %v860, 0.0
      %v1785 = vmax.f32 %v861, 0.0
      %v1786 = vmax.f32 %v862, 0.0
      %v1787 = vmax.f32 %v863, 0.0
      %v1788 = vmax.f32 %v864, 0.0
      %v1789 = vmax.f32 %v865, 0.0
      %v1790 = vmax.f32 %v866, 0.0
      %v1791 = vmax.f32 %v867, 0.0
      %v1792 = vmax.f32 %v868, 0.0
      %v1793 = vmax.f32 %v869, 0.0
      %v1794 = vmax.f32 %v870, 0.0
      %v1795 = vmax.f32 %v871, 0.0
      %v1796 = vmax.f32 %v872, 0.0
      %v1797 = vmax.f32 %v873, 0.0
      %v1798 = vmax.f32 %v874, 0.0
      %v1799 = vmax.f32 %v875, 0.0
      %v1800 = vmax.f32 %v876, 0.0
      %v1801 = vmax.f32 %v877, 0.0
      %v1802 = vmax.f32 %v878, 0.0
      %v1803 = vmax.f32 %v879, 0.0
      %v1804 = vmax.f32 %v880, 0.0
      %v1805 = vmax.f32 %v881, 0.0
      %v1806 = vmax.f32 %v882, 0.0
      %v1807 = vmax.f32 %v883, 0.0
      %v1808 = vmax.f32 %v884, 0.0
      %v1809 = vmax.f32 %v885, 0.0
      %v1810 = vmax.f32 %v886, 0.0
      %v1811 = vmax.f32 %v887, 0.0
      %v1812 = vmax.f32 %v888, 0.0
      %v1813 = vmax.f32 %v889, 0.0
      %v1814 = vmax.f32 %v890, 0.0
      %v1815 = vmax.f32 %v891, 0.0
      %v1816 = vmax.f32 %v892, 0.0
      %v1817 = vmax.f32 %v893, 0.0
      %v1818 = vmax.f32 %v894, 0.0
      %v1819 = vmax.f32 %v895, 0.0
      %v1820 = vmax.f32 %v896, 0.0
      %v1821 = vmax.f32 %v897, 0.0
      %v1822 = vmax.f32 %v898, 0.0
      %v1823 = vmax.f32 %v899, 0.0
      %v1824 = vmax.f32 %v900, 0.0
      %v1825 = vmax.f32 %v901, 0.0
      %v1826 = vmax.f32 %v902, 0.0
      %v1827 = vmax.f32 %v903, 0.0
      %v1828 = vmax.f32 %v904, 0.0
      %v1829 = vmax.f32 %v905, 0.0
      %v1830 = vmax.f32 %v906, 0.0
      %v1831 = vmax.f32 %v907, 0.0
      %v1832 = vmax.f32 %v908, 0.0
      %v1833 = vmax.f32 %v909, 0.0
      %v1834 = vmax.f32 %v910, 0.0
      %v1835 = vmax.f32 %v911, 0.0
      %v1836 = vmax.f32 %v912, 0.0
      %v1837 = vmax.f32 %v913, 0.0
      %v1838 = vmax.f32 %v914, 0.0
      %v1839 = vmax.f32 %v915, 0.0
      %v1840 = vmax.f32 %v916, 0.0
      %v1841 = vmax.f32 %v917, 0.0
      %v1842 = vmax.f32 %v918, 0.0
      %v1843 = vmax.f32 %v919, 0.0
      %v1844 = vmax.f32 %v920, 0.0
      %v1845 = vmax.f32 %v921, 0.0
      %v1846 = vmax.f32 %v922, 0.0
      %v1847 = vmax.f32 %v923, 0.0
      %v1848 = vmax.f32 %v924, 0.0
      %v1849 = vmax.f32 %v925, 0.0
      %v1850 = vmax.f32 %v926, 0.0
      %v1851 = vmax.f32 %v927, 0.0
      %v1852 = vmax.f32 %v928, 0.0
      %v1853 = vmax.f32 %v929, 0.0
      %v1854 = vmax.f32 %v930, 0.0
      %v1855 = vmax.f32 %v931, 0.0
      %v1856 = vmax.f32 %v932, 0.0
      %v1857 = vmax.f32 %v933, 0.0
      %v1858 = vmax.f32 %v934, 0.0
      %v1859 = vmax.f32 %v935, 0.0
      %v1860 = vmax.f32 %v936, 0.0
      %v1861 = vmax.f32 %v937, 0.0
      %v1862 = vmax.f32 %v938, 0.0
      %v1863 = vmax.f32 %v939, 0.0
      %v1864 = vmax.f32 %v940, 0.0
      %v1865 = vmax.f32 %v941, 0.0
      %v1866 = vmax.f32 %v942, 0.0
      %v1867 = vmax.f32 %v943, 0.0
      %v1868 = vmax.f32 %v944, 0.0
      %v1869 = vmax.f32 %v945, 0.0
      %v1870 = vmax.f32 %v946, 0.0
      %v1871 = vmax.f32 %v947, 0.0
      %v1872 = vmax.f32 %v948, 0.0
      %v1873 = vmax.f32 %v949, 0.0
      %v1874 = vmax.f32 %v950, 0.0
      %v1875 = vmax.f32 %v951, 0.0
      %v1876 = vmax.f32 %v952, 0.0
      %v1877 = vmax.f32 %v953, 0.0
      %v1878 = vmax.f32 %v954, 0.0
      %v1879 = vmax.f32 %v955, 0.0
      %v1880 = vmax.f32 %v956, 0.0
      %v1881 = vmax.f32 %v957, 0.0
      %v1882 = vmax.f32 %v958, 0.0
      %v1883 = vmax.f32 %v959, 0.0
      %v1884 = vmax.f32 %v960, 0.0
      %v1885 = vmax.f32 %v961, 0.0
      %v1886 = vmax.f32 %v962, 0.0
      %v1887 = vmax.f32 %v963, 0.0
      %v1888 = vmax.f32 %v964, 0.0
      %v1889 = vmax.f32 %v965, 0.0
      %v1890 = vmax.f32 %v966, 0.0
      %v1891 = vmax.f32 %v967, 0.0
      %v1892 = vmax.f32 %v968, 0.0
      %v1893 = vmax.f32 %v969, 0.0
      %v1894 = vmax.f32 %v970, 0.0
      %v1895 = vmax.f32 %v971, 0.0
      %v1896 = vmax.f32 %v972, 0.0
      %v1897 = vmax.f32 %v973, 0.0
      %v1898 = vmax.f32 %v974, 0.0
      %v1899 = vmax.f32 %v975, 0.0
      %v1900 = vmax.f32 %v976, 0.0
      %v1901 = vmax.f32 %v977, 0.0
      %v1902 = vmax.f32 %v978, 0.0
      %v1903 = vmax.f32 %v979, 0.0
      %v1904 = vmax.f32 %v980, 0.0
      %v1905 = vmax.f32 %v981, 0.0
      %v1906 = vmax.f32 %v982, 0.0
      %v1907 = vmax.f32 %v983, 0.0
      %v1908 = vmax.f32 %v984, 0.0
      %v1909 = vmax.f32 %v985, 0.0
      %v1910 = vmax.f32 %v986, 0.0
      %v1911 = vmax.f32 %v987, 0.0
      %v1912 = vmax.f32 %v988, 0.0
      %v1913 = vmax.f32 %v989, 0.0
      %v1914 = vmax.f32 %v990, 0.0
      %v1915 = vmax.f32 %v991, 0.0
      %v1916 = vmax.f32 %v992, 0.0
      %v1917 = vmax.f32 %v993, 0.0
      %v1918 = vmax.f32 %v994, 0.0
      %v1919 = vmax.f32 %v995, 0.0
      %v1920 = vmax.f32 %v996, 0.0
      %v1921 = vmax.f32 %v997, 0.0
      %v1922 = vmax.f32 %v998, 0.0
      %v1923 = vmax.f32 %v999, 0.0
      %v1924 = vmax.f32 %v1000, 0.0
      %v1925 = vmax.f32 %v1001, 0.0
      %v1926 = vmax.f32 %v1002, 0.0
      %v1927 = vmax.f32 %v1003, 0.0
      %v1928 = vmax.f32 %v1004, 0.0
      %v1929 = vmax.f32 %v1005, 0.0
      %v1930 = vmax.f32 %v1006, 0.0
      %v1931 = vmax.f32 %v1007, 0.0
      %v1932 = vmax.f32 %v1008, 0.0
      %v1933 = vmax.f32 %v1009, 0.0
      %v1934 = vmax.f32 %v1010, 0.0
      %v1935 = vmax.f32 %v1011, 0.0
      %v1936 = vmax.f32 %v1012, 0.0
      %v1937 = vmax.f32 %v1013, 0.0
      %v1938 = vmax.f32 %v1014, 0.0
      %v1939 = vmax.f32 %v1015, 0.0
      %v1940 = vmax.f32 %v1016, 0.0
      %v1941 = vmax.f32 %v1017, 0.0
      %v1942 = vmax.f32 %v1018, 0.0
      %v1943 = vmax.f32 %v1019, 0.0
      %v1944 = vmax.f32 %v1020, 0.0
      %v1945 = vmax.f32 %v1021, 0.0
      %v1946 = vmax.f32 %v1022, 0.0
      %v1947 = vmax.f32 %v1023, 0.0
      %v1948 = vmax.f32 %v1024, 0.0
      %v1949 = vmax.f32 %v1025, 0.0
      %v1950 = vmax.f32 %v1026, 0.0
      %v1951 = vmax.f32 %v1027, 0.0
      %v1952 = vmax.f32 %v1028, 0.0
      %v1953 = vmax.f32 %v1029, 0.0
      %v1954 = vmax.f32 %v1030, 0.0
      %v1955 = vmax.f32 %v1031, 0.0
      %v1956 = vmax.f32 %v1032, 0.0
      %v1957 = vmax.f32 %v1033, 0.0
      %v1958 = vmax.f32 %v1034, 0.0
      %v1959 = vmax.f32 %v1035, 0.0
      %v1960 = vmax.f32 %v1036, 0.0
      %v1961 = vmax.f32 %v1037, 0.0
      %v1962 = vmax.f32 %v1038, 0.0
      %v1963 = vmax.f32 %v1039, 0.0
      %v1964 = vmax.f32 %v1040, 0.0
      %v1965 = vmax.f32 %v1041, 0.0
      %v1966 = vmax.f32 %v1042, 0.0
      %v1967 = vmax.f32 %v1043, 0.0
      %v1968 = vmax.f32 %v1044, 0.0
      %v1969 = vmax.f32 %v1045, 0.0
      %v1970 = vmax.f32 %v1046, 0.0
      %v1971 = vmax.f32 %v1047, 0.0
      %v1972 = vmax.f32 %v1048, 0.0
      %v1973 = vmax.f32 %v1049, 0.0
      %v1974 = vmax.f32 %v1050, 0.0
      %v1975 = vmax.f32 %v1051, 0.0
      %v1976 = vmax.f32 %v1052, 0.0
      %v1977 = vmax.f32 %v1053, 0.0
      %v1978 = vmax.f32 %v1054, 0.0
      %v1979 = vmax.f32 %v1055, 0.0
      %v1980 = vmax.f32 %v1056, 0.0
      %v1981 = vmax.f32 %v1057, 0.0
      %v1982 = vmax.f32 %v1058, 0.0
      %v1983 = vmax.f32 %v1059, 0.0
      %v1984 = vmax.f32 %v1060, 0.0
      %v1985 = vmax.f32 %v1061, 0.0
      %v1986 = vmax.f32 %v1062, 0.0
      %v1987 = vmax.f32 %v1063, 0.0
      %v1988 = vmax.f32 %v1064, 0.0
      %v1989 = vmax.f32 %v1065, 0.0
      %v1990 = vmax.f32 %v1066, 0.0
      %v1991 = vmax.f32 %v1067, 0.0
      %v1992 = vmax.f32 %v1068, 0.0
      %v1993 = vmax.f32 %v1069, 0.0
      %v1994 = vmax.f32 %v1070, 0.0
      %v1995 = vmax.f32 %v1071, 0.0
      %v1996 = vmax.f32 %v1072, 0.0
      %v1997 = vmax.f32 %v1073, 0.0
      %v1998 = vmax.f32 %v1074, 0.0
      %v1999 = vmax.f32 %v1075, 0.0
      %v2000 = vmax.f32 %v1076, 0.0
      %v2001 = vmax.f32 %v1077, 0.0
      %v2002 = vmax.f32 %v1078, 0.0
      %v2003 = vmax.f32 %v1079, 0.0
      %v2004 = vmax.f32 %v1080, 0.0
      %v2005 = vmax.f32 %v1081, 0.0
      %v2006 = vmax.f32 %v1082, 0.0
      %v2007 = vmax.f32 %v1083, 0.0
      %v2008 = vmax.f32 %v1084, 0.0
      %v2009 = vmax.f32 %v1085, 0.0
      %v2010 = vmax.f32 %v1086, 0.0
      %v2011 = vmax.f32 %v1087, 0.0
      %v2012 = vmax.f32 %v1088, 0.0
      %v2013 = vmax.f32 %v1089, 0.0
      %v2014 = vmax.f32 %v1090, 0.0
      %v2015 = vmax.f32 %v1091, 0.0
      %v2016 = vmax.f32 %v1092, 0.0
      %v2017 = vmax.f32 %v1093, 0.0
      %v2018 = vmax.f32 %v1094, 0.0
      %v2019 = vmax.f32 %v1095, 0.0
      %v2020 = vmax.f32 %v1096, 0.0
      %v2021 = vmax.f32 %v1097, 0.0
      %v2022 = vmax.f32 %v1098, 0.0
      %v2023 = vmax.f32 %v1099, 0.0
      %v2024 = vmax.f32 %v1100, 0.0
      %v2025 = vmax.f32 %v1101, 0.0
      %v2026 = vmax.f32 %v1102, 0.0
      %v2027 = vmax.f32 %v1103, 0.0
      %v2028 = vmax.f32 %v1104, 0.0
      %v2029 = vmax.f32 %v1105, 0.0
      %v2030 = vmax.f32 %v1106, 0.0
      %v2031 = vmax.f32 %v1107, 0.0
      %v2032 = vmax.f32 %v1108, 0.0
      %v2033 = vmax.f32 %v1109, 0.0
      %v2034 = vmax.f32 %v1110, 0.0
      %v2035 = vmax.f32 %v1111, 0.0
      %v2036 = vmax.f32 %v1112, 0.0
      %v2037 = vmax.f32 %v1113, 0.0
      %v2038 = vmax.f32 %v1114, 0.0
      %v2039 = vmax.f32 %v1115, 0.0
      %v2040 = vmax.f32 %v1116, 0.0
      %v2041 = vmax.f32 %v1117, 0.0
      %v2042 = vmax.f32 %v1118, 0.0
      %v2043 = vmax.f32 %v1119, 0.0
      %v2044 = vmax.f32 %v1120, 0.0
      %v2045 = vmax.f32 %v1121, 0.0
      %v2046 = vmax.f32 %v1122, 0.0
      %v2047 = vmax.f32 %v1123, 0.0
      %v2048 = vmax.f32 %v1124, 0.0
      %v2049 = vmax.f32 %v1125, 0.0
      %v2050 = vmax.f32 %v1126, 0.0
      %v2051 = vmax.f32 %v1127, 0.0
      %v2052 = vmax.f32 %v1128, 0.0
      %v2053 = vmax.f32 %v1129, 0.0
      %v2054 = vmax.f32 %v1130, 0.0
      %v2055 = vmax.f32 %v1131, 0.0
      %v2056 = vmax.f32 %v1132, 0.0
      %v2057 = vmax.f32 %v1133, 0.0
      %v2058 = vmax.f32 %v1134, 0.0
      %v2059 = vmax.f32 %v1135, 0.0
      %v2060 = vmax.f32 %v1136, 0.0
      %v2061 = vmax.f32 %v1137, 0.0
      %v2062 = vmax.f32 %v1138, 0.0
      %v2063 = vmax.f32 %v1139, 0.0
      %v2064 = vmax.f32 %v1140, 0.0
      %v2065 = vmax.f32 %v1141, 0.0
      %v2066 = vmax.f32 %v1142, 0.0
      %v2067 = vmax.f32 %v1143, 0.0
      %v2068 = vmax.f32 %v1144, 0.0
      %v2069 = vmax.f32 %v1145, 0.0
      %v2070 = vmax.f32 %v1146, 0.0
      %v2071 = vmax.f32 %v1147, 0.0
      %v2072 = vmax.f32 %v1148, 0.0
      %v2073 = vmax.f32 %v1149, 0.0
      %v2074 = vmax.f32 %v1150, 0.0
      %v2075 = vmax.f32 %v1151, 0.0
      %v2076 = vmax.f32 %v1152, 0.0
      %v2077 = vmax.f32 %v1153, 0.0
      %v2078 = vmax.f32 %v1154, 0.0
      %v2079 = vmax.f32 %v1155, 0.0
      %v2080 = vmax.f32 %v1156, 0.0
      %v2081 = vmax.f32 %v1157, 0.0
      %v2082 = vmax.f32 %v1158, 0.0
      %v2083 = vmax.f32 %v1159, 0.0
      %v2084 = vmax.f32 %v1160, 0.0
      %v2085 = vmax.f32 %v1161, 0.0
      %v2086 = vmax.f32 %v1162, 0.0
      %v2087 = vmax.f32 %v1163, 0.0
      %v2088 = vmax.f32 %v1164, 0.0
      %v2089 = vmax.f32 %v1165, 0.0
      %v2090 = vmax.f32 %v1166, 0.0
      %v2091 = vmax.f32 %v1167, 0.0
      %v2092 = vmax.f32 %v1168, 0.0
      %v2093 = vmax.f32 %v1169, 0.0
      %v2094 = vmax.f32 %v1170, 0.0
      %v2095 = vmax.f32 %v1171, 0.0
      %v2096 = vmax.f32 %v1172, 0.0
      %v2097 = vmax.f32 %v1173, 0.0
      %v2098 = vmax.f32 %v1174, 0.0
      %v2099 = vpack.c.bf16 %v1182, %v1175
      %v2100 = vpack.c.bf16 %v1183, %v1176
      %v2101 = vpack.c.bf16 %v1184, %v1177
      %v2102 = vpack.c.bf16 %v1185, %v1178
      %v2103 = vpack.c.bf16 %v1186, %v1179
      %v2104 = vpack.c.bf16 %v1187, %v1180
      %v2105 = vpack.c.bf16 %v1188, %v1181
      %v2106 = vpack.c.bf16 %v1196, %v1189
      %v2107 = vpack.c.bf16 %v1197, %v1190
      %v2108 = vpack.c.bf16 %v1198, %v1191
      %v2109 = vpack.c.bf16 %v1199, %v1192
      %v2110 = vpack.c.bf16 %v1200, %v1193
      %v2111 = vpack.c.bf16 %v1201, %v1194
      %v2112 = vpack.c.bf16 %v1202, %v1195
      %v2113 = vpack.c.bf16 %v1210, %v1203
      %v2114 = vpack.c.bf16 %v1211, %v1204
      %v2115 = vpack.c.bf16 %v1212, %v1205
      %v2116 = vpack.c.bf16 %v1213, %v1206
      %v2117 = vpack.c.bf16 %v1214, %v1207
      %v2118 = vpack.c.bf16 %v1215, %v1208
      %v2119 = vpack.c.bf16 %v1216, %v1209
      %v2120 = vpack.c.bf16 %v1224, %v1217
      %v2121 = vpack.c.bf16 %v1225, %v1218
      %v2122 = vpack.c.bf16 %v1226, %v1219
      %v2123 = vpack.c.bf16 %v1227, %v1220
      %v2124 = vpack.c.bf16 %v1228, %v1221
      %v2125 = vpack.c.bf16 %v1229, %v1222
      %v2126 = vpack.c.bf16 %v1230, %v1223
      %v2127 = vpack.c.bf16 %v1238, %v1231
      %v2128 = vpack.c.bf16 %v1239, %v1232
      %v2129 = vpack.c.bf16 %v1240, %v1233
      %v2130 = vpack.c.bf16 %v1241, %v1234
      %v2131 = vpack.c.bf16 %v1242, %v1235
      %v2132 = vpack.c.bf16 %v1243, %v1236
      %v2133 = vpack.c.bf16 %v1244, %v1237
      %v2134 = vpack.c.bf16 %v1252, %v1245
      %v2135 = vpack.c.bf16 %v1253, %v1246
      %v2136 = vpack.c.bf16 %v1254, %v1247
      %v2137 = vpack.c.bf16 %v1255, %v1248
      %v2138 = vpack.c.bf16 %v1256, %v1249
      %v2139 = vpack.c.bf16 %v1257, %v1250
      %v2140 = vpack.c.bf16 %v1258, %v1251
      %v2141 = vpack.c.bf16 %v1266, %v1259
      %v2142 = vpack.c.bf16 %v1267, %v1260
      %v2143 = vpack.c.bf16 %v1268, %v1261
      %v2144 = vpack.c.bf16 %v1269, %v1262
      %v2145 = vpack.c.bf16 %v1270, %v1263
      %v2146 = vpack.c.bf16 %v1271, %v1264
      %v2147 = vpack.c.bf16 %v1272, %v1265
      %v2148 = vpack.c.bf16 %v1280, %v1273
      %v2149 = vpack.c.bf16 %v1281, %v1274
      %v2150 = vpack.c.bf16 %v1282, %v1275
      %v2151 = vpack.c.bf16 %v1283, %v1276
      %v2152 = vpack.c.bf16 %v1284, %v1277
      %v2153 = vpack.c.bf16 %v1285, %v1278
      %v2154 = vpack.c.bf16 %v1286, %v1279
      %v2155 = vpack.c.bf16 %v1294, %v1287
      %v2156 = vpack.c.bf16 %v1295, %v1288
      %v2157 = vpack.c.bf16 %v1296, %v1289
      %v2158 = vpack.c.bf16 %v1297, %v1290
      %v2159 = vpack.c.bf16 %v1298, %v1291
      %v2160 = vpack.c.bf16 %v1299, %v1292
      %v2161 = vpack.c.bf16 %v1300, %v1293
      %v2162 = vpack.c.bf16 %v1308, %v1301
      %v2163 = vpack.c.bf16 %v1309, %v1302
      %v2164 = vpack.c.bf16 %v1310, %v1303
      %v2165 = vpack.c.bf16 %v1311, %v1304
      %v2166 = vpack.c.bf16 %v1312, %v1305
      %v2167 = vpack.c.bf16 %v1313, %v1306
      %v2168 = vpack.c.bf16 %v1314, %v1307
      %v2169 = vpack.c.bf16 %v1322, %v1315
      %v2170 = vpack.c.bf16 %v1323, %v1316
      %v2171 = vpack.c.bf16 %v1324, %v1317
      %v2172 = vpack.c.bf16 %v1325, %v1318
      %v2173 = vpack.c.bf16 %v1326, %v1319
      %v2174 = vpack.c.bf16 %v1327, %v1320
      %v2175 = vpack.c.bf16 %v1328, %v1321
      %v2176 = vpack.c.bf16 %v1336, %v1329
      %v2177 = vpack.c.bf16 %v1337, %v1330
      %v2178 = vpack.c.bf16 %v1338, %v1331
      %v2179 = vpack.c.bf16 %v1339, %v1332
      %v2180 = vpack.c.bf16 %v1340, %v1333
      %v2181 = vpack.c.bf16 %v1341, %v1334
      %v2182 = vpack.c.bf16 %v1342, %v1335
      %v2183 = vpack.c.bf16 %v1350, %v1343
      %v2184 = vpack.c.bf16 %v1351, %v1344
      %v2185 = vpack.c.bf16 %v1352, %v1345
      %v2186 = vpack.c.bf16 %v1353, %v1346
      %v2187 = vpack.c.bf16 %v1354, %v1347
      %v2188 = vpack.c.bf16 %v1355, %v1348
      %v2189 = vpack.c.bf16 %v1356, %v1349
      %v2190 = vpack.c.bf16 %v1364, %v1357
      %v2191 = vpack.c.bf16 %v1365, %v1358
      %v2192 = vpack.c.bf16 %v1366, %v1359
      %v2193 = vpack.c.bf16 %v1367, %v1360
      %v2194 = vpack.c.bf16 %v1368, %v1361
      %v2195 = vpack.c.bf16 %v1369, %v1362
      %v2196 = vpack.c.bf16 %v1370, %v1363
      %v2197 = vpack.c.bf16 %v1378, %v1371
      %v2198 = vpack.c.bf16 %v1379, %v1372
      %v2199 = vpack.c.bf16 %v1380, %v1373
      %v2200 = vpack.c.bf16 %v1381, %v1374
      %v2201 = vpack.c.bf16 %v1382, %v1375
      %v2202 = vpack.c.bf16 %v1383, %v1376
      %v2203 = vpack.c.bf16 %v1384, %v1377
      %v2204 = vpack.c.bf16 %v1392, %v1385
      %v2205 = vpack.c.bf16 %v1393, %v1386
      %v2206 = vpack.c.bf16 %v1394, %v1387
      %v2207 = vpack.c.bf16 %v1395, %v1388
      %v2208 = vpack.c.bf16 %v1396, %v1389
      %v2209 = vpack.c.bf16 %v1397, %v1390
      %v2210 = vpack.c.bf16 %v1398, %v1391
      %v2211 = vpack.c.bf16 %v1406, %v1399
      %v2212 = vpack.c.bf16 %v1407, %v1400
      %v2213 = vpack.c.bf16 %v1408, %v1401
      %v2214 = vpack.c.bf16 %v1409, %v1402
      %v2215 = vpack.c.bf16 %v1410, %v1403
      %v2216 = vpack.c.bf16 %v1411, %v1404
      %v2217 = vpack.c.bf16 %v1412, %v1405
      %v2218 = vpack.c.bf16 %v1420, %v1413
      %v2219 = vpack.c.bf16 %v1421, %v1414
      %v2220 = vpack.c.bf16 %v1422, %v1415
      %v2221 = vpack.c.bf16 %v1423, %v1416
      %v2222 = vpack.c.bf16 %v1424, %v1417
      %v2223 = vpack.c.bf16 %v1425, %v1418
      %v2224 = vpack.c.bf16 %v1426, %v1419
      %v2225 = vpack.c.bf16 %v1434, %v1427
      %v2226 = vpack.c.bf16 %v1435, %v1428
      %v2227 = vpack.c.bf16 %v1436, %v1429
      %v2228 = vpack.c.bf16 %v1437, %v1430
      %v2229 = vpack.c.bf16 %v1438, %v1431
      %v2230 = vpack.c.bf16 %v1439, %v1432
      %v2231 = vpack.c.bf16 %v1440, %v1433
      %v2232 = vpack.c.bf16 %v1448, %v1441
      %v2233 = vpack.c.bf16 %v1449, %v1442
      %v2234 = vpack.c.bf16 %v1450, %v1443
      %v2235 = vpack.c.bf16 %v1451, %v1444
      %v2236 = vpack.c.bf16 %v1452, %v1445
      %v2237 = vpack.c.bf16 %v1453, %v1446
      %v2238 = vpack.c.bf16 %v1454, %v1447
      %v2239 = vpack.c.bf16 %v1462, %v1455
      %v2240 = vpack.c.bf16 %v1463, %v1456
      %v2241 = vpack.c.bf16 %v1464, %v1457
      %v2242 = vpack.c.bf16 %v1465, %v1458
      %v2243 = vpack.c.bf16 %v1466, %v1459
      %v2244 = vpack.c.bf16 %v1467, %v1460
      %v2245 = vpack.c.bf16 %v1468, %v1461
      %v2246 = vpack.c.bf16 %v1476, %v1469
      %v2247 = vpack.c.bf16 %v1477, %v1470
      %v2248 = vpack.c.bf16 %v1478, %v1471
      %v2249 = vpack.c.bf16 %v1479, %v1472
      %v2250 = vpack.c.bf16 %v1480, %v1473
      %v2251 = vpack.c.bf16 %v1481, %v1474
      %v2252 = vpack.c.bf16 %v1482, %v1475
      %v2253 = vpack.c.bf16 %v1490, %v1483
      %v2254 = vpack.c.bf16 %v1491, %v1484
      %v2255 = vpack.c.bf16 %v1492, %v1485
      %v2256 = vpack.c.bf16 %v1493, %v1486
      %v2257 = vpack.c.bf16 %v1494, %v1487
      %v2258 = vpack.c.bf16 %v1495, %v1488
      %v2259 = vpack.c.bf16 %v1496, %v1489
      %v2260 = vpack.c.bf16 %v1504, %v1497
      %v2261 = vpack.c.bf16 %v1505, %v1498
      %v2262 = vpack.c.bf16 %v1506, %v1499
      %v2263 = vpack.c.bf16 %v1507, %v1500
      %v2264 = vpack.c.bf16 %v1508, %v1501
      %v2265 = vpack.c.bf16 %v1509, %v1502
      %v2266 = vpack.c.bf16 %v1510, %v1503
      %v2267 = vpack.c.bf16 %v1518, %v1511
      %v2268 = vpack.c.bf16 %v1519, %v1512
      %v2269 = vpack.c.bf16 %v1520, %v1513
      %v2270 = vpack.c.bf16 %v1521, %v1514
      %v2271 = vpack.c.bf16 %v1522, %v1515
      %v2272 = vpack.c.bf16 %v1523, %v1516
      %v2273 = vpack.c.bf16 %v1524, %v1517
      %v2274 = vpack.c.bf16 %v1532, %v1525
      %v2275 = vpack.c.bf16 %v1533, %v1526
      %v2276 = vpack.c.bf16 %v1534, %v1527
      %v2277 = vpack.c.bf16 %v1535, %v1528
      %v2278 = vpack.c.bf16 %v1536, %v1529
      %v2279 = vpack.c.bf16 %v1537, %v1530
      %v2280 = vpack.c.bf16 %v1538, %v1531
      %v2281 = vpack.c.bf16 %v1546, %v1539
      %v2282 = vpack.c.bf16 %v1547, %v1540
      %v2283 = vpack.c.bf16 %v1548, %v1541
      %v2284 = vpack.c.bf16 %v1549, %v1542
      %v2285 = vpack.c.bf16 %v1550, %v1543
      %v2286 = vpack.c.bf16 %v1551, %v1544
      %v2287 = vpack.c.bf16 %v1552, %v1545
      %v2288 = vpack.c.bf16 %v1560, %v1553
      %v2289 = vpack.c.bf16 %v1561, %v1554
      %v2290 = vpack.c.bf16 %v1562, %v1555
      %v2291 = vpack.c.bf16 %v1563, %v1556
      %v2292 = vpack.c.bf16 %v1564, %v1557
      %v2293 = vpack.c.bf16 %v1565, %v1558
      %v2294 = vpack.c.bf16 %v1566, %v1559
      %v2295 = vpack.c.bf16 %v1574, %v1567
      %v2296 = vpack.c.bf16 %v1575, %v1568
      %v2297 = vpack.c.bf16 %v1576, %v1569
      %v2298 = vpack.c.bf16 %v1577, %v1570
      %v2299 = vpack.c.bf16 %v1578, %v1571
      %v2300 = vpack.c.bf16 %v1579, %v1572
      %v2301 = vpack.c.bf16 %v1580, %v1573
      %v2302 = vpack.c.bf16 %v1588, %v1581
      %v2303 = vpack.c.bf16 %v1589, %v1582
      %v2304 = vpack.c.bf16 %v1590, %v1583
      %v2305 = vpack.c.bf16 %v1591, %v1584
      %v2306 = vpack.c.bf16 %v1592, %v1585
      %v2307 = vpack.c.bf16 %v1593, %v1586
      %v2308 = vpack.c.bf16 %v1594, %v1587
      %v2309 = vpack.c.bf16 %v1602, %v1595
      %v2310 = vpack.c.bf16 %v1603, %v1596
      %v2311 = vpack.c.bf16 %v1604, %v1597
      %v2312 = vpack.c.bf16 %v1605, %v1598
      %v2313 = vpack.c.bf16 %v1606, %v1599
      %v2314 = vpack.c.bf16 %v1607, %v1600
      %v2315 = vpack.c.bf16 %v1608, %v1601
      %v2316 = vpack.c.bf16 %v1616, %v1609
      %v2317 = vpack.c.bf16 %v1617, %v1610
      %v2318 = vpack.c.bf16 %v1618, %v1611
      %v2319 = vpack.c.bf16 %v1619, %v1612
      %v2320 = vpack.c.bf16 %v1620, %v1613
      %v2321 = vpack.c.bf16 %v1621, %v1614
      %v2322 = vpack.c.bf16 %v1622, %v1615
      %v2323 = vpack.c.bf16 %v1630, %v1623
      %v2324 = vpack.c.bf16 %v1631, %v1624
      %v2325 = vpack.c.bf16 %v1632, %v1625
      %v2326 = vpack.c.bf16 %v1633, %v1626
      %v2327 = vpack.c.bf16 %v1634, %v1627
      %v2328 = vpack.c.bf16 %v1635, %v1628
      %v2329 = vpack.c.bf16 %v1636, %v1629
      %v2330 = vpack.c.bf16 %v1644, %v1637
      %v2331 = vpack.c.bf16 %v1645, %v1638
      %v2332 = vpack.c.bf16 %v1646, %v1639
      %v2333 = vpack.c.bf16 %v1647, %v1640
      %v2334 = vpack.c.bf16 %v1648, %v1641
      %v2335 = vpack.c.bf16 %v1649, %v1642
      %v2336 = vpack.c.bf16 %v1650, %v1643
      %v2337 = vpack.c.bf16 %v1658, %v1651
      %v2338 = vpack.c.bf16 %v1659, %v1652
      %v2339 = vpack.c.bf16 %v1660, %v1653
      %v2340 = vpack.c.bf16 %v1661, %v1654
      %v2341 = vpack.c.bf16 %v1662, %v1655
      %v2342 = vpack.c.bf16 %v1663, %v1656
      %v2343 = vpack.c.bf16 %v1664, %v1657
      %v2344 = vpack.c.bf16 %v1672, %v1665
      %v2345 = vpack.c.bf16 %v1673, %v1666
      %v2346 = vpack.c.bf16 %v1674, %v1667
      %v2347 = vpack.c.bf16 %v1675, %v1668
      %v2348 = vpack.c.bf16 %v1676, %v1669
      %v2349 = vpack.c.bf16 %v1677, %v1670
      %v2350 = vpack.c.bf16 %v1678, %v1671
      %v2351 = vpack.c.bf16 %v1686, %v1679
      %v2352 = vpack.c.bf16 %v1687, %v1680
      %v2353 = vpack.c.bf16 %v1688, %v1681
      %v2354 = vpack.c.bf16 %v1689, %v1682
      %v2355 = vpack.c.bf16 %v1690, %v1683
      %v2356 = vpack.c.bf16 %v1691, %v1684
      %v2357 = vpack.c.bf16 %v1692, %v1685
      %v2358 = vpack.c.bf16 %v1700, %v1693
      %v2359 = vpack.c.bf16 %v1701, %v1694
      %v2360 = vpack.c.bf16 %v1702, %v1695
      %v2361 = vpack.c.bf16 %v1703, %v1696
      %v2362 = vpack.c.bf16 %v1704, %v1697
      %v2363 = vpack.c.bf16 %v1705, %v1698
      %v2364 = vpack.c.bf16 %v1706, %v1699
      %v2365 = vpack.c.bf16 %v1714, %v1707
      %v2366 = vpack.c.bf16 %v1715, %v1708
      %v2367 = vpack.c.bf16 %v1716, %v1709
      %v2368 = vpack.c.bf16 %v1717, %v1710
      %v2369 = vpack.c.bf16 %v1718, %v1711
      %v2370 = vpack.c.bf16 %v1719, %v1712
      %v2371 = vpack.c.bf16 %v1720, %v1713
      %v2372 = vpack.c.bf16 %v1728, %v1721
      %v2373 = vpack.c.bf16 %v1729, %v1722
      %v2374 = vpack.c.bf16 %v1730, %v1723
      %v2375 = vpack.c.bf16 %v1731, %v1724
      %v2376 = vpack.c.bf16 %v1732, %v1725
      %v2377 = vpack.c.bf16 %v1733, %v1726
      %v2378 = vpack.c.bf16 %v1734, %v1727
      %v2379 = vpack.c.bf16 %v1742, %v1735
      %v2380 = vpack.c.bf16 %v1743, %v1736
      %v2381 = vpack.c.bf16 %v1744, %v1737
      %v2382 = vpack.c.bf16 %v1745, %v1738
      %v2383 = vpack.c.bf16 %v1746, %v1739
      %v2384 = vpack.c.bf16 %v1747, %v1740
      %v2385 = vpack.c.bf16 %v1748, %v1741
      %v2386 = vpack.c.bf16 %v1756, %v1749
      %v2387 = vpack.c.bf16 %v1757, %v1750
      %v2388 = vpack.c.bf16 %v1758, %v1751
      %v2389 = vpack.c.bf16 %v1759, %v1752
      %v2390 = vpack.c.bf16 %v1760, %v1753
      %v2391 = vpack.c.bf16 %v1761, %v1754
      %v2392 = vpack.c.bf16 %v1762, %v1755
      %v2393 = vpack.c.bf16 %v1770, %v1763
      %v2394 = vpack.c.bf16 %v1771, %v1764
      %v2395 = vpack.c.bf16 %v1772, %v1765
      %v2396 = vpack.c.bf16 %v1773, %v1766
      %v2397 = vpack.c.bf16 %v1774, %v1767
      %v2398 = vpack.c.bf16 %v1775, %v1768
      %v2399 = vpack.c.bf16 %v1776, %v1769
      %v2400 = vpack.c.bf16 %v1784, %v1777
      %v2401 = vpack.c.bf16 %v1785, %v1778
      %v2402 = vpack.c.bf16 %v1786, %v1779
      %v2403 = vpack.c.bf16 %v1787, %v1780
      %v2404 = vpack.c.bf16 %v1788, %v1781
      %v2405 = vpack.c.bf16 %v1789, %v1782
      %v2406 = vpack.c.bf16 %v1790, %v1783
      %v2407 = vpack.c.bf16 %v1798, %v1791
      %v2408 = vpack.c.bf16 %v1799, %v1792
      %v2409 = vpack.c.bf16 %v1800, %v1793
      %v2410 = vpack.c.bf16 %v1801, %v1794
      %v2411 = vpack.c.bf16 %v1802, %v1795
      %v2412 = vpack.c.bf16 %v1803, %v1796
      %v2413 = vpack.c.bf16 %v1804, %v1797
      %v2414 = vpack.c.bf16 %v1812, %v1805
      %v2415 = vpack.c.bf16 %v1813, %v1806
      %v2416 = vpack.c.bf16 %v1814, %v1807
      %v2417 = vpack.c.bf16 %v1815, %v1808
      %v2418 = vpack.c.bf16 %v1816, %v1809
      %v2419 = vpack.c.bf16 %v1817, %v1810
      %v2420 = vpack.c.bf16 %v1818, %v1811
      %v2421 = vpack.c.bf16 %v1826, %v1819
      %v2422 = vpack.c.bf16 %v1827, %v1820
      %v2423 = vpack.c.bf16 %v1828, %v1821
      %v2424 = vpack.c.bf16 %v1829, %v1822
      %v2425 = vpack.c.bf16 %v1830, %v1823
      %v2426 = vpack.c.bf16 %v1831, %v1824
      %v2427 = vpack.c.bf16 %v1832, %v1825
      %v2428 = vpack.c.bf16 %v1840, %v1833
      %v2429 = vpack.c.bf16 %v1841, %v1834
      %v2430 = vpack.c.bf16 %v1842, %v1835
      %v2431 = vpack.c.bf16 %v1843, %v1836
      %v2432 = vpack.c.bf16 %v1844, %v1837
      %v2433 = vpack.c.bf16 %v1845, %v1838
      %v2434 = vpack.c.bf16 %v1846, %v1839
      %v2435 = vpack.c.bf16 %v1854, %v1847
      %v2436 = vpack.c.bf16 %v1855, %v1848
      %v2437 = vpack.c.bf16 %v1856, %v1849
      %v2438 = vpack.c.bf16 %v1857, %v1850
      %v2439 = vpack.c.bf16 %v1858, %v1851
      %v2440 = vpack.c.bf16 %v1859, %v1852
      %v2441 = vpack.c.bf16 %v1860, %v1853
      %v2442 = vpack.c.bf16 %v1868, %v1861
      %v2443 = vpack.c.bf16 %v1869, %v1862
      %v2444 = vpack.c.bf16 %v1870, %v1863
      %v2445 = vpack.c.bf16 %v1871, %v1864
      %v2446 = vpack.c.bf16 %v1872, %v1865
      %v2447 = vpack.c.bf16 %v1873, %v1866
      %v2448 = vpack.c.bf16 %v1874, %v1867
      %v2449 = vpack.c.bf16 %v1882, %v1875
      %v2450 = vpack.c.bf16 %v1883, %v1876
      %v2451 = vpack.c.bf16 %v1884, %v1877
      %v2452 = vpack.c.bf16 %v1885, %v1878
      %v2453 = vpack.c.bf16 %v1886, %v1879
      %v2454 = vpack.c.bf16 %v1887, %v1880
      %v2455 = vpack.c.bf16 %v1888, %v1881
      %v2456 = vpack.c.bf16 %v1896, %v1889
      %v2457 = vpack.c.bf16 %v1897, %v1890
      %v2458 = vpack.c.bf16 %v1898, %v1891
      %v2459 = vpack.c.bf16 %v1899, %v1892
      %v2460 = vpack.c.bf16 %v1900, %v1893
      %v2461 = vpack.c.bf16 %v1901, %v1894
      %v2462 = vpack.c.bf16 %v1902, %v1895
      %v2463 = vpack.c.bf16 %v1910, %v1903
      %v2464 = vpack.c.bf16 %v1911, %v1904
      %v2465 = vpack.c.bf16 %v1912, %v1905
      %v2466 = vpack.c.bf16 %v1913, %v1906
      %v2467 = vpack.c.bf16 %v1914, %v1907
      %v2468 = vpack.c.bf16 %v1915, %v1908
      %v2469 = vpack.c.bf16 %v1916, %v1909
      %v2470 = vpack.c.bf16 %v1924, %v1917
      %v2471 = vpack.c.bf16 %v1925, %v1918
      %v2472 = vpack.c.bf16 %v1926, %v1919
      %v2473 = vpack.c.bf16 %v1927, %v1920
      %v2474 = vpack.c.bf16 %v1928, %v1921
      %v2475 = vpack.c.bf16 %v1929, %v1922
      %v2476 = vpack.c.bf16 %v1930, %v1923
      %v2477 = vpack.c.bf16 %v1938, %v1931
      %v2478 = vpack.c.bf16 %v1939, %v1932
      %v2479 = vpack.c.bf16 %v1940, %v1933
      %v2480 = vpack.c.bf16 %v1941, %v1934
      %v2481 = vpack.c.bf16 %v1942, %v1935
      %v2482 = vpack.c.bf16 %v1943, %v1936
      %v2483 = vpack.c.bf16 %v1944, %v1937
      %v2484 = vpack.c.bf16 %v1952, %v1945
      %v2485 = vpack.c.bf16 %v1953, %v1946
      %v2486 = vpack.c.bf16 %v1954, %v1947
      %v2487 = vpack.c.bf16 %v1955, %v1948
      %v2488 = vpack.c.bf16 %v1956, %v1949
      %v2489 = vpack.c.bf16 %v1957, %v1950
      %v2490 = vpack.c.bf16 %v1958, %v1951
      %v2491 = vpack.c.bf16 %v1966, %v1959
      %v2492 = vpack.c.bf16 %v1967, %v1960
      %v2493 = vpack.c.bf16 %v1968, %v1961
      %v2494 = vpack.c.bf16 %v1969, %v1962
      %v2495 = vpack.c.bf16 %v1970, %v1963
      %v2496 = vpack.c.bf16 %v1971, %v1964
      %v2497 = vpack.c.bf16 %v1972, %v1965
      %v2498 = vpack.c.bf16 %v1980, %v1973
      %v2499 = vpack.c.bf16 %v1981, %v1974
      %v2500 = vpack.c.bf16 %v1982, %v1975
      %v2501 = vpack.c.bf16 %v1983, %v1976
      %v2502 = vpack.c.bf16 %v1984, %v1977
      %v2503 = vpack.c.bf16 %v1985, %v1978
      %v2504 = vpack.c.bf16 %v1986, %v1979
      %v2505 = vpack.c.bf16 %v1994, %v1987
      %v2506 = vpack.c.bf16 %v1995, %v1988
      %v2507 = vpack.c.bf16 %v1996, %v1989
      %v2508 = vpack.c.bf16 %v1997, %v1990
      %v2509 = vpack.c.bf16 %v1998, %v1991
      %v2510 = vpack.c.bf16 %v1999, %v1992
      %v2511 = vpack.c.bf16 %v2000, %v1993
      %v2512 = vpack.c.bf16 %v2008, %v2001
      %v2513 = vpack.c.bf16 %v2009, %v2002
      %v2514 = vpack.c.bf16 %v2010, %v2003
      %v2515 = vpack.c.bf16 %v2011, %v2004
      %v2516 = vpack.c.bf16 %v2012, %v2005
      %v2517 = vpack.c.bf16 %v2013, %v2006
      %v2518 = vpack.c.bf16 %v2014, %v2007
      %v2519 = vpack.c.bf16 %v2022, %v2015
      %v2520 = vpack.c.bf16 %v2023, %v2016
      %v2521 = vpack.c.bf16 %v2024, %v2017
      %v2522 = vpack.c.bf16 %v2025, %v2018
      %v2523 = vpack.c.bf16 %v2026, %v2019
      %v2524 = vpack.c.bf16 %v2027, %v2020
      %v2525 = vpack.c.bf16 %v2028, %v2021
      %v2526 = vpack.c.bf16 %v2036, %v2029
      %v2527 = vpack.c.bf16 %v2037, %v2030
      %v2528 = vpack.c.bf16 %v2038, %v2031
      %v2529 = vpack.c.bf16 %v2039, %v2032
      %v2530 = vpack.c.bf16 %v2040, %v2033
      %v2531 = vpack.c.bf16 %v2041, %v2034
      %v2532 = vpack.c.bf16 %v2042, %v2035
      %v2533 = vpack.c.bf16 %v2050, %v2043
      %v2534 = vpack.c.bf16 %v2051, %v2044
      %v2535 = vpack.c.bf16 %v2052, %v2045
      %v2536 = vpack.c.bf16 %v2053, %v2046
      %v2537 = vpack.c.bf16 %v2054, %v2047
      %v2538 = vpack.c.bf16 %v2055, %v2048
      %v2539 = vpack.c.bf16 %v2056, %v2049
      %v2540 = vpack.c.bf16 %v2064, %v2057
      %v2541 = vpack.c.bf16 %v2065, %v2058
      %v2542 = vpack.c.bf16 %v2066, %v2059
      %v2543 = vpack.c.bf16 %v2067, %v2060
      %v2544 = vpack.c.bf16 %v2068, %v2061
      %v2545 = vpack.c.bf16 %v2069, %v2062
      %v2546 = vpack.c.bf16 %v2070, %v2063
      %v2547 = vpack.c.bf16 %v2078, %v2071
      %v2548 = vpack.c.bf16 %v2079, %v2072
      %v2549 = vpack.c.bf16 %v2080, %v2073
      %v2550 = vpack.c.bf16 %v2081, %v2074
      %v2551 = vpack.c.bf16 %v2082, %v2075
      %v2552 = vpack.c.bf16 %v2083, %v2076
      %v2553 = vpack.c.bf16 %v2084, %v2077
      %v2554 = vpack.c.bf16 %v2092, %v2085
      %v2555 = vpack.c.bf16 %v2093, %v2086
      %v2556 = vpack.c.bf16 %v2094, %v2087
      %v2557 = vpack.c.bf16 %v2095, %v2088
      %v2558 = vpack.c.bf16 %v2096, %v2089
      %v2559 = vpack.c.bf16 %v2097, %v2090
      %v2560 = vpack.c.bf16 %v2098, %v2091
      %v2561 = vld [vmem:[%s229] sm:$0xff]
      %v2562 = vld [vmem:[%s229 + $0x8] sm:$0xff]
      %v2563 = vld [vmem:[%s229 + $0x10] sm:$0xff]
      %v2564 = vld [vmem:[%s229 + $0x18] sm:$0xff]
      %v2565 = vld [vmem:[%s229 + $0x20] sm:$0xff]
      %v2566 = vld [vmem:[%s229 + $0x28] sm:$0xff]
      %v2567 = vld [vmem:[%s229 + $0x30] sm:$0xff]
      %v2568 = vld [vmem:[%s229 + $0x38] sm:$0xff]
      %v2569 = vld [vmem:[%s229 + $0x40] sm:$0xff]
      %v2570 = vld [vmem:[%s229 + $0x48] sm:$0xff]
      %v2571 = vld [vmem:[%s229 + $0x50] sm:$0xff]
      %v2572 = vld [vmem:[%s229 + $0x58] sm:$0xff]
      %v2573 = vld [vmem:[%s229 + $0x60] sm:$0xff]
      %v2574 = vld [vmem:[%s229 + $0x68] sm:$0xff]
      %v2575 = vld [vmem:[%s229 + $0x70] sm:$0xff]
      %v2576 = vld [vmem:[%s229 + $0x78] sm:$0xff]
      %v2577 = vld [vmem:[%s229 + $0x80] sm:$0xff]
      %v2578 = vld [vmem:[%s229 + $0x88] sm:$0xff]
      %v2579 = vld [vmem:[%s229 + $0x90] sm:$0xff]
      %v2580 = vld [vmem:[%s229 + $0x98] sm:$0xff]
      %v2581 = vld [vmem:[%s229 + $0xa0] sm:$0xff]
      %v2582 = vld [vmem:[%s229 + $0xa8] sm:$0xff]
      %v2583 = vld [vmem:[%s229 + $0xb0] sm:$0xff]
      %v2584 = vld [vmem:[%s229 + $0xb8] sm:$0xff]
      %v2585 = vld [vmem:[%s229 + $0xc0] sm:$0xff]
      %v2586 = vld [vmem:[%s229 + $0xc8] sm:$0xff]
      %v2587 = vld [vmem:[%s229 + $0xd0] sm:$0xff]
      %v2588 = vld [vmem:[%s229 + $0xd8] sm:$0xff]
      %v2589 = vld [vmem:[%s229 + $0xe0] sm:$0xff]
      %v2590 = vld [vmem:[%s229 + $0xe8] sm:$0xff]
      %v2591 = vld [vmem:[%s229 + $0xf0] sm:$0xff]
      %v2592 = vld [vmem:[%s229 + $0xf8] sm:$0xff]
      %v2593 = vld [vmem:[%s229 + $0x100] sm:$0xff]
      %v2594 = vld [vmem:[%s229 + $0x108] sm:$0xff]
      %v2595 = vld [vmem:[%s229 + $0x110] sm:$0xff]
      %v2596 = vld [vmem:[%s229 + $0x118] sm:$0xff]
      %v2597 = vld [vmem:[%s229 + $0x120] sm:$0xff]
      %v2598 = vld [vmem:[%s229 + $0x128] sm:$0xff]
      %v2599 = vld [vmem:[%s229 + $0x130] sm:$0xff]
      %v2600 = vld [vmem:[%s229 + $0x138] sm:$0xff]
      %v2601 = vld [vmem:[%s229 + $0x140] sm:$0xff]
      %v2602 = vld [vmem:[%s229 + $0x148] sm:$0xff]
      %v2603 = vld [vmem:[%s229 + $0x150] sm:$0xff]
      %v2604 = vld [vmem:[%s229 + $0x158] sm:$0xff]
      %v2605 = vld [vmem:[%s229 + $0x160] sm:$0xff]
      %v2606 = vld [vmem:[%s229 + $0x168] sm:$0xff]
      %v2607 = vld [vmem:[%s229 + $0x170] sm:$0xff]
      %v2608 = vld [vmem:[%s229 + $0x178] sm:$0xff]
      %v2609 = vld [vmem:[%s229 + $0x180] sm:$0xff]
      %v2610 = vld [vmem:[%s229 + $0x188] sm:$0xff]
      %v2611 = vld [vmem:[%s229 + $0x190] sm:$0xff]
      %v2612 = vld [vmem:[%s229 + $0x198] sm:$0xff]
      %v2613 = vld [vmem:[%s229 + $0x1a0] sm:$0xff]
      %v2614 = vld [vmem:[%s229 + $0x1a8] sm:$0xff]
      %v2615 = vld [vmem:[%s229 + $0x1b0] sm:$0xff]
      %v2616 = vld [vmem:[%s229 + $0x1b8] sm:$0xff]
      %v2617 = vld [vmem:[%s229 + $0x1c0] sm:$0xff]
      %v2618 = vld [vmem:[%s229 + $0x1c8] sm:$0xff]
      %v2619 = vld [vmem:[%s229 + $0x1d0] sm:$0xff]
      %v2620 = vld [vmem:[%s229 + $0x1d8] sm:$0xff]
      %v2621 = vld [vmem:[%s229 + $0x1e0] sm:$0xff]
      %v2622 = vld [vmem:[%s229 + $0x1e8] sm:$0xff]
      %v2623 = vld [vmem:[%s229 + $0x1f0] sm:$0xff]
      %v2624 = vld [vmem:[%s229 + $0x1f8] sm:$0xff]
      %v2625 = vld [vmem:[%s229 + $0x200] sm:$0xff]
      %v2626 = vld [vmem:[%s229 + $0x208] sm:$0xff]
      %v2627 = vld [vmem:[%s229 + $0x210] sm:$0xff]
      %v2628 = vld [vmem:[%s229 + $0x218] sm:$0xff]
      %v2629 = vld [vmem:[%s229 + $0x220] sm:$0xff]
      %v2630 = vld [vmem:[%s229 + $0x228] sm:$0xff]
      %v2631 = vld [vmem:[%s229 + $0x230] sm:$0xff]
      %v2632 = vld [vmem:[%s229 + $0x238] sm:$0xff]
      %v2633 = vld [vmem:[%s229 + $0x240] sm:$0xff]
      %v2634 = vld [vmem:[%s229 + $0x248] sm:$0xff]
      %v2635 = vld [vmem:[%s229 + $0x250] sm:$0xff]
      %v2636 = vld [vmem:[%s229 + $0x258] sm:$0xff]
      %v2637 = vld [vmem:[%s229 + $0x260] sm:$0xff]
      %v2638 = vld [vmem:[%s229 + $0x268] sm:$0xff]
      %v2639 = vld [vmem:[%s229 + $0x270] sm:$0xff]
      %v2640 = vld [vmem:[%s229 + $0x278] sm:$0xff]
      %v2641 = vld [vmem:[%s229 + $0x280] sm:$0xff]
      %v2642 = vld [vmem:[%s229 + $0x288] sm:$0xff]
      %v2643 = vld [vmem:[%s229 + $0x290] sm:$0xff]
      %v2644 = vld [vmem:[%s229 + $0x298] sm:$0xff]
      %v2645 = vld [vmem:[%s229 + $0x2a0] sm:$0xff]
      %v2646 = vld [vmem:[%s229 + $0x2a8] sm:$0xff]
      %v2647 = vld [vmem:[%s229 + $0x2b0] sm:$0xff]
      %v2648 = vld [vmem:[%s229 + $0x2b8] sm:$0xff]
      %v2649 = vld [vmem:[%s229 + $0x2c0] sm:$0xff]
      %v2650 = vld [vmem:[%s229 + $0x2c8] sm:$0xff]
      %v2651 = vld [vmem:[%s229 + $0x2d0] sm:$0xff]
      %v2652 = vld [vmem:[%s229 + $0x2d8] sm:$0xff]
      %v2653 = vld [vmem:[%s229 + $0x2e0] sm:$0xff]
      %v2654 = vld [vmem:[%s229 + $0x2e8] sm:$0xff]
      %v2655 = vld [vmem:[%s229 + $0x2f0] sm:$0xff]
      %v2656 = vld [vmem:[%s229 + $0x2f8] sm:$0xff]
      %v2657 = vld [vmem:[%s229 + $0x300] sm:$0xff]
      %v2658 = vld [vmem:[%s229 + $0x308] sm:$0xff]
      %v2659 = vld [vmem:[%s229 + $0x310] sm:$0xff]
      %v2660 = vld [vmem:[%s229 + $0x318] sm:$0xff]
      %v2661 = vld [vmem:[%s229 + $0x320] sm:$0xff]
      %v2662 = vld [vmem:[%s229 + $0x328] sm:$0xff]
      %v2663 = vld [vmem:[%s229 + $0x330] sm:$0xff]
      %v2664 = vld [vmem:[%s229 + $0x338] sm:$0xff]
      %v2665 = vld [vmem:[%s229 + $0x340] sm:$0xff]
      %v2666 = vld [vmem:[%s229 + $0x348] sm:$0xff]
      %v2667 = vld [vmem:[%s229 + $0x350] sm:$0xff]
      %v2668 = vld [vmem:[%s229 + $0x358] sm:$0xff]
      %v2669 = vld [vmem:[%s229 + $0x360] sm:$0xff]
      %v2670 = vld [vmem:[%s229 + $0x368] sm:$0xff]
      %v2671 = vld [vmem:[%s229 + $0x370] sm:$0xff]
      %v2672 = vld [vmem:[%s229 + $0x378] sm:$0xff]
      %v2673 = vld [vmem:[%s229 + $0x380] sm:$0xff]
      %v2674 = vld [vmem:[%s229 + $0x388] sm:$0xff]
      %v2675 = vld [vmem:[%s229 + $0x390] sm:$0xff]
      %v2676 = vld [vmem:[%s229 + $0x398] sm:$0xff]
      %v2677 = vld [vmem:[%s229 + $0x3a0] sm:$0xff]
      %v2678 = vld [vmem:[%s229 + $0x3a8] sm:$0xff]
      %v2679 = vld [vmem:[%s229 + $0x3b0] sm:$0xff]
      %v2680 = vld [vmem:[%s229 + $0x3b8] sm:$0xff]
      %v2681 = vld [vmem:[%s229 + $0x3c0] sm:$0xff]
      %v2682 = vld [vmem:[%s229 + $0x3c8] sm:$0xff]
      %v2683 = vld [vmem:[%s229 + $0x3d0] sm:$0xff]
      %v2684 = vld [vmem:[%s229 + $0x3d8] sm:$0xff]
      %v2685 = vld [vmem:[%s229 + $0x3e0] sm:$0xff]
      %v2686 = vld [vmem:[%s229 + $0x3e8] sm:$0xff]
      %v2687 = vld [vmem:[%s229 + $0x3f0] sm:$0xff]
      %v2688 = vld [vmem:[%s229 + $0x3f8] sm:$0xff]
      %v2689 = vld [vmem:[%s229 + $0x400] sm:$0xff]
      %v2690 = vld [vmem:[%s229 + $0x408] sm:$0xff]
      %v2691 = vld [vmem:[%s229 + $0x410] sm:$0xff]
      %v2692 = vld [vmem:[%s229 + $0x418] sm:$0xff]
      %v2693 = vld [vmem:[%s229 + $0x420] sm:$0xff]
      %v2694 = vld [vmem:[%s229 + $0x428] sm:$0xff]
      %v2695 = vld [vmem:[%s229 + $0x430] sm:$0xff]
      %v2696 = vld [vmem:[%s229 + $0x438] sm:$0xff]
      %v2697 = vld [vmem:[%s229 + $0x440] sm:$0xff]
      %v2698 = vld [vmem:[%s229 + $0x448] sm:$0xff]
      %v2699 = vld [vmem:[%s229 + $0x450] sm:$0xff]
      %v2700 = vld [vmem:[%s229 + $0x458] sm:$0xff]
      %v2701 = vld [vmem:[%s229 + $0x460] sm:$0xff]
      %v2702 = vld [vmem:[%s229 + $0x468] sm:$0xff]
      %v2703 = vld [vmem:[%s229 + $0x470] sm:$0xff]
      %v2704 = vld [vmem:[%s229 + $0x478] sm:$0xff]
      %v2705 = vld [vmem:[%s229 + $0x480] sm:$0xff]
      %v2706 = vld [vmem:[%s229 + $0x488] sm:$0xff]
      %v2707 = vld [vmem:[%s229 + $0x490] sm:$0xff]
      %v2708 = vld [vmem:[%s229 + $0x498] sm:$0xff]
      %v2709 = vld [vmem:[%s229 + $0x4a0] sm:$0xff]
      %v2710 = vld [vmem:[%s229 + $0x4a8] sm:$0xff]
      %v2711 = vld [vmem:[%s229 + $0x4b0] sm:$0xff]
      %v2712 = vld [vmem:[%s229 + $0x4b8] sm:$0xff]
      %v2713 = vld [vmem:[%s229 + $0x4c0] sm:$0xff]
      %v2714 = vld [vmem:[%s229 + $0x4c8] sm:$0xff]
      %v2715 = vld [vmem:[%s229 + $0x4d0] sm:$0xff]
      %v2716 = vld [vmem:[%s229 + $0x4d8] sm:$0xff]
      %v2717 = vld [vmem:[%s229 + $0x4e0] sm:$0xff]
      %v2718 = vld [vmem:[%s229 + $0x4e8] sm:$0xff]
      %v2719 = vld [vmem:[%s229 + $0x4f0] sm:$0xff]
      %v2720 = vld [vmem:[%s229 + $0x4f8] sm:$0xff]
      %v2721 = vld [vmem:[%s229 + $0x500] sm:$0xff]
      %v2722 = vld [vmem:[%s229 + $0x508] sm:$0xff]
      %v2723 = vld [vmem:[%s229 + $0x510] sm:$0xff]
      %v2724 = vld [vmem:[%s229 + $0x518] sm:$0xff]
      %v2725 = vld [vmem:[%s229 + $0x520] sm:$0xff]
      %v2726 = vld [vmem:[%s229 + $0x528] sm:$0xff]
      %v2727 = vld [vmem:[%s229 + $0x530] sm:$0xff]
      %v2728 = vld [vmem:[%s229 + $0x538] sm:$0xff]
      %v2729 = vld [vmem:[%s229 + $0x540] sm:$0xff]
      %v2730 = vld [vmem:[%s229 + $0x548] sm:$0xff]
      %v2731 = vld [vmem:[%s229 + $0x550] sm:$0xff]
      %v2732 = vld [vmem:[%s229 + $0x558] sm:$0xff]
      %v2733 = vld [vmem:[%s229 + $0x560] sm:$0xff]
      %v2734 = vld [vmem:[%s229 + $0x568] sm:$0xff]
      %v2735 = vld [vmem:[%s229 + $0x570] sm:$0xff]
      %v2736 = vld [vmem:[%s229 + $0x578] sm:$0xff]
      %v2737 = vld [vmem:[%s229 + $0x580] sm:$0xff]
      %v2738 = vld [vmem:[%s229 + $0x588] sm:$0xff]
      %v2739 = vld [vmem:[%s229 + $0x590] sm:$0xff]
      %v2740 = vld [vmem:[%s229 + $0x598] sm:$0xff]
      %v2741 = vld [vmem:[%s229 + $0x5a0] sm:$0xff]
      %v2742 = vld [vmem:[%s229 + $0x5a8] sm:$0xff]
      %v2743 = vld [vmem:[%s229 + $0x5b0] sm:$0xff]
      %v2744 = vld [vmem:[%s229 + $0x5b8] sm:$0xff]
      %v2745 = vld [vmem:[%s229 + $0x5c0] sm:$0xff]
      %v2746 = vld [vmem:[%s229 + $0x5c8] sm:$0xff]
      %v2747 = vld [vmem:[%s229 + $0x5d0] sm:$0xff]
      %v2748 = vld [vmem:[%s229 + $0x5d8] sm:$0xff]
      %v2749 = vld [vmem:[%s229 + $0x5e0] sm:$0xff]
      %v2750 = vld [vmem:[%s229 + $0x5e8] sm:$0xff]
      %v2751 = vld [vmem:[%s229 + $0x5f0] sm:$0xff]
      %v2752 = vld [vmem:[%s229 + $0x5f8] sm:$0xff]
      %v2753 = vld [vmem:[%s229 + $0x600] sm:$0xff]
      %v2754 = vld [vmem:[%s229 + $0x608] sm:$0xff]
      %v2755 = vld [vmem:[%s229 + $0x610] sm:$0xff]
      %v2756 = vld [vmem:[%s229 + $0x618] sm:$0xff]
      %v2757 = vld [vmem:[%s229 + $0x620] sm:$0xff]
      %v2758 = vld [vmem:[%s229 + $0x628] sm:$0xff]
      %v2759 = vld [vmem:[%s229 + $0x630] sm:$0xff]
      %v2760 = vld [vmem:[%s229 + $0x638] sm:$0xff]
      %v2761 = vld [vmem:[%s229 + $0x640] sm:$0xff]
      %v2762 = vld [vmem:[%s229 + $0x648] sm:$0xff]
      %v2763 = vld [vmem:[%s229 + $0x650] sm:$0xff]
      %v2764 = vld [vmem:[%s229 + $0x658] sm:$0xff]
      %v2765 = vld [vmem:[%s229 + $0x660] sm:$0xff]
      %v2766 = vld [vmem:[%s229 + $0x668] sm:$0xff]
      %v2767 = vld [vmem:[%s229 + $0x670] sm:$0xff]
      %v2768 = vld [vmem:[%s229 + $0x678] sm:$0xff]
      %v2769 = vld [vmem:[%s229 + $0x680] sm:$0xff]
      %v2770 = vld [vmem:[%s229 + $0x688] sm:$0xff]
      %v2771 = vld [vmem:[%s229 + $0x690] sm:$0xff]
      %v2772 = vld [vmem:[%s229 + $0x698] sm:$0xff]
      %v2773 = vld [vmem:[%s229 + $0x6a0] sm:$0xff]
      %v2774 = vld [vmem:[%s229 + $0x6a8] sm:$0xff]
      %v2775 = vld [vmem:[%s229 + $0x6b0] sm:$0xff]
      %v2776 = vld [vmem:[%s229 + $0x6b8] sm:$0xff]
      %v2777 = vld [vmem:[%s229 + $0x6c0] sm:$0xff]
      %v2778 = vld [vmem:[%s229 + $0x6c8] sm:$0xff]
      %v2779 = vld [vmem:[%s229 + $0x6d0] sm:$0xff]
      %v2780 = vld [vmem:[%s229 + $0x6d8] sm:$0xff]
      %v2781 = vld [vmem:[%s229 + $0x6e0] sm:$0xff]
      %v2782 = vld [vmem:[%s229 + $0x6e8] sm:$0xff]
      %v2783 = vld [vmem:[%s229 + $0x6f0] sm:$0xff]
      %v2784 = vld [vmem:[%s229 + $0x6f8] sm:$0xff]
      %v2785 = vld [vmem:[%s229 + $0x700] sm:$0xff]
      %v2786 = vld [vmem:[%s229 + $0x708] sm:$0xff]
      %v2787 = vld [vmem:[%s229 + $0x710] sm:$0xff]
      %v2788 = vld [vmem:[%s229 + $0x718] sm:$0xff]
      %v2789 = vld [vmem:[%s229 + $0x720] sm:$0xff]
      %v2790 = vld [vmem:[%s229 + $0x728] sm:$0xff]
      %v2791 = vld [vmem:[%s229 + $0x730] sm:$0xff]
      %v2792 = vld [vmem:[%s229 + $0x738] sm:$0xff]
      %v2793 = vld [vmem:[%s229 + $0x740] sm:$0xff]
      %v2794 = vld [vmem:[%s229 + $0x748] sm:$0xff]
      %v2795 = vld [vmem:[%s229 + $0x750] sm:$0xff]
      %v2796 = vld [vmem:[%s229 + $0x758] sm:$0xff]
      %v2797 = vld [vmem:[%s229 + $0x760] sm:$0xff]
      %v2798 = vld [vmem:[%s229 + $0x768] sm:$0xff]
      %v2799 = vld [vmem:[%s229 + $0x770] sm:$0xff]
      %v2800 = vld [vmem:[%s229 + $0x778] sm:$0xff]
      %v2801 = vld [vmem:[%s229 + $0x780] sm:$0xff]
      %v2802 = vld [vmem:[%s229 + $0x788] sm:$0xff]
      %v2803 = vld [vmem:[%s229 + $0x790] sm:$0xff]
      %v2804 = vld [vmem:[%s229 + $0x798] sm:$0xff]
      %v2805 = vld [vmem:[%s229 + $0x7a0] sm:$0xff]
      %v2806 = vld [vmem:[%s229 + $0x7a8] sm:$0xff]
      %v2807 = vld [vmem:[%s229 + $0x7b0] sm:$0xff]
      %v2808 = vld [vmem:[%s229 + $0x7b8] sm:$0xff]
      %v2809 = vld [vmem:[%s229 + $0x7c0] sm:$0xff]
      %v2810 = vld [vmem:[%s229 + $0x7c8] sm:$0xff]
      %v2811 = vld [vmem:[%s229 + $0x7d0] sm:$0xff]
      %v2812 = vld [vmem:[%s229 + $0x7d8] sm:$0xff]
      %v2813 = vld [vmem:[%s229 + $0x7e0] sm:$0xff]
      %v2814 = vld [vmem:[%s229 + $0x7e8] sm:$0xff]
      %v2815 = vld [vmem:[%s229 + $0x7f0] sm:$0xff]
      %v2816 = vld [vmem:[%s229 + $0x7f8] sm:$0xff]
      %v2817 = vld [vmem:[%s229 + $0x800] sm:$0xff]
      %v2818 = vld [vmem:[%s229 + $0x808] sm:$0xff]
      %v2819 = vld [vmem:[%s229 + $0x810] sm:$0xff]
      %v2820 = vld [vmem:[%s229 + $0x818] sm:$0xff]
      %v2821 = vld [vmem:[%s229 + $0x820] sm:$0xff]
      %v2822 = vld [vmem:[%s229 + $0x828] sm:$0xff]
      %v2823 = vld [vmem:[%s229 + $0x830] sm:$0xff]
      %v2824 = vld [vmem:[%s229 + $0x838] sm:$0xff]
      %v2825 = vld [vmem:[%s229 + $0x840] sm:$0xff]
      %v2826 = vld [vmem:[%s229 + $0x848] sm:$0xff]
      %v2827 = vld [vmem:[%s229 + $0x850] sm:$0xff]
      %v2828 = vld [vmem:[%s229 + $0x858] sm:$0xff]
      %v2829 = vld [vmem:[%s229 + $0x860] sm:$0xff]
      %v2830 = vld [vmem:[%s229 + $0x868] sm:$0xff]
      %v2831 = vld [vmem:[%s229 + $0x870] sm:$0xff]
      %v2832 = vld [vmem:[%s229 + $0x878] sm:$0xff]
      %v2833 = vld [vmem:[%s229 + $0x880] sm:$0xff]
      %v2834 = vld [vmem:[%s229 + $0x888] sm:$0xff]
      %v2835 = vld [vmem:[%s229 + $0x890] sm:$0xff]
      %v2836 = vld [vmem:[%s229 + $0x898] sm:$0xff]
      %v2837 = vld [vmem:[%s229 + $0x8a0] sm:$0xff]
      %v2838 = vld [vmem:[%s229 + $0x8a8] sm:$0xff]
      %v2839 = vld [vmem:[%s229 + $0x8b0] sm:$0xff]
      %v2840 = vld [vmem:[%s229 + $0x8b8] sm:$0xff]
      %v2841 = vld [vmem:[%s229 + $0x8c0] sm:$0xff]
      %v2842 = vld [vmem:[%s229 + $0x8c8] sm:$0xff]
      %v2843 = vld [vmem:[%s229 + $0x8d0] sm:$0xff]
      %v2844 = vld [vmem:[%s229 + $0x8d8] sm:$0xff]
      %v2845 = vld [vmem:[%s229 + $0x8e0] sm:$0xff]
      %v2846 = vld [vmem:[%s229 + $0x8e8] sm:$0xff]
      %v2847 = vld [vmem:[%s229 + $0x8f0] sm:$0xff]
      %v2848 = vld [vmem:[%s229 + $0x8f8] sm:$0xff]
      %v2849 = vld [vmem:[%s229 + $0x900] sm:$0xff]
      %v2850 = vld [vmem:[%s229 + $0x908] sm:$0xff]
      %v2851 = vld [vmem:[%s229 + $0x910] sm:$0xff]
      %v2852 = vld [vmem:[%s229 + $0x918] sm:$0xff]
      %v2853 = vld [vmem:[%s229 + $0x920] sm:$0xff]
      %v2854 = vld [vmem:[%s229 + $0x928] sm:$0xff]
      %v2855 = vld [vmem:[%s229 + $0x930] sm:$0xff]
      %v2856 = vld [vmem:[%s229 + $0x938] sm:$0xff]
      %v2857 = vld [vmem:[%s229 + $0x940] sm:$0xff]
      %v2858 = vpack.c.bf16 %v2570, %v2561
      %v2859 = vpack.c.bf16 %v2571, %v2562
      %v2860 = vpack.c.bf16 %v2572, %v2563
      %v2861 = vpack.c.bf16 %v2573, %v2564
      %v2862 = vpack.c.bf16 %v2574, %v2565
      %v2863 = vpack.c.bf16 %v2575, %v2566
      %v2864 = vpack.c.bf16 %v2576, %v2567
      %v2865 = vpack.c.bf16 %v2577, %v2568
      %v2866 = vpack.c.bf16 %v2578, %v2569
      %v2867 = vpack.c.bf16 %v2588, %v2579
      %v2868 = vpack.c.bf16 %v2589, %v2580
      %v2869 = vpack.c.bf16 %v2590, %v2581
      %v2870 = vpack.c.bf16 %v2591, %v2582
      %v2871 = vpack.c.bf16 %v2592, %v2583
      %v2872 = vpack.c.bf16 %v2593, %v2584
      %v2873 = vpack.c.bf16 %v2594, %v2585
      %v2874 = vpack.c.bf16 %v2595, %v2586
      %v2875 = vpack.c.bf16 %v2596, %v2587
      %v2876 = vpack.c.bf16 %v2606, %v2597
      %v2877 = vpack.c.bf16 %v2607, %v2598
      %v2878 = vpack.c.bf16 %v2608, %v2599
      %v2879 = vpack.c.bf16 %v2609, %v2600
      %v2880 = vpack.c.bf16 %v2610, %v2601
      %v2881 = vpack.c.bf16 %v2611, %v2602
      %v2882 = vpack.c.bf16 %v2612, %v2603
      %v2883 = vpack.c.bf16 %v2613, %v2604
      %v2884 = vpack.c.bf16 %v2614, %v2605
      %v2885 = vpack.c.bf16 %v2624, %v2615
      %v2886 = vpack.c.bf16 %v2625, %v2616
      %v2887 = vpack.c.bf16 %v2626, %v2617
      %v2888 = vpack.c.bf16 %v2627, %v2618
      %v2889 = vpack.c.bf16 %v2628, %v2619
      %v2890 = vpack.c.bf16 %v2629, %v2620
      %v2891 = vpack.c.bf16 %v2630, %v2621
      %v2892 = vpack.c.bf16 %v2631, %v2622
      %v2893 = vpack.c.bf16 %v2632, %v2623
      %v2894 = vpack.c.bf16 %v2642, %v2633
      %v2895 = vpack.c.bf16 %v2643, %v2634
      %v2896 = vpack.c.bf16 %v2644, %v2635
      %v2897 = vpack.c.bf16 %v2645, %v2636
      %v2898 = vpack.c.bf16 %v2646, %v2637
      %v2899 = vpack.c.bf16 %v2647, %v2638
      %v2900 = vpack.c.bf16 %v2648, %v2639
      %v2901 = vpack.c.bf16 %v2649, %v2640
      %v2902 = vpack.c.bf16 %v2650, %v2641
      %v2903 = vpack.c.bf16 %v2660, %v2651
      %v2904 = vpack.c.bf16 %v2661, %v2652
      %v2905 = vpack.c.bf16 %v2662, %v2653
      %v2906 = vpack.c.bf16 %v2663, %v2654
      %v2907 = vpack.c.bf16 %v2664, %v2655
      %v2908 = vpack.c.bf16 %v2665, %v2656
      %v2909 = vpack.c.bf16 %v2666, %v2657
      %v2910 = vpack.c.bf16 %v2667, %v2658
      %v2911 = vpack.c.bf16 %v2668, %v2659
      %v2912 = vpack.c.bf16 %v2678, %v2669
      %v2913 = vpack.c.bf16 %v2679, %v2670
      %v2914 = vpack.c.bf16 %v2680, %v2671
      %v2915 = vpack.c.bf16 %v2681, %v2672
      %v2916 = vpack.c.bf16 %v2682, %v2673
      %v2917 = vpack.c.bf16 %v2683, %v2674
      %v2918 = vpack.c.bf16 %v2684, %v2675
      %v2919 = vpack.c.bf16 %v2685, %v2676
      %v2920 = vpack.c.bf16 %v2686, %v2677
      %v2921 = vpack.c.bf16 %v2696, %v2687
      %v2922 = vpack.c.bf16 %v2697, %v2688
      %v2923 = vpack.c.bf16 %v2698, %v2689
      %v2924 = vpack.c.bf16 %v2699, %v2690
      %v2925 = vpack.c.bf16 %v2700, %v2691
      %v2926 = vpack.c.bf16 %v2701, %v2692
      %v2927 = vpack.c.bf16 %v2702, %v2693
      %v2928 = vpack.c.bf16 %v2703, %v2694
      %v2929 = vpack.c.bf16 %v2704, %v2695
      %v2930 = vpack.c.bf16 %v2714, %v2705
      %v2931 = vpack.c.bf16 %v2715, %v2706
      %v2932 = vpack.c.bf16 %v2716, %v2707
      %v2933 = vpack.c.bf16 %v2717, %v2708
      %v2934 = vpack.c.bf16 %v2718, %v2709
      %v2935 = vpack.c.bf16 %v2719, %v2710
      %v2936 = vpack.c.bf16 %v2720, %v2711
      %v2937 = vpack.c.bf16 %v2721, %v2712
      %v2938 = vpack.c.bf16 %v2722, %v2713
      %v2939 = vpack.c.bf16 %v2732, %v2723
      %v2940 = vpack.c.bf16 %v2733, %v2724
      %v2941 = vpack.c.bf16 %v2734, %v2725
      %v2942 = vpack.c.bf16 %v2735, %v2726
      %v2943 = vpack.c.bf16 %v2736, %v2727
      %v2944 = vpack.c.bf16 %v2737, %v2728
      %v2945 = vpack.c.bf16 %v2738, %v2729
      %v2946 = vpack.c.bf16 %v2739, %v2730
      %v2947 = vpack.c.bf16 %v2740, %v2731
      %v2948 = vpack.c.bf16 %v2750, %v2741
      %v2949 = vpack.c.bf16 %v2751, %v2742
      %v2950 = vpack.c.bf16 %v2752, %v2743
      %v2951 = vpack.c.bf16 %v2753, %v2744
      %v2952 = vpack.c.bf16 %v2754, %v2745
      %v2953 = vpack.c.bf16 %v2755, %v2746
      %v2954 = vpack.c.bf16 %v2756, %v2747
      %v2955 = vpack.c.bf16 %v2757, %v2748
      %v2956 = vpack.c.bf16 %v2758, %v2749
      %v2957 = vpack.c.bf16 %v2768, %v2759
      %v2958 = vpack.c.bf16 %v2769, %v2760
      %v2959 = vpack.c.bf16 %v2770, %v2761
      %v2960 = vpack.c.bf16 %v2771, %v2762
      %v2961 = vpack.c.bf16 %v2772, %v2763
      %v2962 = vpack.c.bf16 %v2773, %v2764
      %v2963 = vpack.c.bf16 %v2774, %v2765
      %v2964 = vpack.c.bf16 %v2775, %v2766
      %v2965 = vpack.c.bf16 %v2776, %v2767
      %v2966 = vpack.c.bf16 %v2786, %v2777
      %v2967 = vpack.c.bf16 %v2787, %v2778
      %v2968 = vpack.c.bf16 %v2788, %v2779
      %v2969 = vpack.c.bf16 %v2789, %v2780
      %v2970 = vpack.c.bf16 %v2790, %v2781
      %v2971 = vpack.c.bf16 %v2791, %v2782
      %v2972 = vpack.c.bf16 %v2792, %v2783
      %v2973 = vpack.c.bf16 %v2793, %v2784
      %v2974 = vpack.c.bf16 %v2794, %v2785
      %v2975 = vpack.c.bf16 %v2804, %v2795
      %v2976 = vpack.c.bf16 %v2805, %v2796
      %v2977 = vpack.c.bf16 %v2806, %v2797
      %v2978 = vpack.c.bf16 %v2807, %v2798
      %v2979 = vpack.c.bf16 %v2808, %v2799
      %v2980 = vpack.c.bf16 %v2809, %v2800
      %v2981 = vpack.c.bf16 %v2810, %v2801
      %v2982 = vpack.c.bf16 %v2811, %v2802
      %v2983 = vpack.c.bf16 %v2812, %v2803
      %v2984 = vpack.c.bf16 %v2822, %v2813
      %v2985 = vpack.c.bf16 %v2823, %v2814
      %v2986 = vpack.c.bf16 %v2824, %v2815
      %v2987 = vpack.c.bf16 %v2825, %v2816
      %v2988 = vpack.c.bf16 %v2826, %v2817
      %v2989 = vpack.c.bf16 %v2827, %v2818
      %v2990 = vpack.c.bf16 %v2828, %v2819
      %v2991 = vpack.c.bf16 %v2829, %v2820
      %v2992 = vpack.c.bf16 %v2830, %v2821
      %v2993 = vpack.c.bf16 %v2840, %v2831
      %v2994 = vpack.c.bf16 %v2841, %v2832
      %v2995 = vpack.c.bf16 %v2842, %v2833
      %v2996 = vpack.c.bf16 %v2843, %v2834
      %v2997 = vpack.c.bf16 %v2844, %v2835
      %v2998 = vpack.c.bf16 %v2845, %v2836
      %v2999 = vpack.c.bf16 %v2846, %v2837
      %v3000 = vpack.c.bf16 %v2847, %v2838
      %v3001 = vpack.c.bf16 %v2848, %v2839
      %v3002 = vpack.c.bf16 %v2849, %v2849
      %v3003 = vpack.c.bf16 %v2850, %v2850
      %v3004 = vpack.c.bf16 %v2851, %v2851
      %v3005 = vpack.c.bf16 %v2852, %v2852
      %v3006 = vpack.c.bf16 %v2853, %v2853
      %v3007 = vpack.c.bf16 %v2854, %v2854
      %v3008 = vpack.c.bf16 %v2855, %v2855
      %v3009 = vpack.c.bf16 %v2856, %v2856
      %v3010 = vpack.c.bf16 %v2857, %v2857
      %vm3011 = vcmask 261120
      %v3013 = vsel %vm3011, %v2866, 0
      %v3016 = vsel %vm3011, %v2875, 0
      %v3019 = vsel %vm3011, %v2884, 0
      %v3022 = vsel %vm3011, %v2893, 0
      %v3025 = vsel %vm3011, %v2902, 0
      %v3028 = vsel %vm3011, %v2911, 0
      %v3031 = vsel %vm3011, %v2920, 0
      %v3034 = vsel %vm3011, %v2929, 0
      %v3037 = vsel %vm3011, %v2938, 0
      %v3040 = vsel %vm3011, %v2947, 0
      %v3043 = vsel %vm3011, %v2956, 0
      %v3046 = vsel %vm3011, %v2965, 0
      %v3049 = vsel %vm3011, %v2974, 0
      %v3052 = vsel %vm3011, %v2983, 0
      %v3055 = vsel %vm3011, %v2992, 0
      %v3058 = vsel %vm3011, %v3001, 0
      %v3061 = vsel %vm3011, %v3010, 0
      %3063 = vmatprep.subr.bf16.mxu0 %v2100
      %3064 = vmatpush1.bf16.msra.mxu0 %v2099
      %3065 = vmatprep.subr.bf16.mxu0 %v2107
      %3066 = vmatpush1.bf16.msra.mxu0 %v2106
      %3067 = vmatprep.subr.bf16.mxu0 %v2114
      %3068 = vmatpush1.bf16.msra.mxu0 %v2113
      %3069 = vmatprep.subr.bf16.mxu0 %v2121
      %3070 = vmatpush1.bf16.msra.mxu0 %v2120
      %3071 = vmatprep.subr.bf16.mxu0 %v2128
      %3072 = vmatpush1.bf16.msra.mxu0 %v2127
      %3073 = vmatprep.subr.bf16.mxu0 %v2135
      %3074 = vmatpush1.bf16.msra.mxu0 %v2134
      %3075 = vmatprep.subr.bf16.mxu0 %v2142
      %3076 = vmatpush1.bf16.msra.mxu0 %v2141
      %3077 = vmatprep.subr.bf16.mxu0 %v2149
      %3078 = vmatpush1.bf16.msra.mxu0 %v2148
      %3079 = vmatprep.subr.bf16.mxu0 %v2156
      %3080 = vmatpush1.bf16.msra.mxu0 %v2155
      %3081 = vmatprep.subr.bf16.mxu0 %v2163
      %3082 = vmatpush1.bf16.msra.mxu0 %v2162
      %3083 = vmatprep.subr.bf16.mxu0 %v2170
      %3084 = vmatpush1.bf16.msra.mxu0 %v2169
      %3085 = vmatprep.subr.bf16.mxu0 %v2177
      %3086 = vmatpush1.bf16.msra.mxu0 %v2176
      %3087 = vmatprep.subr.bf16.mxu0 %v2184
      %3088 = vmatpush1.bf16.msra.mxu0 %v2183
      %3089 = vmatprep.subr.bf16.mxu0 %v2191
      %3090 = vmatpush1.bf16.msra.mxu0 %v2190
      %3091 = vmatprep.subr.bf16.mxu0 %v2198
      %3092 = vmatpush1.bf16.msra.mxu0 %v2197
      %3093 = vmatprep.subr.bf16.mxu0 %v2205
      %3094 = vmatpush1.bf16.msra.mxu0 %v2204
      %3095 = vmatprep.mubr.bf16.mxu0 %v2859
      %3096 = vmatmul.mubr.bf16.gmra.mrb[0].mxu0 %v2858
      %v3097 = vpop.f32.mrb[0].mxu0
      %v3098 = vadd.f32 0.0, %v3097
      %v3099 = vpop.f32.mrb[0].mxu0
      %v3100 = vadd.f32 0.0, %v3099
      %v3101 = vpop.f32.mrb[0].mxu0
      %v3102 = vadd.f32 0.0, %v3101
      %v3103 = vpop.f32.mrb[0].mxu0
      %v3104 = vadd.f32 0.0, %v3103
      %3105 = vmatprep.mubr.bf16.mxu0 %v2868
      %3106 = vmatmul.mubr.bf16.gmra.mrb[0].mxu0 %v2867
      %v3107 = vpop.f32.mrb[0].mxu0
      %v3108 = vadd.f32 0.0, %v3107
      %v3109 = vpop.f32.mrb[0].mxu0
      %v3110 = vadd.f32 0.0, %v3109
      %v3111 = vpop.f32.mrb[0].mxu0
      %v3112 = vadd.f32 0.0, %v3111
      %v3113 = vpop.f32.mrb[0].mxu0
      %v3114 = vadd.f32 0.0, %v3113
      %3115 = vmatprep.mubr.bf16.mxu0 %v2877
      %3116 = vmatmul.mubr.bf16.gmra.mrb[0].mxu0 %v2876
      %v3117 = vpop.f32.mrb[0].mxu0
      %v3118 = vadd.f32 0.0, %v3117
      %v3119 = vpop.f32.mrb[0].mxu0
      %v3120 = vadd.f32 0.0, %v3119
      %v3121 = vpop.f32.mrb[0].mxu0
      %v3122 = vadd.f32 0.0, %v3121
      %v3123 = vpop.f32.mrb[0].mxu0
      %v3124 = vadd.f32 0.0, %v3123
      %3125 = vmatprep.mubr.bf16.mxu0 %v2886
      %3126 = vmatmul.mubr.bf16.gmra.mrb[0].mxu0 %v2885
      %v3127 = vpop.f32.mrb[0].mxu0
      %v3128 = vadd.f32 0.0, %v3127
      %v3129 = vpop.f32.mrb[0].mxu0
      %v3130 = vadd.f32 0.0, %v3129
      %v3131 = vpop.f32.mrb[0].mxu0
      %v3132 = vadd.f32 0.0, %v3131
      %v3133 = vpop.f32.mrb[0].mxu0
      %v3134 = vadd.f32 0.0, %v3133
      %3135 = vmatprep.mubr.bf16.mxu0 %v2895
      %3136 = vmatmul.mubr.bf16.gmra.mrb[0].mxu0 %v2894
      %v3137 = vpop.f32.mrb[0].mxu0
      %v3138 = vadd.f32 0.0, %v3137
      %v3139 = vpop.f32.mrb[0].mxu0
      %v3140 = vadd.f32 0.0, %v3139
      %v3141 = vpop.f32.mrb[0].mxu0
      %v3142 = vadd.f32 0.0, %v3141
      %v3143 = vpop.f32.mrb[0].mxu0
      %v3144 = vadd.f32 0.0, %v3143
      %3145 = vmatprep.mubr.bf16.mxu0 %v2904
      %3146 = vmatmul.mubr.bf16.gmra.mrb[0].mxu0 %v2903
      %v3147 = vpop.f32.mrb[0].mxu0
      %v3148 = vadd.f32 0.0, %v3147
      %v3149 = vpop.f32.mrb[0].mxu0
      %v3150 = vadd.f32 0.0, %v3149
      %v3151 = vpop.f32.mrb[0].mxu0
      %v3152 = vadd.f32 0.0, %v3151
      %v3153 = vpop.f32.mrb[0].mxu0
      %v3154 = vadd.f32 0.0, %v3153
      %3155 = vmatprep.mubr.bf16.mxu0 %v2913
      %3156 = vmatmul.mubr.bf16.gmra.mrb[0].mxu0 %v2912
      %v3157 = vpop.f32.mrb[0].mxu0
      %v3158 = vadd.f32 0.0, %v3157
      %v3159 = vpop.f32.mrb[0].mxu0
      %v3160 = vadd.f32 0.0, %v3159
      %v3161 = vpop.f32.mrb[0].mxu0
      %v3162 = vadd.f32 0.0, %v3161
      %v3163 = vpop.f32.mrb[0].mxu0
      %v3164 = vadd.f32 0.0, %v3163
      %3165 = vmatprep.mubr.bf16.mxu0 %v2922
      %3166 = vmatmul.mubr.bf16.gmra.mrb[0].mxu0 %v2921
      %v3167 = vpop.f32.mrb[0].mxu0
      %v3168 = vadd.f32 0.0, %v3167
      %v3169 = vpop.f32.mrb[0].mxu0
      %v3170 = vadd.f32 0.0, %v3169
      %v3171 = vpop.f32.mrb[0].mxu0
      %v3172 = vadd.f32 0.0, %v3171
      %v3173 = vpop.f32.mrb[0].mxu0
      %v3174 = vadd.f32 0.0, %v3173
      %3175 = vmatprep.mubr.bf16.mxu0 %v2931
      %3176 = vmatmul.mubr.bf16.gmra.mrb[0].mxu0 %v2930
      %v3177 = vpop.f32.mrb[0].mxu0
      %v3178 = vadd.f32 0.0, %v3177
      %v3179 = vpop.f32.mrb[0].mxu0
      %v3180 = vadd.f32 0.0, %v3179
      %v3181 = vpop.f32.mrb[0].mxu0
      %v3182 = vadd.f32 0.0, %v3181
      %v3183 = vpop.f32.mrb[0].mxu0
      %v3184 = vadd.f32 0.0, %v3183
      %3185 = vmatprep.mubr.bf16.mxu0 %v2940
      %3186 = vmatmul.mubr.bf16.gmra.mrb[0].mxu0 %v2939
      %v3187 = vpop.f32.mrb[0].mxu0
      %v3188 = vadd.f32 0.0, %v3187
      %v3189 = vpop.f32.mrb[0].mxu0
      %v3190 = vadd.f32 0.0, %v3189
      %v3191 = vpop.f32.mrb[0].mxu0
      %v3192 = vadd.f32 0.0, %v3191
      %v3193 = vpop.f32.mrb[0].mxu0
      %v3194 = vadd.f32 0.0, %v3193
      %3195 = vmatprep.mubr.bf16.mxu0 %v2949
      %3196 = vmatmul.mubr.bf16.gmra.mrb[0].mxu0 %v2948
      %v3197 = vpop.f32.mrb[0].mxu0
      %v3198 = vadd.f32 0.0, %v3197
      %v3199 = vpop.f32.mrb[0].mxu0
      %v3200 = vadd.f32 0.0, %v3199
      %v3201 = vpop.f32.mrb[0].mxu0
      %v3202 = vadd.f32 0.0, %v3201
      %v3203 = vpop.f32.mrb[0].mxu0
      %v3204 = vadd.f32 0.0, %v3203
      %3205 = vmatprep.mubr.bf16.mxu0 %v2958
      %3206 = vmatmul.mubr.bf16.gmra.mrb[0].mxu0 %v2957
      %v3207 = vpop.f32.mrb[0].mxu0
      %v3208 = vadd.f32 0.0, %v3207
      %v3209 = vpop.f32.mrb[0].mxu0
      %v3210 = vadd.f32 0.0, %v3209
      %v3211 = vpop.f32.mrb[0].mxu0
      %v3212 = vadd.f32 0.0, %v3211
      %v3213 = vpop.f32.mrb[0].mxu0
      %v3214 = vadd.f32 0.0, %v3213
      %3215 = vmatprep.mubr.bf16.mxu0 %v2967
      %3216 = vmatmul.mubr.bf16.gmra.mrb[0].mxu0 %v2966
      %v3217 = vpop.f32.mrb[0].mxu0
      %v3218 = vadd.f32 0.0, %v3217
      %v3219 = vpop.f32.mrb[0].mxu0
      %v3220 = vadd.f32 0.0, %v3219
      %v3221 = vpop.f32.mrb[0].mxu0
      %v3222 = vadd.f32 0.0, %v3221
      %v3223 = vpop.f32.mrb[0].mxu0
      %v3224 = vadd.f32 0.0, %v3223
      %3225 = vmatprep.mubr.bf16.mxu0 %v2976
      %3226 = vmatmul.mubr.bf16.gmra.mrb[0].mxu0 %v2975
      %v3227 = vpop.f32.mrb[0].mxu0
      %v3228 = vadd.f32 0.0, %v3227
      %v3229 = vpop.f32.mrb[0].mxu0
      %v3230 = vadd.f32 0.0, %v3229
      %v3231 = vpop.f32.mrb[0].mxu0
      %v3232 = vadd.f32 0.0, %v3231
      %v3233 = vpop.f32.mrb[0].mxu0
      %v3234 = vadd.f32 0.0, %v3233
      %3235 = vmatprep.mubr.bf16.mxu0 %v2985
      %3236 = vmatmul.mubr.bf16.gmra.mrb[0].mxu0 %v2984
      %v3237 = vpop.f32.mrb[0].mxu0
      %v3238 = vadd.f32 0.0, %v3237
      %v3239 = vpop.f32.mrb[0].mxu0
      %v3240 = vadd.f32 0.0, %v3239
      %v3241 = vpop.f32.mrb[0].mxu0
      %v3242 = vadd.f32 0.0, %v3241
      %v3243 = vpop.f32.mrb[0].mxu0
      %v3244 = vadd.f32 0.0, %v3243
      %3245 = vmatprep.mubr.bf16.mxu0 %v2994
      %3246 = vmatmul.mubr.bf16.gmra.mrb[0].mxu0 %v2993
      %v3247 = vpop.f32.mrb[0].mxu0
      %v3248 = vadd.f32 0.0, %v3247
      %v3249 = vpop.f32.mrb[0].mxu0
      %v3250 = vadd.f32 0.0, %v3249
      %v3251 = vpop.f32.mrb[0].mxu0
      %v3252 = vadd.f32 0.0, %v3251
      %v3253 = vpop.f32.mrb[0].mxu0
      %v3254 = vadd.f32 0.0, %v3253
      %3255 = vmatprep.mubr.bf16.mxu0 %v3003
      %3256 = vmatmul.mubr.bf16.gmra.mrb[0].mxu0 %v3002
      %v3257 = vpop.f32.mrb[0].mxu0
      %v3258 = vadd.f32 0.0, %v3257
      %v3259 = vpop.f32.mrb[0].mxu0
      %v3260 = vadd.f32 0.0, %v3259
      %v3261 = vpop.f32.mrb[0].mxu0
      %v3262 = vpop.f32.mrb[0].mxu0
      %3263 = vdwg.mxu0
      %3264 = vmatprep.subr.bf16.mxu0 %v2212
      %3265 = vmatpush1.bf16.msra.mxu0 %v2211
      %3266 = vmatprep.subr.bf16.mxu0 %v2219
      %3267 = vmatpush1.bf16.msra.mxu0 %v2218
      %3268 = vmatprep.subr.bf16.mxu0 %v2226
      %3269 = vmatpush1.bf16.msra.mxu0 %v2225
      %3270 = vmatprep.subr.bf16.mxu0 %v2233
      %3271 = vmatpush1.bf16.msra.mxu0 %v2232
      %3272 = vmatprep.subr.bf16.mxu0 %v2240
      %3273 = vmatpush1.bf16.msra.mxu0 %v2239
      %3274 = vmatprep.subr.bf16.mxu0 %v2247
      %3275 = vmatpush1.bf16.msra.mxu0 %v2246
      %3276 = vmatprep.subr.bf16.mxu0 %v2254
      %3277 = vmatpush1.bf16.msra.mxu0 %v2253
      %3278 = vmatprep.subr.bf16.mxu0 %v2261
      %3279 = vmatpush1.bf16.msra.mxu0 %v2260
      %3280 = vmatprep.subr.bf16.mxu0 %v2268
      %3281 = vmatpush1.bf16.msra.mxu0 %v2267
      %3282 = vmatprep.subr.bf16.mxu0 %v2275
      %3283 = vmatpush1.bf16.msra.mxu0 %v2274
      %3284 = vmatprep.subr.bf16.mxu0 %v2282
      %3285 = vmatpush1.bf16.msra.mxu0 %v2281
      %3286 = vmatprep.subr.bf16.mxu0 %v2289
      %3287 = vmatpush1.bf16.msra.mxu0 %v2288
      %3288 = vmatprep.subr.bf16.mxu0 %v2296
      %3289 = vmatpush1.bf16.msra.mxu0 %v2295
      %3290 = vmatprep.subr.bf16.mxu0 %v2303
      %3291 = vmatpush1.bf16.msra.mxu0 %v2302
      %3292 = vmatprep.subr.bf16.mxu0 %v2310
      %3293 = vmatpush1.bf16.msra.mxu0 %v2309
      %3294 = vmatprep.subr.bf16.mxu0 %v2317
      %3295 = vmatpush1.bf16.msra.mxu0 %v2316
      %3296 = vmatprep.mubr.bf16.mxu0 %v2861
      %3297 = vmatmul.mubr.bf16.gmra.mrb[0].mxu0 %v2860
      %v3298 = vpop.f32.mrb[0].mxu0
      %v3299 = vadd.f32 %v3098, %v3298
      %v3300 = vpop.f32.mrb[0].mxu0
      %v3301 = vadd.f32 %v3100, %v3300
      %v3302 = vpop.f32.mrb[0].mxu0
      %v3303 = vadd.f32 %v3102, %v3302
      %v3304 = vpop.f32.mrb[0].mxu0
      %v3305 = vadd.f32 %v3104, %v3304
      %3306 = vmatprep.mubr.bf16.mxu0 %v2870
      %3307 = vmatmul.mubr.bf16.gmra.mrb[0].mxu0 %v2869
      %v3308 = vpop.f32.mrb[0].mxu0
      %v3309 = vadd.f32 %v3108, %v3308
      %v3310 = vpop.f32.mrb[0].mxu0
      %v3311 = vadd.f32 %v3110, %v3310
      %v3312 = vpop.f32.mrb[0].mxu0
      %v3313 = vadd.f32 %v3112, %v3312
      %v3314 = vpop.f32.mrb[0].mxu0
      %v3315 = vadd.f32 %v3114, %v3314
      %3316 = vmatprep.mubr.bf16.mxu0 %v2879
      %3317 = vmatmul.mubr.bf16.gmra.mrb[0].mxu0 %v2878
      %v3318 = vpop.f32.mrb[0].mxu0
      %v3319 = vadd.f32 %v3118, %v3318
      %v3320 = vpop.f32.mrb[0].mxu0
      %v3321 = vadd.f32 %v3120, %v3320
      %v3322 = vpop.f32.mrb[0].mxu0
      %v3323 = vadd.f32 %v3122, %v3322
      %v3324 = vpop.f32.mrb[0].mxu0
      %v3325 = vadd.f32 %v3124, %v3324
      %3326 = vmatprep.mubr.bf16.mxu0 %v2888
      %3327 = vmatmul.mubr.bf16.gmra.mrb[0].mxu0 %v2887
      %v3328 = vpop.f32.mrb[0].mxu0
      %v3329 = vadd.f32 %v3128, %v3328
      %v3330 = vpop.f32.mrb[0].mxu0
      %v3331 = vadd.f32 %v3130, %v3330
      %v3332 = vpop.f32.mrb[0].mxu0
      %v3333 = vadd.f32 %v3132, %v3332
      %v3334 = vpop.f32.mrb[0].mxu0
      %v3335 = vadd.f32 %v3134, %v3334
      %3336 = vmatprep.mubr.bf16.mxu0 %v2897
      %3337 = vmatmul.mubr.bf16.gmra.mrb[0].mxu0 %v2896
      %v3338 = vpop.f32.mrb[0].mxu0
      %v3339 = vadd.f32 %v3138, %v3338
      %v3340 = vpop.f32.mrb[0].mxu0
      %v3341 = vadd.f32 %v3140, %v3340
      %v3342 = vpop.f32.mrb[0].mxu0
      %v3343 = vadd.f32 %v3142, %v3342
      %v3344 = vpop.f32.mrb[0].mxu0
      %v3345 = vadd.f32 %v3144, %v3344
      %3346 = vmatprep.mubr.bf16.mxu0 %v2906
      %3347 = vmatmul.mubr.bf16.gmra.mrb[0].mxu0 %v2905
      %v3348 = vpop.f32.mrb[0].mxu0
      %v3349 = vadd.f32 %v3148, %v3348
      %v3350 = vpop.f32.mrb[0].mxu0
      %v3351 = vadd.f32 %v3150, %v3350
      %v3352 = vpop.f32.mrb[0].mxu0
      %v3353 = vadd.f32 %v3152, %v3352
      %v3354 = vpop.f32.mrb[0].mxu0
      %v3355 = vadd.f32 %v3154, %v3354
      %3356 = vmatprep.mubr.bf16.mxu0 %v2915
      %3357 = vmatmul.mubr.bf16.gmra.mrb[0].mxu0 %v2914
      %v3358 = vpop.f32.mrb[0].mxu0
      %v3359 = vadd.f32 %v3158, %v3358
      %v3360 = vpop.f32.mrb[0].mxu0
      %v3361 = vadd.f32 %v3160, %v3360
      %v3362 = vpop.f32.mrb[0].mxu0
      %v3363 = vadd.f32 %v3162, %v3362
      %v3364 = vpop.f32.mrb[0].mxu0
      %v3365 = vadd.f32 %v3164, %v3364
      %3366 = vmatprep.mubr.bf16.mxu0 %v2924
      %3367 = vmatmul.mubr.bf16.gmra.mrb[0].mxu0 %v2923
      %v3368 = vpop.f32.mrb[0].mxu0
      %v3369 = vadd.f32 %v3168, %v3368
      %v3370 = vpop.f32.mrb[0].mxu0
      %v3371 = vadd.f32 %v3170, %v3370
      %v3372 = vpop.f32.mrb[0].mxu0
      %v3373 = vadd.f32 %v3172, %v3372
      %v3374 = vpop.f32.mrb[0].mxu0
      %v3375 = vadd.f32 %v3174, %v3374
      %3376 = vmatprep.mubr.bf16.mxu0 %v2933
      %3377 = vmatmul.mubr.bf16.gmra.mrb[0].mxu0 %v2932
      %v3378 = vpop.f32.mrb[0].mxu0
      %v3379 = vadd.f32 %v3178, %v3378
      %v3380 = vpop.f32.mrb[0].mxu0
      %v3381 = vadd.f32 %v3180, %v3380
      %v3382 = vpop.f32.mrb[0].mxu0
      %v3383 = vadd.f32 %v3182, %v3382
      %v3384 = vpop.f32.mrb[0].mxu0
      %v3385 = vadd.f32 %v3184, %v3384
      %3386 = vmatprep.mubr.bf16.mxu0 %v2942
      %3387 = vmatmul.mubr.bf16.gmra.mrb[0].mxu0 %v2941
      %v3388 = vpop.f32.mrb[0].mxu0
      %v3389 = vadd.f32 %v3188, %v3388
      %v3390 = vpop.f32.mrb[0].mxu0
      %v3391 = vadd.f32 %v3190, %v3390
      %v3392 = vpop.f32.mrb[0].mxu0
      %v3393 = vadd.f32 %v3192, %v3392
      %v3394 = vpop.f32.mrb[0].mxu0
      %v3395 = vadd.f32 %v3194, %v3394
      %3396 = vmatprep.mubr.bf16.mxu0 %v2951
      %3397 = vmatmul.mubr.bf16.gmra.mrb[0].mxu0 %v2950
      %v3398 = vpop.f32.mrb[0].mxu0
      %v3399 = vadd.f32 %v3198, %v3398
      %v3400 = vpop.f32.mrb[0].mxu0
      %v3401 = vadd.f32 %v3200, %v3400
      %v3402 = vpop.f32.mrb[0].mxu0
      %v3403 = vadd.f32 %v3202, %v3402
      %v3404 = vpop.f32.mrb[0].mxu0
      %v3405 = vadd.f32 %v3204, %v3404
      %3406 = vmatprep.mubr.bf16.mxu0 %v2960
      %3407 = vmatmul.mubr.bf16.gmra.mrb[0].mxu0 %v2959
      %v3408 = vpop.f32.mrb[0].mxu0
      %v3409 = vadd.f32 %v3208, %v3408
      %v3410 = vpop.f32.mrb[0].mxu0
      %v3411 = vadd.f32 %v3210, %v3410
      %v3412 = vpop.f32.mrb[0].mxu0
      %v3413 = vadd.f32 %v3212, %v3412
      %v3414 = vpop.f32.mrb[0].mxu0
      %v3415 = vadd.f32 %v3214, %v3414
      %3416 = vmatprep.mubr.bf16.mxu0 %v2969
      %3417 = vmatmul.mubr.bf16.gmra.mrb[0].mxu0 %v2968
      %v3418 = vpop.f32.mrb[0].mxu0
      %v3419 = vadd.f32 %v3218, %v3418
      %v3420 = vpop.f32.mrb[0].mxu0
      %v3421 = vadd.f32 %v3220, %v3420
      %v3422 = vpop.f32.mrb[0].mxu0
      %v3423 = vadd.f32 %v3222, %v3422
      %v3424 = vpop.f32.mrb[0].mxu0
      %v3425 = vadd.f32 %v3224, %v3424
      %3426 = vmatprep.mubr.bf16.mxu0 %v2978
      %3427 = vmatmul.mubr.bf16.gmra.mrb[0].mxu0 %v2977
      %v3428 = vpop.f32.mrb[0].mxu0
      %v3429 = vadd.f32 %v3228, %v3428
      %v3430 = vpop.f32.mrb[0].mxu0
      %v3431 = vadd.f32 %v3230, %v3430
      %v3432 = vpop.f32.mrb[0].mxu0
      %v3433 = vadd.f32 %v3232, %v3432
      %v3434 = vpop.f32.mrb[0].mxu0
      %v3435 = vadd.f32 %v3234, %v3434
      %3436 = vmatprep.mubr.bf16.mxu0 %v2987
      %3437 = vmatmul.mubr.bf16.gmra.mrb[0].mxu0 %v2986
      %v3438 = vpop.f32.mrb[0].mxu0
      %v3439 = vadd.f32 %v3238, %v3438
      %v3440 = vpop.f32.mrb[0].mxu0
      %v3441 = vadd.f32 %v3240, %v3440
      %v3442 = vpop.f32.mrb[0].mxu0
      %v3443 = vadd.f32 %v3242, %v3442
      %v3444 = vpop.f32.mrb[0].mxu0
      %v3445 = vadd.f32 %v3244, %v3444
      %3446 = vmatprep.mubr.bf16.mxu0 %v2996
      %3447 = vmatmul.mubr.bf16.gmra.mrb[0].mxu0 %v2995
      %v3448 = vpop.f32.mrb[0].mxu0
      %v3449 = vadd.f32 %v3248, %v3448
      %v3450 = vpop.f32.mrb[0].mxu0
      %v3451 = vadd.f32 %v3250, %v3450
      %v3452 = vpop.f32.mrb[0].mxu0
      %v3453 = vadd.f32 %v3252, %v3452
      %v3454 = vpop.f32.mrb[0].mxu0
      %v3455 = vadd.f32 %v3254, %v3454
      %3456 = vmatprep.mubr.bf16.mxu0 %v3005
      %3457 = vmatmul.mubr.bf16.gmra.mrb[0].mxu0 %v3004
      %v3458 = vpop.f32.mrb[0].mxu0
      %v3459 = vadd.f32 %v3258, %v3458
      %v3460 = vpop.f32.mrb[0].mxu0
      %v3461 = vadd.f32 %v3260, %v3460
      %v3462 = vpop.f32.mrb[0].mxu0
      %v3463 = vpop.f32.mrb[0].mxu0
      %3464 = vdwg.mxu0
      %3465 = vmatprep.subr.bf16.mxu0 %v2324
      %3466 = vmatpush1.bf16.msra.mxu0 %v2323
      %3467 = vmatprep.subr.bf16.mxu0 %v2331
      %3468 = vmatpush1.bf16.msra.mxu0 %v2330
      %3469 = vmatprep.subr.bf16.mxu0 %v2338
      %3470 = vmatpush1.bf16.msra.mxu0 %v2337
      %3471 = vmatprep.subr.bf16.mxu0 %v2345
      %3472 = vmatpush1.bf16.msra.mxu0 %v2344
      %3473 = vmatprep.subr.bf16.mxu0 %v2352
      %3474 = vmatpush1.bf16.msra.mxu0 %v2351
      %3475 = vmatprep.subr.bf16.mxu0 %v2359
      %3476 = vmatpush1.bf16.msra.mxu0 %v2358
      %3477 = vmatprep.subr.bf16.mxu0 %v2366
      %3478 = vmatpush1.bf16.msra.mxu0 %v2365
      %3479 = vmatprep.subr.bf16.mxu0 %v2373
      %3480 = vmatpush1.bf16.msra.mxu0 %v2372
      %3481 = vmatprep.subr.bf16.mxu0 %v2380
      %3482 = vmatpush1.bf16.msra.mxu0 %v2379
      %3483 = vmatprep.subr.bf16.mxu0 %v2387
      %3484 = vmatpush1.bf16.msra.mxu0 %v2386
      %3485 = vmatprep.subr.bf16.mxu0 %v2394
      %3486 = vmatpush1.bf16.msra.mxu0 %v2393
      %3487 = vmatprep.subr.bf16.mxu0 %v2401
      %3488 = vmatpush1.bf16.msra.mxu0 %v2400
      %3489 = vmatprep.subr.bf16.mxu0 %v2408
      %3490 = vmatpush1.bf16.msra.mxu0 %v2407
      %3491 = vmatprep.subr.bf16.mxu0 %v2415
      %3492 = vmatpush1.bf16.msra.mxu0 %v2414
      %3493 = vmatprep.subr.bf16.mxu0 %v2422
      %3494 = vmatpush1.bf16.msra.mxu0 %v2421
      %3495 = vmatprep.subr.bf16.mxu0 %v2429
      %3496 = vmatpush1.bf16.msra.mxu0 %v2428
      %3497 = vmatprep.mubr.bf16.mxu0 %v2863
      %3498 = vmatmul.mubr.bf16.gmra.mrb[0].mxu0 %v2862
      %v3499 = vpop.f32.mrb[0].mxu0
      %v3500 = vadd.f32 %v3299, %v3499
      %v3501 = vpop.f32.mrb[0].mxu0
      %v3502 = vadd.f32 %v3301, %v3501
      %v3503 = vpop.f32.mrb[0].mxu0
      %v3504 = vadd.f32 %v3303, %v3503
      %v3505 = vpop.f32.mrb[0].mxu0
      %v3506 = vadd.f32 %v3305, %v3505
      %3507 = vmatprep.mubr.bf16.mxu0 %v2872
      %3508 = vmatmul.mubr.bf16.gmra.mrb[0].mxu0 %v2871
      %v3509 = vpop.f32.mrb[0].mxu0
      %v3510 = vadd.f32 %v3309, %v3509
      %v3511 = vpop.f32.mrb[0].mxu0
      %v3512 = vadd.f32 %v3311, %v3511
      %v3513 = vpop.f32.mrb[0].mxu0
      %v3514 = vadd.f32 %v3313, %v3513
      %v3515 = vpop.f32.mrb[0].mxu0
      %v3516 = vadd.f32 %v3315, %v3515
      %3517 = vmatprep.mubr.bf16.mxu0 %v2881
      %3518 = vmatmul.mubr.bf16.gmra.mrb[0].mxu0 %v2880
      %v3519 = vpop.f32.mrb[0].mxu0
      %v3520 = vadd.f32 %v3319, %v3519
      %v3521 = vpop.f32.mrb[0].mxu0
      %v3522 = vadd.f32 %v3321, %v3521
      %v3523 = vpop.f32.mrb[0].mxu0
      %v3524 = vadd.f32 %v3323, %v3523
      %v3525 = vpop.f32.mrb[0].mxu0
      %v3526 = vadd.f32 %v3325, %v3525
      %3527 = vmatprep.mubr.bf16.mxu0 %v2890
      %3528 = vmatmul.mubr.bf16.gmra.mrb[0].mxu0 %v2889
      %v3529 = vpop.f32.mrb[0].mxu0
      %v3530 = vadd.f32 %v3329, %v3529
      %v3531 = vpop.f32.mrb[0].mxu0
      %v3532 = vadd.f32 %v3331, %v3531
      %v3533 = vpop.f32.mrb[0].mxu0
      %v3534 = vadd.f32 %v3333, %v3533
      %v3535 = vpop.f32.mrb[0].mxu0
      %v3536 = vadd.f32 %v3335, %v3535
      %3537 = vmatprep.mubr.bf16.mxu0 %v2899
      %3538 = vmatmul.mubr.bf16.gmra.mrb[0].mxu0 %v2898
      %v3539 = vpop.f32.mrb[0].mxu0
      %v3540 = vadd.f32 %v3339, %v3539
      %v3541 = vpop.f32.mrb[0].mxu0
      %v3542 = vadd.f32 %v3341, %v3541
      %v3543 = vpop.f32.mrb[0].mxu0
      %v3544 = vadd.f32 %v3343, %v3543
      %v3545 = vpop.f32.mrb[0].mxu0
      %v3546 = vadd.f32 %v3345, %v3545
      %3547 = vmatprep.mubr.bf16.mxu0 %v2908
      %3548 = vmatmul.mubr.bf16.gmra.mrb[0].mxu0 %v2907
      %v3549 = vpop.f32.mrb[0].mxu0
      %v3550 = vadd.f32 %v3349, %v3549
      %v3551 = vpop.f32.mrb[0].mxu0
      %v3552 = vadd.f32 %v3351, %v3551
      %v3553 = vpop.f32.mrb[0].mxu0
      %v3554 = vadd.f32 %v3353, %v3553
      %v3555 = vpop.f32.mrb[0].mxu0
      %v3556 = vadd.f32 %v3355, %v3555
      %3557 = vmatprep.mubr.bf16.mxu0 %v2917
      %3558 = vmatmul.mubr.bf16.gmra.mrb[0].mxu0 %v2916
      %v3559 = vpop.f32.mrb[0].mxu0
      %v3560 = vadd.f32 %v3359, %v3559
      %v3561 = vpop.f32.mrb[0].mxu0
      %v3562 = vadd.f32 %v3361, %v3561
      %v3563 = vpop.f32.mrb[0].mxu0
      %v3564 = vadd.f32 %v3363, %v3563
      %v3565 = vpop.f32.mrb[0].mxu0
      %v3566 = vadd.f32 %v3365, %v3565
      %3567 = vmatprep.mubr.bf16.mxu0 %v2926
      %3568 = vmatmul.mubr.bf16.gmra.mrb[0].mxu0 %v2925
      %v3569 = vpop.f32.mrb[0].mxu0
      %v3570 = vadd.f32 %v3369, %v3569
      %v3571 = vpop.f32.mrb[0].mxu0
      %v3572 = vadd.f32 %v3371, %v3571
      %v3573 = vpop.f32.mrb[0].mxu0
      %v3574 = vadd.f32 %v3373, %v3573
      %v3575 = vpop.f32.mrb[0].mxu0
      %v3576 = vadd.f32 %v3375, %v3575
      %3577 = vmatprep.mubr.bf16.mxu0 %v2935
      %3578 = vmatmul.mubr.bf16.gmra.mrb[0].mxu0 %v2934
      %v3579 = vpop.f32.mrb[0].mxu0
      %v3580 = vadd.f32 %v3379, %v3579
      %v3581 = vpop.f32.mrb[0].mxu0
      %v3582 = vadd.f32 %v3381, %v3581
      %v3583 = vpop.f32.mrb[0].mxu0
      %v3584 = vadd.f32 %v3383, %v3583
      %v3585 = vpop.f32.mrb[0].mxu0
      %v3586 = vadd.f32 %v3385, %v3585
      %3587 = vmatprep.mubr.bf16.mxu0 %v2944
      %3588 = vmatmul.mubr.bf16.gmra.mrb[0].mxu0 %v2943
      %v3589 = vpop.f32.mrb[0].mxu0
      %v3590 = vadd.f32 %v3389, %v3589
      %v3591 = vpop.f32.mrb[0].mxu0
      %v3592 = vadd.f32 %v3391, %v3591
      %v3593 = vpop.f32.mrb[0].mxu0
      %v3594 = vadd.f32 %v3393, %v3593
      %v3595 = vpop.f32.mrb[0].mxu0
      %v3596 = vadd.f32 %v3395, %v3595
      %3597 = vmatprep.mubr.bf16.mxu0 %v2953
      %3598 = vmatmul.mubr.bf16.gmra.mrb[0].mxu0 %v2952
      %v3599 = vpop.f32.mrb[0].mxu0
      %v3600 = vadd.f32 %v3399, %v3599
      %v3601 = vpop.f32.mrb[0].mxu0
      %v3602 = vadd.f32 %v3401, %v3601
      %v3603 = vpop.f32.mrb[0].mxu0
      %v3604 = vadd.f32 %v3403, %v3603
      %v3605 = vpop.f32.mrb[0].mxu0
      %v3606 = vadd.f32 %v3405, %v3605
      %3607 = vmatprep.mubr.bf16.mxu0 %v2962
      %3608 = vmatmul.mubr.bf16.gmra.mrb[0].mxu0 %v2961
      %v3609 = vpop.f32.mrb[0].mxu0
      %v3610 = vadd.f32 %v3409, %v3609
      %v3611 = vpop.f32.mrb[0].mxu0
      %v3612 = vadd.f32 %v3411, %v3611
      %v3613 = vpop.f32.mrb[0].mxu0
      %v3614 = vadd.f32 %v3413, %v3613
      %v3615 = vpop.f32.mrb[0].mxu0
      %v3616 = vadd.f32 %v3415, %v3615
      %3617 = vmatprep.mubr.bf16.mxu0 %v2971
      %3618 = vmatmul.mubr.bf16.gmra.mrb[0].mxu0 %v2970
      %v3619 = vpop.f32.mrb[0].mxu0
      %v3620 = vadd.f32 %v3419, %v3619
      %v3621 = vpop.f32.mrb[0].mxu0
      %v3622 = vadd.f32 %v3421, %v3621
      %v3623 = vpop.f32.mrb[0].mxu0
      %v3624 = vadd.f32 %v3423, %v3623
      %v3625 = vpop.f32.mrb[0].mxu0
      %v3626 = vadd.f32 %v3425, %v3625
      %3627 = vmatprep.mubr.bf16.mxu0 %v2980
      %3628 = vmatmul.mubr.bf16.gmra.mrb[0].mxu0 %v2979
      %v3629 = vpop.f32.mrb[0].mxu0
      %v3630 = vadd.f32 %v3429, %v3629
      %v3631 = vpop.f32.mrb[0].mxu0
      %v3632 = vadd.f32 %v3431, %v3631
      %v3633 = vpop.f32.mrb[0].mxu0
      %v3634 = vadd.f32 %v3433, %v3633
      %v3635 = vpop.f32.mrb[0].mxu0
      %v3636 = vadd.f32 %v3435, %v3635
      %3637 = vmatprep.mubr.bf16.mxu0 %v2989
      %3638 = vmatmul.mubr.bf16.gmra.mrb[0].mxu0 %v2988
      %v3639 = vpop.f32.mrb[0].mxu0
      %v3640 = vadd.f32 %v3439, %v3639
      %v3641 = vpop.f32.mrb[0].mxu0
      %v3642 = vadd.f32 %v3441, %v3641
      %v3643 = vpop.f32.mrb[0].mxu0
      %v3644 = vadd.f32 %v3443, %v3643
      %v3645 = vpop.f32.mrb[0].mxu0
      %v3646 = vadd.f32 %v3445, %v3645
      %3647 = vmatprep.mubr.bf16.mxu0 %v2998
      %3648 = vmatmul.mubr.bf16.gmra.mrb[0].mxu0 %v2997
      %v3649 = vpop.f32.mrb[0].mxu0
      %v3650 = vadd.f32 %v3449, %v3649
      %v3651 = vpop.f32.mrb[0].mxu0
      %v3652 = vadd.f32 %v3451, %v3651
      %v3653 = vpop.f32.mrb[0].mxu0
      %v3654 = vadd.f32 %v3453, %v3653
      %v3655 = vpop.f32.mrb[0].mxu0
      %v3656 = vadd.f32 %v3455, %v3655
      %3657 = vmatprep.mubr.bf16.mxu0 %v3007
      %3658 = vmatmul.mubr.bf16.gmra.mrb[0].mxu0 %v3006
      %v3659 = vpop.f32.mrb[0].mxu0
      %v3660 = vadd.f32 %v3459, %v3659
      %v3661 = vpop.f32.mrb[0].mxu0
      %v3662 = vadd.f32 %v3461, %v3661
      %v3663 = vpop.f32.mrb[0].mxu0
      %v3664 = vpop.f32.mrb[0].mxu0
      %3665 = vdwg.mxu0
      %3666 = vmatprep.subr.bf16.mxu0 %v2436
      %3667 = vmatpush1.bf16.msra.mxu0 %v2435
      %3668 = vmatprep.subr.bf16.mxu0 %v2443
      %3669 = vmatpush1.bf16.msra.mxu0 %v2442
      %3670 = vmatprep.subr.bf16.mxu0 %v2450
      %3671 = vmatpush1.bf16.msra.mxu0 %v2449
      %3672 = vmatprep.subr.bf16.mxu0 %v2457
      %3673 = vmatpush1.bf16.msra.mxu0 %v2456
      %3674 = vmatprep.subr.bf16.mxu0 %v2464
      %3675 = vmatpush1.bf16.msra.mxu0 %v2463
      %3676 = vmatprep.subr.bf16.mxu0 %v2471
      %3677 = vmatpush1.bf16.msra.mxu0 %v2470
      %3678 = vmatprep.subr.bf16.mxu0 %v2478
      %3679 = vmatpush1.bf16.msra.mxu0 %v2477
      %3680 = vmatprep.subr.bf16.mxu0 %v2485
      %3681 = vmatpush1.bf16.msra.mxu0 %v2484
      %3682 = vmatprep.subr.bf16.mxu0 %v2492
      %3683 = vmatpush1.bf16.msra.mxu0 %v2491
      %3684 = vmatprep.subr.bf16.mxu0 %v2499
      %3685 = vmatpush1.bf16.msra.mxu0 %v2498
      %3686 = vmatprep.subr.bf16.mxu0 %v2506
      %3687 = vmatpush1.bf16.msra.mxu0 %v2505
      %3688 = vmatprep.subr.bf16.mxu0 %v2513
      %3689 = vmatpush1.bf16.msra.mxu0 %v2512
      %3690 = vmatprep.subr.bf16.mxu0 %v2520
      %3691 = vmatpush1.bf16.msra.mxu0 %v2519
      %3692 = vmatprep.subr.bf16.mxu0 %v2527
      %3693 = vmatpush1.bf16.msra.mxu0 %v2526
      %3694 = vmatprep.subr.bf16.mxu0 %v2534
      %3695 = vmatpush1.bf16.msra.mxu0 %v2533
      %3696 = vmatprep.subr.bf16.mxu0 %v2541
      %3697 = vmatpush1.bf16.msra.mxu0 %v2540
      %3698 = vmatprep.mubr.bf16.mxu0 %v2865
      %3699 = vmatmul.mubr.bf16.gmra.mrb[0].mxu0 %v2864
      %v3700 = vpop.f32.mrb[0].mxu0
      %v3701 = vadd.f32 %v3500, %v3700
      %v3702 = vpop.f32.mrb[0].mxu0
      %v3703 = vadd.f32 %v3502, %v3702
      %v3704 = vpop.f32.mrb[0].mxu0
      %v3705 = vadd.f32 %v3504, %v3704
      %v3706 = vpop.f32.mrb[0].mxu0
      %v3707 = vadd.f32 %v3506, %v3706
      %3708 = vmatprep.mubr.bf16.mxu0 %v2874
      %3709 = vmatmul.mubr.bf16.gmra.mrb[0].mxu0 %v2873
      %v3710 = vpop.f32.mrb[0].mxu0
      %v3711 = vadd.f32 %v3510, %v3710
      %v3712 = vpop.f32.mrb[0].mxu0
      %v3713 = vadd.f32 %v3512, %v3712
      %v3714 = vpop.f32.mrb[0].mxu0
      %v3715 = vadd.f32 %v3514, %v3714
      %v3716 = vpop.f32.mrb[0].mxu0
      %v3717 = vadd.f32 %v3516, %v3716
      %3718 = vmatprep.mubr.bf16.mxu0 %v2883
      %3719 = vmatmul.mubr.bf16.gmra.mrb[0].mxu0 %v2882
      %v3720 = vpop.f32.mrb[0].mxu0
      %v3721 = vadd.f32 %v3520, %v3720
      %v3722 = vpop.f32.mrb[0].mxu0
      %v3723 = vadd.f32 %v3522, %v3722
      %v3724 = vpop.f32.mrb[0].mxu0
      %v3725 = vadd.f32 %v3524, %v3724
      %v3726 = vpop.f32.mrb[0].mxu0
      %v3727 = vadd.f32 %v3526, %v3726
      %3728 = vmatprep.mubr.bf16.mxu0 %v2892
      %3729 = vmatmul.mubr.bf16.gmra.mrb[0].mxu0 %v2891
      %v3730 = vpop.f32.mrb[0].mxu0
      %v3731 = vadd.f32 %v3530, %v3730
      %v3732 = vpop.f32.mrb[0].mxu0
      %v3733 = vadd.f32 %v3532, %v3732
      %v3734 = vpop.f32.mrb[0].mxu0
      %v3735 = vadd.f32 %v3534, %v3734
      %v3736 = vpop.f32.mrb[0].mxu0
      %v3737 = vadd.f32 %v3536, %v3736
      %3738 = vmatprep.mubr.bf16.mxu0 %v2901
      %3739 = vmatmul.mubr.bf16.gmra.mrb[0].mxu0 %v2900
      %v3740 = vpop.f32.mrb[0].mxu0
      %v3741 = vadd.f32 %v3540, %v3740
      %v3742 = vpop.f32.mrb[0].mxu0
      %v3743 = vadd.f32 %v3542, %v3742
      %v3744 = vpop.f32.mrb[0].mxu0
      %v3745 = vadd.f32 %v3544, %v3744
      %v3746 = vpop.f32.mrb[0].mxu0
      %v3747 = vadd.f32 %v3546, %v3746
      %3748 = vmatprep.mubr.bf16.mxu0 %v2910
      %3749 = vmatmul.mubr.bf16.gmra.mrb[0].mxu0 %v2909
      %v3750 = vpop.f32.mrb[0].mxu0
      %v3751 = vadd.f32 %v3550, %v3750
      %v3752 = vpop.f32.mrb[0].mxu0
      %v3753 = vadd.f32 %v3552, %v3752
      %v3754 = vpop.f32.mrb[0].mxu0
      %v3755 = vadd.f32 %v3554, %v3754
      %v3756 = vpop.f32.mrb[0].mxu0
      %v3757 = vadd.f32 %v3556, %v3756
      %3758 = vmatprep.mubr.bf16.mxu0 %v2919
      %3759 = vmatmul.mubr.bf16.gmra.mrb[0].mxu0 %v2918
      %v3760 = vpop.f32.mrb[0].mxu0
      %v3761 = vadd.f32 %v3560, %v3760
      %v3762 = vpop.f32.mrb[0].mxu0
      %v3763 = vadd.f32 %v3562, %v3762
      %v3764 = vpop.f32.mrb[0].mxu0
      %v3765 = vadd.f32 %v3564, %v3764
      %v3766 = vpop.f32.mrb[0].mxu0
      %v3767 = vadd.f32 %v3566, %v3766
      %3768 = vmatprep.mubr.bf16.mxu0 %v2928
      %3769 = vmatmul.mubr.bf16.gmra.mrb[0].mxu0 %v2927
      %v3770 = vpop.f32.mrb[0].mxu0
      %v3771 = vadd.f32 %v3570, %v3770
      %v3772 = vpop.f32.mrb[0].mxu0
      %v3773 = vadd.f32 %v3572, %v3772
      %v3774 = vpop.f32.mrb[0].mxu0
      %v3775 = vadd.f32 %v3574, %v3774
      %v3776 = vpop.f32.mrb[0].mxu0
      %v3777 = vadd.f32 %v3576, %v3776
      %3778 = vmatprep.mubr.bf16.mxu0 %v2937
      %3779 = vmatmul.mubr.bf16.gmra.mrb[0].mxu0 %v2936
      %v3780 = vpop.f32.mrb[0].mxu0
      %v3781 = vadd.f32 %v3580, %v3780
      %v3782 = vpop.f32.mrb[0].mxu0
      %v3783 = vadd.f32 %v3582, %v3782
      %v3784 = vpop.f32.mrb[0].mxu0
      %v3785 = vadd.f32 %v3584, %v3784
      %v3786 = vpop.f32.mrb[0].mxu0
      %v3787 = vadd.f32 %v3586, %v3786
      %3788 = vmatprep.mubr.bf16.mxu0 %v2946
      %3789 = vmatmul.mubr.bf16.gmra.mrb[0].mxu0 %v2945
      %v3790 = vpop.f32.mrb[0].mxu0
      %v3791 = vadd.f32 %v3590, %v3790
      %v3792 = vpop.f32.mrb[0].mxu0
      %v3793 = vadd.f32 %v3592, %v3792
      %v3794 = vpop.f32.mrb[0].mxu0
      %v3795 = vadd.f32 %v3594, %v3794
      %v3796 = vpop.f32.mrb[0].mxu0
      %v3797 = vadd.f32 %v3596, %v3796
      %3798 = vmatprep.mubr.bf16.mxu0 %v2955
      %3799 = vmatmul.mubr.bf16.gmra.mrb[0].mxu0 %v2954
      %v3800 = vpop.f32.mrb[0].mxu0
      %v3801 = vadd.f32 %v3600, %v3800
      %v3802 = vpop.f32.mrb[0].mxu0
      %v3803 = vadd.f32 %v3602, %v3802
      %v3804 = vpop.f32.mrb[0].mxu0
      %v3805 = vadd.f32 %v3604, %v3804
      %v3806 = vpop.f32.mrb[0].mxu0
      %v3807 = vadd.f32 %v3606, %v3806
      %3808 = vmatprep.mubr.bf16.mxu0 %v2964
      %3809 = vmatmul.mubr.bf16.gmra.mrb[0].mxu0 %v2963
      %v3810 = vpop.f32.mrb[0].mxu0
      %v3811 = vadd.f32 %v3610, %v3810
      %v3812 = vpop.f32.mrb[0].mxu0
      %v3813 = vadd.f32 %v3612, %v3812
      %v3814 = vpop.f32.mrb[0].mxu0
      %v3815 = vadd.f32 %v3614, %v3814
      %v3816 = vpop.f32.mrb[0].mxu0
      %v3817 = vadd.f32 %v3616, %v3816
      %3818 = vmatprep.mubr.bf16.mxu0 %v2973
      %3819 = vmatmul.mubr.bf16.gmra.mrb[0].mxu0 %v2972
      %v3820 = vpop.f32.mrb[0].mxu0
      %v3821 = vadd.f32 %v3620, %v3820
      %v3822 = vpop.f32.mrb[0].mxu0
      %v3823 = vadd.f32 %v3622, %v3822
      %v3824 = vpop.f32.mrb[0].mxu0
      %v3825 = vadd.f32 %v3624, %v3824
      %v3826 = vpop.f32.mrb[0].mxu0
      %v3827 = vadd.f32 %v3626, %v3826
      %3828 = vmatprep.mubr.bf16.mxu0 %v2982
      %3829 = vmatmul.mubr.bf16.gmra.mrb[0].mxu0 %v2981
      %v3830 = vpop.f32.mrb[0].mxu0
      %v3831 = vadd.f32 %v3630, %v3830
      %v3832 = vpop.f32.mrb[0].mxu0
      %v3833 = vadd.f32 %v3632, %v3832
      %v3834 = vpop.f32.mrb[0].mxu0
      %v3835 = vadd.f32 %v3634, %v3834
      %v3836 = vpop.f32.mrb[0].mxu0
      %v3837 = vadd.f32 %v3636, %v3836
      %3838 = vmatprep.mubr.bf16.mxu0 %v2991
      %3839 = vmatmul.mubr.bf16.gmra.mrb[0].mxu0 %v2990
      %v3840 = vpop.f32.mrb[0].mxu0
      %v3841 = vadd.f32 %v3640, %v3840
      %v3842 = vpop.f32.mrb[0].mxu0
      %v3843 = vadd.f32 %v3642, %v3842
      %v3844 = vpop.f32.mrb[0].mxu0
      %v3845 = vadd.f32 %v3644, %v3844
      %v3846 = vpop.f32.mrb[0].mxu0
      %v3847 = vadd.f32 %v3646, %v3846
      %3848 = vmatprep.mubr.bf16.mxu0 %v3000
      %3849 = vmatmul.mubr.bf16.gmra.mrb[0].mxu0 %v2999
      %v3850 = vpop.f32.mrb[0].mxu0
      %v3851 = vadd.f32 %v3650, %v3850
      %v3852 = vpop.f32.mrb[0].mxu0
      %v3853 = vadd.f32 %v3652, %v3852
      %v3854 = vpop.f32.mrb[0].mxu0
      %v3855 = vadd.f32 %v3654, %v3854
      %v3856 = vpop.f32.mrb[0].mxu0
      %v3857 = vadd.f32 %v3656, %v3856
      %3858 = vmatprep.mubr.bf16.mxu0 %v3009
      %3859 = vmatmul.mubr.bf16.gmra.mrb[0].mxu0 %v3008
      %v3860 = vpop.f32.mrb[0].mxu0
      %v3861 = vadd.f32 %v3660, %v3860
      %v3862 = vpop.f32.mrb[0].mxu0
      %v3863 = vadd.f32 %v3662, %v3862
      %v3864 = vpop.f32.mrb[0].mxu0
      %v3865 = vpop.f32.mrb[0].mxu0
      %3866 = vdwg.mxu0
      %3867 = vmatprep.subr.bf16.mxu0 %v2548
      %3868 = vmatpush1.bf16.msra.mxu0 %v2547
      %3869 = vmatprep.subr.bf16.mxu0 %v2555
      %3870 = vmatpush1.bf16.msra.mxu0 %v2554
      %3871 = vmatprep.subr.bf16.mxu0 0
      %3872 = vmatpush1.bf16.msra.mxu0 0
      %3873 = vmatprep.subr.bf16.mxu0 0
      %3874 = vmatpush1.bf16.msra.mxu0 0
      %3875 = vmatprep.subr.bf16.mxu0 0
      %3876 = vmatpush1.bf16.msra.mxu0 0
      %3877 = vmatprep.subr.bf16.mxu0 0
      %3878 = vmatpush1.bf16.msra.mxu0 0
      %3879 = vmatprep.subr.bf16.mxu0 0
      %3880 = vmatpush1.bf16.msra.mxu0 0
      %3881 = vmatprep.subr.bf16.mxu0 0
      %3882 = vmatpush1.bf16.msra.mxu0 0
      %3883 = vmatprep.subr.bf16.mxu0 0
      %3884 = vmatpush1.bf16.msra.mxu0 0
      %3885 = vmatprep.subr.bf16.mxu0 0
      %3886 = vmatpush1.bf16.msra.mxu0 0
      %3887 = vmatprep.subr.bf16.mxu0 0
      %3888 = vmatpush1.bf16.msra.mxu0 0
      %3889 = vmatprep.subr.bf16.mxu0 0
      %3890 = vmatpush1.bf16.msra.mxu0 0
      %3891 = vmatprep.subr.bf16.mxu0 0
      %3892 = vmatpush1.bf16.msra.mxu0 0
      %3893 = vmatprep.subr.bf16.mxu0 0
      %3894 = vmatpush1.bf16.msra.mxu0 0
      %3895 = vmatprep.subr.bf16.mxu0 0
      %3896 = vmatpush1.bf16.msra.mxu0 0
      %3897 = vmatprep.subr.bf16.mxu0 0
      %3898 = vmatpush1.bf16.msra.mxu0 0
      %3899 = vmatprep.mubr.bf16.mxu0 0
      %3900 = vmatmul.mubr.bf16.gmra.mrb[0].mxu0 %v3013
      %v3901 = vpop.f32.mrb[0].mxu0
      %v3902 = vadd.f32 %v3701, %v3901
      %v3903 = vpop.f32.mrb[0].mxu0
      %v3904 = vadd.f32 %v3703, %v3903
      %v3905 = vpop.f32.mrb[0].mxu0
      %v3906 = vadd.f32 %v3705, %v3905
      %v3907 = vpop.f32.mrb[0].mxu0
      %v3908 = vadd.f32 %v3707, %v3907
      %3909 = vmatprep.mubr.bf16.mxu0 0
      %3910 = vmatmul.mubr.bf16.gmra.mrb[0].mxu0 %v3016
      %v3911 = vpop.f32.mrb[0].mxu0
      %v3912 = vadd.f32 %v3711, %v3911
      %v3913 = vpop.f32.mrb[0].mxu0
      %v3914 = vadd.f32 %v3713, %v3913
      %v3915 = vpop.f32.mrb[0].mxu0
      %v3916 = vadd.f32 %v3715, %v3915
      %v3917 = vpop.f32.mrb[0].mxu0
      %v3918 = vadd.f32 %v3717, %v3917
      %3919 = vmatprep.mubr.bf16.mxu0 0
      %3920 = vmatmul.mubr.bf16.gmra.mrb[0].mxu0 %v3019
      %v3921 = vpop.f32.mrb[0].mxu0
      %v3922 = vadd.f32 %v3721, %v3921
      %v3923 = vpop.f32.mrb[0].mxu0
      %v3924 = vadd.f32 %v3723, %v3923
      %v3925 = vpop.f32.mrb[0].mxu0
      %v3926 = vadd.f32 %v3725, %v3925
      %v3927 = vpop.f32.mrb[0].mxu0
      %v3928 = vadd.f32 %v3727, %v3927
      %3929 = vmatprep.mubr.bf16.mxu0 0
      %3930 = vmatmul.mubr.bf16.gmra.mrb[0].mxu0 %v3022
      %v3931 = vpop.f32.mrb[0].mxu0
      %v3932 = vadd.f32 %v3731, %v3931
      %v3933 = vpop.f32.mrb[0].mxu0
      %v3934 = vadd.f32 %v3733, %v3933
      %v3935 = vpop.f32.mrb[0].mxu0
      %v3936 = vadd.f32 %v3735, %v3935
      %v3937 = vpop.f32.mrb[0].mxu0
      %v3938 = vadd.f32 %v3737, %v3937
      %3939 = vmatprep.mubr.bf16.mxu0 0
      %3940 = vmatmul.mubr.bf16.gmra.mrb[0].mxu0 %v3025
      %v3941 = vpop.f32.mrb[0].mxu0
      %v3942 = vadd.f32 %v3741, %v3941
      %v3943 = vpop.f32.mrb[0].mxu0
      %v3944 = vadd.f32 %v3743, %v3943
      %v3945 = vpop.f32.mrb[0].mxu0
      %v3946 = vadd.f32 %v3745, %v3945
      %v3947 = vpop.f32.mrb[0].mxu0
      %v3948 = vadd.f32 %v3747, %v3947
      %3949 = vmatprep.mubr.bf16.mxu0 0
      %3950 = vmatmul.mubr.bf16.gmra.mrb[0].mxu0 %v3028
      %v3951 = vpop.f32.mrb[0].mxu0
      %v3952 = vadd.f32 %v3751, %v3951
      %v3953 = vpop.f32.mrb[0].mxu0
      %v3954 = vadd.f32 %v3753, %v3953
      %v3955 = vpop.f32.mrb[0].mxu0
      %v3956 = vadd.f32 %v3755, %v3955
      %v3957 = vpop.f32.mrb[0].mxu0
      %v3958 = vadd.f32 %v3757, %v3957
      %3959 = vmatprep.mubr.bf16.mxu0 0
      %3960 = vmatmul.mubr.bf16.gmra.mrb[0].mxu0 %v3031
      %v3961 = vpop.f32.mrb[0].mxu0
      %v3962 = vadd.f32 %v3761, %v3961
      %v3963 = vpop.f32.mrb[0].mxu0
      %v3964 = vadd.f32 %v3763, %v3963
      %v3965 = vpop.f32.mrb[0].mxu0
      %v3966 = vadd.f32 %v3765, %v3965
      %v3967 = vpop.f32.mrb[0].mxu0
      %v3968 = vadd.f32 %v3767, %v3967
      %3969 = vmatprep.mubr.bf16.mxu0 0
      %3970 = vmatmul.mubr.bf16.gmra.mrb[0].mxu0 %v3034
      %v3971 = vpop.f32.mrb[0].mxu0
      %v3972 = vadd.f32 %v3771, %v3971
      %v3973 = vpop.f32.mrb[0].mxu0
      %v3974 = vadd.f32 %v3773, %v3973
      %v3975 = vpop.f32.mrb[0].mxu0
      %v3976 = vadd.f32 %v3775, %v3975
      %v3977 = vpop.f32.mrb[0].mxu0
      %v3978 = vadd.f32 %v3777, %v3977
      %3979 = vmatprep.mubr.bf16.mxu0 0
      %3980 = vmatmul.mubr.bf16.gmra.mrb[0].mxu0 %v3037
      %v3981 = vpop.f32.mrb[0].mxu0
      %v3982 = vadd.f32 %v3781, %v3981
      %v3983 = vpop.f32.mrb[0].mxu0
      %v3984 = vadd.f32 %v3783, %v3983
      %v3985 = vpop.f32.mrb[0].mxu0
      %v3986 = vadd.f32 %v3785, %v3985
      %v3987 = vpop.f32.mrb[0].mxu0
      %v3988 = vadd.f32 %v3787, %v3987
      %3989 = vmatprep.mubr.bf16.mxu0 0
      %3990 = vmatmul.mubr.bf16.gmra.mrb[0].mxu0 %v3040
      %v3991 = vpop.f32.mrb[0].mxu0
      %v3992 = vadd.f32 %v3791, %v3991
      %v3993 = vpop.f32.mrb[0].mxu0
      %v3994 = vadd.f32 %v3793, %v3993
      %v3995 = vpop.f32.mrb[0].mxu0
      %v3996 = vadd.f32 %v3795, %v3995
      %v3997 = vpop.f32.mrb[0].mxu0
      %v3998 = vadd.f32 %v3797, %v3997
      %3999 = vmatprep.mubr.bf16.mxu0 0
      %4000 = vmatmul.mubr.bf16.gmra.mrb[0].mxu0 %v3043
      %v4001 = vpop.f32.mrb[0].mxu0
      %v4002 = vadd.f32 %v3801, %v4001
      %v4003 = vpop.f32.mrb[0].mxu0
      %v4004 = vadd.f32 %v3803, %v4003
      %v4005 = vpop.f32.mrb[0].mxu0
      %v4006 = vadd.f32 %v3805, %v4005
      %v4007 = vpop.f32.mrb[0].mxu0
      %v4008 = vadd.f32 %v3807, %v4007
      %4009 = vmatprep.mubr.bf16.mxu0 0
      %4010 = vmatmul.mubr.bf16.gmra.mrb[0].mxu0 %v3046
      %v4011 = vpop.f32.mrb[0].mxu0
      %v4012 = vadd.f32 %v3811, %v4011
      %v4013 = vpop.f32.mrb[0].mxu0
      %v4014 = vadd.f32 %v3813, %v4013
      %v4015 = vpop.f32.mrb[0].mxu0
      %v4016 = vadd.f32 %v3815, %v4015
      %v4017 = vpop.f32.mrb[0].mxu0
      %v4018 = vadd.f32 %v3817, %v4017
      %4019 = vmatprep.mubr.bf16.mxu0 0
      %4020 = vmatmul.mubr.bf16.gmra.mrb[0].mxu0 %v3049
      %v4021 = vpop.f32.mrb[0].mxu0
      %v4022 = vadd.f32 %v3821, %v4021
      %v4023 = vpop.f32.mrb[0].mxu0
      %v4024 = vadd.f32 %v3823, %v4023
      %v4025 = vpop.f32.mrb[0].mxu0
      %v4026 = vadd.f32 %v3825, %v4025
      %v4027 = vpop.f32.mrb[0].mxu0
      %v4028 = vadd.f32 %v3827, %v4027
      %4029 = vmatprep.mubr.bf16.mxu0 0
      %4030 = vmatmul.mubr.bf16.gmra.mrb[0].mxu0 %v3052
      %v4031 = vpop.f32.mrb[0].mxu0
      %v4032 = vadd.f32 %v3831, %v4031
      %v4033 = vpop.f32.mrb[0].mxu0
      %v4034 = vadd.f32 %v3833, %v4033
      %v4035 = vpop.f32.mrb[0].mxu0
      %v4036 = vadd.f32 %v3835, %v4035
      %v4037 = vpop.f32.mrb[0].mxu0
      %v4038 = vadd.f32 %v3837, %v4037
      %4039 = vmatprep.mubr.bf16.mxu0 0
      %4040 = vmatmul.mubr.bf16.gmra.mrb[0].mxu0 %v3055
      %v4041 = vpop.f32.mrb[0].mxu0
      %v4042 = vadd.f32 %v3841, %v4041
      %v4043 = vpop.f32.mrb[0].mxu0
      %v4044 = vadd.f32 %v3843, %v4043
      %v4045 = vpop.f32.mrb[0].mxu0
      %v4046 = vadd.f32 %v3845, %v4045
      %v4047 = vpop.f32.mrb[0].mxu0
      %v4048 = vadd.f32 %v3847, %v4047
      %4049 = vmatprep.mubr.bf16.mxu0 0
      %4050 = vmatmul.mubr.bf16.gmra.mrb[0].mxu0 %v3058
      %v4051 = vpop.f32.mrb[0].mxu0
      %v4052 = vadd.f32 %v3851, %v4051
      %v4053 = vpop.f32.mrb[0].mxu0
      %v4054 = vadd.f32 %v3853, %v4053
      %v4055 = vpop.f32.mrb[0].mxu0
      %v4056 = vadd.f32 %v3855, %v4055
      %v4057 = vpop.f32.mrb[0].mxu0
      %v4058 = vadd.f32 %v3857, %v4057
      %4059 = vmatprep.mubr.bf16.mxu0 0
      %4060 = vmatmul.mubr.bf16.gmra.mrb[0].mxu0 %v3061
      %v4061 = vpop.f32.mrb[0].mxu0
      %v4062 = vadd.f32 %v3861, %v4061
      %v4063 = vpop.f32.mrb[0].mxu0
      %v4064 = vadd.f32 %v3863, %v4063
      %v4065 = vpop.f32.mrb[0].mxu0
      %v4066 = vpop.f32.mrb[0].mxu0
      %4067 = vdwg.mxu0
      %4068 = vmatprep.subr.bf16.mxu0 %v2102
      %4069 = vmatpush1.bf16.msra.mxu0 %v2101
      %4070 = vmatprep.subr.bf16.mxu0 %v2109
      %4071 = vmatpush1.bf16.msra.mxu0 %v2108
      %4072 = vmatprep.subr.bf16.mxu0 %v2116
      %4073 = vmatpush1.bf16.msra.mxu0 %v2115
      %4074 = vmatprep.subr.bf16.mxu0 %v2123
      %4075 = vmatpush1.bf16.msra.mxu0 %v2122
      %4076 = vmatprep.subr.bf16.mxu0 %v2130
      %4077 = vmatpush1.bf16.msra.mxu0 %v2129
      %4078 = vmatprep.subr.bf16.mxu0 %v2137
      %4079 = vmatpush1.bf16.msra.mxu0 %v2136
      %4080 = vmatprep.subr.bf16.mxu0 %v2144
      %4081 = vmatpush1.bf16.msra.mxu0 %v2143
      %4082 = vmatprep.subr.bf16.mxu0 %v2151
      %4083 = vmatpush1.bf16.msra.mxu0 %v2150
      %4084 = vmatprep.subr.bf16.mxu0 %v2158
      %4085 = vmatpush1.bf16.msra.mxu0 %v2157
      %4086 = vmatprep.subr.bf16.mxu0 %v2165
      %4087 = vmatpush1.bf16.msra.mxu0 %v2164
      %4088 = vmatprep.subr.bf16.mxu0 %v2172
      %4089 = vmatpush1.bf16.msra.mxu0 %v2171
      %4090 = vmatprep.subr.bf16.mxu0 %v2179
      %4091 = vmatpush1.bf16.msra.mxu0 %v2178
      %4092 = vmatprep.subr.bf16.mxu0 %v2186
      %4093 = vmatpush1.bf16.msra.mxu0 %v2185
      %4094 = vmatprep.subr.bf16.mxu0 %v2193
      %4095 = vmatpush1.bf16.msra.mxu0 %v2192
      %4096 = vmatprep.subr.bf16.mxu0 %v2200
      %4097 = vmatpush1.bf16.msra.mxu0 %v2199
      %4098 = vmatprep.subr.bf16.mxu0 %v2207
      %4099 = vmatpush1.bf16.msra.mxu0 %v2206
      %4100 = vmatprep.mubr.bf16.mxu0 %v2859
      %4101 = vmatmul.mubr.bf16.gmra.mrb[0].mxu0 %v2858
      %v4102 = vpop.f32.mrb[0].mxu0
      %v4103 = vadd.f32 0.0, %v4102
      %v4104 = vpop.f32.mrb[0].mxu0
      %v4105 = vadd.f32 0.0, %v4104
      %v4106 = vpop.f32.mrb[0].mxu0
      %v4107 = vadd.f32 0.0, %v4106
      %v4108 = vpop.f32.mrb[0].mxu0
      %v4109 = vadd.f32 0.0, %v4108
      %4110 = vmatprep.mubr.bf16.mxu0 %v2868
      %4111 = vmatmul.mubr.bf16.gmra.mrb[0].mxu0 %v2867
      %v4112 = vpop.f32.mrb[0].mxu0
      %v4113 = vadd.f32 0.0, %v4112
      %v4114 = vpop.f32.mrb[0].mxu0
      %v4115 = vadd.f32 0.0, %v4114
      %v4116 = vpop.f32.mrb[0].mxu0
      %v4117 = vadd.f32 0.0, %v4116
      %v4118 = vpop.f32.mrb[0].mxu0
      %v4119 = vadd.f32 0.0, %v4118
      %4120 = vmatprep.mubr.bf16.mxu0 %v2877
      %4121 = vmatmul.mubr.bf16.gmra.mrb[0].mxu0 %v2876
      %v4122 = vpop.f32.mrb[0].mxu0
      %v4123 = vadd.f32 0.0, %v4122
      %v4124 = vpop.f32.mrb[0].mxu0
      %v4125 = vadd.f32 0.0, %v4124
      %v4126 = vpop.f32.mrb[0].mxu0
      %v4127 = vadd.f32 0.0, %v4126
      %v4128 = vpop.f32.mrb[0].mxu0
      %v4129 = vadd.f32 0.0, %v4128
      %4130 = vmatprep.mubr.bf16.mxu0 %v2886
      %4131 = vmatmul.mubr.bf16.gmra.mrb[0].mxu0 %v2885
      %v4132 = vpop.f32.mrb[0].mxu0
      %v4133 = vadd.f32 0.0, %v4132
      %v4134 = vpop.f32.mrb[0].mxu0
      %v4135 = vadd.f32 0.0, %v4134
      %v4136 = vpop.f32.mrb[0].mxu0
      %v4137 = vadd.f32 0.0, %v4136
      %v4138 = vpop.f32.mrb[0].mxu0
      %v4139 = vadd.f32 0.0, %v4138
      %4140 = vmatprep.mubr.bf16.mxu0 %v2895
      %4141 = vmatmul.mubr.bf16.gmra.mrb[0].mxu0 %v2894
      %v4142 = vpop.f32.mrb[0].mxu0
      %v4143 = vadd.f32 0.0, %v4142
      %v4144 = vpop.f32.mrb[0].mxu0
      %v4145 = vadd.f32 0.0, %v4144
      %v4146 = vpop.f32.mrb[0].mxu0
      %v4147 = vadd.f32 0.0, %v4146
      %v4148 = vpop.f32.mrb[0].mxu0
      %v4149 = vadd.f32 0.0, %v4148
      %4150 = vmatprep.mubr.bf16.mxu0 %v2904
      %4151 = vmatmul.mubr.bf16.gmra.mrb[0].mxu0 %v2903
      %v4152 = vpop.f32.mrb[0].mxu0
      %v4153 = vadd.f32 0.0, %v4152
      %v4154 = vpop.f32.mrb[0].mxu0
      %v4155 = vadd.f32 0.0, %v4154
      %v4156 = vpop.f32.mrb[0].mxu0
      %v4157 = vadd.f32 0.0, %v4156
      %v4158 = vpop.f32.mrb[0].mxu0
      %v4159 = vadd.f32 0.0, %v4158
      %4160 = vmatprep.mubr.bf16.mxu0 %v2913
      %4161 = vmatmul.mubr.bf16.gmra.mrb[0].mxu0 %v2912
      %v4162 = vpop.f32.mrb[0].mxu0
      %v4163 = vadd.f32 0.0, %v4162
      %v4164 = vpop.f32.mrb[0].mxu0
      %v4165 = vadd.f32 0.0, %v4164
      %v4166 = vpop.f32.mrb[0].mxu0
      %v4167 = vadd.f32 0.0, %v4166
      %v4168 = vpop.f32.mrb[0].mxu0
      %v4169 = vadd.f32 0.0, %v4168
      %4170 = vmatprep.mubr.bf16.mxu0 %v2922
      %4171 = vmatmul.mubr.bf16.gmra.mrb[0].mxu0 %v2921
      %v4172 = vpop.f32.mrb[0].mxu0
      %v4173 = vadd.f32 0.0, %v4172
      %v4174 = vpop.f32.mrb[0].mxu0
      %v4175 = vadd.f32 0.0, %v4174
      %v4176 = vpop.f32.mrb[0].mxu0
      %v4177 = vadd.f32 0.0, %v4176
      %v4178 = vpop.f32.mrb[0].mxu0
      %v4179 = vadd.f32 0.0, %v4178
      %4180 = vmatprep.mubr.bf16.mxu0 %v2931
      %4181 = vmatmul.mubr.bf16.gmra.mrb[0].mxu0 %v2930
      %v4182 = vpop.f32.mrb[0].mxu0
      %v4183 = vadd.f32 0.0, %v4182
      %v4184 = vpop.f32.mrb[0].mxu0
      %v4185 = vadd.f32 0.0, %v4184
      %v4186 = vpop.f32.mrb[0].mxu0
      %v4187 = vadd.f32 0.0, %v4186
      %v4188 = vpop.f32.mrb[0].mxu0
      %v4189 = vadd.f32 0.0, %v4188
      %4190 = vmatprep.mubr.bf16.mxu0 %v2940
      %4191 = vmatmul.mubr.bf16.gmra.mrb[0].mxu0 %v2939
      %v4192 = vpop.f32.mrb[0].mxu0
      %v4193 = vadd.f32 0.0, %v4192
      %v4194 = vpop.f32.mrb[0].mxu0
      %v4195 = vadd.f32 0.0, %v4194
      %v4196 = vpop.f32.mrb[0].mxu0
      %v4197 = vadd.f32 0.0, %v4196
      %v4198 = vpop.f32.mrb[0].mxu0
      %v4199 = vadd.f32 0.0, %v4198
      %4200 = vmatprep.mubr.bf16.mxu0 %v2949
      %4201 = vmatmul.mubr.bf16.gmra.mrb[0].mxu0 %v2948
      %v4202 = vpop.f32.mrb[0].mxu0
      %v4203 = vadd.f32 0.0, %v4202
      %v4204 = vpop.f32.mrb[0].mxu0
      %v4205 = vadd.f32 0.0, %v4204
      %v4206 = vpop.f32.mrb[0].mxu0
      %v4207 = vadd.f32 0.0, %v4206
      %v4208 = vpop.f32.mrb[0].mxu0
      %v4209 = vadd.f32 0.0, %v4208
      %4210 = vmatprep.mubr.bf16.mxu0 %v2958
      %4211 = vmatmul.mubr.bf16.gmra.mrb[0].mxu0 %v2957
      %v4212 = vpop.f32.mrb[0].mxu0
      %v4213 = vadd.f32 0.0, %v4212
      %v4214 = vpop.f32.mrb[0].mxu0
      %v4215 = vadd.f32 0.0, %v4214
      %v4216 = vpop.f32.mrb[0].mxu0
      %v4217 = vadd.f32 0.0, %v4216
      %v4218 = vpop.f32.mrb[0].mxu0
      %v4219 = vadd.f32 0.0, %v4218
      %4220 = vmatprep.mubr.bf16.mxu0 %v2967
      %4221 = vmatmul.mubr.bf16.gmra.mrb[0].mxu0 %v2966
      %v4222 = vpop.f32.mrb[0].mxu0
      %v4223 = vadd.f32 0.0, %v4222
      %v4224 = vpop.f32.mrb[0].mxu0
      %v4225 = vadd.f32 0.0, %v4224
      %v4226 = vpop.f32.mrb[0].mxu0
      %v4227 = vadd.f32 0.0, %v4226
      %v4228 = vpop.f32.mrb[0].mxu0
      %v4229 = vadd.f32 0.0, %v4228
      %4230 = vmatprep.mubr.bf16.mxu0 %v2976
      %4231 = vmatmul.mubr.bf16.gmra.mrb[0].mxu0 %v2975
      %v4232 = vpop.f32.mrb[0].mxu0
      %v4233 = vadd.f32 0.0, %v4232
      %v4234 = vpop.f32.mrb[0].mxu0
      %v4235 = vadd.f32 0.0, %v4234
      %v4236 = vpop.f32.mrb[0].mxu0
      %v4237 = vadd.f32 0.0, %v4236
      %v4238 = vpop.f32.mrb[0].mxu0
      %v4239 = vadd.f32 0.0, %v4238
      %4240 = vmatprep.mubr.bf16.mxu0 %v2985
      %4241 = vmatmul.mubr.bf16.gmra.mrb[0].mxu0 %v2984
      %v4242 = vpop.f32.mrb[0].mxu0
      %v4243 = vadd.f32 0.0, %v4242
      %v4244 = vpop.f32.mrb[0].mxu0
      %v4245 = vadd.f32 0.0, %v4244
      %v4246 = vpop.f32.mrb[0].mxu0
      %v4247 = vadd.f32 0.0, %v4246
      %v4248 = vpop.f32.mrb[0].mxu0
      %v4249 = vadd.f32 0.0, %v4248
      %4250 = vmatprep.mubr.bf16.mxu0 %v2994
      %4251 = vmatmul.mubr.bf16.gmra.mrb[0].mxu0 %v2993
      %v4252 = vpop.f32.mrb[0].mxu0
      %v4253 = vadd.f32 0.0, %v4252
      %v4254 = vpop.f32.mrb[0].mxu0
      %v4255 = vadd.f32 0.0, %v4254
      %v4256 = vpop.f32.mrb[0].mxu0
      %v4257 = vadd.f32 0.0, %v4256
      %v4258 = vpop.f32.mrb[0].mxu0
      %v4259 = vadd.f32 0.0, %v4258
      %4260 = vmatprep.mubr.bf16.mxu0 %v3003
      %4261 = vmatmul.mubr.bf16.gmra.mrb[0].mxu0 %v3002
      %v4262 = vpop.f32.mrb[0].mxu0
      %v4263 = vadd.f32 0.0, %v4262
      %v4264 = vpop.f32.mrb[0].mxu0
      %v4265 = vadd.f32 0.0, %v4264
      %v4266 = vpop.f32.mrb[0].mxu0
      %v4267 = vpop.f32.mrb[0].mxu0
      %4268 = vdwg.mxu0
      %4269 = vmatprep.subr.bf16.mxu0 %v2214
      %4270 = vmatpush1.bf16.msra.mxu0 %v2213
      %4271 = vmatprep.subr.bf16.mxu0 %v2221
      %4272 = vmatpush1.bf16.msra.mxu0 %v2220
      %4273 = vmatprep.subr.bf16.mxu0 %v2228
      %4274 = vmatpush1.bf16.msra.mxu0 %v2227
      %4275 = vmatprep.subr.bf16.mxu0 %v2235
      %4276 = vmatpush1.bf16.msra.mxu0 %v2234
      %4277 = vmatprep.subr.bf16.mxu0 %v2242
      %4278 = vmatpush1.bf16.msra.mxu0 %v2241
      %4279 = vmatprep.subr.bf16.mxu0 %v2249
      %4280 = vmatpush1.bf16.msra.mxu0 %v2248
      %4281 = vmatprep.subr.bf16.mxu0 %v2256
      %4282 = vmatpush1.bf16.msra.mxu0 %v2255
      %4283 = vmatprep.subr.bf16.mxu0 %v2263
      %4284 = vmatpush1.bf16.msra.mxu0 %v2262
      %4285 = vmatprep.subr.bf16.mxu0 %v2270
      %4286 = vmatpush1.bf16.msra.mxu0 %v2269
      %4287 = vmatprep.subr.bf16.mxu0 %v2277
      %4288 = vmatpush1.bf16.msra.mxu0 %v2276
      %4289 = vmatprep.subr.bf16.mxu0 %v2284
      %4290 = vmatpush1.bf16.msra.mxu0 %v2283
      %4291 = vmatprep.subr.bf16.mxu0 %v2291
      %4292 = vmatpush1.bf16.msra.mxu0 %v2290
      %4293 = vmatprep.subr.bf16.mxu0 %v2298
      %4294 = vmatpush1.bf16.msra.mxu0 %v2297
      %4295 = vmatprep.subr.bf16.mxu0 %v2305
      %4296 = vmatpush1.bf16.msra.mxu0 %v2304
      %4297 = vmatprep.subr.bf16.mxu0 %v2312
      %4298 = vmatpush1.bf16.msra.mxu0 %v2311
      %4299 = vmatprep.subr.bf16.mxu0 %v2319
      %4300 = vmatpush1.bf16.msra.mxu0 %v2318
      %4301 = vmatprep.mubr.bf16.mxu0 %v2861
      %4302 = vmatmul.mubr.bf16.gmra.mrb[0].mxu0 %v2860
      %v4303 = vpop.f32.mrb[0].mxu0
      %v4304 = vadd.f32 %v4103, %v4303
      %v4305 = vpop.f32.mrb[0].mxu0
      %v4306 = vadd.f32 %v4105, %v4305
      %v4307 = vpop.f32.mrb[0].mxu0
      %v4308 = vadd.f32 %v4107, %v4307
      %v4309 = vpop.f32.mrb[0].mxu0
      %v4310 = vadd.f32 %v4109, %v4309
      %4311 = vmatprep.mubr.bf16.mxu0 %v2870
      %4312 = vmatmul.mubr.bf16.gmra.mrb[0].mxu0 %v2869
      %v4313 = vpop.f32.mrb[0].mxu0
      %v4314 = vadd.f32 %v4113, %v4313
      %v4315 = vpop.f32.mrb[0].mxu0
      %v4316 = vadd.f32 %v4115, %v4315
      %v4317 = vpop.f32.mrb[0].mxu0
      %v4318 = vadd.f32 %v4117, %v4317
      %v4319 = vpop.f32.mrb[0].mxu0
      %v4320 = vadd.f32 %v4119, %v4319
      %4321 = vmatprep.mubr.bf16.mxu0 %v2879
      %4322 = vmatmul.mubr.bf16.gmra.mrb[0].mxu0 %v2878
      %v4323 = vpop.f32.mrb[0].mxu0
      %v4324 = vadd.f32 %v4123, %v4323
      %v4325 = vpop.f32.mrb[0].mxu0
      %v4326 = vadd.f32 %v4125, %v4325
      %v4327 = vpop.f32.mrb[0].mxu0
      %v4328 = vadd.f32 %v4127, %v4327
      %v4329 = vpop.f32.mrb[0].mxu0
      %v4330 = vadd.f32 %v4129, %v4329
      %4331 = vmatprep.mubr.bf16.mxu0 %v2888
      %4332 = vmatmul.mubr.bf16.gmra.mrb[0].mxu0 %v2887
      %v4333 = vpop.f32.mrb[0].mxu0
      %v4334 = vadd.f32 %v4133, %v4333
      %v4335 = vpop.f32.mrb[0].mxu0
      %v4336 = vadd.f32 %v4135, %v4335
      %v4337 = vpop.f32.mrb[0].mxu0
      %v4338 = vadd.f32 %v4137, %v4337
      %v4339 = vpop.f32.mrb[0].mxu0
      %v4340 = vadd.f32 %v4139, %v4339
      %4341 = vmatprep.mubr.bf16.mxu0 %v2897
      %4342 = vmatmul.mubr.bf16.gmra.mrb[0].mxu0 %v2896
      %v4343 = vpop.f32.mrb[0].mxu0
      %v4344 = vadd.f32 %v4143, %v4343
      %v4345 = vpop.f32.mrb[0].mxu0
      %v4346 = vadd.f32 %v4145, %v4345
      %v4347 = vpop.f32.mrb[0].mxu0
      %v4348 = vadd.f32 %v4147, %v4347
      %v4349 = vpop.f32.mrb[0].mxu0
      %v4350 = vadd.f32 %v4149, %v4349
      %4351 = vmatprep.mubr.bf16.mxu0 %v2906
      %4352 = vmatmul.mubr.bf16.gmra.mrb[0].mxu0 %v2905
      %v4353 = vpop.f32.mrb[0].mxu0
      %v4354 = vadd.f32 %v4153, %v4353
      %v4355 = vpop.f32.mrb[0].mxu0
      %v4356 = vadd.f32 %v4155, %v4355
      %v4357 = vpop.f32.mrb[0].mxu0
      %v4358 = vadd.f32 %v4157, %v4357
      %v4359 = vpop.f32.mrb[0].mxu0
      %v4360 = vadd.f32 %v4159, %v4359
      %4361 = vmatprep.mubr.bf16.mxu0 %v2915
      %4362 = vmatmul.mubr.bf16.gmra.mrb[0].mxu0 %v2914
      %v4363 = vpop.f32.mrb[0].mxu0
      %v4364 = vadd.f32 %v4163, %v4363
      %v4365 = vpop.f32.mrb[0].mxu0
      %v4366 = vadd.f32 %v4165, %v4365
      %v4367 = vpop.f32.mrb[0].mxu0
      %v4368 = vadd.f32 %v4167, %v4367
      %v4369 = vpop.f32.mrb[0].mxu0
      %v4370 = vadd.f32 %v4169, %v4369
      %4371 = vmatprep.mubr.bf16.mxu0 %v2924
      %4372 = vmatmul.mubr.bf16.gmra.mrb[0].mxu0 %v2923
      %v4373 = vpop.f32.mrb[0].mxu0
      %v4374 = vadd.f32 %v4173, %v4373
      %v4375 = vpop.f32.mrb[0].mxu0
      %v4376 = vadd.f32 %v4175, %v4375
      %v4377 = vpop.f32.mrb[0].mxu0
      %v4378 = vadd.f32 %v4177, %v4377
      %v4379 = vpop.f32.mrb[0].mxu0
      %v4380 = vadd.f32 %v4179, %v4379
      %4381 = vmatprep.mubr.bf16.mxu0 %v2933
      %4382 = vmatmul.mubr.bf16.gmra.mrb[0].mxu0 %v2932
      %v4383 = vpop.f32.mrb[0].mxu0
      %v4384 = vadd.f32 %v4183, %v4383
      %v4385 = vpop.f32.mrb[0].mxu0
      %v4386 = vadd.f32 %v4185, %v4385
      %v4387 = vpop.f32.mrb[0].mxu0
      %v4388 = vadd.f32 %v4187, %v4387
      %v4389 = vpop.f32.mrb[0].mxu0
      %v4390 = vadd.f32 %v4189, %v4389
      %4391 = vmatprep.mubr.bf16.mxu0 %v2942
      %4392 = vmatmul.mubr.bf16.gmra.mrb[0].mxu0 %v2941
      %v4393 = vpop.f32.mrb[0].mxu0
      %v4394 = vadd.f32 %v4193, %v4393
      %v4395 = vpop.f32.mrb[0].mxu0
      %v4396 = vadd.f32 %v4195, %v4395
      %v4397 = vpop.f32.mrb[0].mxu0
      %v4398 = vadd.f32 %v4197, %v4397
      %v4399 = vpop.f32.mrb[0].mxu0
      %v4400 = vadd.f32 %v4199, %v4399
      %4401 = vmatprep.mubr.bf16.mxu0 %v2951
      %4402 = vmatmul.mubr.bf16.gmra.mrb[0].mxu0 %v2950
      %v4403 = vpop.f32.mrb[0].mxu0
      %v4404 = vadd.f32 %v4203, %v4403
      %v4405 = vpop.f32.mrb[0].mxu0
      %v4406 = vadd.f32 %v4205, %v4405
      %v4407 = vpop.f32.mrb[0].mxu0
      %v4408 = vadd.f32 %v4207, %v4407
      %v4409 = vpop.f32.mrb[0].mxu0
      %v4410 = vadd.f32 %v4209, %v4409
      %4411 = vmatprep.mubr.bf16.mxu0 %v2960
      %4412 = vmatmul.mubr.bf16.gmra.mrb[0].mxu0 %v2959
      %v4413 = vpop.f32.mrb[0].mxu0
      %v4414 = vadd.f32 %v4213, %v4413
      %v4415 = vpop.f32.mrb[0].mxu0
      %v4416 = vadd.f32 %v4215, %v4415
      %v4417 = vpop.f32.mrb[0].mxu0
      %v4418 = vadd.f32 %v4217, %v4417
      %v4419 = vpop.f32.mrb[0].mxu0
      %v4420 = vadd.f32 %v4219, %v4419
      %4421 = vmatprep.mubr.bf16.mxu0 %v2969
      %4422 = vmatmul.mubr.bf16.gmra.mrb[0].mxu0 %v2968
      %v4423 = vpop.f32.mrb[0].mxu0
      %v4424 = vadd.f32 %v4223, %v4423
      %v4425 = vpop.f32.mrb[0].mxu0
      %v4426 = vadd.f32 %v4225, %v4425
      %v4427 = vpop.f32.mrb[0].mxu0
      %v4428 = vadd.f32 %v4227, %v4427
      %v4429 = vpop.f32.mrb[0].mxu0
      %v4430 = vadd.f32 %v4229, %v4429
      %4431 = vmatprep.mubr.bf16.mxu0 %v2978
      %4432 = vmatmul.mubr.bf16.gmra.mrb[0].mxu0 %v2977
      %v4433 = vpop.f32.mrb[0].mxu0
      %v4434 = vadd.f32 %v4233, %v4433
      %v4435 = vpop.f32.mrb[0].mxu0
      %v4436 = vadd.f32 %v4235, %v4435
      %v4437 = vpop.f32.mrb[0].mxu0
      %v4438 = vadd.f32 %v4237, %v4437
      %v4439 = vpop.f32.mrb[0].mxu0
      %v4440 = vadd.f32 %v4239, %v4439
      %4441 = vmatprep.mubr.bf16.mxu0 %v2987
      %4442 = vmatmul.mubr.bf16.gmra.mrb[0].mxu0 %v2986
      %v4443 = vpop.f32.mrb[0].mxu0
      %v4444 = vadd.f32 %v4243, %v4443
      %v4445 = vpop.f32.mrb[0].mxu0
      %v4446 = vadd.f32 %v4245, %v4445
      %v4447 = vpop.f32.mrb[0].mxu0
      %v4448 = vadd.f32 %v4247, %v4447
      %v4449 = vpop.f32.mrb[0].mxu0
      %v4450 = vadd.f32 %v4249, %v4449
      %4451 = vmatprep.mubr.bf16.mxu0 %v2996
      %4452 = vmatmul.mubr.bf16.gmra.mrb[0].mxu0 %v2995
      %v4453 = vpop.f32.mrb[0].mxu0
      %v4454 = vadd.f32 %v4253, %v4453
      %v4455 = vpop.f32.mrb[0].mxu0
      %v4456 = vadd.f32 %v4255, %v4455
      %v4457 = vpop.f32.mrb[0].mxu0
      %v4458 = vadd.f32 %v4257, %v4457
      %v4459 = vpop.f32.mrb[0].mxu0
      %v4460 = vadd.f32 %v4259, %v4459
      %4461 = vmatprep.mubr.bf16.mxu0 %v3005
      %4462 = vmatmul.mubr.bf16.gmra.mrb[0].mxu0 %v3004
      %v4463 = vpop.f32.mrb[0].mxu0
      %v4464 = vadd.f32 %v4263, %v4463
      %v4465 = vpop.f32.mrb[0].mxu0
      %v4466 = vadd.f32 %v4265, %v4465
      %v4467 = vpop.f32.mrb[0].mxu0
      %v4468 = vpop.f32.mrb[0].mxu0
      %4469 = vdwg.mxu0
      %4470 = vmatprep.subr.bf16.mxu0 %v2326
      %4471 = vmatpush1.bf16.msra.mxu0 %v2325
      %4472 = vmatprep.subr.bf16.mxu0 %v2333
      %4473 = vmatpush1.bf16.msra.mxu0 %v2332
      %4474 = vmatprep.subr.bf16.mxu0 %v2340
      %4475 = vmatpush1.bf16.msra.mxu0 %v2339
      %4476 = vmatprep.subr.bf16.mxu0 %v2347
      %4477 = vmatpush1.bf16.msra.mxu0 %v2346
      %4478 = vmatprep.subr.bf16.mxu0 %v2354
      %4479 = vmatpush1.bf16.msra.mxu0 %v2353
      %4480 = vmatprep.subr.bf16.mxu0 %v2361
      %4481 = vmatpush1.bf16.msra.mxu0 %v2360
      %4482 = vmatprep.subr.bf16.mxu0 %v2368
      %4483 = vmatpush1.bf16.msra.mxu0 %v2367
      %4484 = vmatprep.subr.bf16.mxu0 %v2375
      %4485 = vmatpush1.bf16.msra.mxu0 %v2374
      %4486 = vmatprep.subr.bf16.mxu0 %v2382
      %4487 = vmatpush1.bf16.msra.mxu0 %v2381
      %4488 = vmatprep.subr.bf16.mxu0 %v2389
      %4489 = vmatpush1.bf16.msra.mxu0 %v2388
      %4490 = vmatprep.subr.bf16.mxu0 %v2396
      %4491 = vmatpush1.bf16.msra.mxu0 %v2395
      %4492 = vmatprep.subr.bf16.mxu0 %v2403
      %4493 = vmatpush1.bf16.msra.mxu0 %v2402
      %4494 = vmatprep.subr.bf16.mxu0 %v2410
      %4495 = vmatpush1.bf16.msra.mxu0 %v2409
      %4496 = vmatprep.subr.bf16.mxu0 %v2417
      %4497 = vmatpush1.bf16.msra.mxu0 %v2416
      %4498 = vmatprep.subr.bf16.mxu0 %v2424
      %4499 = vmatpush1.bf16.msra.mxu0 %v2423
      %4500 = vmatprep.subr.bf16.mxu0 %v2431
      %4501 = vmatpush1.bf16.msra.mxu0 %v2430
      %4502 = vmatprep.mubr.bf16.mxu0 %v2863
      %4503 = vmatmul.mubr.bf16.gmra.mrb[0].mxu0 %v2862
      %v4504 = vpop.f32.mrb[0].mxu0
      %v4505 = vadd.f32 %v4304, %v4504
      %v4506 = vpop.f32.mrb[0].mxu0
      %v4507 = vadd.f32 %v4306, %v4506
      %v4508 = vpop.f32.mrb[0].mxu0
      %v4509 = vadd.f32 %v4308, %v4508
      %v4510 = vpop.f32.mrb[0].mxu0
      %v4511 = vadd.f32 %v4310, %v4510
      %4512 = vmatprep.mubr.bf16.mxu0 %v2872
      %4513 = vmatmul.mubr.bf16.gmra.mrb[0].mxu0 %v2871
      %v4514 = vpop.f32.mrb[0].mxu0
      %v4515 = vadd.f32 %v4314, %v4514
      %v4516 = vpop.f32.mrb[0].mxu0
      %v4517 = vadd.f32 %v4316, %v4516
      %v4518 = vpop.f32.mrb[0].mxu0
      %v4519 = vadd.f32 %v4318, %v4518
      %v4520 = vpop.f32.mrb[0].mxu0
      %v4521 = vadd.f32 %v4320, %v4520
      %4522 = vmatprep.mubr.bf16.mxu0 %v2881
      %4523 = vmatmul.mubr.bf16.gmra.mrb[0].mxu0 %v2880
      %v4524 = vpop.f32.mrb[0].mxu0
      %v4525 = vadd.f32 %v4324, %v4524
      %v4526 = vpop.f32.mrb[0].mxu0
      %v4527 = vadd.f32 %v4326, %v4526
      %v4528 = vpop.f32.mrb[0].mxu0
      %v4529 = vadd.f32 %v4328, %v4528
      %v4530 = vpop.f32.mrb[0].mxu0
      %v4531 = vadd.f32 %v4330, %v4530
      %4532 = vmatprep.mubr.bf16.mxu0 %v2890
      %4533 = vmatmul.mubr.bf16.gmra.mrb[0].mxu0 %v2889
      %v4534 = vpop.f32.mrb[0].mxu0
      %v4535 = vadd.f32 %v4334, %v4534
      %v4536 = vpop.f32.mrb[0].mxu0
      %v4537 = vadd.f32 %v4336, %v4536
      %v4538 = vpop.f32.mrb[0].mxu0
      %v4539 = vadd.f32 %v4338, %v4538
      %v4540 = vpop.f32.mrb[0].mxu0
      %v4541 = vadd.f32 %v4340, %v4540
      %4542 = vmatprep.mubr.bf16.mxu0 %v2899
      %4543 = vmatmul.mubr.bf16.gmra.mrb[0].mxu0 %v2898
      %v4544 = vpop.f32.mrb[0].mxu0
      %v4545 = vadd.f32 %v4344, %v4544
      %v4546 = vpop.f32.mrb[0].mxu0
      %v4547 = vadd.f32 %v4346, %v4546
      %v4548 = vpop.f32.mrb[0].mxu0
      %v4549 = vadd.f32 %v4348, %v4548
      %v4550 = vpop.f32.mrb[0].mxu0
      %v4551 = vadd.f32 %v4350, %v4550
      %4552 = vmatprep.mubr.bf16.mxu0 %v2908
      %4553 = vmatmul.mubr.bf16.gmra.mrb[0].mxu0 %v2907
      %v4554 = vpop.f32.mrb[0].mxu0
      %v4555 = vadd.f32 %v4354, %v4554
      %v4556 = vpop.f32.mrb[0].mxu0
      %v4557 = vadd.f32 %v4356, %v4556
      %v4558 = vpop.f32.mrb[0].mxu0
      %v4559 = vadd.f32 %v4358, %v4558
      %v4560 = vpop.f32.mrb[0].mxu0
      %v4561 = vadd.f32 %v4360, %v4560
      %4562 = vmatprep.mubr.bf16.mxu0 %v2917
      %4563 = vmatmul.mubr.bf16.gmra.mrb[0].mxu0 %v2916
      %v4564 = vpop.f32.mrb[0].mxu0
      %v4565 = vadd.f32 %v4364, %v4564
      %v4566 = vpop.f32.mrb[0].mxu0
      %v4567 = vadd.f32 %v4366, %v4566
      %v4568 = vpop.f32.mrb[0].mxu0
      %v4569 = vadd.f32 %v4368, %v4568
      %v4570 = vpop.f32.mrb[0].mxu0
      %v4571 = vadd.f32 %v4370, %v4570
      %4572 = vmatprep.mubr.bf16.mxu0 %v2926
      %4573 = vmatmul.mubr.bf16.gmra.mrb[0].mxu0 %v2925
      %v4574 = vpop.f32.mrb[0].mxu0
      %v4575 = vadd.f32 %v4374, %v4574
      %v4576 = vpop.f32.mrb[0].mxu0
      %v4577 = vadd.f32 %v4376, %v4576
      %v4578 = vpop.f32.mrb[0].mxu0
      %v4579 = vadd.f32 %v4378, %v4578
      %v4580 = vpop.f32.mrb[0].mxu0
      %v4581 = vadd.f32 %v4380, %v4580
      %4582 = vmatprep.mubr.bf16.mxu0 %v2935
      %4583 = vmatmul.mubr.bf16.gmra.mrb[0].mxu0 %v2934
      %v4584 = vpop.f32.mrb[0].mxu0
      %v4585 = vadd.f32 %v4384, %v4584
      %v4586 = vpop.f32.mrb[0].mxu0
      %v4587 = vadd.f32 %v4386, %v4586
      %v4588 = vpop.f32.mrb[0].mxu0
      %v4589 = vadd.f32 %v4388, %v4588
      %v4590 = vpop.f32.mrb[0].mxu0
      %v4591 = vadd.f32 %v4390, %v4590
      %4592 = vmatprep.mubr.bf16.mxu0 %v2944
      %4593 = vmatmul.mubr.bf16.gmra.mrb[0].mxu0 %v2943
      %v4594 = vpop.f32.mrb[0].mxu0
      %v4595 = vadd.f32 %v4394, %v4594
      %v4596 = vpop.f32.mrb[0].mxu0
      %v4597 = vadd.f32 %v4396, %v4596
      %v4598 = vpop.f32.mrb[0].mxu0
      %v4599 = vadd.f32 %v4398, %v4598
      %v4600 = vpop.f32.mrb[0].mxu0
      %v4601 = vadd.f32 %v4400, %v4600
      %4602 = vmatprep.mubr.bf16.mxu0 %v2953
      %4603 = vmatmul.mubr.bf16.gmra.mrb[0].mxu0 %v2952
      %v4604 = vpop.f32.mrb[0].mxu0
      %v4605 = vadd.f32 %v4404, %v4604
      %v4606 = vpop.f32.mrb[0].mxu0
      %v4607 = vadd.f32 %v4406, %v4606
      %v4608 = vpop.f32.mrb[0].mxu0
      %v4609 = vadd.f32 %v4408, %v4608
      %v4610 = vpop.f32.mrb[0].mxu0
      %v4611 = vadd.f32 %v4410, %v4610
      %4612 = vmatprep.mubr.bf16.mxu0 %v2962
      %4613 = vmatmul.mubr.bf16.gmra.mrb[0].mxu0 %v2961
      %v4614 = vpop.f32.mrb[0].mxu0
      %v4615 = vadd.f32 %v4414, %v4614
      %v4616 = vpop.f32.mrb[0].mxu0
      %v4617 = vadd.f32 %v4416, %v4616
      %v4618 = vpop.f32.mrb[0].mxu0
      %v4619 = vadd.f32 %v4418, %v4618
      %v4620 = vpop.f32.mrb[0].mxu0
      %v4621 = vadd.f32 %v4420, %v4620
      %4622 = vmatprep.mubr.bf16.mxu0 %v2971
      %4623 = vmatmul.mubr.bf16.gmra.mrb[0].mxu0 %v2970
      %v4624 = vpop.f32.mrb[0].mxu0
      %v4625 = vadd.f32 %v4424, %v4624
      %v4626 = vpop.f32.mrb[0].mxu0
      %v4627 = vadd.f32 %v4426, %v4626
      %v4628 = vpop.f32.mrb[0].mxu0
      %v4629 = vadd.f32 %v4428, %v4628
      %v4630 = vpop.f32.mrb[0].mxu0
      %v4631 = vadd.f32 %v4430, %v4630
      %4632 = vmatprep.mubr.bf16.mxu0 %v2980
      %4633 = vmatmul.mubr.bf16.gmra.mrb[0].mxu0 %v2979
      %v4634 = vpop.f32.mrb[0].mxu0
      %v4635 = vadd.f32 %v4434, %v4634
      %v4636 = vpop.f32.mrb[0].mxu0
      %v4637 = vadd.f32 %v4436, %v4636
      %v4638 = vpop.f32.mrb[0].mxu0
      %v4639 = vadd.f32 %v4438, %v4638
      %v4640 = vpop.f32.mrb[0].mxu0
      %v4641 = vadd.f32 %v4440, %v4640
      %4642 = vmatprep.mubr.bf16.mxu0 %v2989
      %4643 = vmatmul.mubr.bf16.gmra.mrb[0].mxu0 %v2988
      %v4644 = vpop.f32.mrb[0].mxu0
      %v4645 = vadd.f32 %v4444, %v4644
      %v4646 = vpop.f32.mrb[0].mxu0
      %v4647 = vadd.f32 %v4446, %v4646
      %v4648 = vpop.f32.mrb[0].mxu0
      %v4649 = vadd.f32 %v4448, %v4648
      %v4650 = vpop.f32.mrb[0].mxu0
      %v4651 = vadd.f32 %v4450, %v4650
      %4652 = vmatprep.mubr.bf16.mxu0 %v2998
      %4653 = vmatmul.mubr.bf16.gmra.mrb[0].mxu0 %v2997
      %v4654 = vpop.f32.mrb[0].mxu0
      %v4655 = vadd.f32 %v4454, %v4654
      %v4656 = vpop.f32.mrb[0].mxu0
      %v4657 = vadd.f32 %v4456, %v4656
      %v4658 = vpop.f32.mrb[0].mxu0
      %v4659 = vadd.f32 %v4458, %v4658
      %v4660 = vpop.f32.mrb[0].mxu0
      %v4661 = vadd.f32 %v4460, %v4660
      %4662 = vmatprep.mubr.bf16.mxu0 %v3007
      %4663 = vmatmul.mubr.bf16.gmra.mrb[0].mxu0 %v3006
      %v4664 = vpop.f32.mrb[0].mxu0
      %v4665 = vadd.f32 %v4464, %v4664
      %v4666 = vpop.f32.mrb[0].mxu0
      %v4667 = vadd.f32 %v4466, %v4666
      %v4668 = vpop.f32.mrb[0].mxu0
      %v4669 = vpop.f32.mrb[0].mxu0
      %4670 = vdwg.mxu0
      %4671 = vmatprep.subr.bf16.mxu0 %v2438
      %4672 = vmatpush1.bf16.msra.mxu0 %v2437
      %4673 = vmatprep.subr.bf16.mxu0 %v2445
      %4674 = vmatpush1.bf16.msra.mxu0 %v2444
      %4675 = vmatprep.subr.bf16.mxu0 %v2452
      %4676 = vmatpush1.bf16.msra.mxu0 %v2451
      %4677 = vmatprep.subr.bf16.mxu0 %v2459
      %4678 = vmatpush1.bf16.msra.mxu0 %v2458
      %4679 = vmatprep.subr.bf16.mxu0 %v2466
      %4680 = vmatpush1.bf16.msra.mxu0 %v2465
      %4681 = vmatprep.subr.bf16.mxu0 %v2473
      %4682 = vmatpush1.bf16.msra.mxu0 %v2472
      %4683 = vmatprep.subr.bf16.mxu0 %v2480
      %4684 = vmatpush1.bf16.msra.mxu0 %v2479
      %4685 = vmatprep.subr.bf16.mxu0 %v2487
      %4686 = vmatpush1.bf16.msra.mxu0 %v2486
      %4687 = vmatprep.subr.bf16.mxu0 %v2494
      %4688 = vmatpush1.bf16.msra.mxu0 %v2493
      %4689 = vmatprep.subr.bf16.mxu0 %v2501
      %4690 = vmatpush1.bf16.msra.mxu0 %v2500
      %4691 = vmatprep.subr.bf16.mxu0 %v2508
      %4692 = vmatpush1.bf16.msra.mxu0 %v2507
      %4693 = vmatprep.subr.bf16.mxu0 %v2515
      %4694 = vmatpush1.bf16.msra.mxu0 %v2514
      %4695 = vmatprep.subr.bf16.mxu0 %v2522
      %4696 = vmatpush1.bf16.msra.mxu0 %v2521
      %4697 = vmatprep.subr.bf16.mxu0 %v2529
      %4698 = vmatpush1.bf16.msra.mxu0 %v2528
      %4699 = vmatprep.subr.bf16.mxu0 %v2536
      %4700 = vmatpush1.bf16.msra.mxu0 %v2535
      %4701 = vmatprep.subr.bf16.mxu0 %v2543
      %4702 = vmatpush1.bf16.msra.mxu0 %v2542
      %4703 = vmatprep.mubr.bf16.mxu0 %v2865
      %4704 = vmatmul.mubr.bf16.gmra.mrb[0].mxu0 %v2864
      %v4705 = vpop.f32.mrb[0].mxu0
      %v4706 = vadd.f32 %v4505, %v4705
      %v4707 = vpop.f32.mrb[0].mxu0
      %v4708 = vadd.f32 %v4507, %v4707
      %v4709 = vpop.f32.mrb[0].mxu0
      %v4710 = vadd.f32 %v4509, %v4709
      %v4711 = vpop.f32.mrb[0].mxu0
      %v4712 = vadd.f32 %v4511, %v4711
      %4713 = vmatprep.mubr.bf16.mxu0 %v2874
      %4714 = vmatmul.mubr.bf16.gmra.mrb[0].mxu0 %v2873
      %v4715 = vpop.f32.mrb[0].mxu0
      %v4716 = vadd.f32 %v4515, %v4715
      %v4717 = vpop.f32.mrb[0].mxu0
      %v4718 = vadd.f32 %v4517, %v4717
      %v4719 = vpop.f32.mrb[0].mxu0
      %v4720 = vadd.f32 %v4519, %v4719
      %v4721 = vpop.f32.mrb[0].mxu0
      %v4722 = vadd.f32 %v4521, %v4721
      %4723 = vmatprep.mubr.bf16.mxu0 %v2883
      %4724 = vmatmul.mubr.bf16.gmra.mrb[0].mxu0 %v2882
      %v4725 = vpop.f32.mrb[0].mxu0
      %v4726 = vadd.f32 %v4525, %v4725
      %v4727 = vpop.f32.mrb[0].mxu0
      %v4728 = vadd.f32 %v4527, %v4727
      %v4729 = vpop.f32.mrb[0].mxu0
      %v4730 = vadd.f32 %v4529, %v4729
      %v4731 = vpop.f32.mrb[0].mxu0
      %v4732 = vadd.f32 %v4531, %v4731
      %4733 = vmatprep.mubr.bf16.mxu0 %v2892
      %4734 = vmatmul.mubr.bf16.gmra.mrb[0].mxu0 %v2891
      %v4735 = vpop.f32.mrb[0].mxu0
      %v4736 = vadd.f32 %v4535, %v4735
      %v4737 = vpop.f32.mrb[0].mxu0
      %v4738 = vadd.f32 %v4537, %v4737
      %v4739 = vpop.f32.mrb[0].mxu0
      %v4740 = vadd.f32 %v4539, %v4739
      %v4741 = vpop.f32.mrb[0].mxu0
      %v4742 = vadd.f32 %v4541, %v4741
      %4743 = vmatprep.mubr.bf16.mxu0 %v2901
      %4744 = vmatmul.mubr.bf16.gmra.mrb[0].mxu0 %v2900
      %v4745 = vpop.f32.mrb[0].mxu0
      %v4746 = vadd.f32 %v4545, %v4745
      %v4747 = vpop.f32.mrb[0].mxu0
      %v4748 = vadd.f32 %v4547, %v4747
      %v4749 = vpop.f32.mrb[0].mxu0
      %v4750 = vadd.f32 %v4549, %v4749
      %v4751 = vpop.f32.mrb[0].mxu0
      %v4752 = vadd.f32 %v4551, %v4751
      %4753 = vmatprep.mubr.bf16.mxu0 %v2910
      %4754 = vmatmul.mubr.bf16.gmra.mrb[0].mxu0 %v2909
      %v4755 = vpop.f32.mrb[0].mxu0
      %v4756 = vadd.f32 %v4555, %v4755
      %v4757 = vpop.f32.mrb[0].mxu0
      %v4758 = vadd.f32 %v4557, %v4757
      %v4759 = vpop.f32.mrb[0].mxu0
      %v4760 = vadd.f32 %v4559, %v4759
      %v4761 = vpop.f32.mrb[0].mxu0
      %v4762 = vadd.f32 %v4561, %v4761
      %4763 = vmatprep.mubr.bf16.mxu0 %v2919
      %4764 = vmatmul.mubr.bf16.gmra.mrb[0].mxu0 %v2918
      %v4765 = vpop.f32.mrb[0].mxu0
      %v4766 = vadd.f32 %v4565, %v4765
      %v4767 = vpop.f32.mrb[0].mxu0
      %v4768 = vadd.f32 %v4567, %v4767
      %v4769 = vpop.f32.mrb[0].mxu0
      %v4770 = vadd.f32 %v4569, %v4769
      %v4771 = vpop.f32.mrb[0].mxu0
      %v4772 = vadd.f32 %v4571, %v4771
      %4773 = vmatprep.mubr.bf16.mxu0 %v2928
      %4774 = vmatmul.mubr.bf16.gmra.mrb[0].mxu0 %v2927
      %v4775 = vpop.f32.mrb[0].mxu0
      %v4776 = vadd.f32 %v4575, %v4775
      %v4777 = vpop.f32.mrb[0].mxu0
      %v4778 = vadd.f32 %v4577, %v4777
      %v4779 = vpop.f32.mrb[0].mxu0
      %v4780 = vadd.f32 %v4579, %v4779
      %v4781 = vpop.f32.mrb[0].mxu0
      %v4782 = vadd.f32 %v4581, %v4781
      %4783 = vmatprep.mubr.bf16.mxu0 %v2937
      %4784 = vmatmul.mubr.bf16.gmra.mrb[0].mxu0 %v2936
      %v4785 = vpop.f32.mrb[0].mxu0
      %v4786 = vadd.f32 %v4585, %v4785
      %v4787 = vpop.f32.mrb[0].mxu0
      %v4788 = vadd.f32 %v4587, %v4787
      %v4789 = vpop.f32.mrb[0].mxu0
      %v4790 = vadd.f32 %v4589, %v4789
      %v4791 = vpop.f32.mrb[0].mxu0
      %v4792 = vadd.f32 %v4591, %v4791
      %4793 = vmatprep.mubr.bf16.mxu0 %v2946
      %4794 = vmatmul.mubr.bf16.gmra.mrb[0].mxu0 %v2945
      %v4795 = vpop.f32.mrb[0].mxu0
      %v4796 = vadd.f32 %v4595, %v4795
      %v4797 = vpop.f32.mrb[0].mxu0
      %v4798 = vadd.f32 %v4597, %v4797
      %v4799 = vpop.f32.mrb[0].mxu0
      %v4800 = vadd.f32 %v4599, %v4799
      %v4801 = vpop.f32.mrb[0].mxu0
      %v4802 = vadd.f32 %v4601, %v4801
      %4803 = vmatprep.mubr.bf16.mxu0 %v2955
      %4804 = vmatmul.mubr.bf16.gmra.mrb[0].mxu0 %v2954
      %v4805 = vpop.f32.mrb[0].mxu0
      %v4806 = vadd.f32 %v4605, %v4805
      %v4807 = vpop.f32.mrb[0].mxu0
      %v4808 = vadd.f32 %v4607, %v4807
      %v4809 = vpop.f32.mrb[0].mxu0
      %v4810 = vadd.f32 %v4609, %v4809
      %v4811 = vpop.f32.mrb[0].mxu0
      %v4812 = vadd.f32 %v4611, %v4811
      %4813 = vmatprep.mubr.bf16.mxu0 %v2964
      %4814 = vmatmul.mubr.bf16.gmra.mrb[0].mxu0 %v2963
      %v4815 = vpop.f32.mrb[0].mxu0
      %v4816 = vadd.f32 %v4615, %v4815
      %v4817 = vpop.f32.mrb[0].mxu0
      %v4818 = vadd.f32 %v4617, %v4817
      %v4819 = vpop.f32.mrb[0].mxu0
      %v4820 = vadd.f32 %v4619, %v4819
      %v4821 = vpop.f32.mrb[0].mxu0
      %v4822 = vadd.f32 %v4621, %v4821
      %4823 = vmatprep.mubr.bf16.mxu0 %v2973
      %4824 = vmatmul.mubr.bf16.gmra.mrb[0].mxu0 %v2972
      %v4825 = vpop.f32.mrb[0].mxu0
      %v4826 = vadd.f32 %v4625, %v4825
      %v4827 = vpop.f32.mrb[0].mxu0
      %v4828 = vadd.f32 %v4627, %v4827
      %v4829 = vpop.f32.mrb[0].mxu0
      %v4830 = vadd.f32 %v4629, %v4829
      %v4831 = vpop.f32.mrb[0].mxu0
      %v4832 = vadd.f32 %v4631, %v4831
      %4833 = vmatprep.mubr.bf16.mxu0 %v2982
      %4834 = vmatmul.mubr.bf16.gmra.mrb[0].mxu0 %v2981
      %v4835 = vpop.f32.mrb[0].mxu0
      %v4836 = vadd.f32 %v4635, %v4835
      %v4837 = vpop.f32.mrb[0].mxu0
      %v4838 = vadd.f32 %v4637, %v4837
      %v4839 = vpop.f32.mrb[0].mxu0
      %v4840 = vadd.f32 %v4639, %v4839
      %v4841 = vpop.f32.mrb[0].mxu0
      %v4842 = vadd.f32 %v4641, %v4841
      %4843 = vmatprep.mubr.bf16.mxu0 %v2991
      %4844 = vmatmul.mubr.bf16.gmra.mrb[0].mxu0 %v2990
      %v4845 = vpop.f32.mrb[0].mxu0
      %v4846 = vadd.f32 %v4645, %v4845
      %v4847 = vpop.f32.mrb[0].mxu0
      %v4848 = vadd.f32 %v4647, %v4847
      %v4849 = vpop.f32.mrb[0].mxu0
      %v4850 = vadd.f32 %v4649, %v4849
      %v4851 = vpop.f32.mrb[0].mxu0
      %v4852 = vadd.f32 %v4651, %v4851
      %4853 = vmatprep.mubr.bf16.mxu0 %v3000
      %4854 = vmatmul.mubr.bf16.gmra.mrb[0].mxu0 %v2999
      %v4855 = vpop.f32.mrb[0].mxu0
      %v4856 = vadd.f32 %v4655, %v4855
      %v4857 = vpop.f32.mrb[0].mxu0
      %v4858 = vadd.f32 %v4657, %v4857
      %v4859 = vpop.f32.mrb[0].mxu0
      %v4860 = vadd.f32 %v4659, %v4859
      %v4861 = vpop.f32.mrb[0].mxu0
      %v4862 = vadd.f32 %v4661, %v4861
      %4863 = vmatprep.mubr.bf16.mxu0 %v3009
      %4864 = vmatmul.mubr.bf16.gmra.mrb[0].mxu0 %v3008
      %v4865 = vpop.f32.mrb[0].mxu0
      %v4866 = vadd.f32 %v4665, %v4865
      %v4867 = vpop.f32.mrb[0].mxu0
      %v4868 = vadd.f32 %v4667, %v4867
      %v4869 = vpop.f32.mrb[0].mxu0
      %v4870 = vpop.f32.mrb[0].mxu0
      %4871 = vdwg.mxu0
      %4872 = vmatprep.subr.bf16.mxu0 %v2550
      %4873 = vmatpush1.bf16.msra.mxu0 %v2549
      %4874 = vmatprep.subr.bf16.mxu0 %v2557
      %4875 = vmatpush1.bf16.msra.mxu0 %v2556
      %4876 = vmatprep.subr.bf16.mxu0 0
      %4877 = vmatpush1.bf16.msra.mxu0 0
      %4878 = vmatprep.subr.bf16.mxu0 0
      %4879 = vmatpush1.bf16.msra.mxu0 0
      %4880 = vmatprep.subr.bf16.mxu0 0
      %4881 = vmatpush1.bf16.msra.mxu0 0
      %4882 = vmatprep.subr.bf16.mxu0 0
      %4883 = vmatpush1.bf16.msra.mxu0 0
      %4884 = vmatprep.subr.bf16.mxu0 0
      %4885 = vmatpush1.bf16.msra.mxu0 0
      %4886 = vmatprep.subr.bf16.mxu0 0
      %4887 = vmatpush1.bf16.msra.mxu0 0
      %4888 = vmatprep.subr.bf16.mxu0 0
      %4889 = vmatpush1.bf16.msra.mxu0 0
      %4890 = vmatprep.subr.bf16.mxu0 0
      %4891 = vmatpush1.bf16.msra.mxu0 0
      %4892 = vmatprep.subr.bf16.mxu0 0
      %4893 = vmatpush1.bf16.msra.mxu0 0
      %4894 = vmatprep.subr.bf16.mxu0 0
      %4895 = vmatpush1.bf16.msra.mxu0 0
      %4896 = vmatprep.subr.bf16.mxu0 0
      %4897 = vmatpush1.bf16.msra.mxu0 0
      %4898 = vmatprep.subr.bf16.mxu0 0
      %4899 = vmatpush1.bf16.msra.mxu0 0
      %4900 = vmatprep.subr.bf16.mxu0 0
      %4901 = vmatpush1.bf16.msra.mxu0 0
      %4902 = vmatprep.subr.bf16.mxu0 0
      %4903 = vmatpush1.bf16.msra.mxu0 0
      %4904 = vmatprep.mubr.bf16.mxu0 0
      %4905 = vmatmul.mubr.bf16.gmra.mrb[0].mxu0 %v3013
      %v4906 = vpop.f32.mrb[0].mxu0
      %v4907 = vadd.f32 %v4706, %v4906
      %v4908 = vpop.f32.mrb[0].mxu0
      %v4909 = vadd.f32 %v4708, %v4908
      %v4910 = vpop.f32.mrb[0].mxu0
      %v4911 = vadd.f32 %v4710, %v4910
      %v4912 = vpop.f32.mrb[0].mxu0
      %v4913 = vadd.f32 %v4712, %v4912
      %4914 = vmatprep.mubr.bf16.mxu0 0
      %4915 = vmatmul.mubr.bf16.gmra.mrb[0].mxu0 %v3016
      %v4916 = vpop.f32.mrb[0].mxu0
      %v4917 = vadd.f32 %v4716, %v4916
      %v4918 = vpop.f32.mrb[0].mxu0
      %v4919 = vadd.f32 %v4718, %v4918
      %v4920 = vpop.f32.mrb[0].mxu0
      %v4921 = vadd.f32 %v4720, %v4920
      %v4922 = vpop.f32.mrb[0].mxu0
      %v4923 = vadd.f32 %v4722, %v4922
      %4924 = vmatprep.mubr.bf16.mxu0 0
      %4925 = vmatmul.mubr.bf16.gmra.mrb[0].mxu0 %v3019
      %v4926 = vpop.f32.mrb[0].mxu0
      %v4927 = vadd.f32 %v4726, %v4926
      %v4928 = vpop.f32.mrb[0].mxu0
      %v4929 = vadd.f32 %v4728, %v4928
      %v4930 = vpop.f32.mrb[0].mxu0
      %v4931 = vadd.f32 %v4730, %v4930
      %v4932 = vpop.f32.mrb[0].mxu0
      %v4933 = vadd.f32 %v4732, %v4932
      %4934 = vmatprep.mubr.bf16.mxu0 0
      %4935 = vmatmul.mubr.bf16.gmra.mrb[0].mxu0 %v3022
      %v4936 = vpop.f32.mrb[0].mxu0
      %v4937 = vadd.f32 %v4736, %v4936
      %v4938 = vpop.f32.mrb[0].mxu0
      %v4939 = vadd.f32 %v4738, %v4938
      %v4940 = vpop.f32.mrb[0].mxu0
      %v4941 = vadd.f32 %v4740, %v4940
      %v4942 = vpop.f32.mrb[0].mxu0
      %v4943 = vadd.f32 %v4742, %v4942
      %4944 = vmatprep.mubr.bf16.mxu0 0
      %4945 = vmatmul.mubr.bf16.gmra.mrb[0].mxu0 %v3025
      %v4946 = vpop.f32.mrb[0].mxu0
      %v4947 = vadd.f32 %v4746, %v4946
      %v4948 = vpop.f32.mrb[0].mxu0
      %v4949 = vadd.f32 %v4748, %v4948
      %v4950 = vpop.f32.mrb[0].mxu0
      %v4951 = vadd.f32 %v4750, %v4950
      %v4952 = vpop.f32.mrb[0].mxu0
      %v4953 = vadd.f32 %v4752, %v4952
      %4954 = vmatprep.mubr.bf16.mxu0 0
      %4955 = vmatmul.mubr.bf16.gmra.mrb[0].mxu0 %v3028
      %v4956 = vpop.f32.mrb[0].mxu0
      %v4957 = vadd.f32 %v4756, %v4956
      %v4958 = vpop.f32.mrb[0].mxu0
      %v4959 = vadd.f32 %v4758, %v4958
      %v4960 = vpop.f32.mrb[0].mxu0
      %v4961 = vadd.f32 %v4760, %v4960
      %v4962 = vpop.f32.mrb[0].mxu0
      %v4963 = vadd.f32 %v4762, %v4962
      %4964 = vmatprep.mubr.bf16.mxu0 0
      %4965 = vmatmul.mubr.bf16.gmra.mrb[0].mxu0 %v3031
      %v4966 = vpop.f32.mrb[0].mxu0
      %v4967 = vadd.f32 %v4766, %v4966
      %v4968 = vpop.f32.mrb[0].mxu0
      %v4969 = vadd.f32 %v4768, %v4968
      %v4970 = vpop.f32.mrb[0].mxu0
      %v4971 = vadd.f32 %v4770, %v4970
      %v4972 = vpop.f32.mrb[0].mxu0
      %v4973 = vadd.f32 %v4772, %v4972
      %4974 = vmatprep.mubr.bf16.mxu0 0
      %4975 = vmatmul.mubr.bf16.gmra.mrb[0].mxu0 %v3034
      %v4976 = vpop.f32.mrb[0].mxu0
      %v4977 = vadd.f32 %v4776, %v4976
      %v4978 = vpop.f32.mrb[0].mxu0
      %v4979 = vadd.f32 %v4778, %v4978
      %v4980 = vpop.f32.mrb[0].mxu0
      %v4981 = vadd.f32 %v4780, %v4980
      %v4982 = vpop.f32.mrb[0].mxu0
      %v4983 = vadd.f32 %v4782, %v4982
      %4984 = vmatprep.mubr.bf16.mxu0 0
      %4985 = vmatmul.mubr.bf16.gmra.mrb[0].mxu0 %v3037
      %v4986 = vpop.f32.mrb[0].mxu0
      %v4987 = vadd.f32 %v4786, %v4986
      %v4988 = vpop.f32.mrb[0].mxu0
      %v4989 = vadd.f32 %v4788, %v4988
      %v4990 = vpop.f32.mrb[0].mxu0
      %v4991 = vadd.f32 %v4790, %v4990
      %v4992 = vpop.f32.mrb[0].mxu0
      %v4993 = vadd.f32 %v4792, %v4992
      %4994 = vmatprep.mubr.bf16.mxu0 0
      %4995 = vmatmul.mubr.bf16.gmra.mrb[0].mxu0 %v3040
      %v4996 = vpop.f32.mrb[0].mxu0
      %v4997 = vadd.f32 %v4796, %v4996
      %v4998 = vpop.f32.mrb[0].mxu0
      %v4999 = vadd.f32 %v4798, %v4998
      %v5000 = vpop.f32.mrb[0].mxu0
      %v5001 = vadd.f32 %v4800, %v5000
      %v5002 = vpop.f32.mrb[0].mxu0
      %v5003 = vadd.f32 %v4802, %v5002
      %5004 = vmatprep.mubr.bf16.mxu0 0
      %5005 = vmatmul.mubr.bf16.gmra.mrb[0].mxu0 %v3043
      %v5006 = vpop.f32.mrb[0].mxu0
      %v5007 = vadd.f32 %v4806, %v5006
      %v5008 = vpop.f32.mrb[0].mxu0
      %v5009 = vadd.f32 %v4808, %v5008
      %v5010 = vpop.f32.mrb[0].mxu0
      %v5011 = vadd.f32 %v4810, %v5010
      %v5012 = vpop.f32.mrb[0].mxu0
      %v5013 = vadd.f32 %v4812, %v5012
      %5014 = vmatprep.mubr.bf16.mxu0 0
      %5015 = vmatmul.mubr.bf16.gmra.mrb[0].mxu0 %v3046
      %v5016 = vpop.f32.mrb[0].mxu0
      %v5017 = vadd.f32 %v4816, %v5016
      %v5018 = vpop.f32.mrb[0].mxu0
      %v5019 = vadd.f32 %v4818, %v5018
      %v5020 = vpop.f32.mrb[0].mxu0
      %v5021 = vadd.f32 %v4820, %v5020
      %v5022 = vpop.f32.mrb[0].mxu0
      %v5023 = vadd.f32 %v4822, %v5022
      %5024 = vmatprep.mubr.bf16.mxu0 0
      %5025 = vmatmul.mubr.bf16.gmra.mrb[0].mxu0 %v3049
      %v5026 = vpop.f32.mrb[0].mxu0
      %v5027 = vadd.f32 %v4826, %v5026
      %v5028 = vpop.f32.mrb[0].mxu0
      %v5029 = vadd.f32 %v4828, %v5028
      %v5030 = vpop.f32.mrb[0].mxu0
      %v5031 = vadd.f32 %v4830, %v5030
      %v5032 = vpop.f32.mrb[0].mxu0
      %v5033 = vadd.f32 %v4832, %v5032
      %5034 = vmatprep.mubr.bf16.mxu0 0
      %5035 = vmatmul.mubr.bf16.gmra.mrb[0].mxu0 %v3052
      %v5036 = vpop.f32.mrb[0].mxu0
      %v5037 = vadd.f32 %v4836, %v5036
      %v5038 = vpop.f32.mrb[0].mxu0
      %v5039 = vadd.f32 %v4838, %v5038
      %v5040 = vpop.f32.mrb[0].mxu0
      %v5041 = vadd.f32 %v4840, %v5040
      %v5042 = vpop.f32.mrb[0].mxu0
      %v5043 = vadd.f32 %v4842, %v5042
      %5044 = vmatprep.mubr.bf16.mxu0 0
      %5045 = vmatmul.mubr.bf16.gmra.mrb[0].mxu0 %v3055
      %v5046 = vpop.f32.mrb[0].mxu0
      %v5047 = vadd.f32 %v4846, %v5046
      %v5048 = vpop.f32.mrb[0].mxu0
      %v5049 = vadd.f32 %v4848, %v5048
      %v5050 = vpop.f32.mrb[0].mxu0
      %v5051 = vadd.f32 %v4850, %v5050
      %v5052 = vpop.f32.mrb[0].mxu0
      %v5053 = vadd.f32 %v4852, %v5052
      %5054 = vmatprep.mubr.bf16.mxu0 0
      %5055 = vmatmul.mubr.bf16.gmra.mrb[0].mxu0 %v3058
      %v5056 = vpop.f32.mrb[0].mxu0
      %v5057 = vadd.f32 %v4856, %v5056
      %v5058 = vpop.f32.mrb[0].mxu0
      %v5059 = vadd.f32 %v4858, %v5058
      %v5060 = vpop.f32.mrb[0].mxu0
      %v5061 = vadd.f32 %v4860, %v5060
      %v5062 = vpop.f32.mrb[0].mxu0
      %v5063 = vadd.f32 %v4862, %v5062
      %5064 = vmatprep.mubr.bf16.mxu0 0
      %5065 = vmatmul.mubr.bf16.gmra.mrb[0].mxu0 %v3061
      %v5066 = vpop.f32.mrb[0].mxu0
      %v5067 = vadd.f32 %v4866, %v5066
      %v5068 = vpop.f32.mrb[0].mxu0
      %v5069 = vadd.f32 %v4868, %v5068
      %v5070 = vpop.f32.mrb[0].mxu0
      %v5071 = vpop.f32.mrb[0].mxu0
      %5072 = vdwg.mxu0
      %5073 = vmatprep.subr.bf16.mxu0 %v2104
      %5074 = vmatpush1.bf16.msra.mxu0 %v2103
      %5075 = vmatprep.subr.bf16.mxu0 %v2111
      %5076 = vmatpush1.bf16.msra.mxu0 %v2110
      %5077 = vmatprep.subr.bf16.mxu0 %v2118
      %5078 = vmatpush1.bf16.msra.mxu0 %v2117
      %5079 = vmatprep.subr.bf16.mxu0 %v2125
      %5080 = vmatpush1.bf16.msra.mxu0 %v2124
      %5081 = vmatprep.subr.bf16.mxu0 %v2132
      %5082 = vmatpush1.bf16.msra.mxu0 %v2131
      %5083 = vmatprep.subr.bf16.mxu0 %v2139
      %5084 = vmatpush1.bf16.msra.mxu0 %v2138
      %5085 = vmatprep.subr.bf16.mxu0 %v2146
      %5086 = vmatpush1.bf16.msra.mxu0 %v2145
      %5087 = vmatprep.subr.bf16.mxu0 %v2153
      %5088 = vmatpush1.bf16.msra.mxu0 %v2152
      %5089 = vmatprep.subr.bf16.mxu0 %v2160
      %5090 = vmatpush1.bf16.msra.mxu0 %v2159
      %5091 = vmatprep.subr.bf16.mxu0 %v2167
      %5092 = vmatpush1.bf16.msra.mxu0 %v2166
      %5093 = vmatprep.subr.bf16.mxu0 %v2174
      %5094 = vmatpush1.bf16.msra.mxu0 %v2173
      %5095 = vmatprep.subr.bf16.mxu0 %v2181
      %5096 = vmatpush1.bf16.msra.mxu0 %v2180
      %5097 = vmatprep.subr.bf16.mxu0 %v2188
      %5098 = vmatpush1.bf16.msra.mxu0 %v2187
      %5099 = vmatprep.subr.bf16.mxu0 %v2195
      %5100 = vmatpush1.bf16.msra.mxu0 %v2194
      %5101 = vmatprep.subr.bf16.mxu0 %v2202
      %5102 = vmatpush1.bf16.msra.mxu0 %v2201
      %5103 = vmatprep.subr.bf16.mxu0 %v2209
      %5104 = vmatpush1.bf16.msra.mxu0 %v2208
      %5105 = vmatprep.mubr.bf16.mxu0 %v2859
      %5106 = vmatmul.mubr.bf16.gmra.mrb[0].mxu0 %v2858
      %v5107 = vpop.f32.mrb[0].mxu0
      %v5108 = vadd.f32 0.0, %v5107
      %v5109 = vpop.f32.mrb[0].mxu0
      %v5110 = vadd.f32 0.0, %v5109
      %v5111 = vpop.f32.mrb[0].mxu0
      %v5112 = vadd.f32 0.0, %v5111
      %v5113 = vpop.f32.mrb[0].mxu0
      %v5114 = vadd.f32 0.0, %v5113
      %5115 = vmatprep.mubr.bf16.mxu0 %v2868
      %5116 = vmatmul.mubr.bf16.gmra.mrb[0].mxu0 %v2867
      %v5117 = vpop.f32.mrb[0].mxu0
      %v5118 = vadd.f32 0.0, %v5117
      %v5119 = vpop.f32.mrb[0].mxu0
      %v5120 = vadd.f32 0.0, %v5119
      %v5121 = vpop.f32.mrb[0].mxu0
      %v5122 = vadd.f32 0.0, %v5121
      %v5123 = vpop.f32.mrb[0].mxu0
      %v5124 = vadd.f32 0.0, %v5123
      %5125 = vmatprep.mubr.bf16.mxu0 %v2877
      %5126 = vmatmul.mubr.bf16.gmra.mrb[0].mxu0 %v2876
      %v5127 = vpop.f32.mrb[0].mxu0
      %v5128 = vadd.f32 0.0, %v5127
      %v5129 = vpop.f32.mrb[0].mxu0
      %v5130 = vadd.f32 0.0, %v5129
      %v5131 = vpop.f32.mrb[0].mxu0
      %v5132 = vadd.f32 0.0, %v5131
      %v5133 = vpop.f32.mrb[0].mxu0
      %v5134 = vadd.f32 0.0, %v5133
      %5135 = vmatprep.mubr.bf16.mxu0 %v2886
      %5136 = vmatmul.mubr.bf16.gmra.mrb[0].mxu0 %v2885
      %v5137 = vpop.f32.mrb[0].mxu0
      %v5138 = vadd.f32 0.0, %v5137
      %v5139 = vpop.f32.mrb[0].mxu0
      %v5140 = vadd.f32 0.0, %v5139
      %v5141 = vpop.f32.mrb[0].mxu0
      %v5142 = vadd.f32 0.0, %v5141
      %v5143 = vpop.f32.mrb[0].mxu0
      %v5144 = vadd.f32 0.0, %v5143
      %5145 = vmatprep.mubr.bf16.mxu0 %v2895
      %5146 = vmatmul.mubr.bf16.gmra.mrb[0].mxu0 %v2894
      %v5147 = vpop.f32.mrb[0].mxu0
      %v5148 = vadd.f32 0.0, %v5147
      %v5149 = vpop.f32.mrb[0].mxu0
      %v5150 = vadd.f32 0.0, %v5149
      %v5151 = vpop.f32.mrb[0].mxu0
      %v5152 = vadd.f32 0.0, %v5151
      %v5153 = vpop.f32.mrb[0].mxu0
      %v5154 = vadd.f32 0.0, %v5153
      %5155 = vmatprep.mubr.bf16.mxu0 %v2904
      %5156 = vmatmul.mubr.bf16.gmra.mrb[0].mxu0 %v2903
      %v5157 = vpop.f32.mrb[0].mxu0
      %v5158 = vadd.f32 0.0, %v5157
      %v5159 = vpop.f32.mrb[0].mxu0
      %v5160 = vadd.f32 0.0, %v5159
      %v5161 = vpop.f32.mrb[0].mxu0
      %v5162 = vadd.f32 0.0, %v5161
      %v5163 = vpop.f32.mrb[0].mxu0
      %v5164 = vadd.f32 0.0, %v5163
      %5165 = vmatprep.mubr.bf16.mxu0 %v2913
      %5166 = vmatmul.mubr.bf16.gmra.mrb[0].mxu0 %v2912
      %v5167 = vpop.f32.mrb[0].mxu0
      %v5168 = vadd.f32 0.0, %v5167
      %v5169 = vpop.f32.mrb[0].mxu0
      %v5170 = vadd.f32 0.0, %v5169
      %v5171 = vpop.f32.mrb[0].mxu0
      %v5172 = vadd.f32 0.0, %v5171
      %v5173 = vpop.f32.mrb[0].mxu0
      %v5174 = vadd.f32 0.0, %v5173
      %5175 = vmatprep.mubr.bf16.mxu0 %v2922
      %5176 = vmatmul.mubr.bf16.gmra.mrb[0].mxu0 %v2921
      %v5177 = vpop.f32.mrb[0].mxu0
      %v5178 = vadd.f32 0.0, %v5177
      %v5179 = vpop.f32.mrb[0].mxu0
      %v5180 = vadd.f32 0.0, %v5179
      %v5181 = vpop.f32.mrb[0].mxu0
      %v5182 = vadd.f32 0.0, %v5181
      %v5183 = vpop.f32.mrb[0].mxu0
      %v5184 = vadd.f32 0.0, %v5183
      %5185 = vmatprep.mubr.bf16.mxu0 %v2931
      %5186 = vmatmul.mubr.bf16.gmra.mrb[0].mxu0 %v2930
      %v5187 = vpop.f32.mrb[0].mxu0
      %v5188 = vadd.f32 0.0, %v5187
      %v5189 = vpop.f32.mrb[0].mxu0
      %v5190 = vadd.f32 0.0, %v5189
      %v5191 = vpop.f32.mrb[0].mxu0
      %v5192 = vadd.f32 0.0, %v5191
      %v5193 = vpop.f32.mrb[0].mxu0
      %v5194 = vadd.f32 0.0, %v5193
      %5195 = vmatprep.mubr.bf16.mxu0 %v2940
      %5196 = vmatmul.mubr.bf16.gmra.mrb[0].mxu0 %v2939
      %v5197 = vpop.f32.mrb[0].mxu0
      %v5198 = vadd.f32 0.0, %v5197
      %v5199 = vpop.f32.mrb[0].mxu0
      %v5200 = vadd.f32 0.0, %v5199
      %v5201 = vpop.f32.mrb[0].mxu0
      %v5202 = vadd.f32 0.0, %v5201
      %v5203 = vpop.f32.mrb[0].mxu0
      %v5204 = vadd.f32 0.0, %v5203
      %5205 = vmatprep.mubr.bf16.mxu0 %v2949
      %5206 = vmatmul.mubr.bf16.gmra.mrb[0].mxu0 %v2948
      %v5207 = vpop.f32.mrb[0].mxu0
      %v5208 = vadd.f32 0.0, %v5207
      %v5209 = vpop.f32.mrb[0].mxu0
      %v5210 = vadd.f32 0.0, %v5209
      %v5211 = vpop.f32.mrb[0].mxu0
      %v5212 = vadd.f32 0.0, %v5211
      %v5213 = vpop.f32.mrb[0].mxu0
      %v5214 = vadd.f32 0.0, %v5213
      %5215 = vmatprep.mubr.bf16.mxu0 %v2958
      %5216 = vmatmul.mubr.bf16.gmra.mrb[0].mxu0 %v2957
      %v5217 = vpop.f32.mrb[0].mxu0
      %v5218 = vadd.f32 0.0, %v5217
      %v5219 = vpop.f32.mrb[0].mxu0
      %v5220 = vadd.f32 0.0, %v5219
      %v5221 = vpop.f32.mrb[0].mxu0
      %v5222 = vadd.f32 0.0, %v5221
      %v5223 = vpop.f32.mrb[0].mxu0
      %v5224 = vadd.f32 0.0, %v5223
      %5225 = vmatprep.mubr.bf16.mxu0 %v2967
      %5226 = vmatmul.mubr.bf16.gmra.mrb[0].mxu0 %v2966
      %v5227 = vpop.f32.mrb[0].mxu0
      %v5228 = vadd.f32 0.0, %v5227
      %v5229 = vpop.f32.mrb[0].mxu0
      %v5230 = vadd.f32 0.0, %v5229
      %v5231 = vpop.f32.mrb[0].mxu0
      %v5232 = vadd.f32 0.0, %v5231
      %v5233 = vpop.f32.mrb[0].mxu0
      %v5234 = vadd.f32 0.0, %v5233
      %5235 = vmatprep.mubr.bf16.mxu0 %v2976
      %5236 = vmatmul.mubr.bf16.gmra.mrb[0].mxu0 %v2975
      %v5237 = vpop.f32.mrb[0].mxu0
      %v5238 = vadd.f32 0.0, %v5237
      %v5239 = vpop.f32.mrb[0].mxu0
      %v5240 = vadd.f32 0.0, %v5239
      %v5241 = vpop.f32.mrb[0].mxu0
      %v5242 = vadd.f32 0.0, %v5241
      %v5243 = vpop.f32.mrb[0].mxu0
      %v5244 = vadd.f32 0.0, %v5243
      %5245 = vmatprep.mubr.bf16.mxu0 %v2985
      %5246 = vmatmul.mubr.bf16.gmra.mrb[0].mxu0 %v2984
      %v5247 = vpop.f32.mrb[0].mxu0
      %v5248 = vadd.f32 0.0, %v5247
      %v5249 = vpop.f32.mrb[0].mxu0
      %v5250 = vadd.f32 0.0, %v5249
      %v5251 = vpop.f32.mrb[0].mxu0
      %v5252 = vadd.f32 0.0, %v5251
      %v5253 = vpop.f32.mrb[0].mxu0
      %v5254 = vadd.f32 0.0, %v5253
      %5255 = vmatprep.mubr.bf16.mxu0 %v2994
      %5256 = vmatmul.mubr.bf16.gmra.mrb[0].mxu0 %v2993
      %v5257 = vpop.f32.mrb[0].mxu0
      %v5258 = vadd.f32 0.0, %v5257
      %v5259 = vpop.f32.mrb[0].mxu0
      %v5260 = vadd.f32 0.0, %v5259
      %v5261 = vpop.f32.mrb[0].mxu0
      %v5262 = vadd.f32 0.0, %v5261
      %v5263 = vpop.f32.mrb[0].mxu0
      %v5264 = vadd.f32 0.0, %v5263
      %5265 = vmatprep.mubr.bf16.mxu0 %v3003
      %5266 = vmatmul.mubr.bf16.gmra.mrb[0].mxu0 %v3002
      %v5267 = vpop.f32.mrb[0].mxu0
      %v5268 = vadd.f32 0.0, %v5267
      %v5269 = vpop.f32.mrb[0].mxu0
      %v5270 = vadd.f32 0.0, %v5269
      %v5271 = vpop.f32.mrb[0].mxu0
      %v5272 = vpop.f32.mrb[0].mxu0
      %5273 = vdwg.mxu0
      %5274 = vmatprep.subr.bf16.mxu0 %v2216
      %5275 = vmatpush1.bf16.msra.mxu0 %v2215
      %5276 = vmatprep.subr.bf16.mxu0 %v2223
      %5277 = vmatpush1.bf16.msra.mxu0 %v2222
      %5278 = vmatprep.subr.bf16.mxu0 %v2230
      %5279 = vmatpush1.bf16.msra.mxu0 %v2229
      %5280 = vmatprep.subr.bf16.mxu0 %v2237
      %5281 = vmatpush1.bf16.msra.mxu0 %v2236
      %5282 = vmatprep.subr.bf16.mxu0 %v2244
      %5283 = vmatpush1.bf16.msra.mxu0 %v2243
      %5284 = vmatprep.subr.bf16.mxu0 %v2251
      %5285 = vmatpush1.bf16.msra.mxu0 %v2250
      %5286 = vmatprep.subr.bf16.mxu0 %v2258
      %5287 = vmatpush1.bf16.msra.mxu0 %v2257
      %5288 = vmatprep.subr.bf16.mxu0 %v2265
      %5289 = vmatpush1.bf16.msra.mxu0 %v2264
      %5290 = vmatprep.subr.bf16.mxu0 %v2272
      %5291 = vmatpush1.bf16.msra.mxu0 %v2271
      %5292 = vmatprep.subr.bf16.mxu0 %v2279
      %5293 = vmatpush1.bf16.msra.mxu0 %v2278
      %5294 = vmatprep.subr.bf16.mxu0 %v2286
      %5295 = vmatpush1.bf16.msra.mxu0 %v2285
      %5296 = vmatprep.subr.bf16.mxu0 %v2293
      %5297 = vmatpush1.bf16.msra.mxu0 %v2292
      %5298 = vmatprep.subr.bf16.mxu0 %v2300
      %5299 = vmatpush1.bf16.msra.mxu0 %v2299
      %5300 = vmatprep.subr.bf16.mxu0 %v2307
      %5301 = vmatpush1.bf16.msra.mxu0 %v2306
      %5302 = vmatprep.subr.bf16.mxu0 %v2314
      %5303 = vmatpush1.bf16.msra.mxu0 %v2313
      %5304 = vmatprep.subr.bf16.mxu0 %v2321
      %5305 = vmatpush1.bf16.msra.mxu0 %v2320
      %5306 = vmatprep.mubr.bf16.mxu0 %v2861
      %5307 = vmatmul.mubr.bf16.gmra.mrb[0].mxu0 %v2860
      %v5308 = vpop.f32.mrb[0].mxu0
      %v5309 = vadd.f32 %v5108, %v5308
      %v5310 = vpop.f32.mrb[0].mxu0
      %v5311 = vadd.f32 %v5110, %v5310
      %v5312 = vpop.f32.mrb[0].mxu0
      %v5313 = vadd.f32 %v5112, %v5312
      %v5314 = vpop.f32.mrb[0].mxu0
      %v5315 = vadd.f32 %v5114, %v5314
      %5316 = vmatprep.mubr.bf16.mxu0 %v2870
      %5317 = vmatmul.mubr.bf16.gmra.mrb[0].mxu0 %v2869
      %v5318 = vpop.f32.mrb[0].mxu0
      %v5319 = vadd.f32 %v5118, %v5318
      %v5320 = vpop.f32.mrb[0].mxu0
      %v5321 = vadd.f32 %v5120, %v5320
      %v5322 = vpop.f32.mrb[0].mxu0
      %v5323 = vadd.f32 %v5122, %v5322
      %v5324 = vpop.f32.mrb[0].mxu0
      %v5325 = vadd.f32 %v5124, %v5324
      %5326 = vmatprep.mubr.bf16.mxu0 %v2879
      %5327 = vmatmul.mubr.bf16.gmra.mrb[0].mxu0 %v2878
      %v5328 = vpop.f32.mrb[0].mxu0
      %v5329 = vadd.f32 %v5128, %v5328
      %v5330 = vpop.f32.mrb[0].mxu0
      %v5331 = vadd.f32 %v5130, %v5330
      %v5332 = vpop.f32.mrb[0].mxu0
      %v5333 = vadd.f32 %v5132, %v5332
      %v5334 = vpop.f32.mrb[0].mxu0
      %v5335 = vadd.f32 %v5134, %v5334
      %5336 = vmatprep.mubr.bf16.mxu0 %v2888
      %5337 = vmatmul.mubr.bf16.gmra.mrb[0].mxu0 %v2887
      %v5338 = vpop.f32.mrb[0].mxu0
      %v5339 = vadd.f32 %v5138, %v5338
      %v5340 = vpop.f32.mrb[0].mxu0
      %v5341 = vadd.f32 %v5140, %v5340
      %v5342 = vpop.f32.mrb[0].mxu0
      %v5343 = vadd.f32 %v5142, %v5342
      %v5344 = vpop.f32.mrb[0].mxu0
      %v5345 = vadd.f32 %v5144, %v5344
      %5346 = vmatprep.mubr.bf16.mxu0 %v2897
      %5347 = vmatmul.mubr.bf16.gmra.mrb[0].mxu0 %v2896
      %v5348 = vpop.f32.mrb[0].mxu0
      %v5349 = vadd.f32 %v5148, %v5348
      %v5350 = vpop.f32.mrb[0].mxu0
      %v5351 = vadd.f32 %v5150, %v5350
      %v5352 = vpop.f32.mrb[0].mxu0
      %v5353 = vadd.f32 %v5152, %v5352
      %v5354 = vpop.f32.mrb[0].mxu0
      %v5355 = vadd.f32 %v5154, %v5354
      %5356 = vmatprep.mubr.bf16.mxu0 %v2906
      %5357 = vmatmul.mubr.bf16.gmra.mrb[0].mxu0 %v2905
      %v5358 = vpop.f32.mrb[0].mxu0
      %v5359 = vadd.f32 %v5158, %v5358
      %v5360 = vpop.f32.mrb[0].mxu0
      %v5361 = vadd.f32 %v5160, %v5360
      %v5362 = vpop.f32.mrb[0].mxu0
      %v5363 = vadd.f32 %v5162, %v5362
      %v5364 = vpop.f32.mrb[0].mxu0
      %v5365 = vadd.f32 %v5164, %v5364
      %5366 = vmatprep.mubr.bf16.mxu0 %v2915
      %5367 = vmatmul.mubr.bf16.gmra.mrb[0].mxu0 %v2914
      %v5368 = vpop.f32.mrb[0].mxu0
      %v5369 = vadd.f32 %v5168, %v5368
      %v5370 = vpop.f32.mrb[0].mxu0
      %v5371 = vadd.f32 %v5170, %v5370
      %v5372 = vpop.f32.mrb[0].mxu0
      %v5373 = vadd.f32 %v5172, %v5372
      %v5374 = vpop.f32.mrb[0].mxu0
      %v5375 = vadd.f32 %v5174, %v5374
      %5376 = vmatprep.mubr.bf16.mxu0 %v2924
      %5377 = vmatmul.mubr.bf16.gmra.mrb[0].mxu0 %v2923
      %v5378 = vpop.f32.mrb[0].mxu0
      %v5379 = vadd.f32 %v5178, %v5378
      %v5380 = vpop.f32.mrb[0].mxu0
      %v5381 = vadd.f32 %v5180, %v5380
      %v5382 = vpop.f32.mrb[0].mxu0
      %v5383 = vadd.f32 %v5182, %v5382
      %v5384 = vpop.f32.mrb[0].mxu0
      %v5385 = vadd.f32 %v5184, %v5384
      %5386 = vmatprep.mubr.bf16.mxu0 %v2933
      %5387 = vmatmul.mubr.bf16.gmra.mrb[0].mxu0 %v2932
      %v5388 = vpop.f32.mrb[0].mxu0
      %v5389 = vadd.f32 %v5188, %v5388
      %v5390 = vpop.f32.mrb[0].mxu0
      %v5391 = vadd.f32 %v5190, %v5390
      %v5392 = vpop.f32.mrb[0].mxu0
      %v5393 = vadd.f32 %v5192, %v5392
      %v5394 = vpop.f32.mrb[0].mxu0
      %v5395 = vadd.f32 %v5194, %v5394
      %5396 = vmatprep.mubr.bf16.mxu0 %v2942
      %5397 = vmatmul.mubr.bf16.gmra.mrb[0].mxu0 %v2941
      %v5398 = vpop.f32.mrb[0].mxu0
      %v5399 = vadd.f32 %v5198, %v5398
      %v5400 = vpop.f32.mrb[0].mxu0
      %v5401 = vadd.f32 %v5200, %v5400
      %v5402 = vpop.f32.mrb[0].mxu0
      %v5403 = vadd.f32 %v5202, %v5402
      %v5404 = vpop.f32.mrb[0].mxu0
      %v5405 = vadd.f32 %v5204, %v5404
      %5406 = vmatprep.mubr.bf16.mxu0 %v2951
      %5407 = vmatmul.mubr.bf16.gmra.mrb[0].mxu0 %v2950
      %v5408 = vpop.f32.mrb[0].mxu0
      %v5409 = vadd.f32 %v5208, %v5408
      %v5410 = vpop.f32.mrb[0].mxu0
      %v5411 = vadd.f32 %v5210, %v5410
      %v5412 = vpop.f32.mrb[0].mxu0
      %v5413 = vadd.f32 %v5212, %v5412
      %v5414 = vpop.f32.mrb[0].mxu0
      %v5415 = vadd.f32 %v5214, %v5414
      %5416 = vmatprep.mubr.bf16.mxu0 %v2960
      %5417 = vmatmul.mubr.bf16.gmra.mrb[0].mxu0 %v2959
      %v5418 = vpop.f32.mrb[0].mxu0
      %v5419 = vadd.f32 %v5218, %v5418
      %v5420 = vpop.f32.mrb[0].mxu0
      %v5421 = vadd.f32 %v5220, %v5420
      %v5422 = vpop.f32.mrb[0].mxu0
      %v5423 = vadd.f32 %v5222, %v5422
      %v5424 = vpop.f32.mrb[0].mxu0
      %v5425 = vadd.f32 %v5224, %v5424
      %5426 = vmatprep.mubr.bf16.mxu0 %v2969
      %5427 = vmatmul.mubr.bf16.gmra.mrb[0].mxu0 %v2968
      %v5428 = vpop.f32.mrb[0].mxu0
      %v5429 = vadd.f32 %v5228, %v5428
      %v5430 = vpop.f32.mrb[0].mxu0
      %v5431 = vadd.f32 %v5230, %v5430
      %v5432 = vpop.f32.mrb[0].mxu0
      %v5433 = vadd.f32 %v5232, %v5432
      %v5434 = vpop.f32.mrb[0].mxu0
      %v5435 = vadd.f32 %v5234, %v5434
      %5436 = vmatprep.mubr.bf16.mxu0 %v2978
      %5437 = vmatmul.mubr.bf16.gmra.mrb[0].mxu0 %v2977
      %v5438 = vpop.f32.mrb[0].mxu0
      %v5439 = vadd.f32 %v5238, %v5438
      %v5440 = vpop.f32.mrb[0].mxu0
      %v5441 = vadd.f32 %v5240, %v5440
      %v5442 = vpop.f32.mrb[0].mxu0
      %v5443 = vadd.f32 %v5242, %v5442
      %v5444 = vpop.f32.mrb[0].mxu0
      %v5445 = vadd.f32 %v5244, %v5444
      %5446 = vmatprep.mubr.bf16.mxu0 %v2987
      %5447 = vmatmul.mubr.bf16.gmra.mrb[0].mxu0 %v2986
      %v5448 = vpop.f32.mrb[0].mxu0
      %v5449 = vadd.f32 %v5248, %v5448
      %v5450 = vpop.f32.mrb[0].mxu0
      %v5451 = vadd.f32 %v5250, %v5450
      %v5452 = vpop.f32.mrb[0].mxu0
      %v5453 = vadd.f32 %v5252, %v5452
      %v5454 = vpop.f32.mrb[0].mxu0
      %v5455 = vadd.f32 %v5254, %v5454
      %5456 = vmatprep.mubr.bf16.mxu0 %v2996
      %5457 = vmatmul.mubr.bf16.gmra.mrb[0].mxu0 %v2995
      %v5458 = vpop.f32.mrb[0].mxu0
      %v5459 = vadd.f32 %v5258, %v5458
      %v5460 = vpop.f32.mrb[0].mxu0
      %v5461 = vadd.f32 %v5260, %v5460
      %v5462 = vpop.f32.mrb[0].mxu0
      %v5463 = vadd.f32 %v5262, %v5462
      %v5464 = vpop.f32.mrb[0].mxu0
      %v5465 = vadd.f32 %v5264, %v5464
      %5466 = vmatprep.mubr.bf16.mxu0 %v3005
      %5467 = vmatmul.mubr.bf16.gmra.mrb[0].mxu0 %v3004
      %v5468 = vpop.f32.mrb[0].mxu0
      %v5469 = vadd.f32 %v5268, %v5468
      %v5470 = vpop.f32.mrb[0].mxu0
      %v5471 = vadd.f32 %v5270, %v5470
      %v5472 = vpop.f32.mrb[0].mxu0
      %v5473 = vpop.f32.mrb[0].mxu0
      %5474 = vdwg.mxu0
      %5475 = vmatprep.subr.bf16.mxu0 %v2328
      %5476 = vmatpush1.bf16.msra.mxu0 %v2327
      %5477 = vmatprep.subr.bf16.mxu0 %v2335
      %5478 = vmatpush1.bf16.msra.mxu0 %v2334
      %5479 = vmatprep.subr.bf16.mxu0 %v2342
      %5480 = vmatpush1.bf16.msra.mxu0 %v2341
      %5481 = vmatprep.subr.bf16.mxu0 %v2349
      %5482 = vmatpush1.bf16.msra.mxu0 %v2348
      %5483 = vmatprep.subr.bf16.mxu0 %v2356
      %5484 = vmatpush1.bf16.msra.mxu0 %v2355
      %5485 = vmatprep.subr.bf16.mxu0 %v2363
      %5486 = vmatpush1.bf16.msra.mxu0 %v2362
      %5487 = vmatprep.subr.bf16.mxu0 %v2370
      %5488 = vmatpush1.bf16.msra.mxu0 %v2369
      %5489 = vmatprep.subr.bf16.mxu0 %v2377
      %5490 = vmatpush1.bf16.msra.mxu0 %v2376
      %5491 = vmatprep.subr.bf16.mxu0 %v2384
      %5492 = vmatpush1.bf16.msra.mxu0 %v2383
      %5493 = vmatprep.subr.bf16.mxu0 %v2391
      %5494 = vmatpush1.bf16.msra.mxu0 %v2390
      %5495 = vmatprep.subr.bf16.mxu0 %v2398
      %5496 = vmatpush1.bf16.msra.mxu0 %v2397
      %5497 = vmatprep.subr.bf16.mxu0 %v2405
      %5498 = vmatpush1.bf16.msra.mxu0 %v2404
      %5499 = vmatprep.subr.bf16.mxu0 %v2412
      %5500 = vmatpush1.bf16.msra.mxu0 %v2411
      %5501 = vmatprep.subr.bf16.mxu0 %v2419
      %5502 = vmatpush1.bf16.msra.mxu0 %v2418
      %5503 = vmatprep.subr.bf16.mxu0 %v2426
      %5504 = vmatpush1.bf16.msra.mxu0 %v2425
      %5505 = vmatprep.subr.bf16.mxu0 %v2433
      %5506 = vmatpush1.bf16.msra.mxu0 %v2432
      %5507 = vmatprep.mubr.bf16.mxu0 %v2863
      %5508 = vmatmul.mubr.bf16.gmra.mrb[0].mxu0 %v2862
      %v5509 = vpop.f32.mrb[0].mxu0
      %v5510 = vadd.f32 %v5309, %v5509
      %v5511 = vpop.f32.mrb[0].mxu0
      %v5512 = vadd.f32 %v5311, %v5511
      %v5513 = vpop.f32.mrb[0].mxu0
      %v5514 = vadd.f32 %v5313, %v5513
      %v5515 = vpop.f32.mrb[0].mxu0
      %v5516 = vadd.f32 %v5315, %v5515
      %5517 = vmatprep.mubr.bf16.mxu0 %v2872
      %5518 = vmatmul.mubr.bf16.gmra.mrb[0].mxu0 %v2871
      %v5519 = vpop.f32.mrb[0].mxu0
      %v5520 = vadd.f32 %v5319, %v5519
      %v5521 = vpop.f32.mrb[0].mxu0
      %v5522 = vadd.f32 %v5321, %v5521
      %v5523 = vpop.f32.mrb[0].mxu0
      %v5524 = vadd.f32 %v5323, %v5523
      %v5525 = vpop.f32.mrb[0].mxu0
      %v5526 = vadd.f32 %v5325, %v5525
      %5527 = vmatprep.mubr.bf16.mxu0 %v2881
      %5528 = vmatmul.mubr.bf16.gmra.mrb[0].mxu0 %v2880
      %v5529 = vpop.f32.mrb[0].mxu0
      %v5530 = vadd.f32 %v5329, %v5529
      %v5531 = vpop.f32.mrb[0].mxu0
      %v5532 = vadd.f32 %v5331, %v5531
      %v5533 = vpop.f32.mrb[0].mxu0
      %v5534 = vadd.f32 %v5333, %v5533
      %v5535 = vpop.f32.mrb[0].mxu0
      %v5536 = vadd.f32 %v5335, %v5535
      %5537 = vmatprep.mubr.bf16.mxu0 %v2890
      %5538 = vmatmul.mubr.bf16.gmra.mrb[0].mxu0 %v2889
      %v5539 = vpop.f32.mrb[0].mxu0
      %v5540 = vadd.f32 %v5339, %v5539
      %v5541 = vpop.f32.mrb[0].mxu0
      %v5542 = vadd.f32 %v5341, %v5541
      %v5543 = vpop.f32.mrb[0].mxu0
      %v5544 = vadd.f32 %v5343, %v5543
      %v5545 = vpop.f32.mrb[0].mxu0
      %v5546 = vadd.f32 %v5345, %v5545
      %5547 = vmatprep.mubr.bf16.mxu0 %v2899
      %5548 = vmatmul.mubr.bf16.gmra.mrb[0].mxu0 %v2898
      %v5549 = vpop.f32.mrb[0].mxu0
      %v5550 = vadd.f32 %v5349, %v5549
      %v5551 = vpop.f32.mrb[0].mxu0
      %v5552 = vadd.f32 %v5351, %v5551
      %v5553 = vpop.f32.mrb[0].mxu0
      %v5554 = vadd.f32 %v5353, %v5553
      %v5555 = vpop.f32.mrb[0].mxu0
      %v5556 = vadd.f32 %v5355, %v5555
      %5557 = vmatprep.mubr.bf16.mxu0 %v2908
      %5558 = vmatmul.mubr.bf16.gmra.mrb[0].mxu0 %v2907
      %v5559 = vpop.f32.mrb[0].mxu0
      %v5560 = vadd.f32 %v5359, %v5559
      %v5561 = vpop.f32.mrb[0].mxu0
      %v5562 = vadd.f32 %v5361, %v5561
      %v5563 = vpop.f32.mrb[0].mxu0
      %v5564 = vadd.f32 %v5363, %v5563
      %v5565 = vpop.f32.mrb[0].mxu0
      %v5566 = vadd.f32 %v5365, %v5565
      %5567 = vmatprep.mubr.bf16.mxu0 %v2917
      %5568 = vmatmul.mubr.bf16.gmra.mrb[0].mxu0 %v2916
      %v5569 = vpop.f32.mrb[0].mxu0
      %v5570 = vadd.f32 %v5369, %v5569
      %v5571 = vpop.f32.mrb[0].mxu0
      %v5572 = vadd.f32 %v5371, %v5571
      %v5573 = vpop.f32.mrb[0].mxu0
      %v5574 = vadd.f32 %v5373, %v5573
      %v5575 = vpop.f32.mrb[0].mxu0
      %v5576 = vadd.f32 %v5375, %v5575
      %5577 = vmatprep.mubr.bf16.mxu0 %v2926
      %5578 = vmatmul.mubr.bf16.gmra.mrb[0].mxu0 %v2925
      %v5579 = vpop.f32.mrb[0].mxu0
      %v5580 = vadd.f32 %v5379, %v5579
      %v5581 = vpop.f32.mrb[0].mxu0
      %v5582 = vadd.f32 %v5381, %v5581
      %v5583 = vpop.f32.mrb[0].mxu0
      %v5584 = vadd.f32 %v5383, %v5583
      %v5585 = vpop.f32.mrb[0].mxu0
      %v5586 = vadd.f32 %v5385, %v5585
      %5587 = vmatprep.mubr.bf16.mxu0 %v2935
      %5588 = vmatmul.mubr.bf16.gmra.mrb[0].mxu0 %v2934
      %v5589 = vpop.f32.mrb[0].mxu0
      %v5590 = vadd.f32 %v5389, %v5589
      %v5591 = vpop.f32.mrb[0].mxu0
      %v5592 = vadd.f32 %v5391, %v5591
      %v5593 = vpop.f32.mrb[0].mxu0
      %v5594 = vadd.f32 %v5393, %v5593
      %v5595 = vpop.f32.mrb[0].mxu0
      %v5596 = vadd.f32 %v5395, %v5595
      %5597 = vmatprep.mubr.bf16.mxu0 %v2944
      %5598 = vmatmul.mubr.bf16.gmra.mrb[0].mxu0 %v2943
      %v5599 = vpop.f32.mrb[0].mxu0
      %v5600 = vadd.f32 %v5399, %v5599
      %v5601 = vpop.f32.mrb[0].mxu0
      %v5602 = vadd.f32 %v5401, %v5601
      %v5603 = vpop.f32.mrb[0].mxu0
      %v5604 = vadd.f32 %v5403, %v5603
      %v5605 = vpop.f32.mrb[0].mxu0
      %v5606 = vadd.f32 %v5405, %v5605
      %5607 = vmatprep.mubr.bf16.mxu0 %v2953
      %5608 = vmatmul.mubr.bf16.gmra.mrb[0].mxu0 %v2952
      %v5609 = vpop.f32.mrb[0].mxu0
      %v5610 = vadd.f32 %v5409, %v5609
      %v5611 = vpop.f32.mrb[0].mxu0
      %v5612 = vadd.f32 %v5411, %v5611
      %v5613 = vpop.f32.mrb[0].mxu0
      %v5614 = vadd.f32 %v5413, %v5613
      %v5615 = vpop.f32.mrb[0].mxu0
      %v5616 = vadd.f32 %v5415, %v5615
      %5617 = vmatprep.mubr.bf16.mxu0 %v2962
      %5618 = vmatmul.mubr.bf16.gmra.mrb[0].mxu0 %v2961
      %v5619 = vpop.f32.mrb[0].mxu0
      %v5620 = vadd.f32 %v5419, %v5619
      %v5621 = vpop.f32.mrb[0].mxu0
      %v5622 = vadd.f32 %v5421, %v5621
      %v5623 = vpop.f32.mrb[0].mxu0
      %v5624 = vadd.f32 %v5423, %v5623
      %v5625 = vpop.f32.mrb[0].mxu0
      %v5626 = vadd.f32 %v5425, %v5625
      %5627 = vmatprep.mubr.bf16.mxu0 %v2971
      %5628 = vmatmul.mubr.bf16.gmra.mrb[0].mxu0 %v2970
      %v5629 = vpop.f32.mrb[0].mxu0
      %v5630 = vadd.f32 %v5429, %v5629
      %v5631 = vpop.f32.mrb[0].mxu0
      %v5632 = vadd.f32 %v5431, %v5631
      %v5633 = vpop.f32.mrb[0].mxu0
      %v5634 = vadd.f32 %v5433, %v5633
      %v5635 = vpop.f32.mrb[0].mxu0
      %v5636 = vadd.f32 %v5435, %v5635
      %5637 = vmatprep.mubr.bf16.mxu0 %v2980
      %5638 = vmatmul.mubr.bf16.gmra.mrb[0].mxu0 %v2979
      %v5639 = vpop.f32.mrb[0].mxu0
      %v5640 = vadd.f32 %v5439, %v5639
      %v5641 = vpop.f32.mrb[0].mxu0
      %v5642 = vadd.f32 %v5441, %v5641
      %v5643 = vpop.f32.mrb[0].mxu0
      %v5644 = vadd.f32 %v5443, %v5643
      %v5645 = vpop.f32.mrb[0].mxu0
      %v5646 = vadd.f32 %v5445, %v5645
      %5647 = vmatprep.mubr.bf16.mxu0 %v2989
      %5648 = vmatmul.mubr.bf16.gmra.mrb[0].mxu0 %v2988
      %v5649 = vpop.f32.mrb[0].mxu0
      %v5650 = vadd.f32 %v5449, %v5649
      %v5651 = vpop.f32.mrb[0].mxu0
      %v5652 = vadd.f32 %v5451, %v5651
      %v5653 = vpop.f32.mrb[0].mxu0
      %v5654 = vadd.f32 %v5453, %v5653
      %v5655 = vpop.f32.mrb[0].mxu0
      %v5656 = vadd.f32 %v5455, %v5655
      %5657 = vmatprep.mubr.bf16.mxu0 %v2998
      %5658 = vmatmul.mubr.bf16.gmra.mrb[0].mxu0 %v2997
      %v5659 = vpop.f32.mrb[0].mxu0
      %v5660 = vadd.f32 %v5459, %v5659
      %v5661 = vpop.f32.mrb[0].mxu0
      %v5662 = vadd.f32 %v5461, %v5661
      %v5663 = vpop.f32.mrb[0].mxu0
      %v5664 = vadd.f32 %v5463, %v5663
      %v5665 = vpop.f32.mrb[0].mxu0
      %v5666 = vadd.f32 %v5465, %v5665
      %5667 = vmatprep.mubr.bf16.mxu0 %v3007
      %5668 = vmatmul.mubr.bf16.gmra.mrb[0].mxu0 %v3006
      %v5669 = vpop.f32.mrb[0].mxu0
      %v5670 = vadd.f32 %v5469, %v5669
      %v5671 = vpop.f32.mrb[0].mxu0
      %v5672 = vadd.f32 %v5471, %v5671
      %v5673 = vpop.f32.mrb[0].mxu0
      %v5674 = vpop.f32.mrb[0].mxu0
      %5675 = vdwg.mxu0
      %5676 = vmatprep.subr.bf16.mxu0 %v2440
      %5677 = vmatpush1.bf16.msra.mxu0 %v2439
      %5678 = vmatprep.subr.bf16.mxu0 %v2447
      %5679 = vmatpush1.bf16.msra.mxu0 %v2446
      %5680 = vmatprep.subr.bf16.mxu0 %v2454
      %5681 = vmatpush1.bf16.msra.mxu0 %v2453
      %5682 = vmatprep.subr.bf16.mxu0 %v2461
      %5683 = vmatpush1.bf16.msra.mxu0 %v2460
      %5684 = vmatprep.subr.bf16.mxu0 %v2468
      %5685 = vmatpush1.bf16.msra.mxu0 %v2467
      %5686 = vmatprep.subr.bf16.mxu0 %v2475
      %5687 = vmatpush1.bf16.msra.mxu0 %v2474
      %5688 = vmatprep.subr.bf16.mxu0 %v2482
      %5689 = vmatpush1.bf16.msra.mxu0 %v2481
      %5690 = vmatprep.subr.bf16.mxu0 %v2489
      %5691 = vmatpush1.bf16.msra.mxu0 %v2488
      %5692 = vmatprep.subr.bf16.mxu0 %v2496
      %5693 = vmatpush1.bf16.msra.mxu0 %v2495
      %5694 = vmatprep.subr.bf16.mxu0 %v2503
      %5695 = vmatpush1.bf16.msra.mxu0 %v2502
      %5696 = vmatprep.subr.bf16.mxu0 %v2510
      %5697 = vmatpush1.bf16.msra.mxu0 %v2509
      %5698 = vmatprep.subr.bf16.mxu0 %v2517
      %5699 = vmatpush1.bf16.msra.mxu0 %v2516
      %5700 = vmatprep.subr.bf16.mxu0 %v2524
      %5701 = vmatpush1.bf16.msra.mxu0 %v2523
      %5702 = vmatprep.subr.bf16.mxu0 %v2531
      %5703 = vmatpush1.bf16.msra.mxu0 %v2530
      %5704 = vmatprep.subr.bf16.mxu0 %v2538
      %5705 = vmatpush1.bf16.msra.mxu0 %v2537
      %5706 = vmatprep.subr.bf16.mxu0 %v2545
      %5707 = vmatpush1.bf16.msra.mxu0 %v2544
      %5708 = vmatprep.mubr.bf16.mxu0 %v2865
      %5709 = vmatmul.mubr.bf16.gmra.mrb[0].mxu0 %v2864
      %v5710 = vpop.f32.mrb[0].mxu0
      %v5711 = vadd.f32 %v5510, %v5710
      %v5712 = vpop.f32.mrb[0].mxu0
      %v5713 = vadd.f32 %v5512, %v5712
      %v5714 = vpop.f32.mrb[0].mxu0
      %v5715 = vadd.f32 %v5514, %v5714
      %v5716 = vpop.f32.mrb[0].mxu0
      %v5717 = vadd.f32 %v5516, %v5716
      %5718 = vmatprep.mubr.bf16.mxu0 %v2874
      %5719 = vmatmul.mubr.bf16.gmra.mrb[0].mxu0 %v2873
      %v5720 = vpop.f32.mrb[0].mxu0
      %v5721 = vadd.f32 %v5520, %v5720
      %v5722 = vpop.f32.mrb[0].mxu0
      %v5723 = vadd.f32 %v5522, %v5722
      %v5724 = vpop.f32.mrb[0].mxu0
      %v5725 = vadd.f32 %v5524, %v5724
      %v5726 = vpop.f32.mrb[0].mxu0
      %v5727 = vadd.f32 %v5526, %v5726
      %5728 = vmatprep.mubr.bf16.mxu0 %v2883
      %5729 = vmatmul.mubr.bf16.gmra.mrb[0].mxu0 %v2882
      %v5730 = vpop.f32.mrb[0].mxu0
      %v5731 = vadd.f32 %v5530, %v5730
      %v5732 = vpop.f32.mrb[0].mxu0
      %v5733 = vadd.f32 %v5532, %v5732
      %v5734 = vpop.f32.mrb[0].mxu0
      %v5735 = vadd.f32 %v5534, %v5734
      %v5736 = vpop.f32.mrb[0].mxu0
      %v5737 = vadd.f32 %v5536, %v5736
      %5738 = vmatprep.mubr.bf16.mxu0 %v2892
      %5739 = vmatmul.mubr.bf16.gmra.mrb[0].mxu0 %v2891
      %v5740 = vpop.f32.mrb[0].mxu0
      %v5741 = vadd.f32 %v5540, %v5740
      %v5742 = vpop.f32.mrb[0].mxu0
      %v5743 = vadd.f32 %v5542, %v5742
      %v5744 = vpop.f32.mrb[0].mxu0
      %v5745 = vadd.f32 %v5544, %v5744
      %v5746 = vpop.f32.mrb[0].mxu0
      %v5747 = vadd.f32 %v5546, %v5746
      %5748 = vmatprep.mubr.bf16.mxu0 %v2901
      %5749 = vmatmul.mubr.bf16.gmra.mrb[0].mxu0 %v2900
      %v5750 = vpop.f32.mrb[0].mxu0
      %v5751 = vadd.f32 %v5550, %v5750
      %v5752 = vpop.f32.mrb[0].mxu0
      %v5753 = vadd.f32 %v5552, %v5752
      %v5754 = vpop.f32.mrb[0].mxu0
      %v5755 = vadd.f32 %v5554, %v5754
      %v5756 = vpop.f32.mrb[0].mxu0
      %v5757 = vadd.f32 %v5556, %v5756
      %5758 = vmatprep.mubr.bf16.mxu0 %v2910
      %5759 = vmatmul.mubr.bf16.gmra.mrb[0].mxu0 %v2909
      %v5760 = vpop.f32.mrb[0].mxu0
      %v5761 = vadd.f32 %v5560, %v5760
      %v5762 = vpop.f32.mrb[0].mxu0
      %v5763 = vadd.f32 %v5562, %v5762
      %v5764 = vpop.f32.mrb[0].mxu0
      %v5765 = vadd.f32 %v5564, %v5764
      %v5766 = vpop.f32.mrb[0].mxu0
      %v5767 = vadd.f32 %v5566, %v5766
      %5768 = vmatprep.mubr.bf16.mxu0 %v2919
      %5769 = vmatmul.mubr.bf16.gmra.mrb[0].mxu0 %v2918
      %v5770 = vpop.f32.mrb[0].mxu0
      %v5771 = vadd.f32 %v5570, %v5770
      %v5772 = vpop.f32.mrb[0].mxu0
      %v5773 = vadd.f32 %v5572, %v5772
      %v5774 = vpop.f32.mrb[0].mxu0
      %v5775 = vadd.f32 %v5574, %v5774
      %v5776 = vpop.f32.mrb[0].mxu0
      %v5777 = vadd.f32 %v5576, %v5776
      %5778 = vmatprep.mubr.bf16.mxu0 %v2928
      %5779 = vmatmul.mubr.bf16.gmra.mrb[0].mxu0 %v2927
      %v5780 = vpop.f32.mrb[0].mxu0
      %v5781 = vadd.f32 %v5580, %v5780
      %v5782 = vpop.f32.mrb[0].mxu0
      %v5783 = vadd.f32 %v5582, %v5782
      %v5784 = vpop.f32.mrb[0].mxu0
      %v5785 = vadd.f32 %v5584, %v5784
      %v5786 = vpop.f32.mrb[0].mxu0
      %v5787 = vadd.f32 %v5586, %v5786
      %5788 = vmatprep.mubr.bf16.mxu0 %v2937
      %5789 = vmatmul.mubr.bf16.gmra.mrb[0].mxu0 %v2936
      %v5790 = vpop.f32.mrb[0].mxu0
      %v5791 = vadd.f32 %v5590, %v5790
      %v5792 = vpop.f32.mrb[0].mxu0
      %v5793 = vadd.f32 %v5592, %v5792
      %v5794 = vpop.f32.mrb[0].mxu0
      %v5795 = vadd.f32 %v5594, %v5794
      %v5796 = vpop.f32.mrb[0].mxu0
      %v5797 = vadd.f32 %v5596, %v5796
      %5798 = vmatprep.mubr.bf16.mxu0 %v2946
      %5799 = vmatmul.mubr.bf16.gmra.mrb[0].mxu0 %v2945
      %v5800 = vpop.f32.mrb[0].mxu0
      %v5801 = vadd.f32 %v5600, %v5800
      %v5802 = vpop.f32.mrb[0].mxu0
      %v5803 = vadd.f32 %v5602, %v5802
      %v5804 = vpop.f32.mrb[0].mxu0
      %v5805 = vadd.f32 %v5604, %v5804
      %v5806 = vpop.f32.mrb[0].mxu0
      %v5807 = vadd.f32 %v5606, %v5806
      %5808 = vmatprep.mubr.bf16.mxu0 %v2955
      %5809 = vmatmul.mubr.bf16.gmra.mrb[0].mxu0 %v2954
      %v5810 = vpop.f32.mrb[0].mxu0
      %v5811 = vadd.f32 %v5610, %v5810
      %v5812 = vpop.f32.mrb[0].mxu0
      %v5813 = vadd.f32 %v5612, %v5812
      %v5814 = vpop.f32.mrb[0].mxu0
      %v5815 = vadd.f32 %v5614, %v5814
      %v5816 = vpop.f32.mrb[0].mxu0
      %v5817 = vadd.f32 %v5616, %v5816
      %5818 = vmatprep.mubr.bf16.mxu0 %v2964
      %5819 = vmatmul.mubr.bf16.gmra.mrb[0].mxu0 %v2963
      %v5820 = vpop.f32.mrb[0].mxu0
      %v5821 = vadd.f32 %v5620, %v5820
      %v5822 = vpop.f32.mrb[0].mxu0
      %v5823 = vadd.f32 %v5622, %v5822
      %v5824 = vpop.f32.mrb[0].mxu0
      %v5825 = vadd.f32 %v5624, %v5824
      %v5826 = vpop.f32.mrb[0].mxu0
      %v5827 = vadd.f32 %v5626, %v5826
      %5828 = vmatprep.mubr.bf16.mxu0 %v2973
      %5829 = vmatmul.mubr.bf16.gmra.mrb[0].mxu0 %v2972
      %v5830 = vpop.f32.mrb[0].mxu0
      %v5831 = vadd.f32 %v5630, %v5830
      %v5832 = vpop.f32.mrb[0].mxu0
      %v5833 = vadd.f32 %v5632, %v5832
      %v5834 = vpop.f32.mrb[0].mxu0
      %v5835 = vadd.f32 %v5634, %v5834
      %v5836 = vpop.f32.mrb[0].mxu0
      %v5837 = vadd.f32 %v5636, %v5836
      %5838 = vmatprep.mubr.bf16.mxu0 %v2982
      %5839 = vmatmul.mubr.bf16.gmra.mrb[0].mxu0 %v2981
      %v5840 = vpop.f32.mrb[0].mxu0
      %v5841 = vadd.f32 %v5640, %v5840
      %v5842 = vpop.f32.mrb[0].mxu0
      %v5843 = vadd.f32 %v5642, %v5842
      %v5844 = vpop.f32.mrb[0].mxu0
      %v5845 = vadd.f32 %v5644, %v5844
      %v5846 = vpop.f32.mrb[0].mxu0
      %v5847 = vadd.f32 %v5646, %v5846
      %5848 = vmatprep.mubr.bf16.mxu0 %v2991
      %5849 = vmatmul.mubr.bf16.gmra.mrb[0].mxu0 %v2990
      %v5850 = vpop.f32.mrb[0].mxu0
      %v5851 = vadd.f32 %v5650, %v5850
      %v5852 = vpop.f32.mrb[0].mxu0
      %v5853 = vadd.f32 %v5652, %v5852
      %v5854 = vpop.f32.mrb[0].mxu0
      %v5855 = vadd.f32 %v5654, %v5854
      %v5856 = vpop.f32.mrb[0].mxu0
      %v5857 = vadd.f32 %v5656, %v5856
      %5858 = vmatprep.mubr.bf16.mxu0 %v3000
      %5859 = vmatmul.mubr.bf16.gmra.mrb[0].mxu0 %v2999
      %v5860 = vpop.f32.mrb[0].mxu0
      %v5861 = vadd.f32 %v5660, %v5860
      %v5862 = vpop.f32.mrb[0].mxu0
      %v5863 = vadd.f32 %v5662, %v5862
      %v5864 = vpop.f32.mrb[0].mxu0
      %v5865 = vadd.f32 %v5664, %v5864
      %v5866 = vpop.f32.mrb[0].mxu0
      %v5867 = vadd.f32 %v5666, %v5866
      %5868 = vmatprep.mubr.bf16.mxu0 %v3009
      %5869 = vmatmul.mubr.bf16.gmra.mrb[0].mxu0 %v3008
      %v5870 = vpop.f32.mrb[0].mxu0
      %v5871 = vadd.f32 %v5670, %v5870
      %v5872 = vpop.f32.mrb[0].mxu0
      %v5873 = vadd.f32 %v5672, %v5872
      %v5874 = vpop.f32.mrb[0].mxu0
      %v5875 = vpop.f32.mrb[0].mxu0
      %5876 = vdwg.mxu0
      %5877 = vmatprep.subr.bf16.mxu0 %v2552
      %5878 = vmatpush1.bf16.msra.mxu0 %v2551
      %5879 = vmatprep.subr.bf16.mxu0 %v2559
      %5880 = vmatpush1.bf16.msra.mxu0 %v2558
      %5881 = vmatprep.subr.bf16.mxu0 0
      %5882 = vmatpush1.bf16.msra.mxu0 0
      %5883 = vmatprep.subr.bf16.mxu0 0
      %5884 = vmatpush1.bf16.msra.mxu0 0
      %5885 = vmatprep.subr.bf16.mxu0 0
      %5886 = vmatpush1.bf16.msra.mxu0 0
      %5887 = vmatprep.subr.bf16.mxu0 0
      %5888 = vmatpush1.bf16.msra.mxu0 0
      %5889 = vmatprep.subr.bf16.mxu0 0
      %5890 = vmatpush1.bf16.msra.mxu0 0
      %5891 = vmatprep.subr.bf16.mxu0 0
      %5892 = vmatpush1.bf16.msra.mxu0 0
      %5893 = vmatprep.subr.bf16.mxu0 0
      %5894 = vmatpush1.bf16.msra.mxu0 0
      %5895 = vmatprep.subr.bf16.mxu0 0
      %5896 = vmatpush1.bf16.msra.mxu0 0
      %5897 = vmatprep.subr.bf16.mxu0 0
      %5898 = vmatpush1.bf16.msra.mxu0 0
      %5899 = vmatprep.subr.bf16.mxu0 0
      %5900 = vmatpush1.bf16.msra.mxu0 0
      %5901 = vmatprep.subr.bf16.mxu0 0
      %5902 = vmatpush1.bf16.msra.mxu0 0
      %5903 = vmatprep.subr.bf16.mxu0 0
      %5904 = vmatpush1.bf16.msra.mxu0 0
      %5905 = vmatprep.subr.bf16.mxu0 0
      %5906 = vmatpush1.bf16.msra.mxu0 0
      %5907 = vmatprep.subr.bf16.mxu0 0
      %5908 = vmatpush1.bf16.msra.mxu0 0
      %5909 = vmatprep.mubr.bf16.mxu0 0
      %5910 = vmatmul.mubr.bf16.gmra.mrb[0].mxu0 %v3013
      %v5911 = vpop.f32.mrb[0].mxu0
      %v5912 = vadd.f32 %v5711, %v5911
      %v5913 = vpop.f32.mrb[0].mxu0
      %v5914 = vadd.f32 %v5713, %v5913
      %v5915 = vpop.f32.mrb[0].mxu0
      %v5916 = vadd.f32 %v5715, %v5915
      %v5917 = vpop.f32.mrb[0].mxu0
      %v5918 = vadd.f32 %v5717, %v5917
      %5919 = vmatprep.mubr.bf16.mxu0 0
      %5920 = vmatmul.mubr.bf16.gmra.mrb[0].mxu0 %v3016
      %v5921 = vpop.f32.mrb[0].mxu0
      %v5922 = vadd.f32 %v5721, %v5921
      %v5923 = vpop.f32.mrb[0].mxu0
      %v5924 = vadd.f32 %v5723, %v5923
      %v5925 = vpop.f32.mrb[0].mxu0
      %v5926 = vadd.f32 %v5725, %v5925
      %v5927 = vpop.f32.mrb[0].mxu0
      %v5928 = vadd.f32 %v5727, %v5927
      %5929 = vmatprep.mubr.bf16.mxu0 0
      %5930 = vmatmul.mubr.bf16.gmra.mrb[0].mxu0 %v3019
      %v5931 = vpop.f32.mrb[0].mxu0
      %v5932 = vadd.f32 %v5731, %v5931
      %v5933 = vpop.f32.mrb[0].mxu0
      %v5934 = vadd.f32 %v5733, %v5933
      %v5935 = vpop.f32.mrb[0].mxu0
      %v5936 = vadd.f32 %v5735, %v5935
      %v5937 = vpop.f32.mrb[0].mxu0
      %v5938 = vadd.f32 %v5737, %v5937
      %5939 = vmatprep.mubr.bf16.mxu0 0
      %5940 = vmatmul.mubr.bf16.gmra.mrb[0].mxu0 %v3022
      %v5941 = vpop.f32.mrb[0].mxu0
      %v5942 = vadd.f32 %v5741, %v5941
      %v5943 = vpop.f32.mrb[0].mxu0
      %v5944 = vadd.f32 %v5743, %v5943
      %v5945 = vpop.f32.mrb[0].mxu0
      %v5946 = vadd.f32 %v5745, %v5945
      %v5947 = vpop.f32.mrb[0].mxu0
      %v5948 = vadd.f32 %v5747, %v5947
      %5949 = vmatprep.mubr.bf16.mxu0 0
      %5950 = vmatmul.mubr.bf16.gmra.mrb[0].mxu0 %v3025
      %v5951 = vpop.f32.mrb[0].mxu0
      %v5952 = vadd.f32 %v5751, %v5951
      %v5953 = vpop.f32.mrb[0].mxu0
      %v5954 = vadd.f32 %v5753, %v5953
      %v5955 = vpop.f32.mrb[0].mxu0
      %v5956 = vadd.f32 %v5755, %v5955
      %v5957 = vpop.f32.mrb[0].mxu0
      %v5958 = vadd.f32 %v5757, %v5957
      %5959 = vmatprep.mubr.bf16.mxu0 0
      %5960 = vmatmul.mubr.bf16.gmra.mrb[0].mxu0 %v3028
      %v5961 = vpop.f32.mrb[0].mxu0
      %v5962 = vadd.f32 %v5761, %v5961
      %v5963 = vpop.f32.mrb[0].mxu0
      %v5964 = vadd.f32 %v5763, %v5963
      %v5965 = vpop.f32.mrb[0].mxu0
      %v5966 = vadd.f32 %v5765, %v5965
      %v5967 = vpop.f32.mrb[0].mxu0
      %v5968 = vadd.f32 %v5767, %v5967
      %5969 = vmatprep.mubr.bf16.mxu0 0
      %5970 = vmatmul.mubr.bf16.gmra.mrb[0].mxu0 %v3031
      %v5971 = vpop.f32.mrb[0].mxu0
      %v5972 = vadd.f32 %v5771, %v5971
      %v5973 = vpop.f32.mrb[0].mxu0
      %v5974 = vadd.f32 %v5773, %v5973
      %v5975 = vpop.f32.mrb[0].mxu0
      %v5976 = vadd.f32 %v5775, %v5975
      %v5977 = vpop.f32.mrb[0].mxu0
      %v5978 = vadd.f32 %v5777, %v5977
      %5979 = vmatprep.mubr.bf16.mxu0 0
      %5980 = vmatmul.mubr.bf16.gmra.mrb[0].mxu0 %v3034
      %v5981 = vpop.f32.mrb[0].mxu0
      %v5982 = vadd.f32 %v5781, %v5981
      %v5983 = vpop.f32.mrb[0].mxu0
      %v5984 = vadd.f32 %v5783, %v5983
      %v5985 = vpop.f32.mrb[0].mxu0
      %v5986 = vadd.f32 %v5785, %v5985
      %v5987 = vpop.f32.mrb[0].mxu0
      %v5988 = vadd.f32 %v5787, %v5987
      %5989 = vmatprep.mubr.bf16.mxu0 0
      %5990 = vmatmul.mubr.bf16.gmra.mrb[0].mxu0 %v3037
      %v5991 = vpop.f32.mrb[0].mxu0
      %v5992 = vadd.f32 %v5791, %v5991
      %v5993 = vpop.f32.mrb[0].mxu0
      %v5994 = vadd.f32 %v5793, %v5993
      %v5995 = vpop.f32.mrb[0].mxu0
      %v5996 = vadd.f32 %v5795, %v5995
      %v5997 = vpop.f32.mrb[0].mxu0
      %v5998 = vadd.f32 %v5797, %v5997
      %5999 = vmatprep.mubr.bf16.mxu0 0
      %6000 = vmatmul.mubr.bf16.gmra.mrb[0].mxu0 %v3040
      %v6001 = vpop.f32.mrb[0].mxu0
      %v6002 = vadd.f32 %v5801, %v6001
      %v6003 = vpop.f32.mrb[0].mxu0
      %v6004 = vadd.f32 %v5803, %v6003
      %v6005 = vpop.f32.mrb[0].mxu0
      %v6006 = vadd.f32 %v5805, %v6005
      %v6007 = vpop.f32.mrb[0].mxu0
      %v6008 = vadd.f32 %v5807, %v6007
      %6009 = vmatprep.mubr.bf16.mxu0 0
      %6010 = vmatmul.mubr.bf16.gmra.mrb[0].mxu0 %v3043
      %v6011 = vpop.f32.mrb[0].mxu0
      %v6012 = vadd.f32 %v5811, %v6011
      %v6013 = vpop.f32.mrb[0].mxu0
      %v6014 = vadd.f32 %v5813, %v6013
      %v6015 = vpop.f32.mrb[0].mxu0
      %v6016 = vadd.f32 %v5815, %v6015
      %v6017 = vpop.f32.mrb[0].mxu0
      %v6018 = vadd.f32 %v5817, %v6017
      %6019 = vmatprep.mubr.bf16.mxu0 0
      %6020 = vmatmul.mubr.bf16.gmra.mrb[0].mxu0 %v3046
      %v6021 = vpop.f32.mrb[0].mxu0
      %v6022 = vadd.f32 %v5821, %v6021
      %v6023 = vpop.f32.mrb[0].mxu0
      %v6024 = vadd.f32 %v5823, %v6023
      %v6025 = vpop.f32.mrb[0].mxu0
      %v6026 = vadd.f32 %v5825, %v6025
      %v6027 = vpop.f32.mrb[0].mxu0
      %v6028 = vadd.f32 %v5827, %v6027
      %6029 = vmatprep.mubr.bf16.mxu0 0
      %6030 = vmatmul.mubr.bf16.gmra.mrb[0].mxu0 %v3049
      %v6031 = vpop.f32.mrb[0].mxu0
      %v6032 = vadd.f32 %v5831, %v6031
      %v6033 = vpop.f32.mrb[0].mxu0
      %v6034 = vadd.f32 %v5833, %v6033
      %v6035 = vpop.f32.mrb[0].mxu0
      %v6036 = vadd.f32 %v5835, %v6035
      %v6037 = vpop.f32.mrb[0].mxu0
      %v6038 = vadd.f32 %v5837, %v6037
      %6039 = vmatprep.mubr.bf16.mxu0 0
      %6040 = vmatmul.mubr.bf16.gmra.mrb[0].mxu0 %v3052
      %v6041 = vpop.f32.mrb[0].mxu0
      %v6042 = vadd.f32 %v5841, %v6041
      %v6043 = vpop.f32.mrb[0].mxu0
      %v6044 = vadd.f32 %v5843, %v6043
      %v6045 = vpop.f32.mrb[0].mxu0
      %v6046 = vadd.f32 %v5845, %v6045
      %v6047 = vpop.f32.mrb[0].mxu0
      %v6048 = vadd.f32 %v5847, %v6047
      %6049 = vmatprep.mubr.bf16.mxu0 0
      %6050 = vmatmul.mubr.bf16.gmra.mrb[0].mxu0 %v3055
      %v6051 = vpop.f32.mrb[0].mxu0
      %v6052 = vadd.f32 %v5851, %v6051
      %v6053 = vpop.f32.mrb[0].mxu0
      %v6054 = vadd.f32 %v5853, %v6053
      %v6055 = vpop.f32.mrb[0].mxu0
      %v6056 = vadd.f32 %v5855, %v6055
      %v6057 = vpop.f32.mrb[0].mxu0
      %v6058 = vadd.f32 %v5857, %v6057
      %6059 = vmatprep.mubr.bf16.mxu0 0
      %6060 = vmatmul.mubr.bf16.gmra.mrb[0].mxu0 %v3058
      %v6061 = vpop.f32.mrb[0].mxu0
      %v6062 = vadd.f32 %v5861, %v6061
      %v6063 = vpop.f32.mrb[0].mxu0
      %v6064 = vadd.f32 %v5863, %v6063
      %v6065 = vpop.f32.mrb[0].mxu0
      %v6066 = vadd.f32 %v5865, %v6065
      %v6067 = vpop.f32.mrb[0].mxu0
      %v6068 = vadd.f32 %v5867, %v6067
      %6069 = vmatprep.mubr.bf16.mxu0 0
      %6070 = vmatmul.mubr.bf16.gmra.mrb[0].mxu0 %v3061
      %v6071 = vpop.f32.mrb[0].mxu0
      %v6072 = vadd.f32 %v5871, %v6071
      %v6073 = vpop.f32.mrb[0].mxu0
      %v6074 = vadd.f32 %v5873, %v6073
      %v6075 = vpop.f32.mrb[0].mxu0
      %v6076 = vpop.f32.mrb[0].mxu0
      %6077 = vdwg.mxu0
      %6078 = vmatprep.subr.bf16.mxu0 0
      %6079 = vmatpush1.bf16.msra.mxu0 %v2105
      %6080 = vmatprep.subr.bf16.mxu0 0
      %6081 = vmatpush1.bf16.msra.mxu0 %v2112
      %6082 = vmatprep.subr.bf16.mxu0 0
      %6083 = vmatpush1.bf16.msra.mxu0 %v2119
      %6084 = vmatprep.subr.bf16.mxu0 0
      %6085 = vmatpush1.bf16.msra.mxu0 %v2126
      %6086 = vmatprep.subr.bf16.mxu0 0
      %6087 = vmatpush1.bf16.msra.mxu0 %v2133
      %6088 = vmatprep.subr.bf16.mxu0 0
      %6089 = vmatpush1.bf16.msra.mxu0 %v2140
      %6090 = vmatprep.subr.bf16.mxu0 0
      %6091 = vmatpush1.bf16.msra.mxu0 %v2147
      %6092 = vmatprep.subr.bf16.mxu0 0
      %6093 = vmatpush1.bf16.msra.mxu0 %v2154
      %6094 = vmatprep.subr.bf16.mxu0 0
      %6095 = vmatpush1.bf16.msra.mxu0 %v2161
      %6096 = vmatprep.subr.bf16.mxu0 0
      %6097 = vmatpush1.bf16.msra.mxu0 %v2168
      %6098 = vmatprep.subr.bf16.mxu0 0
      %6099 = vmatpush1.bf16.msra.mxu0 %v2175
      %6100 = vmatprep.subr.bf16.mxu0 0
      %6101 = vmatpush1.bf16.msra.mxu0 %v2182
      %6102 = vmatprep.subr.bf16.mxu0 0
      %6103 = vmatpush1.bf16.msra.mxu0 %v2189
      %6104 = vmatprep.subr.bf16.mxu0 0
      %6105 = vmatpush1.bf16.msra.mxu0 %v2196
      %6106 = vmatprep.subr.bf16.mxu0 0
      %6107 = vmatpush1.bf16.msra.mxu0 %v2203
      %6108 = vmatprep.subr.bf16.mxu0 0
      %6109 = vmatpush1.bf16.msra.mxu0 %v2210
      %6110 = vmatprep.mubr.bf16.mxu0 %v2859
      %6111 = vmatmul.mubr.bf16.gmra.mrb[0].mxu0 %v2858
      %v6112 = vpop.f32.mrb[0].mxu0
      %v6113 = vadd.f32 0.0, %v6112
      %v6114 = vpop.f32.mrb[0].mxu0
      %v6115 = vpop.f32.mrb[0].mxu0
      %v6116 = vadd.f32 0.0, %v6115
      %v6117 = vpop.f32.mrb[0].mxu0
      %6118 = vmatprep.mubr.bf16.mxu0 %v2868
      %6119 = vmatmul.mubr.bf16.gmra.mrb[0].mxu0 %v2867
      %v6120 = vpop.f32.mrb[0].mxu0
      %v6121 = vadd.f32 0.0, %v6120
      %v6122 = vpop.f32.mrb[0].mxu0
      %v6123 = vpop.f32.mrb[0].mxu0
      %v6124 = vadd.f32 0.0, %v6123
      %v6125 = vpop.f32.mrb[0].mxu0
      %6126 = vmatprep.mubr.bf16.mxu0 %v2877
      %6127 = vmatmul.mubr.bf16.gmra.mrb[0].mxu0 %v2876
      %v6128 = vpop.f32.mrb[0].mxu0
      %v6129 = vadd.f32 0.0, %v6128
      %v6130 = vpop.f32.mrb[0].mxu0
      %v6131 = vpop.f32.mrb[0].mxu0
      %v6132 = vadd.f32 0.0, %v6131
      %v6133 = vpop.f32.mrb[0].mxu0
      %6134 = vmatprep.mubr.bf16.mxu0 %v2886
      %6135 = vmatmul.mubr.bf16.gmra.mrb[0].mxu0 %v2885
      %v6136 = vpop.f32.mrb[0].mxu0
      %v6137 = vadd.f32 0.0, %v6136
      %v6138 = vpop.f32.mrb[0].mxu0
      %v6139 = vpop.f32.mrb[0].mxu0
      %v6140 = vadd.f32 0.0, %v6139
      %v6141 = vpop.f32.mrb[0].mxu0
      %6142 = vmatprep.mubr.bf16.mxu0 %v2895
      %6143 = vmatmul.mubr.bf16.gmra.mrb[0].mxu0 %v2894
      %v6144 = vpop.f32.mrb[0].mxu0
      %v6145 = vadd.f32 0.0, %v6144
      %v6146 = vpop.f32.mrb[0].mxu0
      %v6147 = vpop.f32.mrb[0].mxu0
      %v6148 = vadd.f32 0.0, %v6147
      %v6149 = vpop.f32.mrb[0].mxu0
      %6150 = vmatprep.mubr.bf16.mxu0 %v2904
      %6151 = vmatmul.mubr.bf16.gmra.mrb[0].mxu0 %v2903
      %v6152 = vpop.f32.mrb[0].mxu0
      %v6153 = vadd.f32 0.0, %v6152
      %v6154 = vpop.f32.mrb[0].mxu0
      %v6155 = vpop.f32.mrb[0].mxu0
      %v6156 = vadd.f32 0.0, %v6155
      %v6157 = vpop.f32.mrb[0].mxu0
      %6158 = vmatprep.mubr.bf16.mxu0 %v2913
      %6159 = vmatmul.mubr.bf16.gmra.mrb[0].mxu0 %v2912
      %v6160 = vpop.f32.mrb[0].mxu0
      %v6161 = vadd.f32 0.0, %v6160
      %v6162 = vpop.f32.mrb[0].mxu0
      %v6163 = vpop.f32.mrb[0].mxu0
      %v6164 = vadd.f32 0.0, %v6163
      %v6165 = vpop.f32.mrb[0].mxu0
      %6166 = vmatprep.mubr.bf16.mxu0 %v2922
      %6167 = vmatmul.mubr.bf16.gmra.mrb[0].mxu0 %v2921
      %v6168 = vpop.f32.mrb[0].mxu0
      %v6169 = vadd.f32 0.0, %v6168
      %v6170 = vpop.f32.mrb[0].mxu0
      %v6171 = vpop.f32.mrb[0].mxu0
      %v6172 = vadd.f32 0.0, %v6171
      %v6173 = vpop.f32.mrb[0].mxu0
      %6174 = vmatprep.mubr.bf16.mxu0 %v2931
      %6175 = vmatmul.mubr.bf16.gmra.mrb[0].mxu0 %v2930
      %v6176 = vpop.f32.mrb[0].mxu0
      %v6177 = vadd.f32 0.0, %v6176
      %v6178 = vpop.f32.mrb[0].mxu0
      %v6179 = vpop.f32.mrb[0].mxu0
      %v6180 = vadd.f32 0.0, %v6179
      %v6181 = vpop.f32.mrb[0].mxu0
      %6182 = vmatprep.mubr.bf16.mxu0 %v2940
      %6183 = vmatmul.mubr.bf16.gmra.mrb[0].mxu0 %v2939
      %v6184 = vpop.f32.mrb[0].mxu0
      %v6185 = vadd.f32 0.0, %v6184
      %v6186 = vpop.f32.mrb[0].mxu0
      %v6187 = vpop.f32.mrb[0].mxu0
      %v6188 = vadd.f32 0.0, %v6187
      %v6189 = vpop.f32.mrb[0].mxu0
      %6190 = vmatprep.mubr.bf16.mxu0 %v2949
      %6191 = vmatmul.mubr.bf16.gmra.mrb[0].mxu0 %v2948
      %v6192 = vpop.f32.mrb[0].mxu0
      %v6193 = vadd.f32 0.0, %v6192
      %v6194 = vpop.f32.mrb[0].mxu0
      %v6195 = vpop.f32.mrb[0].mxu0
      %v6196 = vadd.f32 0.0, %v6195
      %v6197 = vpop.f32.mrb[0].mxu0
      %6198 = vmatprep.mubr.bf16.mxu0 %v2958
      %6199 = vmatmul.mubr.bf16.gmra.mrb[0].mxu0 %v2957
      %v6200 = vpop.f32.mrb[0].mxu0
      %v6201 = vadd.f32 0.0, %v6200
      %v6202 = vpop.f32.mrb[0].mxu0
      %v6203 = vpop.f32.mrb[0].mxu0
      %v6204 = vadd.f32 0.0, %v6203
      %v6205 = vpop.f32.mrb[0].mxu0
      %6206 = vmatprep.mubr.bf16.mxu0 %v2967
      %6207 = vmatmul.mubr.bf16.gmra.mrb[0].mxu0 %v2966
      %v6208 = vpop.f32.mrb[0].mxu0
      %v6209 = vadd.f32 0.0, %v6208
      %v6210 = vpop.f32.mrb[0].mxu0
      %v6211 = vpop.f32.mrb[0].mxu0
      %v6212 = vadd.f32 0.0, %v6211
      %v6213 = vpop.f32.mrb[0].mxu0
      %6214 = vmatprep.mubr.bf16.mxu0 %v2976
      %6215 = vmatmul.mubr.bf16.gmra.mrb[0].mxu0 %v2975
      %v6216 = vpop.f32.mrb[0].mxu0
      %v6217 = vadd.f32 0.0, %v6216
      %v6218 = vpop.f32.mrb[0].mxu0
      %v6219 = vpop.f32.mrb[0].mxu0
      %v6220 = vadd.f32 0.0, %v6219
      %v6221 = vpop.f32.mrb[0].mxu0
      %6222 = vmatprep.mubr.bf16.mxu0 %v2985
      %6223 = vmatmul.mubr.bf16.gmra.mrb[0].mxu0 %v2984
      %v6224 = vpop.f32.mrb[0].mxu0
      %v6225 = vadd.f32 0.0, %v6224
      %v6226 = vpop.f32.mrb[0].mxu0
      %v6227 = vpop.f32.mrb[0].mxu0
      %v6228 = vadd.f32 0.0, %v6227
      %v6229 = vpop.f32.mrb[0].mxu0
      %6230 = vmatprep.mubr.bf16.mxu0 %v2994
      %6231 = vmatmul.mubr.bf16.gmra.mrb[0].mxu0 %v2993
      %v6232 = vpop.f32.mrb[0].mxu0
      %v6233 = vadd.f32 0.0, %v6232
      %v6234 = vpop.f32.mrb[0].mxu0
      %v6235 = vpop.f32.mrb[0].mxu0
      %v6236 = vadd.f32 0.0, %v6235
      %v6237 = vpop.f32.mrb[0].mxu0
      %6238 = vmatprep.mubr.bf16.mxu0 %v3003
      %6239 = vmatmul.mubr.bf16.gmra.mrb[0].mxu0 %v3002
      %v6240 = vpop.f32.mrb[0].mxu0
      %v6241 = vadd.f32 0.0, %v6240
      %v6242 = vpop.f32.mrb[0].mxu0
      %v6243 = vpop.f32.mrb[0].mxu0
      %v6244 = vpop.f32.mrb[0].mxu0
      %6245 = vdwg.mxu0
      %6246 = vmatprep.subr.bf16.mxu0 0
      %6247 = vmatpush1.bf16.msra.mxu0 %v2217
      %6248 = vmatprep.subr.bf16.mxu0 0
      %6249 = vmatpush1.bf16.msra.mxu0 %v2224
      %6250 = vmatprep.subr.bf16.mxu0 0
      %6251 = vmatpush1.bf16.msra.mxu0 %v2231
      %6252 = vmatprep.subr.bf16.mxu0 0
      %6253 = vmatpush1.bf16.msra.mxu0 %v2238
      %6254 = vmatprep.subr.bf16.mxu0 0
      %6255 = vmatpush1.bf16.msra.mxu0 %v2245
      %6256 = vmatprep.subr.bf16.mxu0 0
      %6257 = vmatpush1.bf16.msra.mxu0 %v2252
      %6258 = vmatprep.subr.bf16.mxu0 0
      %6259 = vmatpush1.bf16.msra.mxu0 %v2259
      %6260 = vmatprep.subr.bf16.mxu0 0
      %6261 = vmatpush1.bf16.msra.mxu0 %v2266
      %6262 = vmatprep.subr.bf16.mxu0 0
      %6263 = vmatpush1.bf16.msra.mxu0 %v2273
      %6264 = vmatprep.subr.bf16.mxu0 0
      %6265 = vmatpush1.bf16.msra.mxu0 %v2280
      %6266 = vmatprep.subr.bf16.mxu0 0
      %6267 = vmatpush1.bf16.msra.mxu0 %v2287
      %6268 = vmatprep.subr.bf16.mxu0 0
      %6269 = vmatpush1.bf16.msra.mxu0 %v2294
      %6270 = vmatprep.subr.bf16.mxu0 0
      %6271 = vmatpush1.bf16.msra.mxu0 %v2301
      %6272 = vmatprep.subr.bf16.mxu0 0
      %6273 = vmatpush1.bf16.msra.mxu0 %v2308
      %6274 = vmatprep.subr.bf16.mxu0 0
      %6275 = vmatpush1.bf16.msra.mxu0 %v2315
      %6276 = vmatprep.subr.bf16.mxu0 0
      %6277 = vmatpush1.bf16.msra.mxu0 %v2322
      %6278 = vmatprep.mubr.bf16.mxu0 %v2861
      %6279 = vmatmul.mubr.bf16.gmra.mrb[0].mxu0 %v2860
      %v6280 = vpop.f32.mrb[0].mxu0
      %v6281 = vadd.f32 %v6113, %v6280
      %v6282 = vpop.f32.mrb[0].mxu0
      %v6283 = vpop.f32.mrb[0].mxu0
      %v6284 = vadd.f32 %v6116, %v6283
      %v6285 = vpop.f32.mrb[0].mxu0
      %6286 = vmatprep.mubr.bf16.mxu0 %v2870
      %6287 = vmatmul.mubr.bf16.gmra.mrb[0].mxu0 %v2869
      %v6288 = vpop.f32.mrb[0].mxu0
      %v6289 = vadd.f32 %v6121, %v6288
      %v6290 = vpop.f32.mrb[0].mxu0
      %v6291 = vpop.f32.mrb[0].mxu0
      %v6292 = vadd.f32 %v6124, %v6291
      %v6293 = vpop.f32.mrb[0].mxu0
      %6294 = vmatprep.mubr.bf16.mxu0 %v2879
      %6295 = vmatmul.mubr.bf16.gmra.mrb[0].mxu0 %v2878
      %v6296 = vpop.f32.mrb[0].mxu0
      %v6297 = vadd.f32 %v6129, %v6296
      %v6298 = vpop.f32.mrb[0].mxu0
      %v6299 = vpop.f32.mrb[0].mxu0
      %v6300 = vadd.f32 %v6132, %v6299
      %v6301 = vpop.f32.mrb[0].mxu0
      %6302 = vmatprep.mubr.bf16.mxu0 %v2888
      %6303 = vmatmul.mubr.bf16.gmra.mrb[0].mxu0 %v2887
      %v6304 = vpop.f32.mrb[0].mxu0
      %v6305 = vadd.f32 %v6137, %v6304
      %v6306 = vpop.f32.mrb[0].mxu0
      %v6307 = vpop.f32.mrb[0].mxu0
      %v6308 = vadd.f32 %v6140, %v6307
      %v6309 = vpop.f32.mrb[0].mxu0
      %6310 = vmatprep.mubr.bf16.mxu0 %v2897
      %6311 = vmatmul.mubr.bf16.gmra.mrb[0].mxu0 %v2896
      %v6312 = vpop.f32.mrb[0].mxu0
      %v6313 = vadd.f32 %v6145, %v6312
      %v6314 = vpop.f32.mrb[0].mxu0
      %v6315 = vpop.f32.mrb[0].mxu0
      %v6316 = vadd.f32 %v6148, %v6315
      %v6317 = vpop.f32.mrb[0].mxu0
      %6318 = vmatprep.mubr.bf16.mxu0 %v2906
      %6319 = vmatmul.mubr.bf16.gmra.mrb[0].mxu0 %v2905
      %v6320 = vpop.f32.mrb[0].mxu0
      %v6321 = vadd.f32 %v6153, %v6320
      %v6322 = vpop.f32.mrb[0].mxu0
      %v6323 = vpop.f32.mrb[0].mxu0
      %v6324 = vadd.f32 %v6156, %v6323
      %v6325 = vpop.f32.mrb[0].mxu0
      %6326 = vmatprep.mubr.bf16.mxu0 %v2915
      %6327 = vmatmul.mubr.bf16.gmra.mrb[0].mxu0 %v2914
      %v6328 = vpop.f32.mrb[0].mxu0
      %v6329 = vadd.f32 %v6161, %v6328
      %v6330 = vpop.f32.mrb[0].mxu0
      %v6331 = vpop.f32.mrb[0].mxu0
      %v6332 = vadd.f32 %v6164, %v6331
      %v6333 = vpop.f32.mrb[0].mxu0
      %6334 = vmatprep.mubr.bf16.mxu0 %v2924
      %6335 = vmatmul.mubr.bf16.gmra.mrb[0].mxu0 %v2923
      %v6336 = vpop.f32.mrb[0].mxu0
      %v6337 = vadd.f32 %v6169, %v6336
      %v6338 = vpop.f32.mrb[0].mxu0
      %v6339 = vpop.f32.mrb[0].mxu0
      %v6340 = vadd.f32 %v6172, %v6339
      %v6341 = vpop.f32.mrb[0].mxu0
      %6342 = vmatprep.mubr.bf16.mxu0 %v2933
      %6343 = vmatmul.mubr.bf16.gmra.mrb[0].mxu0 %v2932
      %v6344 = vpop.f32.mrb[0].mxu0
      %v6345 = vadd.f32 %v6177, %v6344
      %v6346 = vpop.f32.mrb[0].mxu0
      %v6347 = vpop.f32.mrb[0].mxu0
      %v6348 = vadd.f32 %v6180, %v6347
      %v6349 = vpop.f32.mrb[0].mxu0
      %6350 = vmatprep.mubr.bf16.mxu0 %v2942
      %6351 = vmatmul.mubr.bf16.gmra.mrb[0].mxu0 %v2941
      %v6352 = vpop.f32.mrb[0].mxu0
      %v6353 = vadd.f32 %v6185, %v6352
      %v6354 = vpop.f32.mrb[0].mxu0
      %v6355 = vpop.f32.mrb[0].mxu0
      %v6356 = vadd.f32 %v6188, %v6355
      %v6357 = vpop.f32.mrb[0].mxu0
      %6358 = vmatprep.mubr.bf16.mxu0 %v2951
      %6359 = vmatmul.mubr.bf16.gmra.mrb[0].mxu0 %v2950
      %v6360 = vpop.f32.mrb[0].mxu0
      %v6361 = vadd.f32 %v6193, %v6360
      %v6362 = vpop.f32.mrb[0].mxu0
      %v6363 = vpop.f32.mrb[0].mxu0
      %v6364 = vadd.f32 %v6196, %v6363
      %v6365 = vpop.f32.mrb[0].mxu0
      %6366 = vmatprep.mubr.bf16.mxu0 %v2960
      %6367 = vmatmul.mubr.bf16.gmra.mrb[0].mxu0 %v2959
      %v6368 = vpop.f32.mrb[0].mxu0
      %v6369 = vadd.f32 %v6201, %v6368
      %v6370 = vpop.f32.mrb[0].mxu0
      %v6371 = vpop.f32.mrb[0].mxu0
      %v6372 = vadd.f32 %v6204, %v6371
      %v6373 = vpop.f32.mrb[0].mxu0
      %6374 = vmatprep.mubr.bf16.mxu0 %v2969
      %6375 = vmatmul.mubr.bf16.gmra.mrb[0].mxu0 %v2968
      %v6376 = vpop.f32.mrb[0].mxu0
      %v6377 = vadd.f32 %v6209, %v6376
      %v6378 = vpop.f32.mrb[0].mxu0
      %v6379 = vpop.f32.mrb[0].mxu0
      %v6380 = vadd.f32 %v6212, %v6379
      %v6381 = vpop.f32.mrb[0].mxu0
      %6382 = vmatprep.mubr.bf16.mxu0 %v2978
      %6383 = vmatmul.mubr.bf16.gmra.mrb[0].mxu0 %v2977
      %v6384 = vpop.f32.mrb[0].mxu0
      %v6385 = vadd.f32 %v6217, %v6384
      %v6386 = vpop.f32.mrb[0].mxu0
      %v6387 = vpop.f32.mrb[0].mxu0
      %v6388 = vadd.f32 %v6220, %v6387
      %v6389 = vpop.f32.mrb[0].mxu0
      %6390 = vmatprep.mubr.bf16.mxu0 %v2987
      %6391 = vmatmul.mubr.bf16.gmra.mrb[0].mxu0 %v2986
      %v6392 = vpop.f32.mrb[0].mxu0
      %v6393 = vadd.f32 %v6225, %v6392
      %v6394 = vpop.f32.mrb[0].mxu0
      %v6395 = vpop.f32.mrb[0].mxu0
      %v6396 = vadd.f32 %v6228, %v6395
      %v6397 = vpop.f32.mrb[0].mxu0
      %6398 = vmatprep.mubr.bf16.mxu0 %v2996
      %6399 = vmatmul.mubr.bf16.gmra.mrb[0].mxu0 %v2995
      %v6400 = vpop.f32.mrb[0].mxu0
      %v6401 = vadd.f32 %v6233, %v6400
      %v6402 = vpop.f32.mrb[0].mxu0
      %v6403 = vpop.f32.mrb[0].mxu0
      %v6404 = vadd.f32 %v6236, %v6403
      %v6405 = vpop.f32.mrb[0].mxu0
      %6406 = vmatprep.mubr.bf16.mxu0 %v3005
      %6407 = vmatmul.mubr.bf16.gmra.mrb[0].mxu0 %v3004
      %v6408 = vpop.f32.mrb[0].mxu0
      %v6409 = vadd.f32 %v6241, %v6408
      %v6410 = vpop.f32.mrb[0].mxu0
      %v6411 = vpop.f32.mrb[0].mxu0
      %v6412 = vpop.f32.mrb[0].mxu0
      %6413 = vdwg.mxu0
      %6414 = vmatprep.subr.bf16.mxu0 0
      %6415 = vmatpush1.bf16.msra.mxu0 %v2329
      %6416 = vmatprep.subr.bf16.mxu0 0
      %6417 = vmatpush1.bf16.msra.mxu0 %v2336
      %6418 = vmatprep.subr.bf16.mxu0 0
      %6419 = vmatpush1.bf16.msra.mxu0 %v2343
      %6420 = vmatprep.subr.bf16.mxu0 0
      %6421 = vmatpush1.bf16.msra.mxu0 %v2350
      %6422 = vmatprep.subr.bf16.mxu0 0
      %6423 = vmatpush1.bf16.msra.mxu0 %v2357
      %6424 = vmatprep.subr.bf16.mxu0 0
      %6425 = vmatpush1.bf16.msra.mxu0 %v2364
      %6426 = vmatprep.subr.bf16.mxu0 0
      %6427 = vmatpush1.bf16.msra.mxu0 %v2371
      %6428 = vmatprep.subr.bf16.mxu0 0
      %6429 = vmatpush1.bf16.msra.mxu0 %v2378
      %6430 = vmatprep.subr.bf16.mxu0 0
      %6431 = vmatpush1.bf16.msra.mxu0 %v2385
      %6432 = vmatprep.subr.bf16.mxu0 0
      %6433 = vmatpush1.bf16.msra.mxu0 %v2392
      %6434 = vmatprep.subr.bf16.mxu0 0
      %6435 = vmatpush1.bf16.msra.mxu0 %v2399
      %6436 = vmatprep.subr.bf16.mxu0 0
      %6437 = vmatpush1.bf16.msra.mxu0 %v2406
      %6438 = vmatprep.subr.bf16.mxu0 0
      %6439 = vmatpush1.bf16.msra.mxu0 %v2413
      %6440 = vmatprep.subr.bf16.mxu0 0
      %6441 = vmatpush1.bf16.msra.mxu0 %v2420
      %6442 = vmatprep.subr.bf16.mxu0 0
      %6443 = vmatpush1.bf16.msra.mxu0 %v2427
      %6444 = vmatprep.subr.bf16.mxu0 0
      %6445 = vmatpush1.bf16.msra.mxu0 %v2434
      %6446 = vmatprep.mubr.bf16.mxu0 %v2863
      %6447 = vmatmul.mubr.bf16.gmra.mrb[0].mxu0 %v2862
      %v6448 = vpop.f32.mrb[0].mxu0
      %v6449 = vadd.f32 %v6281, %v6448
      %v6450 = vpop.f32.mrb[0].mxu0
      %v6451 = vpop.f32.mrb[0].mxu0
      %v6452 = vadd.f32 %v6284, %v6451
      %v6453 = vpop.f32.mrb[0].mxu0
      %6454 = vmatprep.mubr.bf16.mxu0 %v2872
      %6455 = vmatmul.mubr.bf16.gmra.mrb[0].mxu0 %v2871
      %v6456 = vpop.f32.mrb[0].mxu0
      %v6457 = vadd.f32 %v6289, %v6456
      %v6458 = vpop.f32.mrb[0].mxu0
      %v6459 = vpop.f32.mrb[0].mxu0
      %v6460 = vadd.f32 %v6292, %v6459
      %v6461 = vpop.f32.mrb[0].mxu0
      %6462 = vmatprep.mubr.bf16.mxu0 %v2881
      %6463 = vmatmul.mubr.bf16.gmra.mrb[0].mxu0 %v2880
      %v6464 = vpop.f32.mrb[0].mxu0
      %v6465 = vadd.f32 %v6297, %v6464
      %v6466 = vpop.f32.mrb[0].mxu0
      %v6467 = vpop.f32.mrb[0].mxu0
      %v6468 = vadd.f32 %v6300, %v6467
      %v6469 = vpop.f32.mrb[0].mxu0
      %6470 = vmatprep.mubr.bf16.mxu0 %v2890
      %6471 = vmatmul.mubr.bf16.gmra.mrb[0].mxu0 %v2889
      %v6472 = vpop.f32.mrb[0].mxu0
      %v6473 = vadd.f32 %v6305, %v6472
      %v6474 = vpop.f32.mrb[0].mxu0
      %v6475 = vpop.f32.mrb[0].mxu0
      %v6476 = vadd.f32 %v6308, %v6475
      %v6477 = vpop.f32.mrb[0].mxu0
      %6478 = vmatprep.mubr.bf16.mxu0 %v2899
      %6479 = vmatmul.mubr.bf16.gmra.mrb[0].mxu0 %v2898
      %v6480 = vpop.f32.mrb[0].mxu0
      %v6481 = vadd.f32 %v6313, %v6480
      %v6482 = vpop.f32.mrb[0].mxu0
      %v6483 = vpop.f32.mrb[0].mxu0
      %v6484 = vadd.f32 %v6316, %v6483
      %v6485 = vpop.f32.mrb[0].mxu0
      %6486 = vmatprep.mubr.bf16.mxu0 %v2908
      %6487 = vmatmul.mubr.bf16.gmra.mrb[0].mxu0 %v2907
      %v6488 = vpop.f32.mrb[0].mxu0
      %v6489 = vadd.f32 %v6321, %v6488
      %v6490 = vpop.f32.mrb[0].mxu0
      %v6491 = vpop.f32.mrb[0].mxu0
      %v6492 = vadd.f32 %v6324, %v6491
      %v6493 = vpop.f32.mrb[0].mxu0
      %6494 = vmatprep.mubr.bf16.mxu0 %v2917
      %6495 = vmatmul.mubr.bf16.gmra.mrb[0].mxu0 %v2916
      %v6496 = vpop.f32.mrb[0].mxu0
      %v6497 = vadd.f32 %v6329, %v6496
      %v6498 = vpop.f32.mrb[0].mxu0
      %v6499 = vpop.f32.mrb[0].mxu0
      %v6500 = vadd.f32 %v6332, %v6499
      %v6501 = vpop.f32.mrb[0].mxu0
      %6502 = vmatprep.mubr.bf16.mxu0 %v2926
      %6503 = vmatmul.mubr.bf16.gmra.mrb[0].mxu0 %v2925
      %v6504 = vpop.f32.mrb[0].mxu0
      %v6505 = vadd.f32 %v6337, %v6504
      %v6506 = vpop.f32.mrb[0].mxu0
      %v6507 = vpop.f32.mrb[0].mxu0
      %v6508 = vadd.f32 %v6340, %v6507
      %v6509 = vpop.f32.mrb[0].mxu0
      %6510 = vmatprep.mubr.bf16.mxu0 %v2935
      %6511 = vmatmul.mubr.bf16.gmra.mrb[0].mxu0 %v2934
      %v6512 = vpop.f32.mrb[0].mxu0
      %v6513 = vadd.f32 %v6345, %v6512
      %v6514 = vpop.f32.mrb[0].mxu0
      %v6515 = vpop.f32.mrb[0].mxu0
      %v6516 = vadd.f32 %v6348, %v6515
      %v6517 = vpop.f32.mrb[0].mxu0
      %6518 = vmatprep.mubr.bf16.mxu0 %v2944
      %6519 = vmatmul.mubr.bf16.gmra.mrb[0].mxu0 %v2943
      %v6520 = vpop.f32.mrb[0].mxu0
      %v6521 = vadd.f32 %v6353, %v6520
      %v6522 = vpop.f32.mrb[0].mxu0
      %v6523 = vpop.f32.mrb[0].mxu0
      %v6524 = vadd.f32 %v6356, %v6523
      %v6525 = vpop.f32.mrb[0].mxu0
      %6526 = vmatprep.mubr.bf16.mxu0 %v2953
      %6527 = vmatmul.mubr.bf16.gmra.mrb[0].mxu0 %v2952
      %v6528 = vpop.f32.mrb[0].mxu0
      %v6529 = vadd.f32 %v6361, %v6528
      %v6530 = vpop.f32.mrb[0].mxu0
      %v6531 = vpop.f32.mrb[0].mxu0
      %v6532 = vadd.f32 %v6364, %v6531
      %v6533 = vpop.f32.mrb[0].mxu0
      %6534 = vmatprep.mubr.bf16.mxu0 %v2962
      %6535 = vmatmul.mubr.bf16.gmra.mrb[0].mxu0 %v2961
      %v6536 = vpop.f32.mrb[0].mxu0
      %v6537 = vadd.f32 %v6369, %v6536
      %v6538 = vpop.f32.mrb[0].mxu0
      %v6539 = vpop.f32.mrb[0].mxu0
      %v6540 = vadd.f32 %v6372, %v6539
      %v6541 = vpop.f32.mrb[0].mxu0
      %6542 = vmatprep.mubr.bf16.mxu0 %v2971
      %6543 = vmatmul.mubr.bf16.gmra.mrb[0].mxu0 %v2970
      %v6544 = vpop.f32.mrb[0].mxu0
      %v6545 = vadd.f32 %v6377, %v6544
      %v6546 = vpop.f32.mrb[0].mxu0
      %v6547 = vpop.f32.mrb[0].mxu0
      %v6548 = vadd.f32 %v6380, %v6547
      %v6549 = vpop.f32.mrb[0].mxu0
      %6550 = vmatprep.mubr.bf16.mxu0 %v2980
      %6551 = vmatmul.mubr.bf16.gmra.mrb[0].mxu0 %v2979
      %v6552 = vpop.f32.mrb[0].mxu0
      %v6553 = vadd.f32 %v6385, %v6552
      %v6554 = vpop.f32.mrb[0].mxu0
      %v6555 = vpop.f32.mrb[0].mxu0
      %v6556 = vadd.f32 %v6388, %v6555
      %v6557 = vpop.f32.mrb[0].mxu0
      %6558 = vmatprep.mubr.bf16.mxu0 %v2989
      %6559 = vmatmul.mubr.bf16.gmra.mrb[0].mxu0 %v2988
      %v6560 = vpop.f32.mrb[0].mxu0
      %v6561 = vadd.f32 %v6393, %v6560
      %v6562 = vpop.f32.mrb[0].mxu0
      %v6563 = vpop.f32.mrb[0].mxu0
      %v6564 = vadd.f32 %v6396, %v6563
      %v6565 = vpop.f32.mrb[0].mxu0
      %6566 = vmatprep.mubr.bf16.mxu0 %v2998
      %6567 = vmatmul.mubr.bf16.gmra.mrb[0].mxu0 %v2997
      %v6568 = vpop.f32.mrb[0].mxu0
      %v6569 = vadd.f32 %v6401, %v6568
      %v6570 = vpop.f32.mrb[0].mxu0
      %v6571 = vpop.f32.mrb[0].mxu0
      %v6572 = vadd.f32 %v6404, %v6571
      %v6573 = vpop.f32.mrb[0].mxu0
      %6574 = vmatprep.mubr.bf16.mxu0 %v3007
      %6575 = vmatmul.mubr.bf16.gmra.mrb[0].mxu0 %v3006
      %v6576 = vpop.f32.mrb[0].mxu0
      %v6577 = vadd.f32 %v6409, %v6576
      %v6578 = vpop.f32.mrb[0].mxu0
      %v6579 = vpop.f32.mrb[0].mxu0
      %v6580 = vpop.f32.mrb[0].mxu0
      %6581 = vdwg.mxu0
      %6582 = vmatprep.subr.bf16.mxu0 0
      %6583 = vmatpush1.bf16.msra.mxu0 %v2441
      %6584 = vmatprep.subr.bf16.mxu0 0
      %6585 = vmatpush1.bf16.msra.mxu0 %v2448
      %6586 = vmatprep.subr.bf16.mxu0 0
      %6587 = vmatpush1.bf16.msra.mxu0 %v2455
      %6588 = vmatprep.subr.bf16.mxu0 0
      %6589 = vmatpush1.bf16.msra.mxu0 %v2462
      %6590 = vmatprep.subr.bf16.mxu0 0
      %6591 = vmatpush1.bf16.msra.mxu0 %v2469
      %6592 = vmatprep.subr.bf16.mxu0 0
      %6593 = vmatpush1.bf16.msra.mxu0 %v2476
      %6594 = vmatprep.subr.bf16.mxu0 0
      %6595 = vmatpush1.bf16.msra.mxu0 %v2483
      %6596 = vmatprep.subr.bf16.mxu0 0
      %6597 = vmatpush1.bf16.msra.mxu0 %v2490
      %6598 = vmatprep.subr.bf16.mxu0 0
      %6599 = vmatpush1.bf16.msra.mxu0 %v2497
      %6600 = vmatprep.subr.bf16.mxu0 0
      %6601 = vmatpush1.bf16.msra.mxu0 %v2504
      %6602 = vmatprep.subr.bf16.mxu0 0
      %6603 = vmatpush1.bf16.msra.mxu0 %v2511
      %6604 = vmatprep.subr.bf16.mxu0 0
      %6605 = vmatpush1.bf16.msra.mxu0 %v2518
      %6606 = vmatprep.subr.bf16.mxu0 0
      %6607 = vmatpush1.bf16.msra.mxu0 %v2525
      %6608 = vmatprep.subr.bf16.mxu0 0
      %6609 = vmatpush1.bf16.msra.mxu0 %v2532
      %6610 = vmatprep.subr.bf16.mxu0 0
      %6611 = vmatpush1.bf16.msra.mxu0 %v2539
      %6612 = vmatprep.subr.bf16.mxu0 0
      %6613 = vmatpush1.bf16.msra.mxu0 %v2546
      %6614 = vmatprep.mubr.bf16.mxu0 %v2865
      %6615 = vmatmul.mubr.bf16.gmra.mrb[0].mxu0 %v2864
      %v6616 = vpop.f32.mrb[0].mxu0
      %v6617 = vadd.f32 %v6449, %v6616
      %v6618 = vpop.f32.mrb[0].mxu0
      %v6619 = vpop.f32.mrb[0].mxu0
      %v6620 = vadd.f32 %v6452, %v6619
      %v6621 = vpop.f32.mrb[0].mxu0
      %6622 = vmatprep.mubr.bf16.mxu0 %v2874
      %6623 = vmatmul.mubr.bf16.gmra.mrb[0].mxu0 %v2873
      %v6624 = vpop.f32.mrb[0].mxu0
      %v6625 = vadd.f32 %v6457, %v6624
      %v6626 = vpop.f32.mrb[0].mxu0
      %v6627 = vpop.f32.mrb[0].mxu0
      %v6628 = vadd.f32 %v6460, %v6627
      %v6629 = vpop.f32.mrb[0].mxu0
      %6630 = vmatprep.mubr.bf16.mxu0 %v2883
      %6631 = vmatmul.mubr.bf16.gmra.mrb[0].mxu0 %v2882
      %v6632 = vpop.f32.mrb[0].mxu0
      %v6633 = vadd.f32 %v6465, %v6632
      %v6634 = vpop.f32.mrb[0].mxu0
      %v6635 = vpop.f32.mrb[0].mxu0
      %v6636 = vadd.f32 %v6468, %v6635
      %v6637 = vpop.f32.mrb[0].mxu0
      %6638 = vmatprep.mubr.bf16.mxu0 %v2892
      %6639 = vmatmul.mubr.bf16.gmra.mrb[0].mxu0 %v2891
      %v6640 = vpop.f32.mrb[0].mxu0
      %v6641 = vadd.f32 %v6473, %v6640
      %v6642 = vpop.f32.mrb[0].mxu0
      %v6643 = vpop.f32.mrb[0].mxu0
      %v6644 = vadd.f32 %v6476, %v6643
      %v6645 = vpop.f32.mrb[0].mxu0
      %6646 = vmatprep.mubr.bf16.mxu0 %v2901
      %6647 = vmatmul.mubr.bf16.gmra.mrb[0].mxu0 %v2900
      %v6648 = vpop.f32.mrb[0].mxu0
      %v6649 = vadd.f32 %v6481, %v6648
      %v6650 = vpop.f32.mrb[0].mxu0
      %v6651 = vpop.f32.mrb[0].mxu0
      %v6652 = vadd.f32 %v6484, %v6651
      %v6653 = vpop.f32.mrb[0].mxu0
      %6654 = vmatprep.mubr.bf16.mxu0 %v2910
      %6655 = vmatmul.mubr.bf16.gmra.mrb[0].mxu0 %v2909
      %v6656 = vpop.f32.mrb[0].mxu0
      %v6657 = vadd.f32 %v6489, %v6656
      %v6658 = vpop.f32.mrb[0].mxu0
      %v6659 = vpop.f32.mrb[0].mxu0
      %v6660 = vadd.f32 %v6492, %v6659
      %v6661 = vpop.f32.mrb[0].mxu0
      %6662 = vmatprep.mubr.bf16.mxu0 %v2919
      %6663 = vmatmul.mubr.bf16.gmra.mrb[0].mxu0 %v2918
      %v6664 = vpop.f32.mrb[0].mxu0
      %v6665 = vadd.f32 %v6497, %v6664
      %v6666 = vpop.f32.mrb[0].mxu0
      %v6667 = vpop.f32.mrb[0].mxu0
      %v6668 = vadd.f32 %v6500, %v6667
      %v6669 = vpop.f32.mrb[0].mxu0
      %6670 = vmatprep.mubr.bf16.mxu0 %v2928
      %6671 = vmatmul.mubr.bf16.gmra.mrb[0].mxu0 %v2927
      %v6672 = vpop.f32.mrb[0].mxu0
      %v6673 = vadd.f32 %v6505, %v6672
      %v6674 = vpop.f32.mrb[0].mxu0
      %v6675 = vpop.f32.mrb[0].mxu0
      %v6676 = vadd.f32 %v6508, %v6675
      %v6677 = vpop.f32.mrb[0].mxu0
      %6678 = vmatprep.mubr.bf16.mxu0 %v2937
      %6679 = vmatmul.mubr.bf16.gmra.mrb[0].mxu0 %v2936
      %v6680 = vpop.f32.mrb[0].mxu0
      %v6681 = vadd.f32 %v6513, %v6680
      %v6682 = vpop.f32.mrb[0].mxu0
      %v6683 = vpop.f32.mrb[0].mxu0
      %v6684 = vadd.f32 %v6516, %v6683
      %v6685 = vpop.f32.mrb[0].mxu0
      %6686 = vmatprep.mubr.bf16.mxu0 %v2946
      %6687 = vmatmul.mubr.bf16.gmra.mrb[0].mxu0 %v2945
      %v6688 = vpop.f32.mrb[0].mxu0
      %v6689 = vadd.f32 %v6521, %v6688
      %v6690 = vpop.f32.mrb[0].mxu0
      %v6691 = vpop.f32.mrb[0].mxu0
      %v6692 = vadd.f32 %v6524, %v6691
      %v6693 = vpop.f32.mrb[0].mxu0
      %6694 = vmatprep.mubr.bf16.mxu0 %v2955
      %6695 = vmatmul.mubr.bf16.gmra.mrb[0].mxu0 %v2954
      %v6696 = vpop.f32.mrb[0].mxu0
      %v6697 = vadd.f32 %v6529, %v6696
      %v6698 = vpop.f32.mrb[0].mxu0
      %v6699 = vpop.f32.mrb[0].mxu0
      %v6700 = vadd.f32 %v6532, %v6699
      %v6701 = vpop.f32.mrb[0].mxu0
      %6702 = vmatprep.mubr.bf16.mxu0 %v2964
      %6703 = vmatmul.mubr.bf16.gmra.mrb[0].mxu0 %v2963
      %v6704 = vpop.f32.mrb[0].mxu0
      %v6705 = vadd.f32 %v6537, %v6704
      %v6706 = vpop.f32.mrb[0].mxu0
      %v6707 = vpop.f32.mrb[0].mxu0
      %v6708 = vadd.f32 %v6540, %v6707
      %v6709 = vpop.f32.mrb[0].mxu0
      %6710 = vmatprep.mubr.bf16.mxu0 %v2973
      %6711 = vmatmul.mubr.bf16.gmra.mrb[0].mxu0 %v2972
      %v6712 = vpop.f32.mrb[0].mxu0
      %v6713 = vadd.f32 %v6545, %v6712
      %v6714 = vpop.f32.mrb[0].mxu0
      %v6715 = vpop.f32.mrb[0].mxu0
      %v6716 = vadd.f32 %v6548, %v6715
      %v6717 = vpop.f32.mrb[0].mxu0
      %6718 = vmatprep.mubr.bf16.mxu0 %v2982
      %6719 = vmatmul.mubr.bf16.gmra.mrb[0].mxu0 %v2981
      %v6720 = vpop.f32.mrb[0].mxu0
      %v6721 = vadd.f32 %v6553, %v6720
      %v6722 = vpop.f32.mrb[0].mxu0
      %v6723 = vpop.f32.mrb[0].mxu0
      %v6724 = vadd.f32 %v6556, %v6723
      %v6725 = vpop.f32.mrb[0].mxu0
      %6726 = vmatprep.mubr.bf16.mxu0 %v2991
      %6727 = vmatmul.mubr.bf16.gmra.mrb[0].mxu0 %v2990
      %v6728 = vpop.f32.mrb[0].mxu0
      %v6729 = vadd.f32 %v6561, %v6728
      %v6730 = vpop.f32.mrb[0].mxu0
      %v6731 = vpop.f32.mrb[0].mxu0
      %v6732 = vadd.f32 %v6564, %v6731
      %v6733 = vpop.f32.mrb[0].mxu0
      %6734 = vmatprep.mubr.bf16.mxu0 %v3000
      %6735 = vmatmul.mubr.bf16.gmra.mrb[0].mxu0 %v2999
      %v6736 = vpop.f32.mrb[0].mxu0
      %v6737 = vadd.f32 %v6569, %v6736
      %v6738 = vpop.f32.mrb[0].mxu0
      %v6739 = vpop.f32.mrb[0].mxu0
      %v6740 = vadd.f32 %v6572, %v6739
      %v6741 = vpop.f32.mrb[0].mxu0
      %6742 = vmatprep.mubr.bf16.mxu0 %v3009
      %6743 = vmatmul.mubr.bf16.gmra.mrb[0].mxu0 %v3008
      %v6744 = vpop.f32.mrb[0].mxu0
      %v6745 = vadd.f32 %v6577, %v6744
      %v6746 = vpop.f32.mrb[0].mxu0
      %v6747 = vpop.f32.mrb[0].mxu0
      %v6748 = vpop.f32.mrb[0].mxu0
      %6749 = vdwg.mxu0
      %6750 = vmatprep.subr.bf16.mxu0 0
      %6751 = vmatpush1.bf16.msra.mxu0 %v2553
      %6752 = vmatprep.subr.bf16.mxu0 0
      %6753 = vmatpush1.bf16.msra.mxu0 %v2560
      %6754 = vmatprep.subr.bf16.mxu0 0
      %6755 = vmatpush1.bf16.msra.mxu0 0
      %6756 = vmatprep.subr.bf16.mxu0 0
      %6757 = vmatpush1.bf16.msra.mxu0 0
      %6758 = vmatprep.subr.bf16.mxu0 0
      %6759 = vmatpush1.bf16.msra.mxu0 0
      %6760 = vmatprep.subr.bf16.mxu0 0
      %6761 = vmatpush1.bf16.msra.mxu0 0
      %6762 = vmatprep.subr.bf16.mxu0 0
      %6763 = vmatpush1.bf16.msra.mxu0 0
      %6764 = vmatprep.subr.bf16.mxu0 0
      %6765 = vmatpush1.bf16.msra.mxu0 0
      %6766 = vmatprep.subr.bf16.mxu0 0
      %6767 = vmatpush1.bf16.msra.mxu0 0
      %6768 = vmatprep.subr.bf16.mxu0 0
      %6769 = vmatpush1.bf16.msra.mxu0 0
      %6770 = vmatprep.subr.bf16.mxu0 0
      %6771 = vmatpush1.bf16.msra.mxu0 0
      %6772 = vmatprep.subr.bf16.mxu0 0
      %6773 = vmatpush1.bf16.msra.mxu0 0
      %6774 = vmatprep.subr.bf16.mxu0 0
      %6775 = vmatpush1.bf16.msra.mxu0 0
      %6776 = vmatprep.subr.bf16.mxu0 0
      %6777 = vmatpush1.bf16.msra.mxu0 0
      %6778 = vmatprep.subr.bf16.mxu0 0
      %6779 = vmatpush1.bf16.msra.mxu0 0
      %6780 = vmatprep.subr.bf16.mxu0 0
      %6781 = vmatpush1.bf16.msra.mxu0 0
      %6782 = vmatprep.mubr.bf16.mxu0 0
      %6783 = vmatmul.mubr.bf16.gmra.mrb[0].mxu0 %v3013
      %v6784 = vpop.f32.mrb[0].mxu0
      %v6785 = vadd.f32 %v6617, %v6784
      %v6786 = vpop.f32.mrb[0].mxu0
      %v6787 = vpop.f32.mrb[0].mxu0
      %v6788 = vadd.f32 %v6620, %v6787
      %v6789 = vpop.f32.mrb[0].mxu0
      %6790 = vmatprep.mubr.bf16.mxu0 0
      %6791 = vmatmul.mubr.bf16.gmra.mrb[0].mxu0 %v3016
      %v6792 = vpop.f32.mrb[0].mxu0
      %v6793 = vadd.f32 %v6625, %v6792
      %v6794 = vpop.f32.mrb[0].mxu0
      %v6795 = vpop.f32.mrb[0].mxu0
      %v6796 = vadd.f32 %v6628, %v6795
      %v6797 = vpop.f32.mrb[0].mxu0
      %6798 = vmatprep.mubr.bf16.mxu0 0
      %6799 = vmatmul.mubr.bf16.gmra.mrb[0].mxu0 %v3019
      %v6800 = vpop.f32.mrb[0].mxu0
      %v6801 = vadd.f32 %v6633, %v6800
      %v6802 = vpop.f32.mrb[0].mxu0
      %v6803 = vpop.f32.mrb[0].mxu0
      %v6804 = vadd.f32 %v6636, %v6803
      %v6805 = vpop.f32.mrb[0].mxu0
      %6806 = vmatprep.mubr.bf16.mxu0 0
      %6807 = vmatmul.mubr.bf16.gmra.mrb[0].mxu0 %v3022
      %v6808 = vpop.f32.mrb[0].mxu0
      %v6809 = vadd.f32 %v6641, %v6808
      %v6810 = vpop.f32.mrb[0].mxu0
      %v6811 = vpop.f32.mrb[0].mxu0
      %v6812 = vadd.f32 %v6644, %v6811
      %v6813 = vpop.f32.mrb[0].mxu0
      %6814 = vmatprep.mubr.bf16.mxu0 0
      %6815 = vmatmul.mubr.bf16.gmra.mrb[0].mxu0 %v3025
      %v6816 = vpop.f32.mrb[0].mxu0
      %v6817 = vadd.f32 %v6649, %v6816
      %v6818 = vpop.f32.mrb[0].mxu0
      %v6819 = vpop.f32.mrb[0].mxu0
      %v6820 = vadd.f32 %v6652, %v6819
      %v6821 = vpop.f32.mrb[0].mxu0
      %6822 = vmatprep.mubr.bf16.mxu0 0
      %6823 = vmatmul.mubr.bf16.gmra.mrb[0].mxu0 %v3028
      %v6824 = vpop.f32.mrb[0].mxu0
      %v6825 = vadd.f32 %v6657, %v6824
      %v6826 = vpop.f32.mrb[0].mxu0
      %v6827 = vpop.f32.mrb[0].mxu0
      %v6828 = vadd.f32 %v6660, %v6827
      %v6829 = vpop.f32.mrb[0].mxu0
      %6830 = vmatprep.mubr.bf16.mxu0 0
      %6831 = vmatmul.mubr.bf16.gmra.mrb[0].mxu0 %v3031
      %v6832 = vpop.f32.mrb[0].mxu0
      %v6833 = vadd.f32 %v6665, %v6832
      %v6834 = vpop.f32.mrb[0].mxu0
      %v6835 = vpop.f32.mrb[0].mxu0
      %v6836 = vadd.f32 %v6668, %v6835
      %v6837 = vpop.f32.mrb[0].mxu0
      %6838 = vmatprep.mubr.bf16.mxu0 0
      %6839 = vmatmul.mubr.bf16.gmra.mrb[0].mxu0 %v3034
      %v6840 = vpop.f32.mrb[0].mxu0
      %v6841 = vadd.f32 %v6673, %v6840
      %v6842 = vpop.f32.mrb[0].mxu0
      %v6843 = vpop.f32.mrb[0].mxu0
      %v6844 = vadd.f32 %v6676, %v6843
      %v6845 = vpop.f32.mrb[0].mxu0
      %6846 = vmatprep.mubr.bf16.mxu0 0
      %6847 = vmatmul.mubr.bf16.gmra.mrb[0].mxu0 %v3037
      %v6848 = vpop.f32.mrb[0].mxu0
      %v6849 = vadd.f32 %v6681, %v6848
      %v6850 = vpop.f32.mrb[0].mxu0
      %v6851 = vpop.f32.mrb[0].mxu0
      %v6852 = vadd.f32 %v6684, %v6851
      %v6853 = vpop.f32.mrb[0].mxu0
      %6854 = vmatprep.mubr.bf16.mxu0 0
      %6855 = vmatmul.mubr.bf16.gmra.mrb[0].mxu0 %v3040
      %v6856 = vpop.f32.mrb[0].mxu0
      %v6857 = vadd.f32 %v6689, %v6856
      %v6858 = vpop.f32.mrb[0].mxu0
      %v6859 = vpop.f32.mrb[0].mxu0
      %v6860 = vadd.f32 %v6692, %v6859
      %v6861 = vpop.f32.mrb[0].mxu0
      %6862 = vmatprep.mubr.bf16.mxu0 0
      %6863 = vmatmul.mubr.bf16.gmra.mrb[0].mxu0 %v3043
      %v6864 = vpop.f32.mrb[0].mxu0
      %v6865 = vadd.f32 %v6697, %v6864
      %v6866 = vpop.f32.mrb[0].mxu0
      %v6867 = vpop.f32.mrb[0].mxu0
      %v6868 = vadd.f32 %v6700, %v6867
      %v6869 = vpop.f32.mrb[0].mxu0
      %6870 = vmatprep.mubr.bf16.mxu0 0
      %6871 = vmatmul.mubr.bf16.gmra.mrb[0].mxu0 %v3046
      %v6872 = vpop.f32.mrb[0].mxu0
      %v6873 = vadd.f32 %v6705, %v6872
      %v6874 = vpop.f32.mrb[0].mxu0
      %v6875 = vpop.f32.mrb[0].mxu0
      %v6876 = vadd.f32 %v6708, %v6875
      %v6877 = vpop.f32.mrb[0].mxu0
      %6878 = vmatprep.mubr.bf16.mxu0 0
      %6879 = vmatmul.mubr.bf16.gmra.mrb[0].mxu0 %v3049
      %v6880 = vpop.f32.mrb[0].mxu0
      %v6881 = vadd.f32 %v6713, %v6880
      %v6882 = vpop.f32.mrb[0].mxu0
      %v6883 = vpop.f32.mrb[0].mxu0
      %v6884 = vadd.f32 %v6716, %v6883
      %v6885 = vpop.f32.mrb[0].mxu0
      %6886 = vmatprep.mubr.bf16.mxu0 0
      %6887 = vmatmul.mubr.bf16.gmra.mrb[0].mxu0 %v3052
      %v6888 = vpop.f32.mrb[0].mxu0
      %v6889 = vadd.f32 %v6721, %v6888
      %v6890 = vpop.f32.mrb[0].mxu0
      %v6891 = vpop.f32.mrb[0].mxu0
      %v6892 = vadd.f32 %v6724, %v6891
      %v6893 = vpop.f32.mrb[0].mxu0
      %6894 = vmatprep.mubr.bf16.mxu0 0
      %6895 = vmatmul.mubr.bf16.gmra.mrb[0].mxu0 %v3055
      %v6896 = vpop.f32.mrb[0].mxu0
      %v6897 = vadd.f32 %v6729, %v6896
      %v6898 = vpop.f32.mrb[0].mxu0
      %v6899 = vpop.f32.mrb[0].mxu0
      %v6900 = vadd.f32 %v6732, %v6899
      %v6901 = vpop.f32.mrb[0].mxu0
      %6902 = vmatprep.mubr.bf16.mxu0 0
      %6903 = vmatmul.mubr.bf16.gmra.mrb[0].mxu0 %v3058
      %v6904 = vpop.f32.mrb[0].mxu0
      %v6905 = vadd.f32 %v6737, %v6904
      %v6906 = vpop.f32.mrb[0].mxu0
      %v6907 = vpop.f32.mrb[0].mxu0
      %v6908 = vadd.f32 %v6740, %v6907
      %v6909 = vpop.f32.mrb[0].mxu0
      %6910 = vmatprep.mubr.bf16.mxu0 0
      %6911 = vmatmul.mubr.bf16.gmra.mrb[0].mxu0 %v3061
      %v6912 = vpop.f32.mrb[0].mxu0
      %v6913 = vadd.f32 %v6745, %v6912
      %v6914 = vpop.f32.mrb[0].mxu0
      %v6915 = vpop.f32.mrb[0].mxu0
      %v6916 = vpop.f32.mrb[0].mxu0
      %6917 = vdwg.mxu0
      %v6918 = vadd.f32 %v3902, %v3904
      %v6919 = vadd.f32 %v6918, %v4907
      %v6920 = vadd.f32 %v6919, %v4909
      %v6921 = vadd.f32 %v6920, %v5912
      %v6922 = vadd.f32 %v6921, %v5914
      %vm6923 = vcmask 130048
      %v6924 = vsel %vm6923, %v6785, 0.0
      %v6925 = vadd.f32 %v6922, %v6924
      %6926 = vadd.xlane.f32.xlu0 %v6925
      %v6927 = vpop.xlane.xlu0 %6926
      %v6928 = vadd.f32 %v3906, %v3908
      %v6929 = vadd.f32 %v6928, %v4911
      %v6930 = vadd.f32 %v6929, %v4913
      %v6931 = vadd.f32 %v6930, %v5916
      %v6932 = vadd.f32 %v6931, %v5918
      %v6933 = vsel %vm6923, %v6788, 0.0
      %v6934 = vadd.f32 %v6932, %v6933
      %6935 = vadd.xlane.f32.xlu0 %v6934
      %v6936 = vpop.xlane.xlu0 %6935
      %v6937 = vadd.f32 %v3912, %v3914
      %v6938 = vadd.f32 %v6937, %v4917
      %v6939 = vadd.f32 %v6938, %v4919
      %v6940 = vadd.f32 %v6939, %v5922
      %v6941 = vadd.f32 %v6940, %v5924
      %v6942 = vsel %vm6923, %v6793, 0.0
      %v6943 = vadd.f32 %v6941, %v6942
      %6944 = vadd.xlane.f32.xlu0 %v6943
      %v6945 = vpop.xlane.xlu0 %6944
      %v6946 = vadd.f32 %v3916, %v3918
      %v6947 = vadd.f32 %v6946, %v4921
      %v6948 = vadd.f32 %v6947, %v4923
      %v6949 = vadd.f32 %v6948, %v5926
      %v6950 = vadd.f32 %v6949, %v5928
      %v6951 = vsel %vm6923, %v6796, 0.0
      %v6952 = vadd.f32 %v6950, %v6951
      %6953 = vadd.xlane.f32.xlu0 %v6952
      %v6954 = vpop.xlane.xlu0 %6953
      %v6955 = vadd.f32 %v3922, %v3924
      %v6956 = vadd.f32 %v6955, %v4927
      %v6957 = vadd.f32 %v6956, %v4929
      %v6958 = vadd.f32 %v6957, %v5932
      %v6959 = vadd.f32 %v6958, %v5934
      %v6960 = vsel %vm6923, %v6801, 0.0
      %v6961 = vadd.f32 %v6959, %v6960
      %6962 = vadd.xlane.f32.xlu0 %v6961
      %v6963 = vpop.xlane.xlu0 %6962
      %v6964 = vadd.f32 %v3926, %v3928
      %v6965 = vadd.f32 %v6964, %v4931
      %v6966 = vadd.f32 %v6965, %v4933
      %v6967 = vadd.f32 %v6966, %v5936
      %v6968 = vadd.f32 %v6967, %v5938
      %v6969 = vsel %vm6923, %v6804, 0.0
      %v6970 = vadd.f32 %v6968, %v6969
      %6971 = vadd.xlane.f32.xlu0 %v6970
      %v6972 = vpop.xlane.xlu0 %6971
      %v6973 = vadd.f32 %v3932, %v3934
      %v6974 = vadd.f32 %v6973, %v4937
      %v6975 = vadd.f32 %v6974, %v4939
      %v6976 = vadd.f32 %v6975, %v5942
      %v6977 = vadd.f32 %v6976, %v5944
      %v6978 = vsel %vm6923, %v6809, 0.0
      %v6979 = vadd.f32 %v6977, %v6978
      %6980 = vadd.xlane.f32.xlu0 %v6979
      %v6981 = vpop.xlane.xlu0 %6980
      %v6982 = vadd.f32 %v3936, %v3938
      %v6983 = vadd.f32 %v6982, %v4941
      %v6984 = vadd.f32 %v6983, %v4943
      %v6985 = vadd.f32 %v6984, %v5946
      %v6986 = vadd.f32 %v6985, %v5948
      %v6987 = vsel %vm6923, %v6812, 0.0
      %v6988 = vadd.f32 %v6986, %v6987
      %6989 = vadd.xlane.f32.xlu0 %v6988
      %v6990 = vpop.xlane.xlu0 %6989
      %v6991 = vadd.f32 %v3942, %v3944
      %v6992 = vadd.f32 %v6991, %v4947
      %v6993 = vadd.f32 %v6992, %v4949
      %v6994 = vadd.f32 %v6993, %v5952
      %v6995 = vadd.f32 %v6994, %v5954
      %v6996 = vsel %vm6923, %v6817, 0.0
      %v6997 = vadd.f32 %v6995, %v6996
      %6998 = vadd.xlane.f32.xlu0 %v6997
      %v6999 = vpop.xlane.xlu0 %6998
      %v7000 = vadd.f32 %v3946, %v3948
      %v7001 = vadd.f32 %v7000, %v4951
      %v7002 = vadd.f32 %v7001, %v4953
      %v7003 = vadd.f32 %v7002, %v5956
      %v7004 = vadd.f32 %v7003, %v5958
      %v7005 = vsel %vm6923, %v6820, 0.0
      %v7006 = vadd.f32 %v7004, %v7005
      %7007 = vadd.xlane.f32.xlu0 %v7006
      %v7008 = vpop.xlane.xlu0 %7007
      %v7009 = vadd.f32 %v3952, %v3954
      %v7010 = vadd.f32 %v7009, %v4957
      %v7011 = vadd.f32 %v7010, %v4959
      %v7012 = vadd.f32 %v7011, %v5962
      %v7013 = vadd.f32 %v7012, %v5964
      %v7014 = vsel %vm6923, %v6825, 0.0
      %v7015 = vadd.f32 %v7013, %v7014
      %7016 = vadd.xlane.f32.xlu0 %v7015
      %v7017 = vpop.xlane.xlu0 %7016
      %v7018 = vadd.f32 %v3956, %v3958
      %v7019 = vadd.f32 %v7018, %v4961
      %v7020 = vadd.f32 %v7019, %v4963
      %v7021 = vadd.f32 %v7020, %v5966
      %v7022 = vadd.f32 %v7021, %v5968
      %v7023 = vsel %vm6923, %v6828, 0.0
      %v7024 = vadd.f32 %v7022, %v7023
      %7025 = vadd.xlane.f32.xlu0 %v7024
      %v7026 = vpop.xlane.xlu0 %7025
      %v7027 = vadd.f32 %v3962, %v3964
      %v7028 = vadd.f32 %v7027, %v4967
      %v7029 = vadd.f32 %v7028, %v4969
      %v7030 = vadd.f32 %v7029, %v5972
      %v7031 = vadd.f32 %v7030, %v5974
      %v7032 = vsel %vm6923, %v6833, 0.0
      %v7033 = vadd.f32 %v7031, %v7032
      %7034 = vadd.xlane.f32.xlu0 %v7033
      %v7035 = vpop.xlane.xlu0 %7034
      %v7036 = vadd.f32 %v3966, %v3968
      %v7037 = vadd.f32 %v7036, %v4971
      %v7038 = vadd.f32 %v7037, %v4973
      %v7039 = vadd.f32 %v7038, %v5976
      %v7040 = vadd.f32 %v7039, %v5978
      %v7041 = vsel %vm6923, %v6836, 0.0
      %v7042 = vadd.f32 %v7040, %v7041
      %7043 = vadd.xlane.f32.xlu0 %v7042
      %v7044 = vpop.xlane.xlu0 %7043
      %v7045 = vadd.f32 %v3972, %v3974
      %v7046 = vadd.f32 %v7045, %v4977
      %v7047 = vadd.f32 %v7046, %v4979
      %v7048 = vadd.f32 %v7047, %v5982
      %v7049 = vadd.f32 %v7048, %v5984
      %v7050 = vsel %vm6923, %v6841, 0.0
      %v7051 = vadd.f32 %v7049, %v7050
      %7052 = vadd.xlane.f32.xlu0 %v7051
      %v7053 = vpop.xlane.xlu0 %7052
      %v7054 = vadd.f32 %v3976, %v3978
      %v7055 = vadd.f32 %v7054, %v4981
      %v7056 = vadd.f32 %v7055, %v4983
      %v7057 = vadd.f32 %v7056, %v5986
      %v7058 = vadd.f32 %v7057, %v5988
      %v7059 = vsel %vm6923, %v6844, 0.0
      %v7060 = vadd.f32 %v7058, %v7059
      %7061 = vadd.xlane.f32.xlu0 %v7060
      %v7062 = vpop.xlane.xlu0 %7061
      %v7063 = vadd.f32 %v3982, %v3984
      %v7064 = vadd.f32 %v7063, %v4987
      %v7065 = vadd.f32 %v7064, %v4989
      %v7066 = vadd.f32 %v7065, %v5992
      %v7067 = vadd.f32 %v7066, %v5994
      %v7068 = vsel %vm6923, %v6849, 0.0
      %v7069 = vadd.f32 %v7067, %v7068
      %7070 = vadd.xlane.f32.xlu0 %v7069
      %v7071 = vpop.xlane.xlu0 %7070
      %v7072 = vadd.f32 %v3986, %v3988
      %v7073 = vadd.f32 %v7072, %v4991
      %v7074 = vadd.f32 %v7073, %v4993
      %v7075 = vadd.f32 %v7074, %v5996
      %v7076 = vadd.f32 %v7075, %v5998
      %v7077 = vsel %vm6923, %v6852, 0.0
      %v7078 = vadd.f32 %v7076, %v7077
      %7079 = vadd.xlane.f32.xlu0 %v7078
      %v7080 = vpop.xlane.xlu0 %7079
      %v7081 = vadd.f32 %v3992, %v3994
      %v7082 = vadd.f32 %v7081, %v4997
      %v7083 = vadd.f32 %v7082, %v4999
      %v7084 = vadd.f32 %v7083, %v6002
      %v7085 = vadd.f32 %v7084, %v6004
      %v7086 = vsel %vm6923, %v6857, 0.0
      %v7087 = vadd.f32 %v7085, %v7086
      %7088 = vadd.xlane.f32.xlu0 %v7087
      %v7089 = vpop.xlane.xlu0 %7088
      %v7090 = vadd.f32 %v3996, %v3998
      %v7091 = vadd.f32 %v7090, %v5001
      %v7092 = vadd.f32 %v7091, %v5003
      %v7093 = vadd.f32 %v7092, %v6006
      %v7094 = vadd.f32 %v7093, %v6008
      %v7095 = vsel %vm6923, %v6860, 0.0
      %v7096 = vadd.f32 %v7094, %v7095
      %7097 = vadd.xlane.f32.xlu0 %v7096
      %v7098 = vpop.xlane.xlu0 %7097
      %v7099 = vadd.f32 %v4002, %v4004
      %v7100 = vadd.f32 %v7099, %v5007
      %v7101 = vadd.f32 %v7100, %v5009
      %v7102 = vadd.f32 %v7101, %v6012
      %v7103 = vadd.f32 %v7102, %v6014
      %v7104 = vsel %vm6923, %v6865, 0.0
      %v7105 = vadd.f32 %v7103, %v7104
      %7106 = vadd.xlane.f32.xlu0 %v7105
      %v7107 = vpop.xlane.xlu0 %7106
      %v7108 = vadd.f32 %v4006, %v4008
      %v7109 = vadd.f32 %v7108, %v5011
      %v7110 = vadd.f32 %v7109, %v5013
      %v7111 = vadd.f32 %v7110, %v6016
      %v7112 = vadd.f32 %v7111, %v6018
      %v7113 = vsel %vm6923, %v6868, 0.0
      %v7114 = vadd.f32 %v7112, %v7113
      %7115 = vadd.xlane.f32.xlu0 %v7114
      %v7116 = vpop.xlane.xlu0 %7115
      %v7117 = vadd.f32 %v4012, %v4014
      %v7118 = vadd.f32 %v7117, %v5017
      %v7119 = vadd.f32 %v7118, %v5019
      %v7120 = vadd.f32 %v7119, %v6022
      %v7121 = vadd.f32 %v7120, %v6024
      %v7122 = vsel %vm6923, %v6873, 0.0
      %v7123 = vadd.f32 %v7121, %v7122
      %7124 = vadd.xlane.f32.xlu0 %v7123
      %v7125 = vpop.xlane.xlu0 %7124
      %v7126 = vadd.f32 %v4016, %v4018
      %v7127 = vadd.f32 %v7126, %v5021
      %v7128 = vadd.f32 %v7127, %v5023
      %v7129 = vadd.f32 %v7128, %v6026
      %v7130 = vadd.f32 %v7129, %v6028
      %v7131 = vsel %vm6923, %v6876, 0.0
      %v7132 = vadd.f32 %v7130, %v7131
      %7133 = vadd.xlane.f32.xlu0 %v7132
      %v7134 = vpop.xlane.xlu0 %7133
      %v7135 = vadd.f32 %v4022, %v4024
      %v7136 = vadd.f32 %v7135, %v5027
      %v7137 = vadd.f32 %v7136, %v5029
      %v7138 = vadd.f32 %v7137, %v6032
      %v7139 = vadd.f32 %v7138, %v6034
      %v7140 = vsel %vm6923, %v6881, 0.0
      %v7141 = vadd.f32 %v7139, %v7140
      %7142 = vadd.xlane.f32.xlu0 %v7141
      %v7143 = vpop.xlane.xlu0 %7142
      %v7144 = vadd.f32 %v4026, %v4028
      %v7145 = vadd.f32 %v7144, %v5031
      %v7146 = vadd.f32 %v7145, %v5033
      %v7147 = vadd.f32 %v7146, %v6036
      %v7148 = vadd.f32 %v7147, %v6038
      %v7149 = vsel %vm6923, %v6884, 0.0
      %v7150 = vadd.f32 %v7148, %v7149
      %7151 = vadd.xlane.f32.xlu0 %v7150
      %v7152 = vpop.xlane.xlu0 %7151
      %v7153 = vadd.f32 %v4032, %v4034
      %v7154 = vadd.f32 %v7153, %v5037
      %v7155 = vadd.f32 %v7154, %v5039
      %v7156 = vadd.f32 %v7155, %v6042
      %v7157 = vadd.f32 %v7156, %v6044
      %v7158 = vsel %vm6923, %v6889, 0.0
      %v7159 = vadd.f32 %v7157, %v7158
      %7160 = vadd.xlane.f32.xlu0 %v7159
      %v7161 = vpop.xlane.xlu0 %7160
      %v7162 = vadd.f32 %v4036, %v4038
      %v7163 = vadd.f32 %v7162, %v5041
      %v7164 = vadd.f32 %v7163, %v5043
      %v7165 = vadd.f32 %v7164, %v6046
      %v7166 = vadd.f32 %v7165, %v6048
      %v7167 = vsel %vm6923, %v6892, 0.0
      %v7168 = vadd.f32 %v7166, %v7167
      %7169 = vadd.xlane.f32.xlu0 %v7168
      %v7170 = vpop.xlane.xlu0 %7169
      %v7171 = vadd.f32 %v4042, %v4044
      %v7172 = vadd.f32 %v7171, %v5047
      %v7173 = vadd.f32 %v7172, %v5049
      %v7174 = vadd.f32 %v7173, %v6052
      %v7175 = vadd.f32 %v7174, %v6054
      %v7176 = vsel %vm6923, %v6897, 0.0
      %v7177 = vadd.f32 %v7175, %v7176
      %7178 = vadd.xlane.f32.xlu0 %v7177
      %v7179 = vpop.xlane.xlu0 %7178
      %v7180 = vadd.f32 %v4046, %v4048
      %v7181 = vadd.f32 %v7180, %v5051
      %v7182 = vadd.f32 %v7181, %v5053
      %v7183 = vadd.f32 %v7182, %v6056
      %v7184 = vadd.f32 %v7183, %v6058
      %v7185 = vsel %vm6923, %v6900, 0.0
      %v7186 = vadd.f32 %v7184, %v7185
      %7187 = vadd.xlane.f32.xlu0 %v7186
      %v7188 = vpop.xlane.xlu0 %7187
      %v7189 = vadd.f32 %v4052, %v4054
      %v7190 = vadd.f32 %v7189, %v5057
      %v7191 = vadd.f32 %v7190, %v5059
      %v7192 = vadd.f32 %v7191, %v6062
      %v7193 = vadd.f32 %v7192, %v6064
      %v7194 = vsel %vm6923, %v6905, 0.0
      %v7195 = vadd.f32 %v7193, %v7194
      %7196 = vadd.xlane.f32.xlu0 %v7195
      %v7197 = vpop.xlane.xlu0 %7196
      %v7198 = vadd.f32 %v4056, %v4058
      %v7199 = vadd.f32 %v7198, %v5061
      %v7200 = vadd.f32 %v7199, %v5063
      %v7201 = vadd.f32 %v7200, %v6066
      %v7202 = vadd.f32 %v7201, %v6068
      %v7203 = vsel %vm6923, %v6908, 0.0
      %v7204 = vadd.f32 %v7202, %v7203
      %7205 = vadd.xlane.f32.xlu0 %v7204
      %v7206 = vpop.xlane.xlu0 %7205
      %v7207 = vadd.f32 %v4062, %v4064
      %v7208 = vadd.f32 %v7207, %v5067
      %v7209 = vadd.f32 %v7208, %v5069
      %v7210 = vadd.f32 %v7209, %v6072
      %v7211 = vadd.f32 %v7210, %v6074
      %v7212 = vsel %vm6923, %v6913, 0.0
      %v7213 = vadd.f32 %v7211, %v7212
      %7214 = vadd.xlane.f32.xlu0 %v7213
      %v7215 = vpop.xlane.xlu0 %7214
      %v7216 = vmul.f32 %v6927, 0.0012755102
      %v7217 = vmul.f32 %v6936, 0.0012755102
      %v7218 = vmul.f32 %v6945, 0.0012755102
      %v7219 = vmul.f32 %v6954, 0.0012755102
      %v7220 = vmul.f32 %v6963, 0.0012755102
      %v7221 = vmul.f32 %v6972, 0.0012755102
      %v7222 = vmul.f32 %v6981, 0.0012755102
      %v7223 = vmul.f32 %v6990, 0.0012755102
      %v7224 = vmul.f32 %v6999, 0.0012755102
      %v7225 = vmul.f32 %v7008, 0.0012755102
      %v7226 = vmul.f32 %v7017, 0.0012755102
      %v7227 = vmul.f32 %v7026, 0.0012755102
      %v7228 = vmul.f32 %v7035, 0.0012755102
      %v7229 = vmul.f32 %v7044, 0.0012755102
      %v7230 = vmul.f32 %v7053, 0.0012755102
      %v7231 = vmul.f32 %v7062, 0.0012755102
      %v7232 = vmul.f32 %v7071, 0.0012755102
      %v7233 = vmul.f32 %v7080, 0.0012755102
      %v7234 = vmul.f32 %v7089, 0.0012755102
      %v7235 = vmul.f32 %v7098, 0.0012755102
      %v7236 = vmul.f32 %v7107, 0.0012755102
      %v7237 = vmul.f32 %v7116, 0.0012755102
      %v7238 = vmul.f32 %v7125, 0.0012755102
      %v7239 = vmul.f32 %v7134, 0.0012755102
      %v7240 = vmul.f32 %v7143, 0.0012755102
      %v7241 = vmul.f32 %v7152, 0.0012755102
      %v7242 = vmul.f32 %v7161, 0.0012755102
      %v7243 = vmul.f32 %v7170, 0.0012755102
      %v7244 = vmul.f32 %v7179, 0.0012755102
      %v7245 = vmul.f32 %v7188, 0.0012755102
      %v7246 = vmul.f32 %v7197, 0.0012755102
      %v7247 = vmul.f32 %v7206, 0.0012755102
      %v7248 = vmul.f32 %v7215, 0.0012755102
      %v7249 = vsub.f32 %v3902, %v7216
      %v7250 = vsub.f32 %v3904, %v7216
      %v7251 = vsub.f32 %v4907, %v7216
      %v7252 = vsub.f32 %v4909, %v7216
      %v7253 = vsub.f32 %v5912, %v7216
      %v7254 = vsub.f32 %v5914, %v7216
      %v7255 = vsub.f32 %v6785, %v7216
      %v7256 = vsub.f32 %v3906, %v7217
      %v7257 = vsub.f32 %v3908, %v7217
      %v7258 = vsub.f32 %v4911, %v7217
      %v7259 = vsub.f32 %v4913, %v7217
      %v7260 = vsub.f32 %v5916, %v7217
      %v7261 = vsub.f32 %v5918, %v7217
      %v7262 = vsub.f32 %v6788, %v7217
      %v7263 = vsub.f32 %v3912, %v7218
      %v7264 = vsub.f32 %v3914, %v7218
      %v7265 = vsub.f32 %v4917, %v7218
      %v7266 = vsub.f32 %v4919, %v7218
      %v7267 = vsub.f32 %v5922, %v7218
      %v7268 = vsub.f32 %v5924, %v7218
      %v7269 = vsub.f32 %v6793, %v7218
      %v7270 = vsub.f32 %v3916, %v7219
      %v7271 = vsub.f32 %v3918, %v7219
      %v7272 = vsub.f32 %v4921, %v7219
      %v7273 = vsub.f32 %v4923, %v7219
      %v7274 = vsub.f32 %v5926, %v7219
      %v7275 = vsub.f32 %v5928, %v7219
      %v7276 = vsub.f32 %v6796, %v7219
      %v7277 = vsub.f32 %v3922, %v7220
      %v7278 = vsub.f32 %v3924, %v7220
      %v7279 = vsub.f32 %v4927, %v7220
      %v7280 = vsub.f32 %v4929, %v7220
      %v7281 = vsub.f32 %v5932, %v7220
      %v7282 = vsub.f32 %v5934, %v7220
      %v7283 = vsub.f32 %v6801, %v7220
      %v7284 = vsub.f32 %v3926, %v7221
      %v7285 = vsub.f32 %v3928, %v7221
      %v7286 = vsub.f32 %v4931, %v7221
      %v7287 = vsub.f32 %v4933, %v7221
      %v7288 = vsub.f32 %v5936, %v7221
      %v7289 = vsub.f32 %v5938, %v7221
      %v7290 = vsub.f32 %v6804, %v7221
      %v7291 = vsub.f32 %v3932, %v7222
      %v7292 = vsub.f32 %v3934, %v7222
      %v7293 = vsub.f32 %v4937, %v7222
      %v7294 = vsub.f32 %v4939, %v7222
      %v7295 = vsub.f32 %v5942, %v7222
      %v7296 = vsub.f32 %v5944, %v7222
      %v7297 = vsub.f32 %v6809, %v7222
      %v7298 = vsub.f32 %v3936, %v7223
      %v7299 = vsub.f32 %v3938, %v7223
      %v7300 = vsub.f32 %v4941, %v7223
      %v7301 = vsub.f32 %v4943, %v7223
      %v7302 = vsub.f32 %v5946, %v7223
      %v7303 = vsub.f32 %v5948, %v7223
      %v7304 = vsub.f32 %v6812, %v7223
      %v7305 = vsub.f32 %v3942, %v7224
      %v7306 = vsub.f32 %v3944, %v7224
      %v7307 = vsub.f32 %v4947, %v7224
      %v7308 = vsub.f32 %v4949, %v7224
      %v7309 = vsub.f32 %v5952, %v7224
      %v7310 = vsub.f32 %v5954, %v7224
      %v7311 = vsub.f32 %v6817, %v7224
      %v7312 = vsub.f32 %v3946, %v7225
      %v7313 = vsub.f32 %v3948, %v7225
      %v7314 = vsub.f32 %v4951, %v7225
      %v7315 = vsub.f32 %v4953, %v7225
      %v7316 = vsub.f32 %v5956, %v7225
      %v7317 = vsub.f32 %v5958, %v7225
      %v7318 = vsub.f32 %v6820, %v7225
      %v7319 = vsub.f32 %v3952, %v7226
      %v7320 = vsub.f32 %v3954, %v7226
      %v7321 = vsub.f32 %v4957, %v7226
      %v7322 = vsub.f32 %v4959, %v7226
      %v7323 = vsub.f32 %v5962, %v7226
      %v7324 = vsub.f32 %v5964, %v7226
      %v7325 = vsub.f32 %v6825, %v7226
      %v7326 = vsub.f32 %v3956, %v7227
      %v7327 = vsub.f32 %v3958, %v7227
      %v7328 = vsub.f32 %v4961, %v7227
      %v7329 = vsub.f32 %v4963, %v7227
      %v7330 = vsub.f32 %v5966, %v7227
      %v7331 = vsub.f32 %v5968, %v7227
      %v7332 = vsub.f32 %v6828, %v7227
      %v7333 = vsub.f32 %v3962, %v7228
      %v7334 = vsub.f32 %v3964, %v7228
      %v7335 = vsub.f32 %v4967, %v7228
      %v7336 = vsub.f32 %v4969, %v7228
      %v7337 = vsub.f32 %v5972, %v7228
      %v7338 = vsub.f32 %v5974, %v7228
      %v7339 = vsub.f32 %v6833, %v7228
      %v7340 = vsub.f32 %v3966, %v7229
      %v7341 = vsub.f32 %v3968, %v7229
      %v7342 = vsub.f32 %v4971, %v7229
      %v7343 = vsub.f32 %v4973, %v7229
      %v7344 = vsub.f32 %v5976, %v7229
      %v7345 = vsub.f32 %v5978, %v7229
      %v7346 = vsub.f32 %v6836, %v7229
      %v7347 = vsub.f32 %v3972, %v7230
      %v7348 = vsub.f32 %v3974, %v7230
      %v7349 = vsub.f32 %v4977, %v7230
      %v7350 = vsub.f32 %v4979, %v7230
      %v7351 = vsub.f32 %v5982, %v7230
      %v7352 = vsub.f32 %v5984, %v7230
      %v7353 = vsub.f32 %v6841, %v7230
      %v7354 = vsub.f32 %v3976, %v7231
      %v7355 = vsub.f32 %v3978, %v7231
      %v7356 = vsub.f32 %v4981, %v7231
      %v7357 = vsub.f32 %v4983, %v7231
      %v7358 = vsub.f32 %v5986, %v7231
      %v7359 = vsub.f32 %v5988, %v7231
      %v7360 = vsub.f32 %v6844, %v7231
      %v7361 = vsub.f32 %v3982, %v7232
      %v7362 = vsub.f32 %v3984, %v7232
      %v7363 = vsub.f32 %v4987, %v7232
      %v7364 = vsub.f32 %v4989, %v7232
      %v7365 = vsub.f32 %v5992, %v7232
      %v7366 = vsub.f32 %v5994, %v7232
      %v7367 = vsub.f32 %v6849, %v7232
      %v7368 = vsub.f32 %v3986, %v7233
      %v7369 = vsub.f32 %v3988, %v7233
      %v7370 = vsub.f32 %v4991, %v7233
      %v7371 = vsub.f32 %v4993, %v7233
      %v7372 = vsub.f32 %v5996, %v7233
      %v7373 = vsub.f32 %v5998, %v7233
      %v7374 = vsub.f32 %v6852, %v7233
      %v7375 = vsub.f32 %v3992, %v7234
      %v7376 = vsub.f32 %v3994, %v7234
      %v7377 = vsub.f32 %v4997, %v7234
      %v7378 = vsub.f32 %v4999, %v7234
      %v7379 = vsub.f32 %v6002, %v7234
      %v7380 = vsub.f32 %v6004, %v7234
      %v7381 = vsub.f32 %v6857, %v7234
      %v7382 = vsub.f32 %v3996, %v7235
      %v7383 = vsub.f32 %v3998, %v7235
      %v7384 = vsub.f32 %v5001, %v7235
      %v7385 = vsub.f32 %v5003, %v7235
      %v7386 = vsub.f32 %v6006, %v7235
      %v7387 = vsub.f32 %v6008, %v7235
      %v7388 = vsub.f32 %v6860, %v7235
      %v7389 = vsub.f32 %v4002, %v7236
      %v7390 = vsub.f32 %v4004, %v7236
      %v7391 = vsub.f32 %v5007, %v7236
      %v7392 = vsub.f32 %v5009, %v7236
      %v7393 = vsub.f32 %v6012, %v7236
      %v7394 = vsub.f32 %v6014, %v7236
      %v7395 = vsub.f32 %v6865, %v7236
      %v7396 = vsub.f32 %v4006, %v7237
      %v7397 = vsub.f32 %v4008, %v7237
      %v7398 = vsub.f32 %v5011, %v7237
      %v7399 = vsub.f32 %v5013, %v7237
      %v7400 = vsub.f32 %v6016, %v7237
      %v7401 = vsub.f32 %v6018, %v7237
      %v7402 = vsub.f32 %v6868, %v7237
      %v7403 = vsub.f32 %v4012, %v7238
      %v7404 = vsub.f32 %v4014, %v7238
      %v7405 = vsub.f32 %v5017, %v7238
      %v7406 = vsub.f32 %v5019, %v7238
      %v7407 = vsub.f32 %v6022, %v7238
      %v7408 = vsub.f32 %v6024, %v7238
      %v7409 = vsub.f32 %v6873, %v7238
      %v7410 = vsub.f32 %v4016, %v7239
      %v7411 = vsub.f32 %v4018, %v7239
      %v7412 = vsub.f32 %v5021, %v7239
      %v7413 = vsub.f32 %v5023, %v7239
      %v7414 = vsub.f32 %v6026, %v7239
      %v7415 = vsub.f32 %v6028, %v7239
      %v7416 = vsub.f32 %v6876, %v7239
      %v7417 = vsub.f32 %v4022, %v7240
      %v7418 = vsub.f32 %v4024, %v7240
      %v7419 = vsub.f32 %v5027, %v7240
      %v7420 = vsub.f32 %v5029, %v7240
      %v7421 = vsub.f32 %v6032, %v7240
      %v7422 = vsub.f32 %v6034, %v7240
      %v7423 = vsub.f32 %v6881, %v7240
      %v7424 = vsub.f32 %v4026, %v7241
      %v7425 = vsub.f32 %v4028, %v7241
      %v7426 = vsub.f32 %v5031, %v7241
      %v7427 = vsub.f32 %v5033, %v7241
      %v7428 = vsub.f32 %v6036, %v7241
      %v7429 = vsub.f32 %v6038, %v7241
      %v7430 = vsub.f32 %v6884, %v7241
      %v7431 = vsub.f32 %v4032, %v7242
      %v7432 = vsub.f32 %v4034, %v7242
      %v7433 = vsub.f32 %v5037, %v7242
      %v7434 = vsub.f32 %v5039, %v7242
      %v7435 = vsub.f32 %v6042, %v7242
      %v7436 = vsub.f32 %v6044, %v7242
      %v7437 = vsub.f32 %v6889, %v7242
      %v7438 = vsub.f32 %v4036, %v7243
      %v7439 = vsub.f32 %v4038, %v7243
      %v7440 = vsub.f32 %v5041, %v7243
      %v7441 = vsub.f32 %v5043, %v7243
      %v7442 = vsub.f32 %v6046, %v7243
      %v7443 = vsub.f32 %v6048, %v7243
      %v7444 = vsub.f32 %v6892, %v7243
      %v7445 = vsub.f32 %v4042, %v7244
      %v7446 = vsub.f32 %v4044, %v7244
      %v7447 = vsub.f32 %v5047, %v7244
      %v7448 = vsub.f32 %v5049, %v7244
      %v7449 = vsub.f32 %v6052, %v7244
      %v7450 = vsub.f32 %v6054, %v7244
      %v7451 = vsub.f32 %v6897, %v7244
      %v7452 = vsub.f32 %v4046, %v7245
      %v7453 = vsub.f32 %v4048, %v7245
      %v7454 = vsub.f32 %v5051, %v7245
      %v7455 = vsub.f32 %v5053, %v7245
      %v7456 = vsub.f32 %v6056, %v7245
      %v7457 = vsub.f32 %v6058, %v7245
      %v7458 = vsub.f32 %v6900, %v7245
      %v7459 = vsub.f32 %v4052, %v7246
      %v7460 = vsub.f32 %v4054, %v7246
      %v7461 = vsub.f32 %v5057, %v7246
      %v7462 = vsub.f32 %v5059, %v7246
      %v7463 = vsub.f32 %v6062, %v7246
      %v7464 = vsub.f32 %v6064, %v7246
      %v7465 = vsub.f32 %v6905, %v7246
      %v7466 = vsub.f32 %v4056, %v7247
      %v7467 = vsub.f32 %v4058, %v7247
      %v7468 = vsub.f32 %v5061, %v7247
      %v7469 = vsub.f32 %v5063, %v7247
      %v7470 = vsub.f32 %v6066, %v7247
      %v7471 = vsub.f32 %v6068, %v7247
      %v7472 = vsub.f32 %v6908, %v7247
      %v7473 = vsub.f32 %v4062, %v7248
      %v7474 = vsub.f32 %v4064, %v7248
      %v7475 = vsub.f32 %v5067, %v7248
      %v7476 = vsub.f32 %v5069, %v7248
      %v7477 = vsub.f32 %v6072, %v7248
      %v7478 = vsub.f32 %v6074, %v7248
      %v7479 = vsub.f32 %v6913, %v7248
      %v7480 = vmul.f32 %v7249, %v7249
      %v7481 = vmul.f32 %v7250, %v7250
      %v7482 = vmul.f32 %v7251, %v7251
      %v7483 = vmul.f32 %v7252, %v7252
      %v7484 = vmul.f32 %v7253, %v7253
      %v7485 = vmul.f32 %v7254, %v7254
      %v7486 = vmul.f32 %v7255, %v7255
      %v7487 = vmul.f32 %v7256, %v7256
      %v7488 = vmul.f32 %v7257, %v7257
      %v7489 = vmul.f32 %v7258, %v7258
      %v7490 = vmul.f32 %v7259, %v7259
      %v7491 = vmul.f32 %v7260, %v7260
      %v7492 = vmul.f32 %v7261, %v7261
      %v7493 = vmul.f32 %v7262, %v7262
      %v7494 = vmul.f32 %v7263, %v7263
      %v7495 = vmul.f32 %v7264, %v7264
      %v7496 = vmul.f32 %v7265, %v7265
      %v7497 = vmul.f32 %v7266, %v7266
      %v7498 = vmul.f32 %v7267, %v7267
      %v7499 = vmul.f32 %v7268, %v7268
      %v7500 = vmul.f32 %v7269, %v7269
      %v7501 = vmul.f32 %v7270, %v7270
      %v7502 = vmul.f32 %v7271, %v7271
      %v7503 = vmul.f32 %v7272, %v7272
      %v7504 = vmul.f32 %v7273, %v7273
      %v7505 = vmul.f32 %v7274, %v7274
      %v7506 = vmul.f32 %v7275, %v7275
      %v7507 = vmul.f32 %v7276, %v7276
      %v7508 = vmul.f32 %v7277, %v7277
      %v7509 = vmul.f32 %v7278, %v7278
      %v7510 = vmul.f32 %v7279, %v7279
      %v7511 = vmul.f32 %v7280, %v7280
      %v7512 = vmul.f32 %v7281, %v7281
      %v7513 = vmul.f32 %v7282, %v7282
      %v7514 = vmul.f32 %v7283, %v7283
      %v7515 = vmul.f32 %v7284, %v7284
      %v7516 = vmul.f32 %v7285, %v7285
      %v7517 = vmul.f32 %v7286, %v7286
      %v7518 = vmul.f32 %v7287, %v7287
      %v7519 = vmul.f32 %v7288, %v7288
      %v7520 = vmul.f32 %v7289, %v7289
      %v7521 = vmul.f32 %v7290, %v7290
      %v7522 = vmul.f32 %v7291, %v7291
      %v7523 = vmul.f32 %v7292, %v7292
      %v7524 = vmul.f32 %v7293, %v7293
      %v7525 = vmul.f32 %v7294, %v7294
      %v7526 = vmul.f32 %v7295, %v7295
      %v7527 = vmul.f32 %v7296, %v7296
      %v7528 = vmul.f32 %v7297, %v7297
      %v7529 = vmul.f32 %v7298, %v7298
      %v7530 = vmul.f32 %v7299, %v7299
      %v7531 = vmul.f32 %v7300, %v7300
      %v7532 = vmul.f32 %v7301, %v7301
      %v7533 = vmul.f32 %v7302, %v7302
      %v7534 = vmul.f32 %v7303, %v7303
      %v7535 = vmul.f32 %v7304, %v7304
      %v7536 = vmul.f32 %v7305, %v7305
      %v7537 = vmul.f32 %v7306, %v7306
      %v7538 = vmul.f32 %v7307, %v7307
      %v7539 = vmul.f32 %v7308, %v7308
      %v7540 = vmul.f32 %v7309, %v7309
      %v7541 = vmul.f32 %v7310, %v7310
      %v7542 = vmul.f32 %v7311, %v7311
      %v7543 = vmul.f32 %v7312, %v7312
      %v7544 = vmul.f32 %v7313, %v7313
      %v7545 = vmul.f32 %v7314, %v7314
      %v7546 = vmul.f32 %v7315, %v7315
      %v7547 = vmul.f32 %v7316, %v7316
      %v7548 = vmul.f32 %v7317, %v7317
      %v7549 = vmul.f32 %v7318, %v7318
      %v7550 = vmul.f32 %v7319, %v7319
      %v7551 = vmul.f32 %v7320, %v7320
      %v7552 = vmul.f32 %v7321, %v7321
      %v7553 = vmul.f32 %v7322, %v7322
      %v7554 = vmul.f32 %v7323, %v7323
      %v7555 = vmul.f32 %v7324, %v7324
      %v7556 = vmul.f32 %v7325, %v7325
      %v7557 = vmul.f32 %v7326, %v7326
      %v7558 = vmul.f32 %v7327, %v7327
      %v7559 = vmul.f32 %v7328, %v7328
      %v7560 = vmul.f32 %v7329, %v7329
      %v7561 = vmul.f32 %v7330, %v7330
      %v7562 = vmul.f32 %v7331, %v7331
      %v7563 = vmul.f32 %v7332, %v7332
      %v7564 = vmul.f32 %v7333, %v7333
      %v7565 = vmul.f32 %v7334, %v7334
      %v7566 = vmul.f32 %v7335, %v7335
      %v7567 = vmul.f32 %v7336, %v7336
      %v7568 = vmul.f32 %v7337, %v7337
      %v7569 = vmul.f32 %v7338, %v7338
      %v7570 = vmul.f32 %v7339, %v7339
      %v7571 = vmul.f32 %v7340, %v7340
      %v7572 = vmul.f32 %v7341, %v7341
      %v7573 = vmul.f32 %v7342, %v7342
      %v7574 = vmul.f32 %v7343, %v7343
      %v7575 = vmul.f32 %v7344, %v7344
      %v7576 = vmul.f32 %v7345, %v7345
      %v7577 = vmul.f32 %v7346, %v7346
      %v7578 = vmul.f32 %v7347, %v7347
      %v7579 = vmul.f32 %v7348, %v7348
      %v7580 = vmul.f32 %v7349, %v7349
      %v7581 = vmul.f32 %v7350, %v7350
      %v7582 = vmul.f32 %v7351, %v7351
      %v7583 = vmul.f32 %v7352, %v7352
      %v7584 = vmul.f32 %v7353, %v7353
      %v7585 = vmul.f32 %v7354, %v7354
      %v7586 = vmul.f32 %v7355, %v7355
      %v7587 = vmul.f32 %v7356, %v7356
      %v7588 = vmul.f32 %v7357, %v7357
      %v7589 = vmul.f32 %v7358, %v7358
      %v7590 = vmul.f32 %v7359, %v7359
      %v7591 = vmul.f32 %v7360, %v7360
      %v7592 = vmul.f32 %v7361, %v7361
      %v7593 = vmul.f32 %v7362, %v7362
      %v7594 = vmul.f32 %v7363, %v7363
      %v7595 = vmul.f32 %v7364, %v7364
      %v7596 = vmul.f32 %v7365, %v7365
      %v7597 = vmul.f32 %v7366, %v7366
      %v7598 = vmul.f32 %v7367, %v7367
      %v7599 = vmul.f32 %v7368, %v7368
      %v7600 = vmul.f32 %v7369, %v7369
      %v7601 = vmul.f32 %v7370, %v7370
      %v7602 = vmul.f32 %v7371, %v7371
      %v7603 = vmul.f32 %v7372, %v7372
      %v7604 = vmul.f32 %v7373, %v7373
      %v7605 = vmul.f32 %v7374, %v7374
      %v7606 = vmul.f32 %v7375, %v7375
      %v7607 = vmul.f32 %v7376, %v7376
      %v7608 = vmul.f32 %v7377, %v7377
      %v7609 = vmul.f32 %v7378, %v7378
      %v7610 = vmul.f32 %v7379, %v7379
      %v7611 = vmul.f32 %v7380, %v7380
      %v7612 = vmul.f32 %v7381, %v7381
      %v7613 = vmul.f32 %v7382, %v7382
      %v7614 = vmul.f32 %v7383, %v7383
      %v7615 = vmul.f32 %v7384, %v7384
      %v7616 = vmul.f32 %v7385, %v7385
      %v7617 = vmul.f32 %v7386, %v7386
      %v7618 = vmul.f32 %v7387, %v7387
      %v7619 = vmul.f32 %v7388, %v7388
      %v7620 = vmul.f32 %v7389, %v7389
      %v7621 = vmul.f32 %v7390, %v7390
      %v7622 = vmul.f32 %v7391, %v7391
      %v7623 = vmul.f32 %v7392, %v7392
      %v7624 = vmul.f32 %v7393, %v7393
      %v7625 = vmul.f32 %v7394, %v7394
      %v7626 = vmul.f32 %v7395, %v7395
      %v7627 = vmul.f32 %v7396, %v7396
      %v7628 = vmul.f32 %v7397, %v7397
      %v7629 = vmul.f32 %v7398, %v7398
      %v7630 = vmul.f32 %v7399, %v7399
      %v7631 = vmul.f32 %v7400, %v7400
      %v7632 = vmul.f32 %v7401, %v7401
      %v7633 = vmul.f32 %v7402, %v7402
      %v7634 = vmul.f32 %v7403, %v7403
      %v7635 = vmul.f32 %v7404, %v7404
      %v7636 = vmul.f32 %v7405, %v7405
      %v7637 = vmul.f32 %v7406, %v7406
      %v7638 = vmul.f32 %v7407, %v7407
      %v7639 = vmul.f32 %v7408, %v7408
      %v7640 = vmul.f32 %v7409, %v7409
      %v7641 = vmul.f32 %v7410, %v7410
      %v7642 = vmul.f32 %v7411, %v7411
      %v7643 = vmul.f32 %v7412, %v7412
      %v7644 = vmul.f32 %v7413, %v7413
      %v7645 = vmul.f32 %v7414, %v7414
      %v7646 = vmul.f32 %v7415, %v7415
      %v7647 = vmul.f32 %v7416, %v7416
      %v7648 = vmul.f32 %v7417, %v7417
      %v7649 = vmul.f32 %v7418, %v7418
      %v7650 = vmul.f32 %v7419, %v7419
      %v7651 = vmul.f32 %v7420, %v7420
      %v7652 = vmul.f32 %v7421, %v7421
      %v7653 = vmul.f32 %v7422, %v7422
      %v7654 = vmul.f32 %v7423, %v7423
      %v7655 = vmul.f32 %v7424, %v7424
      %v7656 = vmul.f32 %v7425, %v7425
      %v7657 = vmul.f32 %v7426, %v7426
      %v7658 = vmul.f32 %v7427, %v7427
      %v7659 = vmul.f32 %v7428, %v7428
      %v7660 = vmul.f32 %v7429, %v7429
      %v7661 = vmul.f32 %v7430, %v7430
      %v7662 = vmul.f32 %v7431, %v7431
      %v7663 = vmul.f32 %v7432, %v7432
      %v7664 = vmul.f32 %v7433, %v7433
      %v7665 = vmul.f32 %v7434, %v7434
      %v7666 = vmul.f32 %v7435, %v7435
      %v7667 = vmul.f32 %v7436, %v7436
      %v7668 = vmul.f32 %v7437, %v7437
      %v7669 = vmul.f32 %v7438, %v7438
      %v7670 = vmul.f32 %v7439, %v7439
      %v7671 = vmul.f32 %v7440, %v7440
      %v7672 = vmul.f32 %v7441, %v7441
      %v7673 = vmul.f32 %v7442, %v7442
      %v7674 = vmul.f32 %v7443, %v7443
      %v7675 = vmul.f32 %v7444, %v7444
      %v7676 = vmul.f32 %v7445, %v7445
      %v7677 = vmul.f32 %v7446, %v7446
      %v7678 = vmul.f32 %v7447, %v7447
      %v7679 = vmul.f32 %v7448, %v7448
      %v7680 = vmul.f32 %v7449, %v7449
      %v7681 = vmul.f32 %v7450, %v7450
      %v7682 = vmul.f32 %v7451, %v7451
      %v7683 = vmul.f32 %v7452, %v7452
      %v7684 = vmul.f32 %v7453, %v7453
      %v7685 = vmul.f32 %v7454, %v7454
      %v7686 = vmul.f32 %v7455, %v7455
      %v7687 = vmul.f32 %v7456, %v7456
      %v7688 = vmul.f32 %v7457, %v7457
      %v7689 = vmul.f32 %v7458, %v7458
      %v7690 = vmul.f32 %v7459, %v7459
      %v7691 = vmul.f32 %v7460, %v7460
      %v7692 = vmul.f32 %v7461, %v7461
      %v7693 = vmul.f32 %v7462, %v7462
      %v7694 = vmul.f32 %v7463, %v7463
      %v7695 = vmul.f32 %v7464, %v7464
      %v7696 = vmul.f32 %v7465, %v7465
      %v7697 = vmul.f32 %v7466, %v7466
      %v7698 = vmul.f32 %v7467, %v7467
      %v7699 = vmul.f32 %v7468, %v7468
      %v7700 = vmul.f32 %v7469, %v7469
      %v7701 = vmul.f32 %v7470, %v7470
      %v7702 = vmul.f32 %v7471, %v7471
      %v7703 = vmul.f32 %v7472, %v7472
      %v7704 = vmul.f32 %v7473, %v7473
      %v7705 = vmul.f32 %v7474, %v7474
      %v7706 = vmul.f32 %v7475, %v7475
      %v7707 = vmul.f32 %v7476, %v7476
      %v7708 = vmul.f32 %v7477, %v7477
      %v7709 = vmul.f32 %v7478, %v7478
      %v7710 = vmul.f32 %v7479, %v7479
      %v7711 = vadd.f32 %v7480, %v7481
      %v7712 = vadd.f32 %v7711, %v7482
      %v7713 = vadd.f32 %v7712, %v7483
      %v7714 = vadd.f32 %v7713, %v7484
      %v7715 = vadd.f32 %v7714, %v7485
      %v7716 = vsel %vm6923, %v7486, 0.0
      %v7717 = vadd.f32 %v7715, %v7716
      %7718 = vadd.xlane.f32.xlu0 %v7717
      %v7719 = vpop.xlane.xlu0 %7718
      %v7720 = vadd.f32 %v7487, %v7488
      %v7721 = vadd.f32 %v7720, %v7489
      %v7722 = vadd.f32 %v7721, %v7490
      %v7723 = vadd.f32 %v7722, %v7491
      %v7724 = vadd.f32 %v7723, %v7492
      %v7725 = vsel %vm6923, %v7493, 0.0
      %v7726 = vadd.f32 %v7724, %v7725
      %7727 = vadd.xlane.f32.xlu0 %v7726
      %v7728 = vpop.xlane.xlu0 %7727
      %v7729 = vadd.f32 %v7494, %v7495
      %v7730 = vadd.f32 %v7729, %v7496
      %v7731 = vadd.f32 %v7730, %v7497
      %v7732 = vadd.f32 %v7731, %v7498
      %v7733 = vadd.f32 %v7732, %v7499
      %v7734 = vsel %vm6923, %v7500, 0.0
      %v7735 = vadd.f32 %v7733, %v7734
      %7736 = vadd.xlane.f32.xlu0 %v7735
      %v7737 = vpop.xlane.xlu0 %7736
      %v7738 = vadd.f32 %v7501, %v7502
      %v7739 = vadd.f32 %v7738, %v7503
      %v7740 = vadd.f32 %v7739, %v7504
      %v7741 = vadd.f32 %v7740, %v7505
      %v7742 = vadd.f32 %v7741, %v7506
      %v7743 = vsel %vm6923, %v7507, 0.0
      %v7744 = vadd.f32 %v7742, %v7743
      %7745 = vadd.xlane.f32.xlu0 %v7744
      %v7746 = vpop.xlane.xlu0 %7745
      %v7747 = vadd.f32 %v7508, %v7509
      %v7748 = vadd.f32 %v7747, %v7510
      %v7749 = vadd.f32 %v7748, %v7511
      %v7750 = vadd.f32 %v7749, %v7512
      %v7751 = vadd.f32 %v7750, %v7513
      %v7752 = vsel %vm6923, %v7514, 0.0
      %v7753 = vadd.f32 %v7751, %v7752
      %7754 = vadd.xlane.f32.xlu0 %v7753
      %v7755 = vpop.xlane.xlu0 %7754
      %v7756 = vadd.f32 %v7515, %v7516
      %v7757 = vadd.f32 %v7756, %v7517
      %v7758 = vadd.f32 %v7757, %v7518
      %v7759 = vadd.f32 %v7758, %v7519
      %v7760 = vadd.f32 %v7759, %v7520
      %v7761 = vsel %vm6923, %v7521, 0.0
      %v7762 = vadd.f32 %v7760, %v7761
      %7763 = vadd.xlane.f32.xlu0 %v7762
      %v7764 = vpop.xlane.xlu0 %7763
      %v7765 = vadd.f32 %v7522, %v7523
      %v7766 = vadd.f32 %v7765, %v7524
      %v7767 = vadd.f32 %v7766, %v7525
      %v7768 = vadd.f32 %v7767, %v7526
      %v7769 = vadd.f32 %v7768, %v7527
      %v7770 = vsel %vm6923, %v7528, 0.0
      %v7771 = vadd.f32 %v7769, %v7770
      %7772 = vadd.xlane.f32.xlu0 %v7771
      %v7773 = vpop.xlane.xlu0 %7772
      %v7774 = vadd.f32 %v7529, %v7530
      %v7775 = vadd.f32 %v7774, %v7531
      %v7776 = vadd.f32 %v7775, %v7532
      %v7777 = vadd.f32 %v7776, %v7533
      %v7778 = vadd.f32 %v7777, %v7534
      %v7779 = vsel %vm6923, %v7535, 0.0
      %v7780 = vadd.f32 %v7778, %v7779
      %7781 = vadd.xlane.f32.xlu0 %v7780
      %v7782 = vpop.xlane.xlu0 %7781
      %v7783 = vadd.f32 %v7536, %v7537
      %v7784 = vadd.f32 %v7783, %v7538
      %v7785 = vadd.f32 %v7784, %v7539
      %v7786 = vadd.f32 %v7785, %v7540
      %v7787 = vadd.f32 %v7786, %v7541
      %v7788 = vsel %vm6923, %v7542, 0.0
      %v7789 = vadd.f32 %v7787, %v7788
      %7790 = vadd.xlane.f32.xlu0 %v7789
      %v7791 = vpop.xlane.xlu0 %7790
      %v7792 = vadd.f32 %v7543, %v7544
      %v7793 = vadd.f32 %v7792, %v7545
      %v7794 = vadd.f32 %v7793, %v7546
      %v7795 = vadd.f32 %v7794, %v7547
      %v7796 = vadd.f32 %v7795, %v7548
      %v7797 = vsel %vm6923, %v7549, 0.0
      %v7798 = vadd.f32 %v7796, %v7797
      %7799 = vadd.xlane.f32.xlu0 %v7798
      %v7800 = vpop.xlane.xlu0 %7799
      %v7801 = vadd.f32 %v7550, %v7551
      %v7802 = vadd.f32 %v7801, %v7552
      %v7803 = vadd.f32 %v7802, %v7553
      %v7804 = vadd.f32 %v7803, %v7554
      %v7805 = vadd.f32 %v7804, %v7555
      %v7806 = vsel %vm6923, %v7556, 0.0
      %v7807 = vadd.f32 %v7805, %v7806
      %7808 = vadd.xlane.f32.xlu0 %v7807
      %v7809 = vpop.xlane.xlu0 %7808
      %v7810 = vadd.f32 %v7557, %v7558
      %v7811 = vadd.f32 %v7810, %v7559
      %v7812 = vadd.f32 %v7811, %v7560
      %v7813 = vadd.f32 %v7812, %v7561
      %v7814 = vadd.f32 %v7813, %v7562
      %v7815 = vsel %vm6923, %v7563, 0.0
      %v7816 = vadd.f32 %v7814, %v7815
      %7817 = vadd.xlane.f32.xlu0 %v7816
      %v7818 = vpop.xlane.xlu0 %7817
      %v7819 = vadd.f32 %v7564, %v7565
      %v7820 = vadd.f32 %v7819, %v7566
      %v7821 = vadd.f32 %v7820, %v7567
      %v7822 = vadd.f32 %v7821, %v7568
      %v7823 = vadd.f32 %v7822, %v7569
      %v7824 = vsel %vm6923, %v7570, 0.0
      %v7825 = vadd.f32 %v7823, %v7824
      %7826 = vadd.xlane.f32.xlu0 %v7825
      %v7827 = vpop.xlane.xlu0 %7826
      %v7828 = vadd.f32 %v7571, %v7572
      %v7829 = vadd.f32 %v7828, %v7573
      %v7830 = vadd.f32 %v7829, %v7574
      %v7831 = vadd.f32 %v7830, %v7575
      %v7832 = vadd.f32 %v7831, %v7576
      %v7833 = vsel %vm6923, %v7577, 0.0
      %v7834 = vadd.f32 %v7832, %v7833
      %7835 = vadd.xlane.f32.xlu0 %v7834
      %v7836 = vpop.xlane.xlu0 %7835
      %v7837 = vadd.f32 %v7578, %v7579
      %v7838 = vadd.f32 %v7837, %v7580
      %v7839 = vadd.f32 %v7838, %v7581
      %v7840 = vadd.f32 %v7839, %v7582
      %v7841 = vadd.f32 %v7840, %v7583
      %v7842 = vsel %vm6923, %v7584, 0.0
      %v7843 = vadd.f32 %v7841, %v7842
      %7844 = vadd.xlane.f32.xlu0 %v7843
      %v7845 = vpop.xlane.xlu0 %7844
      %v7846 = vadd.f32 %v7585, %v7586
      %v7847 = vadd.f32 %v7846, %v7587
      %v7848 = vadd.f32 %v7847, %v7588
      %v7849 = vadd.f32 %v7848, %v7589
      %v7850 = vadd.f32 %v7849, %v7590
      %v7851 = vsel %vm6923, %v7591, 0.0
      %v7852 = vadd.f32 %v7850, %v7851
      %7853 = vadd.xlane.f32.xlu0 %v7852
      %v7854 = vpop.xlane.xlu0 %7853
      %v7855 = vadd.f32 %v7592, %v7593
      %v7856 = vadd.f32 %v7855, %v7594
      %v7857 = vadd.f32 %v7856, %v7595
      %v7858 = vadd.f32 %v7857, %v7596
      %v7859 = vadd.f32 %v7858, %v7597
      %v7860 = vsel %vm6923, %v7598, 0.0
      %v7861 = vadd.f32 %v7859, %v7860
      %7862 = vadd.xlane.f32.xlu0 %v7861
      %v7863 = vpop.xlane.xlu0 %7862
      %v7864 = vadd.f32 %v7599, %v7600
      %v7865 = vadd.f32 %v7864, %v7601
      %v7866 = vadd.f32 %v7865, %v7602
      %v7867 = vadd.f32 %v7866, %v7603
      %v7868 = vadd.f32 %v7867, %v7604
      %v7869 = vsel %vm6923, %v7605, 0.0
      %v7870 = vadd.f32 %v7868, %v7869
      %7871 = vadd.xlane.f32.xlu0 %v7870
      %v7872 = vpop.xlane.xlu0 %7871
      %v7873 = vadd.f32 %v7606, %v7607
      %v7874 = vadd.f32 %v7873, %v7608
      %v7875 = vadd.f32 %v7874, %v7609
      %v7876 = vadd.f32 %v7875, %v7610
      %v7877 = vadd.f32 %v7876, %v7611
      %v7878 = vsel %vm6923, %v7612, 0.0
      %v7879 = vadd.f32 %v7877, %v7878
      %7880 = vadd.xlane.f32.xlu0 %v7879
      %v7881 = vpop.xlane.xlu0 %7880
      %v7882 = vadd.f32 %v7613, %v7614
      %v7883 = vadd.f32 %v7882, %v7615
      %v7884 = vadd.f32 %v7883, %v7616
      %v7885 = vadd.f32 %v7884, %v7617
      %v7886 = vadd.f32 %v7885, %v7618
      %v7887 = vsel %vm6923, %v7619, 0.0
      %v7888 = vadd.f32 %v7886, %v7887
      %7889 = vadd.xlane.f32.xlu0 %v7888
      %v7890 = vpop.xlane.xlu0 %7889
      %v7891 = vadd.f32 %v7620, %v7621
      %v7892 = vadd.f32 %v7891, %v7622
      %v7893 = vadd.f32 %v7892, %v7623
      %v7894 = vadd.f32 %v7893, %v7624
      %v7895 = vadd.f32 %v7894, %v7625
      %v7896 = vsel %vm6923, %v7626, 0.0
      %v7897 = vadd.f32 %v7895, %v7896
      %7898 = vadd.xlane.f32.xlu0 %v7897
      %v7899 = vpop.xlane.xlu0 %7898
      %v7900 = vadd.f32 %v7627, %v7628
      %v7901 = vadd.f32 %v7900, %v7629
      %v7902 = vadd.f32 %v7901, %v7630
      %v7903 = vadd.f32 %v7902, %v7631
      %v7904 = vadd.f32 %v7903, %v7632
      %v7905 = vsel %vm6923, %v7633, 0.0
      %v7906 = vadd.f32 %v7904, %v7905
      %7907 = vadd.xlane.f32.xlu0 %v7906
      %v7908 = vpop.xlane.xlu0 %7907
      %v7909 = vadd.f32 %v7634, %v7635
      %v7910 = vadd.f32 %v7909, %v7636
      %v7911 = vadd.f32 %v7910, %v7637
      %v7912 = vadd.f32 %v7911, %v7638
      %v7913 = vadd.f32 %v7912, %v7639
      %v7914 = vsel %vm6923, %v7640, 0.0
      %v7915 = vadd.f32 %v7913, %v7914
      %7916 = vadd.xlane.f32.xlu0 %v7915
      %v7917 = vpop.xlane.xlu0 %7916
      %v7918 = vadd.f32 %v7641, %v7642
      %v7919 = vadd.f32 %v7918, %v7643
      %v7920 = vadd.f32 %v7919, %v7644
      %v7921 = vadd.f32 %v7920, %v7645
      %v7922 = vadd.f32 %v7921, %v7646
      %v7923 = vsel %vm6923, %v7647, 0.0
      %v7924 = vadd.f32 %v7922, %v7923
      %7925 = vadd.xlane.f32.xlu0 %v7924
      %v7926 = vpop.xlane.xlu0 %7925
      %v7927 = vadd.f32 %v7648, %v7649
      %v7928 = vadd.f32 %v7927, %v7650
      %v7929 = vadd.f32 %v7928, %v7651
      %v7930 = vadd.f32 %v7929, %v7652
      %v7931 = vadd.f32 %v7930, %v7653
      %v7932 = vsel %vm6923, %v7654, 0.0
      %v7933 = vadd.f32 %v7931, %v7932
      %7934 = vadd.xlane.f32.xlu0 %v7933
      %v7935 = vpop.xlane.xlu0 %7934
      %v7936 = vadd.f32 %v7655, %v7656
      %v7937 = vadd.f32 %v7936, %v7657
      %v7938 = vadd.f32 %v7937, %v7658
      %v7939 = vadd.f32 %v7938, %v7659
      %v7940 = vadd.f32 %v7939, %v7660
      %v7941 = vsel %vm6923, %v7661, 0.0
      %v7942 = vadd.f32 %v7940, %v7941
      %7943 = vadd.xlane.f32.xlu0 %v7942
      %v7944 = vpop.xlane.xlu0 %7943
      %v7945 = vadd.f32 %v7662, %v7663
      %v7946 = vadd.f32 %v7945, %v7664
      %v7947 = vadd.f32 %v7946, %v7665
      %v7948 = vadd.f32 %v7947, %v7666
      %v7949 = vadd.f32 %v7948, %v7667
      %v7950 = vsel %vm6923, %v7668, 0.0
      %v7951 = vadd.f32 %v7949, %v7950
      %7952 = vadd.xlane.f32.xlu0 %v7951
      %v7953 = vpop.xlane.xlu0 %7952
      %v7954 = vadd.f32 %v7669, %v7670
      %v7955 = vadd.f32 %v7954, %v7671
      %v7956 = vadd.f32 %v7955, %v7672
      %v7957 = vadd.f32 %v7956, %v7673
      %v7958 = vadd.f32 %v7957, %v7674
      %v7959 = vsel %vm6923, %v7675, 0.0
      %v7960 = vadd.f32 %v7958, %v7959
      %7961 = vadd.xlane.f32.xlu0 %v7960
      %v7962 = vpop.xlane.xlu0 %7961
      %v7963 = vadd.f32 %v7676, %v7677
      %v7964 = vadd.f32 %v7963, %v7678
      %v7965 = vadd.f32 %v7964, %v7679
      %v7966 = vadd.f32 %v7965, %v7680
      %v7967 = vadd.f32 %v7966, %v7681
      %v7968 = vsel %vm6923, %v7682, 0.0
      %v7969 = vadd.f32 %v7967, %v7968
      %7970 = vadd.xlane.f32.xlu0 %v7969
      %v7971 = vpop.xlane.xlu0 %7970
      %v7972 = vadd.f32 %v7683, %v7684
      %v7973 = vadd.f32 %v7972, %v7685
      %v7974 = vadd.f32 %v7973, %v7686
      %v7975 = vadd.f32 %v7974, %v7687
      %v7976 = vadd.f32 %v7975, %v7688
      %v7977 = vsel %vm6923, %v7689, 0.0
      %v7978 = vadd.f32 %v7976, %v7977
      %7979 = vadd.xlane.f32.xlu0 %v7978
      %v7980 = vpop.xlane.xlu0 %7979
      %v7981 = vadd.f32 %v7690, %v7691
      %v7982 = vadd.f32 %v7981, %v7692
      %v7983 = vadd.f32 %v7982, %v7693
      %v7984 = vadd.f32 %v7983, %v7694
      %v7985 = vadd.f32 %v7984, %v7695
      %v7986 = vsel %vm6923, %v7696, 0.0
      %v7987 = vadd.f32 %v7985, %v7986
      %7988 = vadd.xlane.f32.xlu0 %v7987
      %v7989 = vpop.xlane.xlu0 %7988
      %v7990 = vadd.f32 %v7697, %v7698
      %v7991 = vadd.f32 %v7990, %v7699
      %v7992 = vadd.f32 %v7991, %v7700
      %v7993 = vadd.f32 %v7992, %v7701
      %v7994 = vadd.f32 %v7993, %v7702
      %v7995 = vsel %vm6923, %v7703, 0.0
      %v7996 = vadd.f32 %v7994, %v7995
      %7997 = vadd.xlane.f32.xlu0 %v7996
      %v7998 = vpop.xlane.xlu0 %7997
      %v7999 = vadd.f32 %v7704, %v7705
      %v8000 = vadd.f32 %v7999, %v7706
      %v8001 = vadd.f32 %v8000, %v7707
      %v8002 = vadd.f32 %v8001, %v7708
      %v8003 = vadd.f32 %v8002, %v7709
      %v8004 = vsel %vm6923, %v7710, 0.0
      %v8005 = vadd.f32 %v8003, %v8004
      %8006 = vadd.xlane.f32.xlu0 %v8005
      %v8007 = vpop.xlane.xlu0 %8006
      %v8008 = vmul.f32 %v7719, 0.0012755102
      %v8009 = vmul.f32 %v7728, 0.0012755102
      %v8010 = vmul.f32 %v7737, 0.0012755102
      %v8011 = vmul.f32 %v7746, 0.0012755102
      %v8012 = vmul.f32 %v7755, 0.0012755102
      %v8013 = vmul.f32 %v7764, 0.0012755102
      %v8014 = vmul.f32 %v7773, 0.0012755102
      %v8015 = vmul.f32 %v7782, 0.0012755102
      %v8016 = vmul.f32 %v7791, 0.0012755102
      %v8017 = vmul.f32 %v7800, 0.0012755102
      %v8018 = vmul.f32 %v7809, 0.0012755102
      %v8019 = vmul.f32 %v7818, 0.0012755102
      %v8020 = vmul.f32 %v7827, 0.0012755102
      %v8021 = vmul.f32 %v7836, 0.0012755102
      %v8022 = vmul.f32 %v7845, 0.0012755102
      %v8023 = vmul.f32 %v7854, 0.0012755102
      %v8024 = vmul.f32 %v7863, 0.0012755102
      %v8025 = vmul.f32 %v7872, 0.0012755102
      %v8026 = vmul.f32 %v7881, 0.0012755102
      %v8027 = vmul.f32 %v7890, 0.0012755102
      %v8028 = vmul.f32 %v7899, 0.0012755102
      %v8029 = vmul.f32 %v7908, 0.0012755102
      %v8030 = vmul.f32 %v7917, 0.0012755102
      %v8031 = vmul.f32 %v7926, 0.0012755102
      %v8032 = vmul.f32 %v7935, 0.0012755102
      %v8033 = vmul.f32 %v7944, 0.0012755102
      %v8034 = vmul.f32 %v7953, 0.0012755102
      %v8035 = vmul.f32 %v7962, 0.0012755102
      %v8036 = vmul.f32 %v7971, 0.0012755102
      %v8037 = vmul.f32 %v7980, 0.0012755102
      %v8038 = vmul.f32 %v7989, 0.0012755102
      %v8039 = vmul.f32 %v7998, 0.0012755102
      %v8040 = vmul.f32 %v8007, 0.0012755102
      %v8041 = vld [vmem:[%s235] sm:$0xff]
      %v8042 = vld [vmem:[%s235 + $0x8] sm:$0xff]
      %v8043 = vld [vmem:[%s235 + $0x10] sm:$0xff]
      %v8044 = vld [vmem:[%s235 + $0x18] sm:$0xff]
      %v8045 = vld [vmem:[%s235 + $0x20] sm:$0xff]
      %v8046 = vld [vmem:[%s235 + $0x28] sm:$0xff]
      %v8047 = vld [vmem:[%s235 + $0x30] sm:$0xff]
      %v8048 = vld [vmem:[%s235 + $0x38] sm:$0xff]
      %v8049 = vld [vmem:[%s235 + $0x40] sm:$0xff]
      %v8050 = vld [vmem:[%s235 + $0x48] sm:$0xff]
      %v8051 = vld [vmem:[%s235 + $0x50] sm:$0xff]
      %v8052 = vld [vmem:[%s235 + $0x58] sm:$0xff]
      %v8053 = vld [vmem:[%s235 + $0x60] sm:$0xff]
      %v8054 = vld [vmem:[%s235 + $0x68] sm:$0xff]
      %v8055 = vld [vmem:[%s235 + $0x70] sm:$0xff]
      %v8056 = vld [vmem:[%s235 + $0x78] sm:$0xff]
      %v8057 = vld [vmem:[%s235 + $0x80] sm:$0xff]
      %v8058 = vld [vmem:[%s235 + $0x88] sm:$0xff]
      %v8059 = vld [vmem:[%s235 + $0x90] sm:$0xff]
      %v8060 = vld [vmem:[%s235 + $0x98] sm:$0xff]
      %v8061 = vld [vmem:[%s235 + $0xa0] sm:$0xff]
      %v8062 = vld [vmem:[%s235 + $0xa8] sm:$0xff]
      %v8063 = vld [vmem:[%s235 + $0xb0] sm:$0xff]
      %v8064 = vld [vmem:[%s235 + $0xb8] sm:$0xff]
      %v8065 = vld [vmem:[%s235 + $0xc0] sm:$0xff]
      %v8066 = vld [vmem:[%s235 + $0xc8] sm:$0xff]
      %v8067 = vld [vmem:[%s235 + $0xd0] sm:$0xff]
      %v8068 = vld [vmem:[%s235 + $0xd8] sm:$0xff]
      %v8069 = vld [vmem:[%s235 + $0xe0] sm:$0xff]
      %v8070 = vld [vmem:[%s235 + $0xe8] sm:$0xff]
      %v8071 = vld [vmem:[%s235 + $0xf0] sm:$0xff]
      %v8072 = vld [vmem:[%s235 + $0xf8] sm:$0xff]
      %v8073 = vld [vmem:[%s235 + $0x100] sm:$0xff]
      %v8074 = vadd.f32 %v8008, 1e-05
      %v8075 = vadd.f32 %v8009, 1e-05
      %v8076 = vadd.f32 %v8010, 1e-05
      %v8077 = vadd.f32 %v8011, 1e-05
      %v8078 = vadd.f32 %v8012, 1e-05
      %v8079 = vadd.f32 %v8013, 1e-05
      %v8080 = vadd.f32 %v8014, 1e-05
      %v8081 = vadd.f32 %v8015, 1e-05
      %v8082 = vadd.f32 %v8016, 1e-05
      %v8083 = vadd.f32 %v8017, 1e-05
      %v8084 = vadd.f32 %v8018, 1e-05
      %v8085 = vadd.f32 %v8019, 1e-05
      %v8086 = vadd.f32 %v8020, 1e-05
      %v8087 = vadd.f32 %v8021, 1e-05
      %v8088 = vadd.f32 %v8022, 1e-05
      %v8089 = vadd.f32 %v8023, 1e-05
      %v8090 = vadd.f32 %v8024, 1e-05
      %v8091 = vadd.f32 %v8025, 1e-05
      %v8092 = vadd.f32 %v8026, 1e-05
      %v8093 = vadd.f32 %v8027, 1e-05
      %v8094 = vadd.f32 %v8028, 1e-05
      %v8095 = vadd.f32 %v8029, 1e-05
      %v8096 = vadd.f32 %v8030, 1e-05
      %v8097 = vadd.f32 %v8031, 1e-05
      %v8098 = vadd.f32 %v8032, 1e-05
      %v8099 = vadd.f32 %v8033, 1e-05
      %v8100 = vadd.f32 %v8034, 1e-05
      %v8101 = vadd.f32 %v8035, 1e-05
      %v8102 = vadd.f32 %v8036, 1e-05
      %v8103 = vadd.f32 %v8037, 1e-05
      %v8104 = vadd.f32 %v8038, 1e-05
      %v8105 = vadd.f32 %v8039, 1e-05
      %v8106 = vadd.f32 %v8040, 1e-05
      %v8107 = vrsqrt.pop %v8074
      %v8108 = vrsqrt.pop %v8075
      %v8109 = vrsqrt.pop %v8076
      %v8110 = vrsqrt.pop %v8077
      %v8111 = vrsqrt.pop %v8078
      %v8112 = vrsqrt.pop %v8079
      %v8113 = vrsqrt.pop %v8080
      %v8114 = vrsqrt.pop %v8081
      %v8115 = vrsqrt.pop %v8082
      %v8116 = vrsqrt.pop %v8083
      %v8117 = vrsqrt.pop %v8084
      %v8118 = vrsqrt.pop %v8085
      %v8119 = vrsqrt.pop %v8086
      %v8120 = vrsqrt.pop %v8087
      %v8121 = vrsqrt.pop %v8088
      %v8122 = vrsqrt.pop %v8089
      %v8123 = vrsqrt.pop %v8090
      %v8124 = vrsqrt.pop %v8091
      %v8125 = vrsqrt.pop %v8092
      %v8126 = vrsqrt.pop %v8093
      %v8127 = vrsqrt.pop %v8094
      %v8128 = vrsqrt.pop %v8095
      %v8129 = vrsqrt.pop %v8096
      %v8130 = vrsqrt.pop %v8097
      %v8131 = vrsqrt.pop %v8098
      %v8132 = vrsqrt.pop %v8099
      %v8133 = vrsqrt.pop %v8100
      %v8134 = vrsqrt.pop %v8101
      %v8135 = vrsqrt.pop %v8102
      %v8136 = vrsqrt.pop %v8103
      %v8137 = vrsqrt.pop %v8104
      %v8138 = vrsqrt.pop %v8105
      %v8139 = vrsqrt.pop %v8106
      %v8140 = vmul.f32 %v8041, %v8107
      %v8141 = vmul.f32 %v8042, %v8108
      %v8142 = vmul.f32 %v8043, %v8109
      %v8143 = vmul.f32 %v8044, %v8110
      %v8144 = vmul.f32 %v8045, %v8111
      %v8145 = vmul.f32 %v8046, %v8112
      %v8146 = vmul.f32 %v8047, %v8113
      %v8147 = vmul.f32 %v8048, %v8114
      %v8148 = vmul.f32 %v8049, %v8115
      %v8149 = vmul.f32 %v8050, %v8116
      %v8150 = vmul.f32 %v8051, %v8117
      %v8151 = vmul.f32 %v8052, %v8118
      %v8152 = vmul.f32 %v8053, %v8119
      %v8153 = vmul.f32 %v8054, %v8120
      %v8154 = vmul.f32 %v8055, %v8121
      %v8155 = vmul.f32 %v8056, %v8122
      %v8156 = vmul.f32 %v8057, %v8123
      %v8157 = vmul.f32 %v8058, %v8124
      %v8158 = vmul.f32 %v8059, %v8125
      %v8159 = vmul.f32 %v8060, %v8126
      %v8160 = vmul.f32 %v8061, %v8127
      %v8161 = vmul.f32 %v8062, %v8128
      %v8162 = vmul.f32 %v8063, %v8129
      %v8163 = vmul.f32 %v8064, %v8130
      %v8164 = vmul.f32 %v8065, %v8131
      %v8165 = vmul.f32 %v8066, %v8132
      %v8166 = vmul.f32 %v8067, %v8133
      %v8167 = vmul.f32 %v8068, %v8134
      %v8168 = vmul.f32 %v8069, %v8135
      %v8169 = vmul.f32 %v8070, %v8136
      %v8170 = vmul.f32 %v8071, %v8137
      %v8171 = vmul.f32 %v8072, %v8138
      %v8172 = vmul.f32 %v8073, %v8139
      %8174 = vset.pattern.permute.xlu0 0
      %8175 = vperm.xlu0 %8174, %v8140
      %v8176 = vpop.permute.xlu0 %8175
      %8179 = vset.pattern.permute.xlu0 0
      %8180 = vperm.xlu0 %8179, %v8141
      %v8181 = vpop.permute.xlu0 %8180
      %8184 = vset.pattern.permute.xlu0 0
      %8185 = vperm.xlu0 %8184, %v8142
      %v8186 = vpop.permute.xlu0 %8185
      %8189 = vset.pattern.permute.xlu0 0
      %8190 = vperm.xlu0 %8189, %v8143
      %v8191 = vpop.permute.xlu0 %8190
      %8194 = vset.pattern.permute.xlu0 0
      %8195 = vperm.xlu0 %8194, %v8144
      %v8196 = vpop.permute.xlu0 %8195
      %8199 = vset.pattern.permute.xlu0 0
      %8200 = vperm.xlu0 %8199, %v8145
      %v8201 = vpop.permute.xlu0 %8200
      %8204 = vset.pattern.permute.xlu0 0
      %8205 = vperm.xlu0 %8204, %v8146
      %v8206 = vpop.permute.xlu0 %8205
      %8209 = vset.pattern.permute.xlu0 0
      %8210 = vperm.xlu0 %8209, %v8147
      %v8211 = vpop.permute.xlu0 %8210
      %8214 = vset.pattern.permute.xlu0 0
      %8215 = vperm.xlu0 %8214, %v8148
      %v8216 = vpop.permute.xlu0 %8215
      %8219 = vset.pattern.permute.xlu0 0
      %8220 = vperm.xlu0 %8219, %v8149
      %v8221 = vpop.permute.xlu0 %8220
      %8224 = vset.pattern.permute.xlu0 0
      %8225 = vperm.xlu0 %8224, %v8150
      %v8226 = vpop.permute.xlu0 %8225
      %8229 = vset.pattern.permute.xlu0 0
      %8230 = vperm.xlu0 %8229, %v8151
      %v8231 = vpop.permute.xlu0 %8230
      %8234 = vset.pattern.permute.xlu0 0
      %8235 = vperm.xlu0 %8234, %v8152
      %v8236 = vpop.permute.xlu0 %8235
      %8239 = vset.pattern.permute.xlu0 0
      %8240 = vperm.xlu0 %8239, %v8153
      %v8241 = vpop.permute.xlu0 %8240
      %8244 = vset.pattern.permute.xlu0 0
      %8245 = vperm.xlu0 %8244, %v8154
      %v8246 = vpop.permute.xlu0 %8245
      %8249 = vset.pattern.permute.xlu0 0
      %8250 = vperm.xlu0 %8249, %v8155
      %v8251 = vpop.permute.xlu0 %8250
      %8254 = vset.pattern.permute.xlu0 0
      %8255 = vperm.xlu0 %8254, %v8156
      %v8256 = vpop.permute.xlu0 %8255
      %8259 = vset.pattern.permute.xlu0 0
      %8260 = vperm.xlu0 %8259, %v8157
      %v8261 = vpop.permute.xlu0 %8260
      %8264 = vset.pattern.permute.xlu0 0
      %8265 = vperm.xlu0 %8264, %v8158
      %v8266 = vpop.permute.xlu0 %8265
      %8269 = vset.pattern.permute.xlu0 0
      %8270 = vperm.xlu0 %8269, %v8159
      %v8271 = vpop.permute.xlu0 %8270
      %8274 = vset.pattern.permute.xlu0 0
      %8275 = vperm.xlu0 %8274, %v8160
      %v8276 = vpop.permute.xlu0 %8275
      %8279 = vset.pattern.permute.xlu0 0
      %8280 = vperm.xlu0 %8279, %v8161
      %v8281 = vpop.permute.xlu0 %8280
      %8284 = vset.pattern.permute.xlu0 0
      %8285 = vperm.xlu0 %8284, %v8162
      %v8286 = vpop.permute.xlu0 %8285
      %8289 = vset.pattern.permute.xlu0 0
      %8290 = vperm.xlu0 %8289, %v8163
      %v8291 = vpop.permute.xlu0 %8290
      %8294 = vset.pattern.permute.xlu0 0
      %8295 = vperm.xlu0 %8294, %v8164
      %v8296 = vpop.permute.xlu0 %8295
      %8299 = vset.pattern.permute.xlu0 0
      %8300 = vperm.xlu0 %8299, %v8165
      %v8301 = vpop.permute.xlu0 %8300
      %8304 = vset.pattern.permute.xlu0 0
      %8305 = vperm.xlu0 %8304, %v8166
      %v8306 = vpop.permute.xlu0 %8305
      %8309 = vset.pattern.permute.xlu0 0
      %8310 = vperm.xlu0 %8309, %v8167
      %v8311 = vpop.permute.xlu0 %8310
      %8314 = vset.pattern.permute.xlu0 0
      %8315 = vperm.xlu0 %8314, %v8168
      %v8316 = vpop.permute.xlu0 %8315
      %8319 = vset.pattern.permute.xlu0 0
      %8320 = vperm.xlu0 %8319, %v8169
      %v8321 = vpop.permute.xlu0 %8320
      %8324 = vset.pattern.permute.xlu0 0
      %8325 = vperm.xlu0 %8324, %v8170
      %v8326 = vpop.permute.xlu0 %8325
      %8329 = vset.pattern.permute.xlu0 0
      %8330 = vperm.xlu0 %8329, %v8171
      %v8331 = vpop.permute.xlu0 %8330
      %8334 = vset.pattern.permute.xlu0 0
      %8335 = vperm.xlu0 %8334, %v8172
      %v8336 = vpop.permute.xlu0 %8335
      %v8338 = vmul.f32 %v7249, %v8176
      %v8339 = vmul.f32 %v7250, %v8176
      %v8340 = vmul.f32 %v7251, %v8176
      %v8341 = vmul.f32 %v7252, %v8176
      %v8342 = vmul.f32 %v7253, %v8176
      %v8343 = vmul.f32 %v7254, %v8176
      %v8344 = vmul.f32 %v7255, %v8176
      %v8345 = vmul.f32 %v7256, %v8181
      %v8346 = vmul.f32 %v7257, %v8181
      %v8347 = vmul.f32 %v7258, %v8181
      %v8348 = vmul.f32 %v7259, %v8181
      %v8349 = vmul.f32 %v7260, %v8181
      %v8350 = vmul.f32 %v7261, %v8181
      %v8351 = vmul.f32 %v7262, %v8181
      %v8352 = vmul.f32 %v7263, %v8186
      %v8353 = vmul.f32 %v7264, %v8186
      %v8354 = vmul.f32 %v7265, %v8186
      %v8355 = vmul.f32 %v7266, %v8186
      %v8356 = vmul.f32 %v7267, %v8186
      %v8357 = vmul.f32 %v7268, %v8186
      %v8358 = vmul.f32 %v7269, %v8186
      %v8359 = vmul.f32 %v7270, %v8191
      %v8360 = vmul.f32 %v7271, %v8191
      %v8361 = vmul.f32 %v7272, %v8191
      %v8362 = vmul.f32 %v7273, %v8191
      %v8363 = vmul.f32 %v7274, %v8191
      %v8364 = vmul.f32 %v7275, %v8191
      %v8365 = vmul.f32 %v7276, %v8191
      %v8366 = vmul.f32 %v7277, %v8196
      %v8367 = vmul.f32 %v7278, %v8196
      %v8368 = vmul.f32 %v7279, %v8196
      %v8369 = vmul.f32 %v7280, %v8196
      %v8370 = vmul.f32 %v7281, %v8196
      %v8371 = vmul.f32 %v7282, %v8196
      %v8372 = vmul.f32 %v7283, %v8196
      %v8373 = vmul.f32 %v7284, %v8201
      %v8374 = vmul.f32 %v7285, %v8201
      %v8375 = vmul.f32 %v7286, %v8201
      %v8376 = vmul.f32 %v7287, %v8201
      %v8377 = vmul.f32 %v7288, %v8201
      %v8378 = vmul.f32 %v7289, %v8201
      %v8379 = vmul.f32 %v7290, %v8201
      %v8380 = vmul.f32 %v7291, %v8206
      %v8381 = vmul.f32 %v7292, %v8206
      %v8382 = vmul.f32 %v7293, %v8206
      %v8383 = vmul.f32 %v7294, %v8206
      %v8384 = vmul.f32 %v7295, %v8206
      %v8385 = vmul.f32 %v7296, %v8206
      %v8386 = vmul.f32 %v7297, %v8206
      %v8387 = vmul.f32 %v7298, %v8211
      %v8388 = vmul.f32 %v7299, %v8211
      %v8389 = vmul.f32 %v7300, %v8211
      %v8390 = vmul.f32 %v7301, %v8211
      %v8391 = vmul.f32 %v7302, %v8211
      %v8392 = vmul.f32 %v7303, %v8211
      %v8393 = vmul.f32 %v7304, %v8211
      %v8394 = vmul.f32 %v7305, %v8216
      %v8395 = vmul.f32 %v7306, %v8216
      %v8396 = vmul.f32 %v7307, %v8216
      %v8397 = vmul.f32 %v7308, %v8216
      %v8398 = vmul.f32 %v7309, %v8216
      %v8399 = vmul.f32 %v7310, %v8216
      %v8400 = vmul.f32 %v7311, %v8216
      %v8401 = vmul.f32 %v7312, %v8221
      %v8402 = vmul.f32 %v7313, %v8221
      %v8403 = vmul.f32 %v7314, %v8221
      %v8404 = vmul.f32 %v7315, %v8221
      %v8405 = vmul.f32 %v7316, %v8221
      %v8406 = vmul.f32 %v7317, %v8221
      %v8407 = vmul.f32 %v7318, %v8221
      %v8408 = vmul.f32 %v7319, %v8226
      %v8409 = vmul.f32 %v7320, %v8226
      %v8410 = vmul.f32 %v7321, %v8226
      %v8411 = vmul.f32 %v7322, %v8226
      %v8412 = vmul.f32 %v7323, %v8226
      %v8413 = vmul.f32 %v7324, %v8226
      %v8414 = vmul.f32 %v7325, %v8226
      %v8415 = vmul.f32 %v7326, %v8231
      %v8416 = vmul.f32 %v7327, %v8231
      %v8417 = vmul.f32 %v7328, %v8231
      %v8418 = vmul.f32 %v7329, %v8231
      %v8419 = vmul.f32 %v7330, %v8231
      %v8420 = vmul.f32 %v7331, %v8231
      %v8421 = vmul.f32 %v7332, %v8231
      %v8422 = vmul.f32 %v7333, %v8236
      %v8423 = vmul.f32 %v7334, %v8236
      %v8424 = vmul.f32 %v7335, %v8236
      %v8425 = vmul.f32 %v7336, %v8236
      %v8426 = vmul.f32 %v7337, %v8236
      %v8427 = vmul.f32 %v7338, %v8236
      %v8428 = vmul.f32 %v7339, %v8236
      %v8429 = vmul.f32 %v7340, %v8241
      %v8430 = vmul.f32 %v7341, %v8241
      %v8431 = vmul.f32 %v7342, %v8241
      %v8432 = vmul.f32 %v7343, %v8241
      %v8433 = vmul.f32 %v7344, %v8241
      %v8434 = vmul.f32 %v7345, %v8241
      %v8435 = vmul.f32 %v7346, %v8241
      %v8436 = vmul.f32 %v7347, %v8246
      %v8437 = vmul.f32 %v7348, %v8246
      %v8438 = vmul.f32 %v7349, %v8246
      %v8439 = vmul.f32 %v7350, %v8246
      %v8440 = vmul.f32 %v7351, %v8246
      %v8441 = vmul.f32 %v7352, %v8246
      %v8442 = vmul.f32 %v7353, %v8246
      %v8443 = vmul.f32 %v7354, %v8251
      %v8444 = vmul.f32 %v7355, %v8251
      %v8445 = vmul.f32 %v7356, %v8251
      %v8446 = vmul.f32 %v7357, %v8251
      %v8447 = vmul.f32 %v7358, %v8251
      %v8448 = vmul.f32 %v7359, %v8251
      %v8449 = vmul.f32 %v7360, %v8251
      %v8450 = vmul.f32 %v7361, %v8256
      %v8451 = vmul.f32 %v7362, %v8256
      %v8452 = vmul.f32 %v7363, %v8256
      %v8453 = vmul.f32 %v7364, %v8256
      %v8454 = vmul.f32 %v7365, %v8256
      %v8455 = vmul.f32 %v7366, %v8256
      %v8456 = vmul.f32 %v7367, %v8256
      %v8457 = vmul.f32 %v7368, %v8261
      %v8458 = vmul.f32 %v7369, %v8261
      %v8459 = vmul.f32 %v7370, %v8261
      %v8460 = vmul.f32 %v7371, %v8261
      %v8461 = vmul.f32 %v7372, %v8261
      %v8462 = vmul.f32 %v7373, %v8261
      %v8463 = vmul.f32 %v7374, %v8261
      %v8464 = vmul.f32 %v7375, %v8266
      %v8465 = vmul.f32 %v7376, %v8266
      %v8466 = vmul.f32 %v7377, %v8266
      %v8467 = vmul.f32 %v7378, %v8266
      %v8468 = vmul.f32 %v7379, %v8266
      %v8469 = vmul.f32 %v7380, %v8266
      %v8470 = vmul.f32 %v7381, %v8266
      %v8471 = vmul.f32 %v7382, %v8271
      %v8472 = vmul.f32 %v7383, %v8271
      %v8473 = vmul.f32 %v7384, %v8271
      %v8474 = vmul.f32 %v7385, %v8271
      %v8475 = vmul.f32 %v7386, %v8271
      %v8476 = vmul.f32 %v7387, %v8271
      %v8477 = vmul.f32 %v7388, %v8271
      %v8478 = vmul.f32 %v7389, %v8276
      %v8479 = vmul.f32 %v7390, %v8276
      %v8480 = vmul.f32 %v7391, %v8276
      %v8481 = vmul.f32 %v7392, %v8276
      %v8482 = vmul.f32 %v7393, %v8276
      %v8483 = vmul.f32 %v7394, %v8276
      %v8484 = vmul.f32 %v7395, %v8276
      %v8485 = vmul.f32 %v7396, %v8281
      %v8486 = vmul.f32 %v7397, %v8281
      %v8487 = vmul.f32 %v7398, %v8281
      %v8488 = vmul.f32 %v7399, %v8281
      %v8489 = vmul.f32 %v7400, %v8281
      %v8490 = vmul.f32 %v7401, %v8281
      %v8491 = vmul.f32 %v7402, %v8281
      %v8492 = vmul.f32 %v7403, %v8286
      %v8493 = vmul.f32 %v7404, %v8286
      %v8494 = vmul.f32 %v7405, %v8286
      %v8495 = vmul.f32 %v7406, %v8286
      %v8496 = vmul.f32 %v7407, %v8286
      %v8497 = vmul.f32 %v7408, %v8286
      %v8498 = vmul.f32 %v7409, %v8286
      %v8499 = vmul.f32 %v7410, %v8291
      %v8500 = vmul.f32 %v7411, %v8291
      %v8501 = vmul.f32 %v7412, %v8291
      %v8502 = vmul.f32 %v7413, %v8291
      %v8503 = vmul.f32 %v7414, %v8291
      %v8504 = vmul.f32 %v7415, %v8291
      %v8505 = vmul.f32 %v7416, %v8291
      %v8506 = vmul.f32 %v7417, %v8296
      %v8507 = vmul.f32 %v7418, %v8296
      %v8508 = vmul.f32 %v7419, %v8296
      %v8509 = vmul.f32 %v7420, %v8296
      %v8510 = vmul.f32 %v7421, %v8296
      %v8511 = vmul.f32 %v7422, %v8296
      %v8512 = vmul.f32 %v7423, %v8296
      %v8513 = vmul.f32 %v7424, %v8301
      %v8514 = vmul.f32 %v7425, %v8301
      %v8515 = vmul.f32 %v7426, %v8301
      %v8516 = vmul.f32 %v7427, %v8301
      %v8517 = vmul.f32 %v7428, %v8301
      %v8518 = vmul.f32 %v7429, %v8301
      %v8519 = vmul.f32 %v7430, %v8301
      %v8520 = vmul.f32 %v7431, %v8306
      %v8521 = vmul.f32 %v7432, %v8306
      %v8522 = vmul.f32 %v7433, %v8306
      %v8523 = vmul.f32 %v7434, %v8306
      %v8524 = vmul.f32 %v7435, %v8306
      %v8525 = vmul.f32 %v7436, %v8306
      %v8526 = vmul.f32 %v7437, %v8306
      %v8527 = vmul.f32 %v7438, %v8311
      %v8528 = vmul.f32 %v7439, %v8311
      %v8529 = vmul.f32 %v7440, %v8311
      %v8530 = vmul.f32 %v7441, %v8311
      %v8531 = vmul.f32 %v7442, %v8311
      %v8532 = vmul.f32 %v7443, %v8311
      %v8533 = vmul.f32 %v7444, %v8311
      %v8534 = vmul.f32 %v7445, %v8316
      %v8535 = vmul.f32 %v7446, %v8316
      %v8536 = vmul.f32 %v7447, %v8316
      %v8537 = vmul.f32 %v7448, %v8316
      %v8538 = vmul.f32 %v7449, %v8316
      %v8539 = vmul.f32 %v7450, %v8316
      %v8540 = vmul.f32 %v7451, %v8316
      %v8541 = vmul.f32 %v7452, %v8321
      %v8542 = vmul.f32 %v7453, %v8321
      %v8543 = vmul.f32 %v7454, %v8321
      %v8544 = vmul.f32 %v7455, %v8321
      %v8545 = vmul.f32 %v7456, %v8321
      %v8546 = vmul.f32 %v7457, %v8321
      %v8547 = vmul.f32 %v7458, %v8321
      %v8548 = vmul.f32 %v7459, %v8326
      %v8549 = vmul.f32 %v7460, %v8326
      %v8550 = vmul.f32 %v7461, %v8326
      %v8551 = vmul.f32 %v7462, %v8326
      %v8552 = vmul.f32 %v7463, %v8326
      %v8553 = vmul.f32 %v7464, %v8326
      %v8554 = vmul.f32 %v7465, %v8326
      %v8555 = vmul.f32 %v7466, %v8331
      %v8556 = vmul.f32 %v7467, %v8331
      %v8557 = vmul.f32 %v7468, %v8331
      %v8558 = vmul.f32 %v7469, %v8331
      %v8559 = vmul.f32 %v7470, %v8331
      %v8560 = vmul.f32 %v7471, %v8331
      %v8561 = vmul.f32 %v7472, %v8331
      %v8562 = vmul.f32 %v7473, %v8336
      %v8563 = vmul.f32 %v7474, %v8336
      %v8564 = vmul.f32 %v7475, %v8336
      %v8565 = vmul.f32 %v7476, %v8336
      %v8566 = vmul.f32 %v7477, %v8336
      %v8567 = vmul.f32 %v7478, %v8336
      %v8568 = vmul.f32 %v7479, %v8336
      %v8569 = vld [vmem:[%s241] sm:$0xff]
      %v8570 = vld [vmem:[%s241 + $0x8] sm:$0xff]
      %v8571 = vld [vmem:[%s241 + $0x10] sm:$0xff]
      %v8572 = vld [vmem:[%s241 + $0x18] sm:$0xff]
      %v8573 = vld [vmem:[%s241 + $0x20] sm:$0xff]
      %v8574 = vld [vmem:[%s241 + $0x28] sm:$0xff]
      %v8575 = vld [vmem:[%s241 + $0x30] sm:$0xff]
      %v8576 = vld [vmem:[%s241 + $0x38] sm:$0xff]
      %v8577 = vld [vmem:[%s241 + $0x40] sm:$0xff]
      %v8578 = vld [vmem:[%s241 + $0x48] sm:$0xff]
      %v8579 = vld [vmem:[%s241 + $0x50] sm:$0xff]
      %v8580 = vld [vmem:[%s241 + $0x58] sm:$0xff]
      %v8581 = vld [vmem:[%s241 + $0x60] sm:$0xff]
      %v8582 = vld [vmem:[%s241 + $0x68] sm:$0xff]
      %v8583 = vld [vmem:[%s241 + $0x70] sm:$0xff]
      %v8584 = vld [vmem:[%s241 + $0x78] sm:$0xff]
      %v8585 = vld [vmem:[%s241 + $0x80] sm:$0xff]
      %v8586 = vld [vmem:[%s241 + $0x88] sm:$0xff]
      %v8587 = vld [vmem:[%s241 + $0x90] sm:$0xff]
      %v8588 = vld [vmem:[%s241 + $0x98] sm:$0xff]
      %v8589 = vld [vmem:[%s241 + $0xa0] sm:$0xff]
      %v8590 = vld [vmem:[%s241 + $0xa8] sm:$0xff]
      %v8591 = vld [vmem:[%s241 + $0xb0] sm:$0xff]
      %v8592 = vld [vmem:[%s241 + $0xb8] sm:$0xff]
      %v8593 = vld [vmem:[%s241 + $0xc0] sm:$0xff]
      %v8594 = vld [vmem:[%s241 + $0xc8] sm:$0xff]
      %v8595 = vld [vmem:[%s241 + $0xd0] sm:$0xff]
      %v8596 = vld [vmem:[%s241 + $0xd8] sm:$0xff]
      %v8597 = vld [vmem:[%s241 + $0xe0] sm:$0xff]
      %v8598 = vld [vmem:[%s241 + $0xe8] sm:$0xff]
      %v8599 = vld [vmem:[%s241 + $0xf0] sm:$0xff]
      %v8600 = vld [vmem:[%s241 + $0xf8] sm:$0xff]
      %v8601 = vld [vmem:[%s241 + $0x100] sm:$0xff]
      %8603 = vset.pattern.permute.xlu0 0
      %8604 = vperm.xlu0 %8603, %v8569
      %v8605 = vpop.permute.xlu0 %8604
      %8608 = vset.pattern.permute.xlu0 0
      %8609 = vperm.xlu0 %8608, %v8570
      %v8610 = vpop.permute.xlu0 %8609
      %8613 = vset.pattern.permute.xlu0 0
      %8614 = vperm.xlu0 %8613, %v8571
      %v8615 = vpop.permute.xlu0 %8614
      %8618 = vset.pattern.permute.xlu0 0
      %8619 = vperm.xlu0 %8618, %v8572
      %v8620 = vpop.permute.xlu0 %8619
      %8623 = vset.pattern.permute.xlu0 0
      %8624 = vperm.xlu0 %8623, %v8573
      %v8625 = vpop.permute.xlu0 %8624
      %8628 = vset.pattern.permute.xlu0 0
      %8629 = vperm.xlu0 %8628, %v8574
      %v8630 = vpop.permute.xlu0 %8629
      %8633 = vset.pattern.permute.xlu0 0
      %8634 = vperm.xlu0 %8633, %v8575
      %v8635 = vpop.permute.xlu0 %8634
      %8638 = vset.pattern.permute.xlu0 0
      %8639 = vperm.xlu0 %8638, %v8576
      %v8640 = vpop.permute.xlu0 %8639
      %8643 = vset.pattern.permute.xlu0 0
      %8644 = vperm.xlu0 %8643, %v8577
      %v8645 = vpop.permute.xlu0 %8644
      %8648 = vset.pattern.permute.xlu0 0
      %8649 = vperm.xlu0 %8648, %v8578
      %v8650 = vpop.permute.xlu0 %8649
      %8653 = vset.pattern.permute.xlu0 0
      %8654 = vperm.xlu0 %8653, %v8579
      %v8655 = vpop.permute.xlu0 %8654
      %8658 = vset.pattern.permute.xlu0 0
      %8659 = vperm.xlu0 %8658, %v8580
      %v8660 = vpop.permute.xlu0 %8659
      %8663 = vset.pattern.permute.xlu0 0
      %8664 = vperm.xlu0 %8663, %v8581
      %v8665 = vpop.permute.xlu0 %8664
      %8668 = vset.pattern.permute.xlu0 0
      %8669 = vperm.xlu0 %8668, %v8582
      %v8670 = vpop.permute.xlu0 %8669
      %8673 = vset.pattern.permute.xlu0 0
      %8674 = vperm.xlu0 %8673, %v8583
      %v8675 = vpop.permute.xlu0 %8674
      %8678 = vset.pattern.permute.xlu0 0
      %8679 = vperm.xlu0 %8678, %v8584
      %v8680 = vpop.permute.xlu0 %8679
      %8683 = vset.pattern.permute.xlu0 0
      %8684 = vperm.xlu0 %8683, %v8585
      %v8685 = vpop.permute.xlu0 %8684
      %8688 = vset.pattern.permute.xlu0 0
      %8689 = vperm.xlu0 %8688, %v8586
      %v8690 = vpop.permute.xlu0 %8689
      %8693 = vset.pattern.permute.xlu0 0
      %8694 = vperm.xlu0 %8693, %v8587
      %v8695 = vpop.permute.xlu0 %8694
      %8698 = vset.pattern.permute.xlu0 0
      %8699 = vperm.xlu0 %8698, %v8588
      %v8700 = vpop.permute.xlu0 %8699
      %8703 = vset.pattern.permute.xlu0 0
      %8704 = vperm.xlu0 %8703, %v8589
      %v8705 = vpop.permute.xlu0 %8704
      %8708 = vset.pattern.permute.xlu0 0
      %8709 = vperm.xlu0 %8708, %v8590
      %v8710 = vpop.permute.xlu0 %8709
      %8713 = vset.pattern.permute.xlu0 0
      %8714 = vperm.xlu0 %8713, %v8591
      %v8715 = vpop.permute.xlu0 %8714
      %8718 = vset.pattern.permute.xlu0 0
      %8719 = vperm.xlu0 %8718, %v8592
      %v8720 = vpop.permute.xlu0 %8719
      %8723 = vset.pattern.permute.xlu0 0
      %8724 = vperm.xlu0 %8723, %v8593
      %v8725 = vpop.permute.xlu0 %8724
      %8728 = vset.pattern.permute.xlu0 0
      %8729 = vperm.xlu0 %8728, %v8594
      %v8730 = vpop.permute.xlu0 %8729
      %8733 = vset.pattern.permute.xlu0 0
      %8734 = vperm.xlu0 %8733, %v8595
      %v8735 = vpop.permute.xlu0 %8734
      %8738 = vset.pattern.permute.xlu0 0
      %8739 = vperm.xlu0 %8738, %v8596
      %v8740 = vpop.permute.xlu0 %8739
      %8743 = vset.pattern.permute.xlu0 0
      %8744 = vperm.xlu0 %8743, %v8597
      %v8745 = vpop.permute.xlu0 %8744
      %8748 = vset.pattern.permute.xlu0 0
      %8749 = vperm.xlu0 %8748, %v8598
      %v8750 = vpop.permute.xlu0 %8749
      %8753 = vset.pattern.permute.xlu0 0
      %8754 = vperm.xlu0 %8753, %v8599
      %v8755 = vpop.permute.xlu0 %8754
      %8758 = vset.pattern.permute.xlu0 0
      %8759 = vperm.xlu0 %8758, %v8600
      %v8760 = vpop.permute.xlu0 %8759
      %8763 = vset.pattern.permute.xlu0 0
      %8764 = vperm.xlu0 %8763, %v8601
      %v8765 = vpop.permute.xlu0 %8764
      %v8767 = vadd.f32 %v8338, %v8605
      %v8768 = vadd.f32 %v8339, %v8605
      %v8769 = vadd.f32 %v8340, %v8605
      %v8770 = vadd.f32 %v8341, %v8605
      %v8771 = vadd.f32 %v8342, %v8605
      %v8772 = vadd.f32 %v8343, %v8605
      %v8773 = vadd.f32 %v8344, %v8605
      %v8774 = vadd.f32 %v8345, %v8610
      %v8775 = vadd.f32 %v8346, %v8610
      %v8776 = vadd.f32 %v8347, %v8610
      %v8777 = vadd.f32 %v8348, %v8610
      %v8778 = vadd.f32 %v8349, %v8610
      %v8779 = vadd.f32 %v8350, %v8610
      %v8780 = vadd.f32 %v8351, %v8610
      %v8781 = vadd.f32 %v8352, %v8615
      %v8782 = vadd.f32 %v8353, %v8615
      %v8783 = vadd.f32 %v8354, %v8615
      %v8784 = vadd.f32 %v8355, %v8615
      %v8785 = vadd.f32 %v8356, %v8615
      %v8786 = vadd.f32 %v8357, %v8615
      %v8787 = vadd.f32 %v8358, %v8615
      %v8788 = vadd.f32 %v8359, %v8620
      %v8789 = vadd.f32 %v8360, %v8620
      %v8790 = vadd.f32 %v8361, %v8620
      %v8791 = vadd.f32 %v8362, %v8620
      %v8792 = vadd.f32 %v8363, %v8620
      %v8793 = vadd.f32 %v8364, %v8620
      %v8794 = vadd.f32 %v8365, %v8620
      %v8795 = vadd.f32 %v8366, %v8625
      %v8796 = vadd.f32 %v8367, %v8625
      %v8797 = vadd.f32 %v8368, %v8625
      %v8798 = vadd.f32 %v8369, %v8625
      %v8799 = vadd.f32 %v8370, %v8625
      %v8800 = vadd.f32 %v8371, %v8625
      %v8801 = vadd.f32 %v8372, %v8625
      %v8802 = vadd.f32 %v8373, %v8630
      %v8803 = vadd.f32 %v8374, %v8630
      %v8804 = vadd.f32 %v8375, %v8630
      %v8805 = vadd.f32 %v8376, %v8630
      %v8806 = vadd.f32 %v8377, %v8630
      %v8807 = vadd.f32 %v8378, %v8630
      %v8808 = vadd.f32 %v8379, %v8630
      %v8809 = vadd.f32 %v8380, %v8635
      %v8810 = vadd.f32 %v8381, %v8635
      %v8811 = vadd.f32 %v8382, %v8635
      %v8812 = vadd.f32 %v8383, %v8635
      %v8813 = vadd.f32 %v8384, %v8635
      %v8814 = vadd.f32 %v8385, %v8635
      %v8815 = vadd.f32 %v8386, %v8635
      %v8816 = vadd.f32 %v8387, %v8640
      %v8817 = vadd.f32 %v8388, %v8640
      %v8818 = vadd.f32 %v8389, %v8640
      %v8819 = vadd.f32 %v8390, %v8640
      %v8820 = vadd.f32 %v8391, %v8640
      %v8821 = vadd.f32 %v8392, %v8640
      %v8822 = vadd.f32 %v8393, %v8640
      %v8823 = vadd.f32 %v8394, %v8645
      %v8824 = vadd.f32 %v8395, %v8645
      %v8825 = vadd.f32 %v8396, %v8645
      %v8826 = vadd.f32 %v8397, %v8645
      %v8827 = vadd.f32 %v8398, %v8645
      %v8828 = vadd.f32 %v8399, %v8645
      %v8829 = vadd.f32 %v8400, %v8645
      %v8830 = vadd.f32 %v8401, %v8650
      %v8831 = vadd.f32 %v8402, %v8650
      %v8832 = vadd.f32 %v8403, %v8650
      %v8833 = vadd.f32 %v8404, %v8650
      %v8834 = vadd.f32 %v8405, %v8650
      %v8835 = vadd.f32 %v8406, %v8650
      %v8836 = vadd.f32 %v8407, %v8650
      %v8837 = vadd.f32 %v8408, %v8655
      %v8838 = vadd.f32 %v8409, %v8655
      %v8839 = vadd.f32 %v8410, %v8655
      %v8840 = vadd.f32 %v8411, %v8655
      %v8841 = vadd.f32 %v8412, %v8655
      %v8842 = vadd.f32 %v8413, %v8655
      %v8843 = vadd.f32 %v8414, %v8655
      %v8844 = vadd.f32 %v8415, %v8660
      %v8845 = vadd.f32 %v8416, %v8660
      %v8846 = vadd.f32 %v8417, %v8660
      %v8847 = vadd.f32 %v8418, %v8660
      %v8848 = vadd.f32 %v8419, %v8660
      %v8849 = vadd.f32 %v8420, %v8660
      %v8850 = vadd.f32 %v8421, %v8660
      %v8851 = vadd.f32 %v8422, %v8665
      %v8852 = vadd.f32 %v8423, %v8665
      %v8853 = vadd.f32 %v8424, %v8665
      %v8854 = vadd.f32 %v8425, %v8665
      %v8855 = vadd.f32 %v8426, %v8665
      %v8856 = vadd.f32 %v8427, %v8665
      %v8857 = vadd.f32 %v8428, %v8665
      %v8858 = vadd.f32 %v8429, %v8670
      %v8859 = vadd.f32 %v8430, %v8670
      %v8860 = vadd.f32 %v8431, %v8670
      %v8861 = vadd.f32 %v8432, %v8670
      %v8862 = vadd.f32 %v8433, %v8670
      %v8863 = vadd.f32 %v8434, %v8670
      %v8864 = vadd.f32 %v8435, %v8670
      %v8865 = vadd.f32 %v8436, %v8675
      %v8866 = vadd.f32 %v8437, %v8675
      %v8867 = vadd.f32 %v8438, %v8675
      %v8868 = vadd.f32 %v8439, %v8675
      %v8869 = vadd.f32 %v8440, %v8675
      %v8870 = vadd.f32 %v8441, %v8675
      %v8871 = vadd.f32 %v8442, %v8675
      %v8872 = vadd.f32 %v8443, %v8680
      %v8873 = vadd.f32 %v8444, %v8680
      %v8874 = vadd.f32 %v8445, %v8680
      %v8875 = vadd.f32 %v8446, %v8680
      %v8876 = vadd.f32 %v8447, %v8680
      %v8877 = vadd.f32 %v8448, %v8680
      %v8878 = vadd.f32 %v8449, %v8680
      %v8879 = vadd.f32 %v8450, %v8685
      %v8880 = vadd.f32 %v8451, %v8685
      %v8881 = vadd.f32 %v8452, %v8685
      %v8882 = vadd.f32 %v8453, %v8685
      %v8883 = vadd.f32 %v8454, %v8685
      %v8884 = vadd.f32 %v8455, %v8685
      %v8885 = vadd.f32 %v8456, %v8685
      %v8886 = vadd.f32 %v8457, %v8690
      %v8887 = vadd.f32 %v8458, %v8690
      %v8888 = vadd.f32 %v8459, %v8690
      %v8889 = vadd.f32 %v8460, %v8690
      %v8890 = vadd.f32 %v8461, %v8690
      %v8891 = vadd.f32 %v8462, %v8690
      %v8892 = vadd.f32 %v8463, %v8690
      %v8893 = vadd.f32 %v8464, %v8695
      %v8894 = vadd.f32 %v8465, %v8695
      %v8895 = vadd.f32 %v8466, %v8695
      %v8896 = vadd.f32 %v8467, %v8695
      %v8897 = vadd.f32 %v8468, %v8695
      %v8898 = vadd.f32 %v8469, %v8695
      %v8899 = vadd.f32 %v8470, %v8695
      %v8900 = vadd.f32 %v8471, %v8700
      %v8901 = vadd.f32 %v8472, %v8700
      %v8902 = vadd.f32 %v8473, %v8700
      %v8903 = vadd.f32 %v8474, %v8700
      %v8904 = vadd.f32 %v8475, %v8700
      %v8905 = vadd.f32 %v8476, %v8700
      %v8906 = vadd.f32 %v8477, %v8700
      %v8907 = vadd.f32 %v8478, %v8705
      %v8908 = vadd.f32 %v8479, %v8705
      %v8909 = vadd.f32 %v8480, %v8705
      %v8910 = vadd.f32 %v8481, %v8705
      %v8911 = vadd.f32 %v8482, %v8705
      %v8912 = vadd.f32 %v8483, %v8705
      %v8913 = vadd.f32 %v8484, %v8705
      %v8914 = vadd.f32 %v8485, %v8710
      %v8915 = vadd.f32 %v8486, %v8710
      %v8916 = vadd.f32 %v8487, %v8710
      %v8917 = vadd.f32 %v8488, %v8710
      %v8918 = vadd.f32 %v8489, %v8710
      %v8919 = vadd.f32 %v8490, %v8710
      %v8920 = vadd.f32 %v8491, %v8710
      %v8921 = vadd.f32 %v8492, %v8715
      %v8922 = vadd.f32 %v8493, %v8715
      %v8923 = vadd.f32 %v8494, %v8715
      %v8924 = vadd.f32 %v8495, %v8715
      %v8925 = vadd.f32 %v8496, %v8715
      %v8926 = vadd.f32 %v8497, %v8715
      %v8927 = vadd.f32 %v8498, %v8715
      %v8928 = vadd.f32 %v8499, %v8720
      %v8929 = vadd.f32 %v8500, %v8720
      %v8930 = vadd.f32 %v8501, %v8720
      %v8931 = vadd.f32 %v8502, %v8720
      %v8932 = vadd.f32 %v8503, %v8720
      %v8933 = vadd.f32 %v8504, %v8720
      %v8934 = vadd.f32 %v8505, %v8720
      %v8935 = vadd.f32 %v8506, %v8725
      %v8936 = vadd.f32 %v8507, %v8725
      %v8937 = vadd.f32 %v8508, %v8725
      %v8938 = vadd.f32 %v8509, %v8725
      %v8939 = vadd.f32 %v8510, %v8725
      %v8940 = vadd.f32 %v8511, %v8725
      %v8941 = vadd.f32 %v8512, %v8725
      %v8942 = vadd.f32 %v8513, %v8730
      %v8943 = vadd.f32 %v8514, %v8730
      %v8944 = vadd.f32 %v8515, %v8730
      %v8945 = vadd.f32 %v8516, %v8730
      %v8946 = vadd.f32 %v8517, %v8730
      %v8947 = vadd.f32 %v8518, %v8730
      %v8948 = vadd.f32 %v8519, %v8730
      %v8949 = vadd.f32 %v8520, %v8735
      %v8950 = vadd.f32 %v8521, %v8735
      %v8951 = vadd.f32 %v8522, %v8735
      %v8952 = vadd.f32 %v8523, %v8735
      %v8953 = vadd.f32 %v8524, %v8735
      %v8954 = vadd.f32 %v8525, %v8735
      %v8955 = vadd.f32 %v8526, %v8735
      %v8956 = vadd.f32 %v8527, %v8740
      %v8957 = vadd.f32 %v8528, %v8740
      %v8958 = vadd.f32 %v8529, %v8740
      %v8959 = vadd.f32 %v8530, %v8740
      %v8960 = vadd.f32 %v8531, %v8740
      %v8961 = vadd.f32 %v8532, %v8740
      %v8962 = vadd.f32 %v8533, %v8740
      %v8963 = vadd.f32 %v8534, %v8745
      %v8964 = vadd.f32 %v8535, %v8745
      %v8965 = vadd.f32 %v8536, %v8745
      %v8966 = vadd.f32 %v8537, %v8745
      %v8967 = vadd.f32 %v8538, %v8745
      %v8968 = vadd.f32 %v8539, %v8745
      %v8969 = vadd.f32 %v8540, %v8745
      %v8970 = vadd.f32 %v8541, %v8750
      %v8971 = vadd.f32 %v8542, %v8750
      %v8972 = vadd.f32 %v8543, %v8750
      %v8973 = vadd.f32 %v8544, %v8750
      %v8974 = vadd.f32 %v8545, %v8750
      %v8975 = vadd.f32 %v8546, %v8750
      %v8976 = vadd.f32 %v8547, %v8750
      %v8977 = vadd.f32 %v8548, %v8755
      %v8978 = vadd.f32 %v8549, %v8755
      %v8979 = vadd.f32 %v8550, %v8755
      %v8980 = vadd.f32 %v8551, %v8755
      %v8981 = vadd.f32 %v8552, %v8755
      %v8982 = vadd.f32 %v8553, %v8755
      %v8983 = vadd.f32 %v8554, %v8755
      %v8984 = vadd.f32 %v8555, %v8760
      %v8985 = vadd.f32 %v8556, %v8760
      %v8986 = vadd.f32 %v8557, %v8760
      %v8987 = vadd.f32 %v8558, %v8760
      %v8988 = vadd.f32 %v8559, %v8760
      %v8989 = vadd.f32 %v8560, %v8760
      %v8990 = vadd.f32 %v8561, %v8760
      %v8991 = vadd.f32 %v8562, %v8765
      %v8992 = vadd.f32 %v8563, %v8765
      %v8993 = vadd.f32 %v8564, %v8765
      %v8994 = vadd.f32 %v8565, %v8765
      %v8995 = vadd.f32 %v8566, %v8765
      %v8996 = vadd.f32 %v8567, %v8765
      %v8997 = vadd.f32 %v8568, %v8765
      %8998 = vst [vmem:[%s248] sm:$0xff] %v8767
      %8999 = vst [vmem:[%s248 + $0x8] sm:$0xff] %v8768
      %9000 = vst [vmem:[%s248 + $0x10] sm:$0xff] %v8769
      %9001 = vst [vmem:[%s248 + $0x18] sm:$0xff] %v8770
      %9002 = vst [vmem:[%s248 + $0x20] sm:$0xff] %v8771
      %9003 = vst [vmem:[%s248 + $0x28] sm:$0xff] %v8772
      %9004 = vst.msk [vmem:[%s248 + $0x30] sm:$0xff] %vm6923, %v8773
      %9005 = vst [vmem:[%s248 + $0x38] sm:$0xff] %v8774
      %9006 = vst [vmem:[%s248 + $0x40] sm:$0xff] %v8775
      %9007 = vst [vmem:[%s248 + $0x48] sm:$0xff] %v8776
      %9008 = vst [vmem:[%s248 + $0x50] sm:$0xff] %v8777
      %9009 = vst [vmem:[%s248 + $0x58] sm:$0xff] %v8778
      %9010 = vst [vmem:[%s248 + $0x60] sm:$0xff] %v8779
      %9011 = vst.msk [vmem:[%s248 + $0x68] sm:$0xff] %vm6923, %v8780
      %9012 = vst [vmem:[%s248 + $0x70] sm:$0xff] %v8781
      %9013 = vst [vmem:[%s248 + $0x78] sm:$0xff] %v8782
      %9014 = vst [vmem:[%s248 + $0x80] sm:$0xff] %v8783
      %9015 = vst [vmem:[%s248 + $0x88] sm:$0xff] %v8784
      %9016 = vst [vmem:[%s248 + $0x90] sm:$0xff] %v8785
      %9017 = vst [vmem:[%s248 + $0x98] sm:$0xff] %v8786
      %9018 = vst.msk [vmem:[%s248 + $0xa0] sm:$0xff] %vm6923, %v8787
      %9019 = vst [vmem:[%s248 + $0xa8] sm:$0xff] %v8788
      %9020 = vst [vmem:[%s248 + $0xb0] sm:$0xff] %v8789
      %9021 = vst [vmem:[%s248 + $0xb8] sm:$0xff] %v8790
      %9022 = vst [vmem:[%s248 + $0xc0] sm:$0xff] %v8791
      %9023 = vst [vmem:[%s248 + $0xc8] sm:$0xff] %v8792
      %9024 = vst [vmem:[%s248 + $0xd0] sm:$0xff] %v8793
      %9025 = vst.msk [vmem:[%s248 + $0xd8] sm:$0xff] %vm6923, %v8794
      %9026 = vst [vmem:[%s248 + $0xe0] sm:$0xff] %v8795
      %9027 = vst [vmem:[%s248 + $0xe8] sm:$0xff] %v8796
      %9028 = vst [vmem:[%s248 + $0xf0] sm:$0xff] %v8797
      %9029 = vst [vmem:[%s248 + $0xf8] sm:$0xff] %v8798
      %9030 = vst [vmem:[%s248 + $0x100] sm:$0xff] %v8799
      %9031 = vst [vmem:[%s248 + $0x108] sm:$0xff] %v8800
      %9032 = vst.msk [vmem:[%s248 + $0x110] sm:$0xff] %vm6923, %v8801
      %9033 = vst [vmem:[%s248 + $0x118] sm:$0xff] %v8802
      %9034 = vst [vmem:[%s248 + $0x120] sm:$0xff] %v8803
      %9035 = vst [vmem:[%s248 + $0x128] sm:$0xff] %v8804
      %9036 = vst [vmem:[%s248 + $0x130] sm:$0xff] %v8805
      %9037 = vst [vmem:[%s248 + $0x138] sm:$0xff] %v8806
      %9038 = vst [vmem:[%s248 + $0x140] sm:$0xff] %v8807
      %9039 = vst.msk [vmem:[%s248 + $0x148] sm:$0xff] %vm6923, %v8808
      %9040 = vst [vmem:[%s248 + $0x150] sm:$0xff] %v8809
      %9041 = vst [vmem:[%s248 + $0x158] sm:$0xff] %v8810
      %9042 = vst [vmem:[%s248 + $0x160] sm:$0xff] %v8811
      %9043 = vst [vmem:[%s248 + $0x168] sm:$0xff] %v8812
      %9044 = vst [vmem:[%s248 + $0x170] sm:$0xff] %v8813
      %9045 = vst [vmem:[%s248 + $0x178] sm:$0xff] %v8814
      %9046 = vst.msk [vmem:[%s248 + $0x180] sm:$0xff] %vm6923, %v8815
      %9047 = vst [vmem:[%s248 + $0x188] sm:$0xff] %v8816
      %9048 = vst [vmem:[%s248 + $0x190] sm:$0xff] %v8817
      %9049 = vst [vmem:[%s248 + $0x198] sm:$0xff] %v8818
      %9050 = vst [vmem:[%s248 + $0x1a0] sm:$0xff] %v8819
      %9051 = vst [vmem:[%s248 + $0x1a8] sm:$0xff] %v8820
      %9052 = vst [vmem:[%s248 + $0x1b0] sm:$0xff] %v8821
      %9053 = vst.msk [vmem:[%s248 + $0x1b8] sm:$0xff] %vm6923, %v8822
      %9054 = vst [vmem:[%s248 + $0x1c0] sm:$0xff] %v8823
      %9055 = vst [vmem:[%s248 + $0x1c8] sm:$0xff] %v8824
      %9056 = vst [vmem:[%s248 + $0x1d0] sm:$0xff] %v8825
      %9057 = vst [vmem:[%s248 + $0x1d8] sm:$0xff] %v8826
      %9058 = vst [vmem:[%s248 + $0x1e0] sm:$0xff] %v8827
      %9059 = vst [vmem:[%s248 + $0x1e8] sm:$0xff] %v8828
      %9060 = vst.msk [vmem:[%s248 + $0x1f0] sm:$0xff] %vm6923, %v8829
      %9061 = vst [vmem:[%s248 + $0x1f8] sm:$0xff] %v8830
      %9062 = vst [vmem:[%s248 + $0x200] sm:$0xff] %v8831
      %9063 = vst [vmem:[%s248 + $0x208] sm:$0xff] %v8832
      %9064 = vst [vmem:[%s248 + $0x210] sm:$0xff] %v8833
      %9065 = vst [vmem:[%s248 + $0x218] sm:$0xff] %v8834
      %9066 = vst [vmem:[%s248 + $0x220] sm:$0xff] %v8835
      %9067 = vst.msk [vmem:[%s248 + $0x228] sm:$0xff] %vm6923, %v8836
      %9068 = vst [vmem:[%s248 + $0x230] sm:$0xff] %v8837
      %9069 = vst [vmem:[%s248 + $0x238] sm:$0xff] %v8838
      %9070 = vst [vmem:[%s248 + $0x240] sm:$0xff] %v8839
      %9071 = vst [vmem:[%s248 + $0x248] sm:$0xff] %v8840
      %9072 = vst [vmem:[%s248 + $0x250] sm:$0xff] %v8841
      %9073 = vst [vmem:[%s248 + $0x258] sm:$0xff] %v8842
      %9074 = vst.msk [vmem:[%s248 + $0x260] sm:$0xff] %vm6923, %v8843
      %9075 = vst [vmem:[%s248 + $0x268] sm:$0xff] %v8844
      %9076 = vst [vmem:[%s248 + $0x270] sm:$0xff] %v8845
      %9077 = vst [vmem:[%s248 + $0x278] sm:$0xff] %v8846
      %9078 = vst [vmem:[%s248 + $0x280] sm:$0xff] %v8847
      %9079 = vst [vmem:[%s248 + $0x288] sm:$0xff] %v8848
      %9080 = vst [vmem:[%s248 + $0x290] sm:$0xff] %v8849
      %9081 = vst.msk [vmem:[%s248 + $0x298] sm:$0xff] %vm6923, %v8850
      %9082 = vst [vmem:[%s248 + $0x2a0] sm:$0xff] %v8851
      %9083 = vst [vmem:[%s248 + $0x2a8] sm:$0xff] %v8852
      %9084 = vst [vmem:[%s248 + $0x2b0] sm:$0xff] %v8853
      %9085 = vst [vmem:[%s248 + $0x2b8] sm:$0xff] %v8854
      %9086 = vst [vmem:[%s248 + $0x2c0] sm:$0xff] %v8855
      %9087 = vst [vmem:[%s248 + $0x2c8] sm:$0xff] %v8856
      %9088 = vst.msk [vmem:[%s248 + $0x2d0] sm:$0xff] %vm6923, %v8857
      %9089 = vst [vmem:[%s248 + $0x2d8] sm:$0xff] %v8858
      %9090 = vst [vmem:[%s248 + $0x2e0] sm:$0xff] %v8859
      %9091 = vst [vmem:[%s248 + $0x2e8] sm:$0xff] %v8860
      %9092 = vst [vmem:[%s248 + $0x2f0] sm:$0xff] %v8861
      %9093 = vst [vmem:[%s248 + $0x2f8] sm:$0xff] %v8862
      %9094 = vst [vmem:[%s248 + $0x300] sm:$0xff] %v8863
      %9095 = vst.msk [vmem:[%s248 + $0x308] sm:$0xff] %vm6923, %v8864
      %9096 = vst [vmem:[%s248 + $0x310] sm:$0xff] %v8865
      %9097 = vst [vmem:[%s248 + $0x318] sm:$0xff] %v8866
      %9098 = vst [vmem:[%s248 + $0x320] sm:$0xff] %v8867
      %9099 = vst [vmem:[%s248 + $0x328] sm:$0xff] %v8868
      %9100 = vst [vmem:[%s248 + $0x330] sm:$0xff] %v8869
      %9101 = vst [vmem:[%s248 + $0x338] sm:$0xff] %v8870
      %9102 = vst.msk [vmem:[%s248 + $0x340] sm:$0xff] %vm6923, %v8871
      %9103 = vst [vmem:[%s248 + $0x348] sm:$0xff] %v8872
      %9104 = vst [vmem:[%s248 + $0x350] sm:$0xff] %v8873
      %9105 = vst [vmem:[%s248 + $0x358] sm:$0xff] %v8874
      %9106 = vst [vmem:[%s248 + $0x360] sm:$0xff] %v8875
      %9107 = vst [vmem:[%s248 + $0x368] sm:$0xff] %v8876
      %9108 = vst [vmem:[%s248 + $0x370] sm:$0xff] %v8877
      %9109 = vst.msk [vmem:[%s248 + $0x378] sm:$0xff] %vm6923, %v8878
      %9110 = vst [vmem:[%s248 + $0x380] sm:$0xff] %v8879
      %9111 = vst [vmem:[%s248 + $0x388] sm:$0xff] %v8880
      %9112 = vst [vmem:[%s248 + $0x390] sm:$0xff] %v8881
      %9113 = vst [vmem:[%s248 + $0x398] sm:$0xff] %v8882
      %9114 = vst [vmem:[%s248 + $0x3a0] sm:$0xff] %v8883
      %9115 = vst [vmem:[%s248 + $0x3a8] sm:$0xff] %v8884
      %9116 = vst.msk [vmem:[%s248 + $0x3b0] sm:$0xff] %vm6923, %v8885
      %9117 = vst [vmem:[%s248 + $0x3b8] sm:$0xff] %v8886
      %9118 = vst [vmem:[%s248 + $0x3c0] sm:$0xff] %v8887
      %9119 = vst [vmem:[%s248 + $0x3c8] sm:$0xff] %v8888
      %9120 = vst [vmem:[%s248 + $0x3d0] sm:$0xff] %v8889
      %9121 = vst [vmem:[%s248 + $0x3d8] sm:$0xff] %v8890
      %9122 = vst [vmem:[%s248 + $0x3e0] sm:$0xff] %v8891
      %9123 = vst.msk [vmem:[%s248 + $0x3e8] sm:$0xff] %vm6923, %v8892
      %9124 = vst [vmem:[%s248 + $0x3f0] sm:$0xff] %v8893
      %9125 = vst [vmem:[%s248 + $0x3f8] sm:$0xff] %v8894
      %9126 = vst [vmem:[%s248 + $0x400] sm:$0xff] %v8895
      %9127 = vst [vmem:[%s248 + $0x408] sm:$0xff] %v8896
      %9128 = vst [vmem:[%s248 + $0x410] sm:$0xff] %v8897
      %9129 = vst [vmem:[%s248 + $0x418] sm:$0xff] %v8898
      %9130 = vst.msk [vmem:[%s248 + $0x420] sm:$0xff] %vm6923, %v8899
      %9131 = vst [vmem:[%s248 + $0x428] sm:$0xff] %v8900
      %9132 = vst [vmem:[%s248 + $0x430] sm:$0xff] %v8901
      %9133 = vst [vmem:[%s248 + $0x438] sm:$0xff] %v8902
      %9134 = vst [vmem:[%s248 + $0x440] sm:$0xff] %v8903
      %9135 = vst [vmem:[%s248 + $0x448] sm:$0xff] %v8904
      %9136 = vst [vmem:[%s248 + $0x450] sm:$0xff] %v8905
      %9137 = vst.msk [vmem:[%s248 + $0x458] sm:$0xff] %vm6923, %v8906
      %9138 = vst [vmem:[%s248 + $0x460] sm:$0xff] %v8907
      %9139 = vst [vmem:[%s248 + $0x468] sm:$0xff] %v8908
      %9140 = vst [vmem:[%s248 + $0x470] sm:$0xff] %v8909
      %9141 = vst [vmem:[%s248 + $0x478] sm:$0xff] %v8910
      %9142 = vst [vmem:[%s248 + $0x480] sm:$0xff] %v8911
      %9143 = vst [vmem:[%s248 + $0x488] sm:$0xff] %v8912
      %9144 = vst.msk [vmem:[%s248 + $0x490] sm:$0xff] %vm6923, %v8913
      %9145 = vst [vmem:[%s248 + $0x498] sm:$0xff] %v8914
      %9146 = vst [vmem:[%s248 + $0x4a0] sm:$0xff] %v8915
      %9147 = vst [vmem:[%s248 + $0x4a8] sm:$0xff] %v8916
      %9148 = vst [vmem:[%s248 + $0x4b0] sm:$0xff] %v8917
      %9149 = vst [vmem:[%s248 + $0x4b8] sm:$0xff] %v8918
      %9150 = vst [vmem:[%s248 + $0x4c0] sm:$0xff] %v8919
      %9151 = vst.msk [vmem:[%s248 + $0x4c8] sm:$0xff] %vm6923, %v8920
      %9152 = vst [vmem:[%s248 + $0x4d0] sm:$0xff] %v8921
      %9153 = vst [vmem:[%s248 + $0x4d8] sm:$0xff] %v8922
      %9154 = vst [vmem:[%s248 + $0x4e0] sm:$0xff] %v8923
      %9155 = vst [vmem:[%s248 + $0x4e8] sm:$0xff] %v8924
      %9156 = vst [vmem:[%s248 + $0x4f0] sm:$0xff] %v8925
      %9157 = vst [vmem:[%s248 + $0x4f8] sm:$0xff] %v8926
      %9158 = vst.msk [vmem:[%s248 + $0x500] sm:$0xff] %vm6923, %v8927
      %9159 = vst [vmem:[%s248 + $0x508] sm:$0xff] %v8928
      %9160 = vst [vmem:[%s248 + $0x510] sm:$0xff] %v8929
      %9161 = vst [vmem:[%s248 + $0x518] sm:$0xff] %v8930
      %9162 = vst [vmem:[%s248 + $0x520] sm:$0xff] %v8931
      %9163 = vst [vmem:[%s248 + $0x528] sm:$0xff] %v8932
      %9164 = vst [vmem:[%s248 + $0x530] sm:$0xff] %v8933
      %9165 = vst.msk [vmem:[%s248 + $0x538] sm:$0xff] %vm6923, %v8934
      %9166 = vst [vmem:[%s248 + $0x540] sm:$0xff] %v8935
      %9167 = vst [vmem:[%s248 + $0x548] sm:$0xff] %v8936
      %9168 = vst [vmem:[%s248 + $0x550] sm:$0xff] %v8937
      %9169 = vst [vmem:[%s248 + $0x558] sm:$0xff] %v8938
      %9170 = vst [vmem:[%s248 + $0x560] sm:$0xff] %v8939
      %9171 = vst [vmem:[%s248 + $0x568] sm:$0xff] %v8940
      %9172 = vst.msk [vmem:[%s248 + $0x570] sm:$0xff] %vm6923, %v8941
      %9173 = vst [vmem:[%s248 + $0x578] sm:$0xff] %v8942
      %9174 = vst [vmem:[%s248 + $0x580] sm:$0xff] %v8943
      %9175 = vst [vmem:[%s248 + $0x588] sm:$0xff] %v8944
      %9176 = vst [vmem:[%s248 + $0x590] sm:$0xff] %v8945
      %9177 = vst [vmem:[%s248 + $0x598] sm:$0xff] %v8946
      %9178 = vst [vmem:[%s248 + $0x5a0] sm:$0xff] %v8947
      %9179 = vst.msk [vmem:[%s248 + $0x5a8] sm:$0xff] %vm6923, %v8948
      %9180 = vst [vmem:[%s248 + $0x5b0] sm:$0xff] %v8949
      %9181 = vst [vmem:[%s248 + $0x5b8] sm:$0xff] %v8950
      %9182 = vst [vmem:[%s248 + $0x5c0] sm:$0xff] %v8951
      %9183 = vst [vmem:[%s248 + $0x5c8] sm:$0xff] %v8952
      %9184 = vst [vmem:[%s248 + $0x5d0] sm:$0xff] %v8953
      %9185 = vst [vmem:[%s248 + $0x5d8] sm:$0xff] %v8954
      %9186 = vst.msk [vmem:[%s248 + $0x5e0] sm:$0xff] %vm6923, %v8955
      %9187 = vst [vmem:[%s248 + $0x5e8] sm:$0xff] %v8956
      %9188 = vst [vmem:[%s248 + $0x5f0] sm:$0xff] %v8957
      %9189 = vst [vmem:[%s248 + $0x5f8] sm:$0xff] %v8958
      %9190 = vst [vmem:[%s248 + $0x600] sm:$0xff] %v8959
      %9191 = vst [vmem:[%s248 + $0x608] sm:$0xff] %v8960
      %9192 = vst [vmem:[%s248 + $0x610] sm:$0xff] %v8961
      %9193 = vst.msk [vmem:[%s248 + $0x618] sm:$0xff] %vm6923, %v8962
      %9194 = vst [vmem:[%s248 + $0x620] sm:$0xff] %v8963
      %9195 = vst [vmem:[%s248 + $0x628] sm:$0xff] %v8964
      %9196 = vst [vmem:[%s248 + $0x630] sm:$0xff] %v8965
      %9197 = vst [vmem:[%s248 + $0x638] sm:$0xff] %v8966
      %9198 = vst [vmem:[%s248 + $0x640] sm:$0xff] %v8967
      %9199 = vst [vmem:[%s248 + $0x648] sm:$0xff] %v8968
      %9200 = vst.msk [vmem:[%s248 + $0x650] sm:$0xff] %vm6923, %v8969
      %9201 = vst [vmem:[%s248 + $0x658] sm:$0xff] %v8970
      %9202 = vst [vmem:[%s248 + $0x660] sm:$0xff] %v8971
      %9203 = vst [vmem:[%s248 + $0x668] sm:$0xff] %v8972
      %9204 = vst [vmem:[%s248 + $0x670] sm:$0xff] %v8973
      %9205 = vst [vmem:[%s248 + $0x678] sm:$0xff] %v8974
      %9206 = vst [vmem:[%s248 + $0x680] sm:$0xff] %v8975
      %9207 = vst.msk [vmem:[%s248 + $0x688] sm:$0xff] %vm6923, %v8976
      %9208 = vst [vmem:[%s248 + $0x690] sm:$0xff] %v8977
      %9209 = vst [vmem:[%s248 + $0x698] sm:$0xff] %v8978
      %9210 = vst [vmem:[%s248 + $0x6a0] sm:$0xff] %v8979
      %9211 = vst [vmem:[%s248 + $0x6a8] sm:$0xff] %v8980
      %9212 = vst [vmem:[%s248 + $0x6b0] sm:$0xff] %v8981
      %9213 = vst [vmem:[%s248 + $0x6b8] sm:$0xff] %v8982
      %9214 = vst.msk [vmem:[%s248 + $0x6c0] sm:$0xff] %vm6923, %v8983
      %9215 = vst [vmem:[%s248 + $0x6c8] sm:$0xff] %v8984
      %9216 = vst [vmem:[%s248 + $0x6d0] sm:$0xff] %v8985
      %9217 = vst [vmem:[%s248 + $0x6d8] sm:$0xff] %v8986
      %9218 = vst [vmem:[%s248 + $0x6e0] sm:$0xff] %v8987
      %9219 = vst [vmem:[%s248 + $0x6e8] sm:$0xff] %v8988
      %9220 = vst [vmem:[%s248 + $0x6f0] sm:$0xff] %v8989
      %9221 = vst.msk [vmem:[%s248 + $0x6f8] sm:$0xff] %vm6923, %v8990
      %9222 = vst [vmem:[%s248 + $0x700] sm:$0xff] %v8991
      %9223 = vst [vmem:[%s248 + $0x708] sm:$0xff] %v8992
      %9224 = vst [vmem:[%s248 + $0x710] sm:$0xff] %v8993
      %9225 = vst [vmem:[%s248 + $0x718] sm:$0xff] %v8994
      %9226 = vst [vmem:[%s248 + $0x720] sm:$0xff] %v8995
      %9227 = vst [vmem:[%s248 + $0x728] sm:$0xff] %v8996
      %9228 = vst.msk [vmem:[%s248 + $0x730] sm:$0xff] %vm6923, %v8997
      %s9229 = smul.u32 33, %s15
      %p9230 = scmp.lt.s32.totalorder %s9229, 131
      %s9231 = scalar_select %p9230, %s9229, 131
      %s9232 = smul.addr %s9231, 7
      %s9233 = smul.addr %s9232, 8
      %s9234 = scalar_lea.vmem %s4, %s9233
      // Predicated region
      $region37: #{tpu_custom_call.1} parent=35 // pred_check
        %p9235 = pneg %p132
      $region38: #{tpu_custom_call.1} parent=35 // pred_check_branch
        %9237 = sbr.rel (%p9235) target = $region40
      $region39: #{tpu_custom_call.1} parent=35 // pred_region
        %s9238 = smul.u32 33, %s15
      $region40: #{tpu_custom_call.1} parent=35 // pred_fallthru
        _
    $region36: #{tpu_custom_call.1} parent=5 // pred_fallthru
      _
    %p9239 = scmp.le.s32.totalorder 2, %s10
    // Predicated region
    $region41: #{tpu_custom_call.1} parent=5 // pred_check
      %p9240 = pneg %p9239
    $region42: #{tpu_custom_call.1} parent=5 // pred_check_branch
      %9242 = sbr.rel (%p9240) target = $region44
    $region43: #{tpu_custom_call.1} parent=5 // pred_region
      %s9243 = ssub.s32 %s10, 2
      // Predicated region
      $region45: #{tpu_custom_call.1} parent=43 // pred_check
        %p9244 = pneg %p138
      $region46: #{tpu_custom_call.1} parent=43 // pred_check_branch
        %9246 = sbr.rel (%p9244) target = $region48
      $region47: #{tpu_custom_call.1} parent=43 // pred_region
        %s9247 = smul.u32 33, %s16
        %p9248 = scmp.lt.s32.totalorder %s9247, 131
        %s9249 = scalar_select %p9248, %s9247, 131
        %s9250 = smul.addr %s9249, 7
        %s9251 = smul.addr %s9250, 8
        %s9252 = scalar_lea.vmem %s4, %s9251
      $region48: #{tpu_custom_call.1} parent=43 // pred_fallthru
        _
    $region44: #{tpu_custom_call.1} parent=5 // pred_fallthru
      _
  $region6: #{tpu_custom_call.1} parent=0 // loop_footer
    %s14 = sadd.s32 1, %s10
  $region7: #{tpu_custom_call.1} parent=0 // loop_footer_branch
    %9 = sbr.rel target = $region3
  $region8: #{tpu_custom_call.1} parent=0 // loop_exit
    _

</llo_original>
